<compile_context>
chip_gen: v7x
topology: tpu7x:2x2x1
jax: 0.10.0
libtpu: 0.0.40
codegen_flags: <defaults>
</compile_context>

<pallas_src>
import functools

import jax
import jax.numpy as jnp
from jax.experimental import pallas as pl
from jax.experimental.pallas import tpu as pltpu


# ------------------------------ tile helpers --------------------------------

def _batch_tile(n, rows_per_sample, target_rows=1024):
    """Largest batch tile whose row block divides the total rows and is 8-aligned."""
    want = max(1, target_rows // rows_per_sample)
    for tb in range(min(want, n), 0, -1):
        if n % tb == 0 and (tb * rows_per_sample) % 8 == 0:
            return tb
    return n  # whole-array block (always a legal BlockSpec)


def _largest_row_tile(m, cap=512):
    """Largest row tile <= cap dividing m (m is a multiple of 8: batch is padded)."""
    t = min(m, cap)
    while m % t or (t % 8 and t != m):
        t -= 1
    return t


# ----------------------------- Pallas kernels -------------------------------

def _conv_pool_kernel(p_ref, w_ref, b_ref, o_ref):
    # p: (TM, K) pooled-window patches (bf16)
    # w: (4, K, Cout) shifted weight copies, one per position of the 2x2 pool
    #    window (bf16); b: (1, Cout) f32.
    # Fused: conv matmul (x4) -> max over the 2x2 window -> +bias -> ReLU.
    p = p_ref[...]
    m = jnp.dot(p, w_ref[0], preferred_element_type=jnp.float32)
    for a in range(1, 4):
        m = jnp.maximum(m, jnp.dot(p, w_ref[a],
                                   preferred_element_type=jnp.float32))
    o_ref[...] = jnp.maximum(m + b_ref[...], 0.0).astype(o_ref.dtype)


def _mlp_kernel(x_ref, w1_ref, b1_ref, w2_ref, b2_ref, o_ref):
    # Fused fc1 (+ReLU) and fc; the (TM, 512) hidden stays on-chip.
    h = jnp.dot(x_ref[...], w1_ref[...], preferred_element_type=jnp.float32)
    h = jnp.maximum(h + b1_ref[...], 0.0).astype(w2_ref.dtype)
    o = jnp.dot(h, w2_ref[...], preferred_element_type=jnp.float32) + b2_ref[...]
    o_ref[...] = o.astype(o_ref.dtype)


# ------------------------------ kernel wrappers ------------------------------

def _pooled_patches(x_nhwc, kh, kw, ph, pw):
    # TODO(synk): this strided window gather still runs as XLA glue in HBM; a
    # fully in-kernel gather would need sublane-splitting reshapes that Mosaic
    # does not lower reliably for these shapes.  It is ~4x smaller (and bf16)
    # than a classic kh*kw im2col and is the only remaining large glue pass.
    n, _, _, cin = x_nhwc.shape
    cols = []
    for di in range(kh + 1):
        for dj in range(kw + 1):
            cols.append(jax.lax.slice(
                x_nhwc,
                (0, di, dj, 0),
                (n, di + 2 * (ph - 1) + 1, dj + 2 * (pw - 1) + 1, cin),
                (1, 2, 2, 1)))
    patches = jnp.concatenate(cols, axis=-1)      # (n, ph, pw, (kh+1)(kw+1)cin)
    return patches.reshape(n * ph * pw, -1)


def conv_relu_pool_pallas(x_nhwc, w4, b):
    """Fused Conv2d(valid, stride 1) + bias + ReLU + MaxPool2d(2) on NHWC input.

    x_nhwc: (N, H, W, Cin) bf16
    w4:     (4, (kh+1)*(kw+1)*Cin, Cout) from prepare_params (bf16)
    b:      (1, Cout) f32
    returns (N, OH//2, OW//2, Cout) bf16
    """
    n, hgt, wdt, cin = x_nhwc.shape
    cout = b.shape[-1]
    win = int(round((w4.shape[1] // cin) ** 0.5))      # = kh + 1
    kh = kw = win - 1
    oh, ow = hgt - kh + 1, wdt - kw + 1
    ph, pw = oh // 2, ow // 2

    patches = _pooled_patches(x_nhwc, kh, kw, ph, pw)  # (n*ph*pw, win*win*cin)
    rows, kdim = patches.shape
    tb = _batch_tile(n, ph * pw)
    tm = tb * ph * pw

    out = pl.pallas_call(
        _conv_pool_kernel,
        out_shape=jax.ShapeDtypeStruct((rows, cout), jnp.bfloat16),
        grid=(rows // tm,),
        in_specs=[
            pl.BlockSpec((tm, kdim), lambda i: (i, 0)),
            pl.BlockSpec(w4.shape, lambda i: (0, 0, 0)),
            pl.BlockSpec((1, cout), lambda i: (0, 0)),
        ],
        out_specs=pl.BlockSpec((tm, cout), lambda i: (i, 0)),
        compiler_params=pltpu.CompilerParams(
            dimension_semantics=("parallel",)),
    )(patches, w4, b)
    return out.reshape(n, ph, pw, cout)


def mlp_pallas(x, w1, b1, w2, b2, *, tm_cap=512):
    """Fused (x @ w1 + b1 -> ReLU) @ w2 + b2; w2/b2 already padded to 128 cols."""
    m, kdim = x.shape
    n1 = w1.shape[1]
    n2 = w2.shape[1]
    tm = _largest_row_tile(m, tm_cap)
    return pl.pallas_call(
        _mlp_kernel,
        out_shape=jax.ShapeDtypeStruct((m, n2), jnp.float32),
        grid=(m // tm,),
        in_specs=[
            pl.BlockSpec((tm, kdim), lambda i: (i, 0)),
            pl.BlockSpec((kdim, n1), lambda i: (0, 0)),
            pl.BlockSpec((1, n1), lambda i: (0, 0)),
            pl.BlockSpec((n1, n2), lambda i: (0, 0)),
            pl.BlockSpec((1, n2), lambda i: (0, 0)),
        ],
        out_specs=pl.BlockSpec((tm, n2), lambda i: (i, 0)),
        compiler_params=pltpu.CompilerParams(
            dimension_semantics=("parallel",)),
    )(x.astype(jnp.bfloat16), w1, b1, w2, b2)


# ------------------------- one-time parameter prep ---------------------------

def prepare_params(p):
    """Convert PyTorch-layout parameters into kernel-ready layout (done once)."""

    def conv_pool_w(w_pt):
        # (Cout, Cin, kh, kw) -> (4, (kh+1)*(kw+1)*Cin, Cout): one shifted copy
        # of the HWIO weight per position (a, b) of the 2x2 pooling window.
        cout, cin, kh, kw = w_pt.shape
        whwio = jnp.transpose(w_pt, (2, 3, 1, 0))            # (kh, kw, cin, cout)
        blocks = []
        for a in (0, 1):
            for bb in (0, 1):
                blk = jnp.zeros((kh + 1, kw + 1, cin, cout), w_pt.dtype)
                blk = blk.at[a:a + kh, bb:bb + kw].set(whwio)
                blocks.append(blk.reshape((kh + 1) * (kw + 1) * cin, cout))
        return jnp.stack(blocks).astype(jnp.bfloat16)

    cout2 = p["conv2_w"].shape[0]
    nh, dim = p["fc1_w"].shape
    hw = int(round((dim // cout2) ** 0.5))                   # square feature map
    # fc1 rows reordered from PyTorch's (C, H, W) flatten to NHWC (H, W, C)
    # flatten, so no activation transpose is needed before fc1.
    fc1_w = (p["fc1_w"].reshape(nh, cout2, hw, hw)
             .transpose(0, 2, 3, 1).reshape(nh, dim).T)      # (dim, 512)

    nc = p["fc_w"].shape[0]
    ncp = 128                                                # lane-dense fc out
    fc_w = jnp.zeros((nh, ncp), jnp.float32).at[:, :nc].set(p["fc_w"].T)
    fc_b = jnp.zeros((1, ncp), jnp.float32).at[0, :nc].set(p["fc_b"])

    return {
        "conv1_w": conv_pool_w(p["conv1_w"]),
        "conv1_b": p["conv1_b"].reshape(1, -1).astype(jnp.float32),
        "conv2_w": conv_pool_w(p["conv2_w"]),
        "conv2_b": p["conv2_b"].reshape(1, -1).astype(jnp.float32),
        "fc1_w": fc1_w.astype(jnp.bfloat16),
        "fc1_b": p["fc1_b"].reshape(1, -1).astype(jnp.float32),
        "fc_w": fc_w.astype(jnp.bfloat16),
        "fc_b": fc_b,
    }


# --------------------------------- forward -----------------------------------

@functools.partial(jax.jit, static_argnames=("num_classes",))
def fedavg_cnn_forward(x_nchw, p, *, num_classes=10):
    n = x_nchw.shape[0]
    n_pad = -(-n // 8) * 8                  # pad batch once (tiny input only)
    x = jnp.transpose(x_nchw, (0, 2, 3, 1)).astype(jnp.bfloat16)   # NCHW -> NHWC
    if n_pad != n:
        x = jnp.pad(x, ((0, n_pad - n), (0, 0), (0, 0), (0, 0)))
    h = conv_relu_pool_pallas(x, p["conv1_w"], p["conv1_b"])
    h = conv_relu_pool_pallas(h, p["conv2_w"], p["conv2_b"])
    h = h.reshape(n_pad, -1)                # NHWC flatten (fc1_w pre-permuted)
    out = mlp_pallas(h, p["fc1_w"], p["fc1_b"], p["fc_w"], p["fc_b"])
    return out[:n, :num_classes]


# ------------------------ deterministic parameter init ----------------------

def init_params(key, in_features=1, dim=1024, num_classes=10):
    ks = jax.random.split(key, 8)

    def u(k, shape, fan_in):
        bound = 1.0 / (fan_in ** 0.5)
        return jax.random.uniform(k, shape, jnp.float32, -bound, bound)

    return {
        "conv1_w": u(ks[0], (32, in_features, 5, 5), in_features * 25),
        "conv1_b": u(ks[1], (32,), in_features * 25),
        "conv2_w": u(ks[2], (64, 32, 5, 5), 32 * 25),
        "conv2_b": u(ks[3], (64,), 32 * 25),
        "fc1_w":   u(ks[4], (512, dim), dim),
        "fc1_b":   u(ks[5], (512,), dim),
        "fc_w":    u(ks[6], (num_classes, 512), 512),
        "fc_b":    u(ks[7], (num_classes,), 512),
    }


# ------------------------------ reference check ------------------------------

def reference_forward(x_nchw, p):
    dn = ("NCHW", "OIHW", "NCHW")

    def block(x, w, b):
        y = jax.lax.conv_general_dilated(x, w, (1, 1), "VALID",
                                         dimension_numbers=dn)
        y = jax.nn.relu(y + b[None, :, None, None])
        return jax.lax.reduce_window(y, -jnp.inf, jax.lax.max,
                                     (1, 1, 2, 2), (1, 1, 2, 2), "VALID")

    y = block(x_nchw, p["conv1_w"], p["conv1_b"])
    y = block(y, p["conv2_w"], p["conv2_b"])
    y = y.reshape(y.shape[0], -1)
    y = jax.nn.relu(y @ p["fc1_w"].T + p["fc1_b"])
    return y @ p["fc_w"].T + p["fc_b"]


if __name__ == "__main__":
    key = jax.random.PRNGKey(0)
    kx, kp = jax.random.split(key)

    # MNIST-like config: in_features=1, 28x28 input -> dim = 64*4*4 = 1024.
    batch, in_features, hw_in, dim, num_classes = 2, 1, 28, 1024, 10
    x = jax.random.normal(kx, (batch, in_features, hw_in, hw_in), jnp.float32)
    params = init_params(kp, in_features=in_features, dim=dim,
                         num_classes=num_classes)
    kparams = prepare_params(params)

    out = jax.block_until_ready(
        fedavg_cnn_forward(x, kparams, num_classes=num_classes))
    assert out.shape == (batch, num_classes)

    ref = jax.block_until_ready(reference_forward(x, params))
    assert jnp.allclose(out, ref, atol=2e-2, rtol=2e-2), \
        float(jnp.max(jnp.abs(out - ref)))

    print("KERNEL_OK")
</pallas_src>

<mosaic_0001>
module attributes {stable_mosaic.version = 11 : i64} {
  func.func @_conv_pool_kernel(%arg0: i32, %arg1: memref<576x36xbf16, #tpu.memory_space<vmem>>, %arg2: memref<4x36x32xbf16, #tpu.memory_space<vmem>>, %arg3: memref<1x32xf32, #tpu.memory_space<vmem>>, %arg4: memref<576x32xbf16, #tpu.memory_space<vmem>>) attributes {dimension_semantics = [#tpu.dimension_semantics<parallel>], iteration_bounds = array<i64: 2>, scalar_prefetch = 0 : i64, scratch_operands = 0 : i64, tpu.core_type = #tpu.core_type<tc>, window_params = [{transform_indices = @transform_0, window_bounds = array<i64: 576, 36>}, {pipeline_mode = #tpu.pipeline_mode<synchronous>, transform_indices = @transform_1, window_bounds = array<i64: 4, 36, 32>}, {pipeline_mode = #tpu.pipeline_mode<synchronous>, transform_indices = @transform_2, window_bounds = array<i64: 1, 32>}, {transform_indices = @transform_3, window_bounds = array<i64: 576, 32>}]} {
    %c0 = arith.constant 0 : index
    %c0_0 = arith.constant 0 : index
    %0 = vector.load %arg1[%c0, %c0_0] : memref<576x36xbf16, #tpu.memory_space<vmem>>, vector<576x36xbf16>
    %c0_1 = arith.constant 0 : index
    %c0_2 = arith.constant 0 : index
    %c0_3 = arith.constant 0 : index
    %1 = vector.load %arg2[%c0_1, %c0_2, %c0_3] : memref<4x36x32xbf16, #tpu.memory_space<vmem>>, vector<1x36x32xbf16>
    %2 = vector.shape_cast %1 : vector<1x36x32xbf16> to vector<36x32xbf16>
    %cst = arith.constant dense<0.000000e+00> : vector<576x32xf32>
    %3 = tpu.matmul %0, %2, %cst {dimension_numbers = #tpu.dot_dimension_numbers<[1], [0], [0], [1], [0, 0, 1, 1], [], []>} : vector<576x36xbf16>, vector<36x32xbf16>, vector<576x32xf32> -> vector<576x32xf32>
    %c1 = arith.constant 1 : index
    %c0_4 = arith.constant 0 : index
    %c0_5 = arith.constant 0 : index
    %4 = vector.load %arg2[%c1, %c0_4, %c0_5] : memref<4x36x32xbf16, #tpu.memory_space<vmem>>, vector<1x36x32xbf16>
    %5 = vector.shape_cast %4 : vector<1x36x32xbf16> to vector<36x32xbf16>
    %cst_6 = arith.constant dense<0.000000e+00> : vector<576x32xf32>
    %6 = tpu.matmul %0, %5, %cst_6 {dimension_numbers = #tpu.dot_dimension_numbers<[1], [0], [0], [1], [0, 0, 1, 1], [], []>} : vector<576x36xbf16>, vector<36x32xbf16>, vector<576x32xf32> -> vector<576x32xf32>
    %7 = arith.maximumf %3, %6 : vector<576x32xf32>
    %c2 = arith.constant 2 : index
    %c0_7 = arith.constant 0 : index
    %c0_8 = arith.constant 0 : index
    %8 = vector.load %arg2[%c2, %c0_7, %c0_8] : memref<4x36x32xbf16, #tpu.memory_space<vmem>>, vector<1x36x32xbf16>
    %9 = vector.shape_cast %8 : vector<1x36x32xbf16> to vector<36x32xbf16>
    %cst_9 = arith.constant dense<0.000000e+00> : vector<576x32xf32>
    %10 = tpu.matmul %0, %9, %cst_9 {dimension_numbers = #tpu.dot_dimension_numbers<[1], [0], [0], [1], [0, 0, 1, 1], [], []>} : vector<576x36xbf16>, vector<36x32xbf16>, vector<576x32xf32> -> vector<576x32xf32>
    %11 = arith.maximumf %7, %10 : vector<576x32xf32>
    %c3 = arith.constant 3 : index
    %c0_10 = arith.constant 0 : index
    %c0_11 = arith.constant 0 : index
    %12 = vector.load %arg2[%c3, %c0_10, %c0_11] : memref<4x36x32xbf16, #tpu.memory_space<vmem>>, vector<1x36x32xbf16>
    %13 = vector.shape_cast %12 : vector<1x36x32xbf16> to vector<36x32xbf16>
    %cst_12 = arith.constant dense<0.000000e+00> : vector<576x32xf32>
    %14 = tpu.matmul %0, %13, %cst_12 {dimension_numbers = #tpu.dot_dimension_numbers<[1], [0], [0], [1], [0, 0, 1, 1], [], []>} : vector<576x36xbf16>, vector<36x32xbf16>, vector<576x32xf32> -> vector<576x32xf32>
    %15 = arith.maximumf %11, %14 : vector<576x32xf32>
    %c0_13 = arith.constant 0 : index
    %c0_14 = arith.constant 0 : index
    %16 = vector.load %arg3[%c0_13, %c0_14] : memref<1x32xf32, #tpu.memory_space<vmem>>, vector<1x32xf32>
    %17 = vector.broadcast %16 : vector<1x32xf32> to vector<576x32xf32>
    %18 = arith.addf %15, %17 : vector<576x32xf32>
    %cst_15 = arith.constant 0.000000e+00 : f32
    %19 = vector.broadcast %cst_15 : f32 to vector<576x32xf32>
    %20 = arith.maximumf %18, %19 : vector<576x32xf32>
    %21 = arith.truncf %20 : vector<576x32xf32> to vector<576x32xbf16>
    %c0_16 = arith.constant 0 : index
    %c0_17 = arith.constant 0 : index
    %22 = vector.load %arg4[%c0_16, %c0_17] : memref<576x32xbf16, #tpu.memory_space<vmem>>, vector<576x32xbf16>
    tpu.vector_store %arg4[%c0_16, %c0_17], %21 {strides = array<i32>} : memref<576x32xbf16, #tpu.memory_space<vmem>>, vector<576x32xbf16>,
    return
  }
  func.func @transform_0(%arg0: i32) -> (i32, i32) {
    %c0_i32 = arith.constant 0 : i32
    %c0_i32_0 = arith.constant 0 : i32
    return %arg0, %c0_i32 : i32, i32
  }
  func.func @transform_1(%arg0: i32) -> (i32, i32, i32) {
    %c0_i32 = arith.constant 0 : i32
    %c0_i32_0 = arith.constant 0 : i32
    %c0_i32_1 = arith.constant 0 : i32
    %c0_i32_2 = arith.constant 0 : i32
    return %c0_i32, %c0_i32_0, %c0_i32_1 : i32, i32, i32
  }
  func.func @transform_2(%arg0: i32) -> (i32, i32) {
    %c0_i32 = arith.constant 0 : i32
    %c0_i32_0 = arith.constant 0 : i32
    %c0_i32_1 = arith.constant 0 : i32
    return %c0_i32, %c0_i32_0 : i32, i32
  }
  func.func @transform_3(%arg0: i32) -> (i32, i32) {
    %c0_i32 = arith.constant 0 : i32
    %c0_i32_0 = arith.constant 0 : i32
    return %arg0, %c0_i32 : i32, i32
  }
}

module attributes {stable_mosaic.version = 11 : i64} {
  func.func @_conv_pool_kernel(%arg0: i32, %arg1: memref<128x1152xbf16, #tpu.memory_space<vmem>>, %arg2: memref<4x1152x64xbf16, #tpu.memory_space<vmem>>, %arg3: memref<1x64xf32, #tpu.memory_space<vmem>>, %arg4: memref<128x64xbf16, #tpu.memory_space<vmem>>) attributes {dimension_semantics = [#tpu.dimension_semantics<parallel>], iteration_bounds = array<i64: 1>, scalar_prefetch = 0 : i64, scratch_operands = 0 : i64, tpu.core_type = #tpu.core_type<tc>, window_params = [{transform_indices = @transform_0, window_bounds = array<i64: 128, 1152>}, {pipeline_mode = #tpu.pipeline_mode<synchronous>, transform_indices = @transform_1, window_bounds = array<i64: 4, 1152, 64>}, {pipeline_mode = #tpu.pipeline_mode<synchronous>, transform_indices = @transform_2, window_bounds = array<i64: 1, 64>}, {transform_indices = @transform_3, window_bounds = array<i64: 128, 64>}]} {
    %c0 = arith.constant 0 : index
    %c0_0 = arith.constant 0 : index
    %0 = vector.load %arg1[%c0, %c0_0] : memref<128x1152xbf16, #tpu.memory_space<vmem>>, vector<128x1152xbf16>
    %c0_1 = arith.constant 0 : index
    %c0_2 = arith.constant 0 : index
    %c0_3 = arith.constant 0 : index
    %1 = vector.load %arg2[%c0_1, %c0_2, %c0_3] : memref<4x1152x64xbf16, #tpu.memory_space<vmem>>, vector<1x1152x64xbf16>
    %2 = vector.shape_cast %1 : vector<1x1152x64xbf16> to vector<1152x64xbf16>
    %cst = arith.constant dense<0.000000e+00> : vector<128x64xf32>
    %3 = tpu.matmul %0, %2, %cst {dimension_numbers = #tpu.dot_dimension_numbers<[1], [0], [0], [1], [0, 0, 1, 1], [], []>} : vector<128x1152xbf16>, vector<1152x64xbf16>, vector<128x64xf32> -> vector<128x64xf32>
    %c1 = arith.constant 1 : index
    %c0_4 = arith.constant 0 : index
    %c0_5 = arith.constant 0 : index
    %4 = vector.load %arg2[%c1, %c0_4, %c0_5] : memref<4x1152x64xbf16, #tpu.memory_space<vmem>>, vector<1x1152x64xbf16>
    %5 = vector.shape_cast %4 : vector<1x1152x64xbf16> to vector<1152x64xbf16>
    %cst_6 = arith.constant dense<0.000000e+00> : vector<128x64xf32>
    %6 = tpu.matmul %0, %5, %cst_6 {dimension_numbers = #tpu.dot_dimension_numbers<[1], [0], [0], [1], [0, 0, 1, 1], [], []>} : vector<128x1152xbf16>, vector<1152x64xbf16>, vector<128x64xf32> -> vector<128x64xf32>
    %7 = arith.maximumf %3, %6 : vector<128x64xf32>
    %c2 = arith.constant 2 : index
    %c0_7 = arith.constant 0 : index
    %c0_8 = arith.constant 0 : index
    %8 = vector.load %arg2[%c2, %c0_7, %c0_8] : memref<4x1152x64xbf16, #tpu.memory_space<vmem>>, vector<1x1152x64xbf16>
    %9 = vector.shape_cast %8 : vector<1x1152x64xbf16> to vector<1152x64xbf16>
    %cst_9 = arith.constant dense<0.000000e+00> : vector<128x64xf32>
    %10 = tpu.matmul %0, %9, %cst_9 {dimension_numbers = #tpu.dot_dimension_numbers<[1], [0], [0], [1], [0, 0, 1, 1], [], []>} : vector<128x1152xbf16>, vector<1152x64xbf16>, vector<128x64xf32> -> vector<128x64xf32>
    %11 = arith.maximumf %7, %10 : vector<128x64xf32>
    %c3 = arith.constant 3 : index
    %c0_10 = arith.constant 0 : index
    %c0_11 = arith.constant 0 : index
    %12 = vector.load %arg2[%c3, %c0_10, %c0_11] : memref<4x1152x64xbf16, #tpu.memory_space<vmem>>, vector<1x1152x64xbf16>
    %13 = vector.shape_cast %12 : vector<1x1152x64xbf16> to vector<1152x64xbf16>
    %cst_12 = arith.constant dense<0.000000e+00> : vector<128x64xf32>
    %14 = tpu.matmul %0, %13, %cst_12 {dimension_numbers = #tpu.dot_dimension_numbers<[1], [0], [0], [1], [0, 0, 1, 1], [], []>} : vector<128x1152xbf16>, vector<1152x64xbf16>, vector<128x64xf32> -> vector<128x64xf32>
    %15 = arith.maximumf %11, %14 : vector<128x64xf32>
    %c0_13 = arith.constant 0 : index
    %c0_14 = arith.constant 0 : index
    %16 = vector.load %arg3[%c0_13, %c0_14] : memref<1x64xf32, #tpu.memory_space<vmem>>, vector<1x64xf32>
    %17 = vector.broadcast %16 : vector<1x64xf32> to vector<128x64xf32>
    %18 = arith.addf %15, %17 : vector<128x64xf32>
    %cst_15 = arith.constant 0.000000e+00 : f32
    %19 = vector.broadcast %cst_15 : f32 to vector<128x64xf32>
    %20 = arith.maximumf %18, %19 : vector<128x64xf32>
    %21 = arith.truncf %20 : vector<128x64xf32> to vector<128x64xbf16>
    %c0_16 = arith.constant 0 : index
    %c0_17 = arith.constant 0 : index
    %22 = vector.load %arg4[%c0_16, %c0_17] : memref<128x64xbf16, #tpu.memory_space<vmem>>, vector<128x64xbf16>
    tpu.vector_store %arg4[%c0_16, %c0_17], %21 {strides = array<i32>} : memref<128x64xbf16, #tpu.memory_space<vmem>>, vector<128x64xbf16>,
    return
  }
  func.func @transform_0(%arg0: i32) -> (i32, i32) {
    %c0_i32 = arith.constant 0 : i32
    %c0_i32_0 = arith.constant 0 : i32
    return %arg0, %c0_i32 : i32, i32
  }
  func.func @transform_1(%arg0: i32) -> (i32, i32, i32) {
    %c0_i32 = arith.constant 0 : i32
    %c0_i32_0 = arith.constant 0 : i32
    %c0_i32_1 = arith.constant 0 : i32
    %c0_i32_2 = arith.constant 0 : i32
    return %c0_i32, %c0_i32_0, %c0_i32_1 : i32, i32, i32
  }
  func.func @transform_2(%arg0: i32) -> (i32, i32) {
    %c0_i32 = arith.constant 0 : i32
    %c0_i32_0 = arith.constant 0 : i32
    %c0_i32_1 = arith.constant 0 : i32
    return %c0_i32, %c0_i32_0 : i32, i32
  }
  func.func @transform_3(%arg0: i32) -> (i32, i32) {
    %c0_i32 = arith.constant 0 : i32
    %c0_i32_0 = arith.constant 0 : i32
    return %arg0, %c0_i32 : i32, i32
  }
}

module attributes {stable_mosaic.version = 11 : i64} {
  func.func @_mlp_kernel(%arg0: i32, %arg1: memref<8x1024xbf16, #tpu.memory_space<vmem>>, %arg2: memref<1024x512xbf16, #tpu.memory_space<vmem>>, %arg3: memref<1x512xf32, #tpu.memory_space<vmem>>, %arg4: memref<512x128xbf16, #tpu.memory_space<vmem>>, %arg5: memref<1x128xf32, #tpu.memory_space<vmem>>, %arg6: memref<8x128xf32, #tpu.memory_space<vmem>>) attributes {dimension_semantics = [#tpu.dimension_semantics<parallel>], iteration_bounds = array<i64: 1>, scalar_prefetch = 0 : i64, scratch_operands = 0 : i64, tpu.core_type = #tpu.core_type<tc>, window_params = [{transform_indices = @transform_0, window_bounds = array<i64: 8, 1024>}, {pipeline_mode = #tpu.pipeline_mode<synchronous>, transform_indices = @transform_1, window_bounds = array<i64: 1024, 512>}, {pipeline_mode = #tpu.pipeline_mode<synchronous>, transform_indices = @transform_2, window_bounds = array<i64: 1, 512>}, {pipeline_mode = #tpu.pipeline_mode<synchronous>, transform_indices = @transform_3, window_bounds = array<i64: 512, 128>}, {pipeline_mode = #tpu.pipeline_mode<synchronous>, transform_indices = @transform_4, window_bounds = array<i64: 1, 128>}, {transform_indices = @transform_5, window_bounds = array<i64: 8, 128>}]} {
    %c0 = arith.constant 0 : index
    %c0_0 = arith.constant 0 : index
    %0 = vector.load %arg1[%c0, %c0_0] : memref<8x1024xbf16, #tpu.memory_space<vmem>>, vector<8x1024xbf16>
    %c0_1 = arith.constant 0 : index
    %c0_2 = arith.constant 0 : index
    %1 = vector.load %arg2[%c0_1, %c0_2] : memref<1024x512xbf16, #tpu.memory_space<vmem>>, vector<1024x512xbf16>
    %cst = arith.constant dense<0.000000e+00> : vector<8x512xf32>
    %2 = tpu.matmul %0, %1, %cst {dimension_numbers = #tpu.dot_dimension_numbers<[1], [0], [0], [1], [0, 0, 1, 1], [], []>} : vector<8x1024xbf16>, vector<1024x512xbf16>, vector<8x512xf32> -> vector<8x512xf32>
    %c0_3 = arith.constant 0 : index
    %c0_4 = arith.constant 0 : index
    %3 = vector.load %arg3[%c0_3, %c0_4] : memref<1x512xf32, #tpu.memory_space<vmem>>, vector<1x512xf32>
    %4 = vector.broadcast %3 : vector<1x512xf32> to vector<8x512xf32>
    %5 = arith.addf %2, %4 : vector<8x512xf32>
    %cst_5 = arith.constant 0.000000e+00 : f32
    %6 = vector.broadcast %cst_5 : f32 to vector<8x512xf32>
    %7 = arith.maximumf %5, %6 : vector<8x512xf32>
    %8 = arith.truncf %7 : vector<8x512xf32> to vector<8x512xbf16>
    %c0_6 = arith.constant 0 : index
    %c0_7 = arith.constant 0 : index
    %9 = vector.load %arg4[%c0_6, %c0_7] : memref<512x128xbf16, #tpu.memory_space<vmem>>, vector<512x128xbf16>
    %cst_8 = arith.constant dense<0.000000e+00> : vector<8x128xf32>
    %10 = tpu.matmul %8, %9, %cst_8 {dimension_numbers = #tpu.dot_dimension_numbers<[1], [0], [0], [1], [0, 0, 1, 1], [], []>} : vector<8x512xbf16>, vector<512x128xbf16>, vector<8x128xf32> -> vector<8x128xf32>
    %c0_9 = arith.constant 0 : index
    %c0_10 = arith.constant 0 : index
    %11 = vector.load %arg5[%c0_9, %c0_10] : memref<1x128xf32, #tpu.memory_space<vmem>>, vector<1x128xf32>
    %12 = vector.broadcast %11 : vector<1x128xf32> to vector<8x128xf32>
    %13 = arith.addf %10, %12 : vector<8x128xf32>
    %c0_11 = arith.constant 0 : index
    %c0_12 = arith.constant 0 : index
    %14 = vector.load %arg6[%c0_11, %c0_12] : memref<8x128xf32, #tpu.memory_space<vmem>>, vector<8x128xf32>
    tpu.vector_store %arg6[%c0_11, %c0_12], %13 {strides = array<i32>} : memref<8x128xf32, #tpu.memory_space<vmem>>, vector<8x128xf32>,
    return
  }
  func.func @transform_0(%arg0: i32) -> (i32, i32) {
    %c0_i32 = arith.constant 0 : i32
    %c0_i32_0 = arith.constant 0 : i32
    return %arg0, %c0_i32 : i32, i32
  }
  func.func @transform_1(%arg0: i32) -> (i32, i32) {
    %c0_i32 = arith.constant 0 : i32
    %c0_i32_0 = arith.constant 0 : i32
    %c0_i32_1 = arith.constant 0 : i32
    return %c0_i32, %c0_i32_0 : i32, i32
  }
  func.func @transform_2(%arg0: i32) -> (i32, i32) {
    %c0_i32 = arith.constant 0 : i32
    %c0_i32_0 = arith.constant 0 : i32
    %c0_i32_1 = arith.constant 0 : i32
    return %c0_i32, %c0_i32_0 : i32, i32
  }
  func.func @transform_3(%arg0: i32) -> (i32, i32) {
    %c0_i32 = arith.constant 0 : i32
    %c0_i32_0 = arith.constant 0 : i32
    %c0_i32_1 = arith.constant 0 : i32
    return %c0_i32, %c0_i32_0 : i32, i32
  }
  func.func @transform_4(%arg0: i32) -> (i32, i32) {
    %c0_i32 = arith.constant 0 : i32
    %c0_i32_0 = arith.constant 0 : i32
    %c0_i32_1 = arith.constant 0 : i32
    return %c0_i32, %c0_i32_0 : i32, i32
  }
  func.func @transform_5(%arg0: i32) -> (i32, i32) {
    %c0_i32 = arith.constant 0 : i32
    %c0_i32_0 = arith.constant 0 : i32
    return %arg0, %c0_i32 : i32, i32
  }
}

</mosaic_0001>

<llo_original>
// kernel: fedavg_cnn_forward.3
$region0: #{fedavg_cnn_forward.3}
  #allocation0 [shape = 'u32[]', space=smem, size = 0x4, offset = 0x4, fixed_abs, tag = 'smem constant byte address 0x4 - core index']
  #allocation1 [shape = 'u32[144,128]{1,0:T(1,128)}', space=vmem, size = 0x12000, scoped, tag = 'internal scratch']
  %s0 = inlined_call_operand.vmem [shape: bf16[1152,36], index: 0, kind: input, shape index: {}]
  %s1 = inlined_call_operand.vmem [shape: bf16[4,36,32], index: 1, kind: input, shape index: {}]
  %s2 = inlined_call_operand.vmem [shape: f32[1,32], index: 2, kind: input, shape index: {}]
  %s3 = inlined_call_operand.vmem [shape: bf16[1152,32], index: 3, kind: output, shape index: {}]
  %s4 = sld [smem:[#allocation0]]
  $region45: #{fedavg_cnn_forward.3} parent=0
    _
  %s6 = ssub.s32 1, %s4
  %s7 = scalar_select 0, %s6, %s4
  loop: start=0, step=1, limit=4
  $region2: #{fedavg_cnn_forward.3} parent=0 // loop_pre_header
    _
  $region3: #{fedavg_cnn_forward.3} parent=0 // loop_header
    %s9 = sphi 0, %s13
    %p10 = scmp.ge.s32.totalorder %s9, 4
    %s19 = sphi 0, %s21
    %s22 = sphi 0, %s19
    %s23 = sphi 0, %s22
    %s39 = sphi 0, %s23
    %s43 = sphi 0, %s43
    %s45 = sphi 0, %s43
    %s46 = sphi 0, %s45
    %s60 = sphi 0, %s46
    %s64 = sphi 0, %s64
    %s66 = sphi 0, %s64
    %s67 = sphi 0, %s66
    %s81 = sphi 0, %s67
    %s87 = sphi 0, %s89
    %s90 = sphi 0, %s87
    %s91 = sphi 0, %s90
    %s107 = sphi 0, %s91
  $region4: #{fedavg_cnn_forward.3} parent=0 // loop_header_branch
    %12 = sbr.rel (%p10) target = $region8
  $region5: #{fedavg_cnn_forward.3} parent=0 // loop_body
    %s14 = ssub.s32 %s9, 1
    %s15 = ssub.s32 %s9, 2
    %s16 = sadd.s32 %s9, 1
    %s17 = ssub.s32 %s9, %s16
    %p18 = scmp.eq.s32.totalorder %s17, 0
    %s20 = sadd.s32 %s19, 1
    %s21 = scalar_select %p18, %s19, %s20
    %p24 = pneg %p18
    %p25 = scmp.eq.s32.totalorder %s9, 1
    %p26 = por %p24, %p25
    %p27 = scmp.ne.s32.totalorder %s19, %s22
    %p28 = scmp.eq.s32.totalorder %s9, 0
    %p29 = por %p27, %p28
    %p30 = scmp.ne.s32.totalorder %s19, %s22
    %p31 = scmp.eq.s32.totalorder %s14, 1
    %p32 = por %p30, %p31
    %p33 = scmp.ne.s32.totalorder %s22, %s23
    %p34 = scmp.eq.s32.totalorder %s14, 0
    %p35 = por %p33, %p34
    %p36 = scmp.ne.s32.totalorder %s22, %s23
    %p37 = scmp.eq.s32.totalorder %s15, 1
    %p38 = por %p36, %p37
    %p40 = scmp.ne.s32.totalorder %s23, %s39
    %p41 = scmp.eq.s32.totalorder %s15, 0
    %p42 = por %p40, %p41
    %s44 = sadd.s32 %s43, 1
    %p47 = scmp.eq.s32.totalorder %s9, 1
    %p48 = scmp.ne.s32.totalorder %s43, %s45
    %p49 = scmp.eq.s32.totalorder %s9, 0
    %p50 = por %p48, %p49
    %p51 = scmp.ne.s32.totalorder %s43, %s45
    %p52 = scmp.eq.s32.totalorder %s14, 1
    %p53 = por %p51, %p52
    %p54 = scmp.ne.s32.totalorder %s45, %s46
    %p55 = scmp.eq.s32.totalorder %s14, 0
    %p56 = por %p54, %p55
    %p57 = scmp.ne.s32.totalorder %s45, %s46
    %p58 = scmp.eq.s32.totalorder %s15, 1
    %p59 = por %p57, %p58
    %p61 = scmp.ne.s32.totalorder %s46, %s60
    %p62 = scmp.eq.s32.totalorder %s15, 0
    %p63 = por %p61, %p62
    %s65 = sadd.s32 %s64, 1
    %p68 = scmp.eq.s32.totalorder %s9, 1
    %p69 = scmp.ne.s32.totalorder %s64, %s66
    %p70 = scmp.eq.s32.totalorder %s9, 0
    %p71 = por %p69, %p70
    %p72 = scmp.ne.s32.totalorder %s64, %s66
    %p73 = scmp.eq.s32.totalorder %s14, 1
    %p74 = por %p72, %p73
    %p75 = scmp.ne.s32.totalorder %s66, %s67
    %p76 = scmp.eq.s32.totalorder %s14, 0
    %p77 = por %p75, %p76
    %p78 = scmp.ne.s32.totalorder %s66, %s67
    %p79 = scmp.eq.s32.totalorder %s15, 1
    %p80 = por %p78, %p79
    %p82 = scmp.ne.s32.totalorder %s67, %s81
    %p83 = scmp.eq.s32.totalorder %s15, 0
    %p84 = por %p82, %p83
    %s85 = ssub.s32 %s9, %s16
    %p86 = scmp.eq.s32.totalorder %s85, 0
    %s88 = sadd.s32 %s87, 1
    %s89 = scalar_select %p86, %s87, %s88
    %p92 = pneg %p86
    %p93 = scmp.eq.s32.totalorder %s9, 1
    %p94 = por %p92, %p93
    %p95 = scmp.ne.s32.totalorder %s87, %s90
    %p96 = scmp.eq.s32.totalorder %s9, 0
    %p97 = por %p95, %p96
    %p98 = scmp.ne.s32.totalorder %s87, %s90
    %p99 = scmp.eq.s32.totalorder %s14, 1
    %p100 = por %p98, %p99
    %p101 = scmp.ne.s32.totalorder %s90, %s91
    %p102 = scmp.eq.s32.totalorder %s14, 0
    %p103 = por %p101, %p102
    %p104 = scmp.ne.s32.totalorder %s90, %s91
    %p105 = scmp.eq.s32.totalorder %s15, 1
    %p106 = por %p104, %p105
    %p108 = scmp.ne.s32.totalorder %s91, %s107
    %p109 = scmp.eq.s32.totalorder %s15, 0
    %p110 = por %p108, %p109
    %p111 = scmp.le.s32.totalorder 1, %s9
    %p112 = scmp.lt.s32.totalorder %s9, 3
    %p113 = pnand %p111, %p112
    %p114 = pneg %p113
    // Predicated region
    $region9: #{fedavg_cnn_forward.3} parent=5 // pred_check
      _
    $region10: #{fedavg_cnn_forward.3} parent=5 // pred_check_branch
      %116 = sbr.rel (%p113) target = $region12
    $region11: #{fedavg_cnn_forward.3} parent=5 // pred_region
      %s117 = ssub.s32 %s9, 1
      // Predicated region
      $region13: #{fedavg_cnn_forward.3} parent=11 // pred_check
        %p118 = pneg %p56
      $region14: #{fedavg_cnn_forward.3} parent=11 // pred_check_branch
        %120 = sbr.rel (%p118) target = $region16
      $region15: #{fedavg_cnn_forward.3} parent=11 // pred_region
        _
      $region16: #{fedavg_cnn_forward.3} parent=11 // pred_fallthru
        _
      // Predicated region
      $region17: #{fedavg_cnn_forward.3} parent=11 // pred_check
        %p121 = pneg %p77
      $region18: #{fedavg_cnn_forward.3} parent=11 // pred_check_branch
        %123 = sbr.rel (%p121) target = $region20
      $region19: #{fedavg_cnn_forward.3} parent=11 // pred_region
        _
      $region20: #{fedavg_cnn_forward.3} parent=11 // pred_fallthru
        _
    $region12: #{fedavg_cnn_forward.3} parent=5 // pred_fallthru
      _
    %p124 = scmp.lt.s32.totalorder %s9, 2
    // Predicated region
    $region21: #{fedavg_cnn_forward.3} parent=5 // pred_check
      %p125 = pneg %p124
    $region22: #{fedavg_cnn_forward.3} parent=5 // pred_check_branch
      %127 = sbr.rel (%p125) target = $region24
    $region23: #{fedavg_cnn_forward.3} parent=5 // pred_region
      // Predicated region
      $region25: #{fedavg_cnn_forward.3} parent=23 // pred_check
        %p128 = pneg %p29
      $region26: #{fedavg_cnn_forward.3} parent=23 // pred_check_branch
        %130 = sbr.rel (%p128) target = $region28
      $region27: #{fedavg_cnn_forward.3} parent=23 // pred_region
        %s131 = smul.u32 72, %s9
        %p132 = scmp.lt.s32.totalorder %s131, 143
        %s133 = scalar_select %p132, %s131, 143
        %s134 = smul.addr %s133, 4
        %s135 = scalar_lea.vmem %s0, %s134
        %s136 = smul.u32 72, %s9
      $region28: #{fedavg_cnn_forward.3} parent=23 // pred_fallthru
        _
    $region24: #{fedavg_cnn_forward.3} parent=5 // pred_fallthru
      _
    %p137 = scmp.le.s32.totalorder 1, %s9
    %p138 = scmp.lt.s32.totalorder %s9, 3
    %p139 = pnand %p137, %p138
    %p140 = pneg %p139
    // Predicated region
    $region29: #{fedavg_cnn_forward.3} parent=5 // pred_check
      _
    $region30: #{fedavg_cnn_forward.3} parent=5 // pred_check_branch
      %142 = sbr.rel (%p139) target = $region32
    $region31: #{fedavg_cnn_forward.3} parent=5 // pred_region
      %s143 = ssub.s32 %s9, 1
      %s144 = smul.u32 72, %s14
      %p145 = scmp.lt.s32.totalorder %s144, 143
      %s146 = scalar_select %p145, %s144, 143
      %s147 = smul.addr %s146, 4
      %s148 = scalar_lea.vmem %s0, %s147
      %p149 = pneg %p35
      %p150 = pneg %p32
      %p151 = pneg %p56
      %p152 = pneg %p53
      %p153 = pneg %p77
      %p154 = pneg %p74
      %p155 = pneg %p103
      %p156 = pneg %p100
      %s157 = smul.u32 72, %s14
      %p158 = scmp.lt.s32.totalorder %s157, 143
      %s159 = scalar_select %p158, %s157, 143
      %s160 = smul.addr %s159, 4
      %s161 = scalar_lea.vmem %s3, %s160
      %s162 = smul.u32 72, %s14
      %p163 = scmp.lt.s32.totalorder %s162, 143
      %s164 = scalar_select %p163, %s162, 143
      %s165 = smul.addr %s164, 4
      %s166 = scalar_lea.vmem %s0, %s165
      %s167 = smul.u32 72, %s14
      %s168 = smul.u32 72, %s14
      %p169 = scmp.lt.s32.totalorder %s168, 143
      %s170 = scalar_select %p169, %s168, 143
      %s171 = smul.addr %s170, 4
      %s172 = scalar_lea.vmem %s3, %s171
      %s173 = smul.u32 72, %s14
      %v175 = vld [vmem:[%s166] sm:$0xf]
      %v176 = vld [vmem:[%s166 + $0x4] sm:$0xf]
      %v177 = vld [vmem:[%s166 + $0x8] sm:$0xf]
      %v178 = vld [vmem:[%s166 + $0xc] sm:$0xf]
      %v179 = vld [vmem:[%s166 + $0x10] sm:$0xf]
      %v180 = vld [vmem:[%s166 + $0x14] sm:$0xf]
      %v181 = vld [vmem:[%s166 + $0x18] sm:$0xf]
      %v182 = vld [vmem:[%s166 + $0x1c] sm:$0xf]
      %v183 = vld [vmem:[%s166 + $0x20] sm:$0xf]
      %v184 = vld [vmem:[%s166 + $0x24] sm:$0xf]
      %v185 = vld [vmem:[%s166 + $0x28] sm:$0xf]
      %v186 = vld [vmem:[%s166 + $0x2c] sm:$0xf]
      %v187 = vld [vmem:[%s166 + $0x30] sm:$0xf]
      %v188 = vld [vmem:[%s166 + $0x34] sm:$0xf]
      %v189 = vld [vmem:[%s166 + $0x38] sm:$0xf]
      %v190 = vld [vmem:[%s166 + $0x3c] sm:$0xf]
      %v191 = vld [vmem:[%s166 + $0x40] sm:$0xf]
      %v192 = vld [vmem:[%s166 + $0x44] sm:$0xf]
      %v193 = vld [vmem:[%s166 + $0x48] sm:$0xf]
      %v194 = vld [vmem:[%s166 + $0x4c] sm:$0xf]
      %v195 = vld [vmem:[%s166 + $0x50] sm:$0xf]
      %v196 = vld [vmem:[%s166 + $0x54] sm:$0xf]
      %v197 = vld [vmem:[%s166 + $0x58] sm:$0xf]
      %v198 = vld [vmem:[%s166 + $0x5c] sm:$0xf]
      %v199 = vld [vmem:[%s166 + $0x60] sm:$0xf]
      %v200 = vld [vmem:[%s166 + $0x64] sm:$0xf]
      %v201 = vld [vmem:[%s166 + $0x68] sm:$0xf]
      %v202 = vld [vmem:[%s166 + $0x6c] sm:$0xf]
      %v203 = vld [vmem:[%s166 + $0x70] sm:$0xf]
      %v204 = vld [vmem:[%s166 + $0x74] sm:$0xf]
      %v205 = vld [vmem:[%s166 + $0x78] sm:$0xf]
      %v206 = vld [vmem:[%s166 + $0x7c] sm:$0xf]
      %v207 = vld [vmem:[%s166 + $0x80] sm:$0xf]
      %v208 = vld [vmem:[%s166 + $0x84] sm:$0xf]
      %v209 = vld [vmem:[%s166 + $0x88] sm:$0xf]
      %v210 = vld [vmem:[%s166 + $0x8c] sm:$0xf]
      %v211 = vld [vmem:[%s166 + $0x90] sm:$0xf]
      %v212 = vld [vmem:[%s166 + $0x94] sm:$0xf]
      %v213 = vld [vmem:[%s166 + $0x98] sm:$0xf]
      %v214 = vld [vmem:[%s166 + $0x9c] sm:$0xf]
      %v215 = vld [vmem:[%s166 + $0xa0] sm:$0xf]
      %v216 = vld [vmem:[%s166 + $0xa4] sm:$0xf]
      %v217 = vld [vmem:[%s166 + $0xa8] sm:$0xf]
      %v218 = vld [vmem:[%s166 + $0xac] sm:$0xf]
      %v219 = vld [vmem:[%s166 + $0xb0] sm:$0xf]
      %v220 = vld [vmem:[%s166 + $0xb4] sm:$0xf]
      %v221 = vld [vmem:[%s166 + $0xb8] sm:$0xf]
      %v222 = vld [vmem:[%s166 + $0xbc] sm:$0xf]
      %v223 = vld [vmem:[%s166 + $0xc0] sm:$0xf]
      %v224 = vld [vmem:[%s166 + $0xc4] sm:$0xf]
      %v225 = vld [vmem:[%s166 + $0xc8] sm:$0xf]
      %v226 = vld [vmem:[%s166 + $0xcc] sm:$0xf]
      %v227 = vld [vmem:[%s166 + $0xd0] sm:$0xf]
      %v228 = vld [vmem:[%s166 + $0xd4] sm:$0xf]
      %v229 = vld [vmem:[%s166 + $0xd8] sm:$0xf]
      %v230 = vld [vmem:[%s166 + $0xdc] sm:$0xf]
      %v231 = vld [vmem:[%s166 + $0xe0] sm:$0xf]
      %v232 = vld [vmem:[%s166 + $0xe4] sm:$0xf]
      %v233 = vld [vmem:[%s166 + $0xe8] sm:$0xf]
      %v234 = vld [vmem:[%s166 + $0xec] sm:$0xf]
      %v235 = vld [vmem:[%s166 + $0xf0] sm:$0xf]
      %v236 = vld [vmem:[%s166 + $0xf4] sm:$0xf]
      %v237 = vld [vmem:[%s166 + $0xf8] sm:$0xf]
      %v238 = vld [vmem:[%s166 + $0xfc] sm:$0xf]
      %v239 = vld [vmem:[%s166 + $0x100] sm:$0xf]
      %v240 = vld [vmem:[%s166 + $0x104] sm:$0xf]
      %v241 = vld [vmem:[%s166 + $0x108] sm:$0xf]
      %v242 = vld [vmem:[%s166 + $0x10c] sm:$0xf]
      %v243 = vld [vmem:[%s166 + $0x110] sm:$0xf]
      %v244 = vld [vmem:[%s166 + $0x114] sm:$0xf]
      %v245 = vld [vmem:[%s166 + $0x118] sm:$0xf]
      %v246 = vld [vmem:[%s166 + $0x11c] sm:$0xf]
      %v247 = vld [vmem:[%s1] sm:$0xf]
      %v248 = vld [vmem:[%s1 + $0x4] sm:$0xf]
      %v249 = vld [vmem:[%s1 + $0x8] sm:$0xf]
      %v250 = vld [vmem:[%s1 + $0xc] sm:$0xf]
      %v251 = vld [vmem:[%s1 + $0x10] sm:$0x3]
      %v324 = vunpack.c.l.b16 %v175
      %v325 = vunpack.c.l.b16 %v176
      %v326 = vunpack.c.l.b16 %v177
      %v327 = vunpack.c.l.b16 %v178
      %v328 = vunpack.c.l.b16 %v179
      %v329 = vunpack.c.l.b16 %v180
      %v330 = vunpack.c.l.b16 %v181
      %v331 = vunpack.c.l.b16 %v182
      %v332 = vunpack.c.l.b16 %v183
      %v333 = vunpack.c.l.b16 %v184
      %v334 = vunpack.c.l.b16 %v185
      %v335 = vunpack.c.l.b16 %v186
      %v336 = vunpack.c.l.b16 %v187
      %v337 = vunpack.c.l.b16 %v188
      %v338 = vunpack.c.l.b16 %v189
      %v339 = vunpack.c.l.b16 %v190
      %v340 = vunpack.c.l.b16 %v191
      %v341 = vunpack.c.l.b16 %v192
      %v342 = vunpack.c.l.b16 %v193
      %v343 = vunpack.c.l.b16 %v194
      %v344 = vunpack.c.l.b16 %v195
      %v345 = vunpack.c.l.b16 %v196
      %v346 = vunpack.c.l.b16 %v197
      %v347 = vunpack.c.l.b16 %v198
      %v348 = vunpack.c.l.b16 %v199
      %v349 = vunpack.c.l.b16 %v200
      %v350 = vunpack.c.l.b16 %v201
      %v351 = vunpack.c.l.b16 %v202
      %v352 = vunpack.c.l.b16 %v203
      %v353 = vunpack.c.l.b16 %v204
      %v354 = vunpack.c.l.b16 %v205
      %v355 = vunpack.c.l.b16 %v206
      %v356 = vunpack.c.l.b16 %v207
      %v357 = vunpack.c.l.b16 %v208
      %v358 = vunpack.c.l.b16 %v209
      %v359 = vunpack.c.l.b16 %v210
      %v360 = vunpack.c.l.b16 %v211
      %v361 = vunpack.c.l.b16 %v212
      %v362 = vunpack.c.l.b16 %v213
      %v363 = vunpack.c.l.b16 %v214
      %v364 = vunpack.c.l.b16 %v215
      %v365 = vunpack.c.l.b16 %v216
      %v366 = vunpack.c.l.b16 %v217
      %v367 = vunpack.c.l.b16 %v218
      %v368 = vunpack.c.l.b16 %v219
      %v369 = vunpack.c.l.b16 %v220
      %v370 = vunpack.c.l.b16 %v221
      %v371 = vunpack.c.l.b16 %v222
      %v372 = vunpack.c.l.b16 %v223
      %v373 = vunpack.c.l.b16 %v224
      %v374 = vunpack.c.l.b16 %v225
      %v375 = vunpack.c.l.b16 %v226
      %v376 = vunpack.c.l.b16 %v227
      %v377 = vunpack.c.l.b16 %v228
      %v378 = vunpack.c.l.b16 %v229
      %v379 = vunpack.c.l.b16 %v230
      %v380 = vunpack.c.l.b16 %v231
      %v381 = vunpack.c.l.b16 %v232
      %v382 = vunpack.c.l.b16 %v233
      %v383 = vunpack.c.l.b16 %v234
      %v384 = vunpack.c.l.b16 %v235
      %v385 = vunpack.c.l.b16 %v236
      %v386 = vunpack.c.l.b16 %v237
      %v387 = vunpack.c.l.b16 %v238
      %v388 = vunpack.c.l.b16 %v239
      %v389 = vunpack.c.l.b16 %v240
      %v390 = vunpack.c.l.b16 %v241
      %v391 = vunpack.c.l.b16 %v242
      %v392 = vunpack.c.l.b16 %v243
      %v393 = vunpack.c.l.b16 %v244
      %v394 = vunpack.c.l.b16 %v245
      %v395 = vunpack.c.l.b16 %v246
      %v396 = vpack.c.b16 %v325, %v324
      %v397 = vpack.c.b16 %v327, %v326
      %v398 = vpack.c.b16 %v329, %v328
      %v399 = vpack.c.b16 %v331, %v330
      %v400 = vpack.c.b16 %v333, %v332
      %v401 = vpack.c.b16 %v335, %v334
      %v402 = vpack.c.b16 %v337, %v336
      %v403 = vpack.c.b16 %v339, %v338
      %v404 = vpack.c.b16 %v341, %v340
      %v405 = vpack.c.b16 %v343, %v342
      %v406 = vpack.c.b16 %v345, %v344
      %v407 = vpack.c.b16 %v347, %v346
      %v408 = vpack.c.b16 %v349, %v348
      %v409 = vpack.c.b16 %v351, %v350
      %v410 = vpack.c.b16 %v353, %v352
      %v411 = vpack.c.b16 %v355, %v354
      %v412 = vpack.c.b16 %v357, %v356
      %v413 = vpack.c.b16 %v359, %v358
      %v414 = vpack.c.b16 %v361, %v360
      %v415 = vpack.c.b16 %v363, %v362
      %v416 = vpack.c.b16 %v365, %v364
      %v417 = vpack.c.b16 %v367, %v366
      %v418 = vpack.c.b16 %v369, %v368
      %v419 = vpack.c.b16 %v371, %v370
      %v420 = vpack.c.b16 %v373, %v372
      %v421 = vpack.c.b16 %v375, %v374
      %v422 = vpack.c.b16 %v377, %v376
      %v423 = vpack.c.b16 %v379, %v378
      %v424 = vpack.c.b16 %v381, %v380
      %v425 = vpack.c.b16 %v383, %v382
      %v426 = vpack.c.b16 %v385, %v384
      %v427 = vpack.c.b16 %v387, %v386
      %v428 = vpack.c.b16 %v389, %v388
      %v429 = vpack.c.b16 %v391, %v390
      %v430 = vpack.c.b16 %v393, %v392
      %v431 = vpack.c.b16 %v395, %v394
      %v437 = vunpack.c.l.b16 %v247
      %v438 = vunpack.c.l.b16 %v248
      %v439 = vunpack.c.l.b16 %v249
      %v440 = vunpack.c.l.b16 %v250
      %v441 = vunpack.c.l.b16 %v251
      %v442 = vpack.c.b16 %v438, %v437
      %v443 = vpack.c.b16 %v440, %v439
      %v444 = vpack.c.b16 %v441, %v441
      %vm447 = vcmask 293888
      %v449 = vsel %vm447, %v396, 0
      %v452 = vsel %vm447, %v397, 0
      %v455 = vsel %vm447, %v398, 0
      %v458 = vsel %vm447, %v399, 0
      %v461 = vsel %vm447, %v400, 0
      %v464 = vsel %vm447, %v401, 0
      %v467 = vsel %vm447, %v402, 0
      %v470 = vsel %vm447, %v403, 0
      %v473 = vsel %vm447, %v404, 0
      %v476 = vsel %vm447, %v405, 0
      %v479 = vsel %vm447, %v406, 0
      %v482 = vsel %vm447, %v407, 0
      %v485 = vsel %vm447, %v408, 0
      %v488 = vsel %vm447, %v409, 0
      %v491 = vsel %vm447, %v410, 0
      %v494 = vsel %vm447, %v411, 0
      %v497 = vsel %vm447, %v412, 0
      %v500 = vsel %vm447, %v413, 0
      %v503 = vsel %vm447, %v414, 0
      %v506 = vsel %vm447, %v415, 0
      %v509 = vsel %vm447, %v416, 0
      %v512 = vsel %vm447, %v417, 0
      %v515 = vsel %vm447, %v418, 0
      %v518 = vsel %vm447, %v419, 0
      %v521 = vsel %vm447, %v420, 0
      %v524 = vsel %vm447, %v421, 0
      %v527 = vsel %vm447, %v422, 0
      %v530 = vsel %vm447, %v423, 0
      %v533 = vsel %vm447, %v424, 0
      %v536 = vsel %vm447, %v425, 0
      %v539 = vsel %vm447, %v426, 0
      %v542 = vsel %vm447, %v427, 0
      %v545 = vsel %vm447, %v428, 0
      %v548 = vsel %vm447, %v429, 0
      %v551 = vsel %vm447, %v430, 0
      %v554 = vsel %vm447, %v431, 0
      %vm556 = vcmask 1041408
      %v558 = vsel %vm556, %v444, 0
      %560 = vmatprep.subr.bf16.mxu0 0
      %561 = vmatpush1.bf16.msra.mxu0 %v442
      %562 = vmatprep.subr.bf16.mxu0 0
      %563 = vmatpush1.bf16.msra.mxu0 %v443
      %564 = vmatprep.subr.bf16.mxu0 0
      %565 = vmatpush1.bf16.msra.mxu0 %v558
      %566 = vmatprep.subr.bf16.mxu0 0
      %567 = vmatpush1.bf16.msra.mxu0 0
      %568 = vmatprep.subr.bf16.mxu0 0
      %569 = vmatpush1.bf16.msra.mxu0 0
      %570 = vmatprep.subr.bf16.mxu0 0
      %571 = vmatpush1.bf16.msra.mxu0 0
      %572 = vmatprep.subr.bf16.mxu0 0
      %573 = vmatpush1.bf16.msra.mxu0 0
      %574 = vmatprep.subr.bf16.mxu0 0
      %575 = vmatpush1.bf16.msra.mxu0 0
      %576 = vmatprep.subr.bf16.mxu0 0
      %577 = vmatpush1.bf16.msra.mxu0 0
      %578 = vmatprep.subr.bf16.mxu0 0
      %579 = vmatpush1.bf16.msra.mxu0 0
      %580 = vmatprep.subr.bf16.mxu0 0
      %581 = vmatpush1.bf16.msra.mxu0 0
      %582 = vmatprep.subr.bf16.mxu0 0
      %583 = vmatpush1.bf16.msra.mxu0 0
      %584 = vmatprep.subr.bf16.mxu0 0
      %585 = vmatpush1.bf16.msra.mxu0 0
      %586 = vmatprep.subr.bf16.mxu0 0
      %587 = vmatpush1.bf16.msra.mxu0 0
      %588 = vmatprep.subr.bf16.mxu0 0
      %589 = vmatpush1.bf16.msra.mxu0 0
      %590 = vmatprep.subr.bf16.mxu0 0
      %591 = vmatpush1.bf16.msra.mxu0 0
      %592 = vmatprep.mubr.bf16.mxu0 0
      %593 = vmatmul.mubr.bf16.gmra.mrb[0].mxu0 %v449
      %v594 = vpop.f32.mrb[0].mxu0
      %v595 = vadd.f32 0.0, %v594
      %v596 = vpop.f32.mrb[0].mxu0
      %v597 = vpop.f32.mrb[0].mxu0
      %v598 = vadd.f32 0.0, %v597
      %v599 = vpop.f32.mrb[0].mxu0
      %600 = vmatprep.mubr.bf16.mxu0 0
      %601 = vmatmul.mubr.bf16.gmra.mrb[0].mxu0 %v452
      %v602 = vpop.f32.mrb[0].mxu0
      %v603 = vadd.f32 0.0, %v602
      %v604 = vpop.f32.mrb[0].mxu0
      %v605 = vpop.f32.mrb[0].mxu0
      %v606 = vadd.f32 0.0, %v605
      %v607 = vpop.f32.mrb[0].mxu0
      %608 = vmatprep.mubr.bf16.mxu0 0
      %609 = vmatmul.mubr.bf16.gmra.mrb[0].mxu0 %v455
      %v610 = vpop.f32.mrb[0].mxu0
      %v611 = vadd.f32 0.0, %v610
      %v612 = vpop.f32.mrb[0].mxu0
      %v613 = vpop.f32.mrb[0].mxu0
      %v614 = vadd.f32 0.0, %v613
      %v615 = vpop.f32.mrb[0].mxu0
      %616 = vmatprep.mubr.bf16.mxu0 0
      %617 = vmatmul.mubr.bf16.gmra.mrb[0].mxu0 %v458
      %v618 = vpop.f32.mrb[0].mxu0
      %v619 = vadd.f32 0.0, %v618
      %v620 = vpop.f32.mrb[0].mxu0
      %v621 = vpop.f32.mrb[0].mxu0
      %v622 = vadd.f32 0.0, %v621
      %v623 = vpop.f32.mrb[0].mxu0
      %624 = vmatprep.mubr.bf16.mxu0 0
      %625 = vmatmul.mubr.bf16.gmra.mrb[0].mxu0 %v461
      %v626 = vpop.f32.mrb[0].mxu0
      %v627 = vadd.f32 0.0, %v626
      %v628 = vpop.f32.mrb[0].mxu0
      %v629 = vpop.f32.mrb[0].mxu0
      %v630 = vadd.f32 0.0, %v629
      %v631 = vpop.f32.mrb[0].mxu0
      %632 = vmatprep.mubr.bf16.mxu0 0
      %633 = vmatmul.mubr.bf16.gmra.mrb[0].mxu0 %v464
      %v634 = vpop.f32.mrb[0].mxu0
      %v635 = vadd.f32 0.0, %v634
      %v636 = vpop.f32.mrb[0].mxu0
      %v637 = vpop.f32.mrb[0].mxu0
      %v638 = vadd.f32 0.0, %v637
      %v639 = vpop.f32.mrb[0].mxu0
      %640 = vmatprep.mubr.bf16.mxu0 0
      %641 = vmatmul.mubr.bf16.gmra.mrb[0].mxu0 %v467
      %v642 = vpop.f32.mrb[0].mxu0
      %v643 = vadd.f32 0.0, %v642
      %v644 = vpop.f32.mrb[0].mxu0
      %v645 = vpop.f32.mrb[0].mxu0
      %v646 = vadd.f32 0.0, %v645
      %v647 = vpop.f32.mrb[0].mxu0
      %648 = vmatprep.mubr.bf16.mxu0 0
      %649 = vmatmul.mubr.bf16.gmra.mrb[0].mxu0 %v470
      %v650 = vpop.f32.mrb[0].mxu0
      %v651 = vadd.f32 0.0, %v650
      %v652 = vpop.f32.mrb[0].mxu0
      %v653 = vpop.f32.mrb[0].mxu0
      %v654 = vadd.f32 0.0, %v653
      %v655 = vpop.f32.mrb[0].mxu0
      %656 = vmatprep.mubr.bf16.mxu0 0
      %657 = vmatmul.mubr.bf16.gmra.mrb[0].mxu0 %v473
      %v658 = vpop.f32.mrb[0].mxu0
      %v659 = vadd.f32 0.0, %v658
      %v660 = vpop.f32.mrb[0].mxu0
      %v661 = vpop.f32.mrb[0].mxu0
      %v662 = vadd.f32 0.0, %v661
      %v663 = vpop.f32.mrb[0].mxu0
      %664 = vmatprep.mubr.bf16.mxu0 0
      %665 = vmatmul.mubr.bf16.gmra.mrb[0].mxu0 %v476
      %v666 = vpop.f32.mrb[0].mxu0
      %v667 = vadd.f32 0.0, %v666
      %v668 = vpop.f32.mrb[0].mxu0
      %v669 = vpop.f32.mrb[0].mxu0
      %v670 = vadd.f32 0.0, %v669
      %v671 = vpop.f32.mrb[0].mxu0
      %672 = vmatprep.mubr.bf16.mxu0 0
      %673 = vmatmul.mubr.bf16.gmra.mrb[0].mxu0 %v479
      %v674 = vpop.f32.mrb[0].mxu0
      %v675 = vadd.f32 0.0, %v674
      %v676 = vpop.f32.mrb[0].mxu0
      %v677 = vpop.f32.mrb[0].mxu0
      %v678 = vadd.f32 0.0, %v677
      %v679 = vpop.f32.mrb[0].mxu0
      %680 = vmatprep.mubr.bf16.mxu0 0
      %681 = vmatmul.mubr.bf16.gmra.mrb[0].mxu0 %v482
      %v682 = vpop.f32.mrb[0].mxu0
      %v683 = vadd.f32 0.0, %v682
      %v684 = vpop.f32.mrb[0].mxu0
      %v685 = vpop.f32.mrb[0].mxu0
      %v686 = vadd.f32 0.0, %v685
      %v687 = vpop.f32.mrb[0].mxu0
      %688 = vmatprep.mubr.bf16.mxu0 0
      %689 = vmatmul.mubr.bf16.gmra.mrb[0].mxu0 %v485
      %v690 = vpop.f32.mrb[0].mxu0
      %v691 = vadd.f32 0.0, %v690
      %v692 = vpop.f32.mrb[0].mxu0
      %v693 = vpop.f32.mrb[0].mxu0
      %v694 = vadd.f32 0.0, %v693
      %v695 = vpop.f32.mrb[0].mxu0
      %696 = vmatprep.mubr.bf16.mxu0 0
      %697 = vmatmul.mubr.bf16.gmra.mrb[0].mxu0 %v488
      %v698 = vpop.f32.mrb[0].mxu0
      %v699 = vadd.f32 0.0, %v698
      %v700 = vpop.f32.mrb[0].mxu0
      %v701 = vpop.f32.mrb[0].mxu0
      %v702 = vadd.f32 0.0, %v701
      %v703 = vpop.f32.mrb[0].mxu0
      %704 = vmatprep.mubr.bf16.mxu0 0
      %705 = vmatmul.mubr.bf16.gmra.mrb[0].mxu0 %v491
      %v706 = vpop.f32.mrb[0].mxu0
      %v707 = vadd.f32 0.0, %v706
      %v708 = vpop.f32.mrb[0].mxu0
      %v709 = vpop.f32.mrb[0].mxu0
      %v710 = vadd.f32 0.0, %v709
      %v711 = vpop.f32.mrb[0].mxu0
      %712 = vmatprep.mubr.bf16.mxu0 0
      %713 = vmatmul.mubr.bf16.gmra.mrb[0].mxu0 %v494
      %v714 = vpop.f32.mrb[0].mxu0
      %v715 = vadd.f32 0.0, %v714
      %v716 = vpop.f32.mrb[0].mxu0
      %v717 = vpop.f32.mrb[0].mxu0
      %v718 = vadd.f32 0.0, %v717
      %v719 = vpop.f32.mrb[0].mxu0
      %720 = vmatprep.mubr.bf16.mxu0 0
      %721 = vmatmul.mubr.bf16.gmra.mrb[0].mxu0 %v497
      %v722 = vpop.f32.mrb[0].mxu0
      %v723 = vadd.f32 0.0, %v722
      %v724 = vpop.f32.mrb[0].mxu0
      %v725 = vpop.f32.mrb[0].mxu0
      %v726 = vadd.f32 0.0, %v725
      %v727 = vpop.f32.mrb[0].mxu0
      %728 = vmatprep.mubr.bf16.mxu0 0
      %729 = vmatmul.mubr.bf16.gmra.mrb[0].mxu0 %v500
      %v730 = vpop.f32.mrb[0].mxu0
      %v731 = vadd.f32 0.0, %v730
      %v732 = vpop.f32.mrb[0].mxu0
      %v733 = vpop.f32.mrb[0].mxu0
      %v734 = vadd.f32 0.0, %v733
      %v735 = vpop.f32.mrb[0].mxu0
      %736 = vmatprep.mubr.bf16.mxu0 0
      %737 = vmatmul.mubr.bf16.gmra.mrb[0].mxu0 %v503
      %v738 = vpop.f32.mrb[0].mxu0
      %v739 = vadd.f32 0.0, %v738
      %v740 = vpop.f32.mrb[0].mxu0
      %v741 = vpop.f32.mrb[0].mxu0
      %v742 = vadd.f32 0.0, %v741
      %v743 = vpop.f32.mrb[0].mxu0
      %744 = vmatprep.mubr.bf16.mxu0 0
      %745 = vmatmul.mubr.bf16.gmra.mrb[0].mxu0 %v506
      %v746 = vpop.f32.mrb[0].mxu0
      %v747 = vadd.f32 0.0, %v746
      %v748 = vpop.f32.mrb[0].mxu0
      %v749 = vpop.f32.mrb[0].mxu0
      %v750 = vadd.f32 0.0, %v749
      %v751 = vpop.f32.mrb[0].mxu0
      %752 = vmatprep.mubr.bf16.mxu0 0
      %753 = vmatmul.mubr.bf16.gmra.mrb[0].mxu0 %v509
      %v754 = vpop.f32.mrb[0].mxu0
      %v755 = vadd.f32 0.0, %v754
      %v756 = vpop.f32.mrb[0].mxu0
      %v757 = vpop.f32.mrb[0].mxu0
      %v758 = vadd.f32 0.0, %v757
      %v759 = vpop.f32.mrb[0].mxu0
      %760 = vmatprep.mubr.bf16.mxu0 0
      %761 = vmatmul.mubr.bf16.gmra.mrb[0].mxu0 %v512
      %v762 = vpop.f32.mrb[0].mxu0
      %v763 = vadd.f32 0.0, %v762
      %v764 = vpop.f32.mrb[0].mxu0
      %v765 = vpop.f32.mrb[0].mxu0
      %v766 = vadd.f32 0.0, %v765
      %v767 = vpop.f32.mrb[0].mxu0
      %768 = vmatprep.mubr.bf16.mxu0 0
      %769 = vmatmul.mubr.bf16.gmra.mrb[0].mxu0 %v515
      %v770 = vpop.f32.mrb[0].mxu0
      %v771 = vadd.f32 0.0, %v770
      %v772 = vpop.f32.mrb[0].mxu0
      %v773 = vpop.f32.mrb[0].mxu0
      %v774 = vadd.f32 0.0, %v773
      %v775 = vpop.f32.mrb[0].mxu0
      %776 = vmatprep.mubr.bf16.mxu0 0
      %777 = vmatmul.mubr.bf16.gmra.mrb[0].mxu0 %v518
      %v778 = vpop.f32.mrb[0].mxu0
      %v779 = vadd.f32 0.0, %v778
      %v780 = vpop.f32.mrb[0].mxu0
      %v781 = vpop.f32.mrb[0].mxu0
      %v782 = vadd.f32 0.0, %v781
      %v783 = vpop.f32.mrb[0].mxu0
      %784 = vmatprep.mubr.bf16.mxu0 0
      %785 = vmatmul.mubr.bf16.gmra.mrb[0].mxu0 %v521
      %v786 = vpop.f32.mrb[0].mxu0
      %v787 = vadd.f32 0.0, %v786
      %v788 = vpop.f32.mrb[0].mxu0
      %v789 = vpop.f32.mrb[0].mxu0
      %v790 = vadd.f32 0.0, %v789
      %v791 = vpop.f32.mrb[0].mxu0
      %792 = vmatprep.mubr.bf16.mxu0 0
      %793 = vmatmul.mubr.bf16.gmra.mrb[0].mxu0 %v524
      %v794 = vpop.f32.mrb[0].mxu0
      %v795 = vadd.f32 0.0, %v794
      %v796 = vpop.f32.mrb[0].mxu0
      %v797 = vpop.f32.mrb[0].mxu0
      %v798 = vadd.f32 0.0, %v797
      %v799 = vpop.f32.mrb[0].mxu0
      %800 = vmatprep.mubr.bf16.mxu0 0
      %801 = vmatmul.mubr.bf16.gmra.mrb[0].mxu0 %v527
      %v802 = vpop.f32.mrb[0].mxu0
      %v803 = vadd.f32 0.0, %v802
      %v804 = vpop.f32.mrb[0].mxu0
      %v805 = vpop.f32.mrb[0].mxu0
      %v806 = vadd.f32 0.0, %v805
      %v807 = vpop.f32.mrb[0].mxu0
      %808 = vmatprep.mubr.bf16.mxu0 0
      %809 = vmatmul.mubr.bf16.gmra.mrb[0].mxu0 %v530
      %v810 = vpop.f32.mrb[0].mxu0
      %v811 = vadd.f32 0.0, %v810
      %v812 = vpop.f32.mrb[0].mxu0
      %v813 = vpop.f32.mrb[0].mxu0
      %v814 = vadd.f32 0.0, %v813
      %v815 = vpop.f32.mrb[0].mxu0
      %816 = vmatprep.mubr.bf16.mxu0 0
      %817 = vmatmul.mubr.bf16.gmra.mrb[0].mxu0 %v533
      %v818 = vpop.f32.mrb[0].mxu0
      %v819 = vadd.f32 0.0, %v818
      %v820 = vpop.f32.mrb[0].mxu0
      %v821 = vpop.f32.mrb[0].mxu0
      %v822 = vadd.f32 0.0, %v821
      %v823 = vpop.f32.mrb[0].mxu0
      %824 = vmatprep.mubr.bf16.mxu0 0
      %825 = vmatmul.mubr.bf16.gmra.mrb[0].mxu0 %v536
      %v826 = vpop.f32.mrb[0].mxu0
      %v827 = vadd.f32 0.0, %v826
      %v828 = vpop.f32.mrb[0].mxu0
      %v829 = vpop.f32.mrb[0].mxu0
      %v830 = vadd.f32 0.0, %v829
      %v831 = vpop.f32.mrb[0].mxu0
      %832 = vmatprep.mubr.bf16.mxu0 0
      %833 = vmatmul.mubr.bf16.gmra.mrb[0].mxu0 %v539
      %v834 = vpop.f32.mrb[0].mxu0
      %v835 = vadd.f32 0.0, %v834
      %v836 = vpop.f32.mrb[0].mxu0
      %v837 = vpop.f32.mrb[0].mxu0
      %v838 = vadd.f32 0.0, %v837
      %v839 = vpop.f32.mrb[0].mxu0
      %840 = vmatprep.mubr.bf16.mxu0 0
      %841 = vmatmul.mubr.bf16.gmra.mrb[0].mxu0 %v542
      %v842 = vpop.f32.mrb[0].mxu0
      %v843 = vadd.f32 0.0, %v842
      %v844 = vpop.f32.mrb[0].mxu0
      %v845 = vpop.f32.mrb[0].mxu0
      %v846 = vadd.f32 0.0, %v845
      %v847 = vpop.f32.mrb[0].mxu0
      %848 = vmatprep.mubr.bf16.mxu0 0
      %849 = vmatmul.mubr.bf16.gmra.mrb[0].mxu0 %v545
      %v850 = vpop.f32.mrb[0].mxu0
      %v851 = vadd.f32 0.0, %v850
      %v852 = vpop.f32.mrb[0].mxu0
      %v853 = vpop.f32.mrb[0].mxu0
      %v854 = vadd.f32 0.0, %v853
      %v855 = vpop.f32.mrb[0].mxu0
      %856 = vmatprep.mubr.bf16.mxu0 0
      %857 = vmatmul.mubr.bf16.gmra.mrb[0].mxu0 %v548
      %v858 = vpop.f32.mrb[0].mxu0
      %v859 = vadd.f32 0.0, %v858
      %v860 = vpop.f32.mrb[0].mxu0
      %v861 = vpop.f32.mrb[0].mxu0
      %v862 = vadd.f32 0.0, %v861
      %v863 = vpop.f32.mrb[0].mxu0
      %864 = vmatprep.mubr.bf16.mxu0 0
      %865 = vmatmul.mubr.bf16.gmra.mrb[0].mxu0 %v551
      %v866 = vpop.f32.mrb[0].mxu0
      %v867 = vadd.f32 0.0, %v866
      %v868 = vpop.f32.mrb[0].mxu0
      %v869 = vpop.f32.mrb[0].mxu0
      %v870 = vadd.f32 0.0, %v869
      %v871 = vpop.f32.mrb[0].mxu0
      %872 = vmatprep.mubr.bf16.mxu0 0
      %873 = vmatmul.mubr.bf16.gmra.mrb[0].mxu0 %v554
      %v874 = vpop.f32.mrb[0].mxu0
      %v875 = vadd.f32 0.0, %v874
      %v876 = vpop.f32.mrb[0].mxu0
      %v877 = vpop.f32.mrb[0].mxu0
      %v878 = vadd.f32 0.0, %v877
      %v879 = vpop.f32.mrb[0].mxu0
      %880 = vdwg.mxu0
      %s881 = scalar_lea.vmem %s1, 20
      %v882 = vld [vmem:[%s881] sm:$0xf]
      %v883 = vld [vmem:[%s881 + $0x4] sm:$0xf]
      %v884 = vld [vmem:[%s881 + $0x8] sm:$0xf]
      %v885 = vld [vmem:[%s881 + $0xc] sm:$0xf]
      %v886 = vld [vmem:[%s881 + $0x10] sm:$0x3]
      %v892 = vunpack.c.l.b16 %v882
      %v893 = vunpack.c.l.b16 %v883
      %v894 = vunpack.c.l.b16 %v884
      %v895 = vunpack.c.l.b16 %v885
      %v896 = vunpack.c.l.b16 %v886
      %v897 = vpack.c.b16 %v893, %v892
      %v898 = vpack.c.b16 %v895, %v894
      %v899 = vpack.c.b16 %v896, %v896
      %v903 = vsel %vm556, %v899, 0
      %905 = vmatprep.subr.bf16.mxu0 0
      %906 = vmatpush1.bf16.msra.mxu0 %v897
      %907 = vmatprep.subr.bf16.mxu0 0
      %908 = vmatpush1.bf16.msra.mxu0 %v898
      %909 = vmatprep.subr.bf16.mxu0 0
      %910 = vmatpush1.bf16.msra.mxu0 %v903
      %911 = vmatprep.subr.bf16.mxu0 0
      %912 = vmatpush1.bf16.msra.mxu0 0
      %913 = vmatprep.subr.bf16.mxu0 0
      %914 = vmatpush1.bf16.msra.mxu0 0
      %915 = vmatprep.subr.bf16.mxu0 0
      %916 = vmatpush1.bf16.msra.mxu0 0
      %917 = vmatprep.subr.bf16.mxu0 0
      %918 = vmatpush1.bf16.msra.mxu0 0
      %919 = vmatprep.subr.bf16.mxu0 0
      %920 = vmatpush1.bf16.msra.mxu0 0
      %921 = vmatprep.subr.bf16.mxu0 0
      %922 = vmatpush1.bf16.msra.mxu0 0
      %923 = vmatprep.subr.bf16.mxu0 0
      %924 = vmatpush1.bf16.msra.mxu0 0
      %925 = vmatprep.subr.bf16.mxu0 0
      %926 = vmatpush1.bf16.msra.mxu0 0
      %927 = vmatprep.subr.bf16.mxu0 0
      %928 = vmatpush1.bf16.msra.mxu0 0
      %929 = vmatprep.subr.bf16.mxu0 0
      %930 = vmatpush1.bf16.msra.mxu0 0
      %931 = vmatprep.subr.bf16.mxu0 0
      %932 = vmatpush1.bf16.msra.mxu0 0
      %933 = vmatprep.subr.bf16.mxu0 0
      %934 = vmatpush1.bf16.msra.mxu0 0
      %935 = vmatprep.subr.bf16.mxu0 0
      %936 = vmatpush1.bf16.msra.mxu0 0
      %937 = vmatprep.mubr.bf16.mxu0 0
      %938 = vmatmul.mubr.bf16.gmra.mrb[0].mxu0 %v449
      %v939 = vpop.f32.mrb[0].mxu0
      %v940 = vadd.f32 0.0, %v939
      %v941 = vpop.f32.mrb[0].mxu0
      %v942 = vpop.f32.mrb[0].mxu0
      %v943 = vadd.f32 0.0, %v942
      %v944 = vpop.f32.mrb[0].mxu0
      %945 = vmatprep.mubr.bf16.mxu0 0
      %946 = vmatmul.mubr.bf16.gmra.mrb[0].mxu0 %v452
      %v947 = vpop.f32.mrb[0].mxu0
      %v948 = vadd.f32 0.0, %v947
      %v949 = vpop.f32.mrb[0].mxu0
      %v950 = vpop.f32.mrb[0].mxu0
      %v951 = vadd.f32 0.0, %v950
      %v952 = vpop.f32.mrb[0].mxu0
      %953 = vmatprep.mubr.bf16.mxu0 0
      %954 = vmatmul.mubr.bf16.gmra.mrb[0].mxu0 %v455
      %v955 = vpop.f32.mrb[0].mxu0
      %v956 = vadd.f32 0.0, %v955
      %v957 = vpop.f32.mrb[0].mxu0
      %v958 = vpop.f32.mrb[0].mxu0
      %v959 = vadd.f32 0.0, %v958
      %v960 = vpop.f32.mrb[0].mxu0
      %961 = vmatprep.mubr.bf16.mxu0 0
      %962 = vmatmul.mubr.bf16.gmra.mrb[0].mxu0 %v458
      %v963 = vpop.f32.mrb[0].mxu0
      %v964 = vadd.f32 0.0, %v963
      %v965 = vpop.f32.mrb[0].mxu0
      %v966 = vpop.f32.mrb[0].mxu0
      %v967 = vadd.f32 0.0, %v966
      %v968 = vpop.f32.mrb[0].mxu0
      %969 = vmatprep.mubr.bf16.mxu0 0
      %970 = vmatmul.mubr.bf16.gmra.mrb[0].mxu0 %v461
      %v971 = vpop.f32.mrb[0].mxu0
      %v972 = vadd.f32 0.0, %v971
      %v973 = vpop.f32.mrb[0].mxu0
      %v974 = vpop.f32.mrb[0].mxu0
      %v975 = vadd.f32 0.0, %v974
      %v976 = vpop.f32.mrb[0].mxu0
      %977 = vmatprep.mubr.bf16.mxu0 0
      %978 = vmatmul.mubr.bf16.gmra.mrb[0].mxu0 %v464
      %v979 = vpop.f32.mrb[0].mxu0
      %v980 = vadd.f32 0.0, %v979
      %v981 = vpop.f32.mrb[0].mxu0
      %v982 = vpop.f32.mrb[0].mxu0
      %v983 = vadd.f32 0.0, %v982
      %v984 = vpop.f32.mrb[0].mxu0
      %985 = vmatprep.mubr.bf16.mxu0 0
      %986 = vmatmul.mubr.bf16.gmra.mrb[0].mxu0 %v467
      %v987 = vpop.f32.mrb[0].mxu0
      %v988 = vadd.f32 0.0, %v987
      %v989 = vpop.f32.mrb[0].mxu0
      %v990 = vpop.f32.mrb[0].mxu0
      %v991 = vadd.f32 0.0, %v990
      %v992 = vpop.f32.mrb[0].mxu0
      %993 = vmatprep.mubr.bf16.mxu0 0
      %994 = vmatmul.mubr.bf16.gmra.mrb[0].mxu0 %v470
      %v995 = vpop.f32.mrb[0].mxu0
      %v996 = vadd.f32 0.0, %v995
      %v997 = vpop.f32.mrb[0].mxu0
      %v998 = vpop.f32.mrb[0].mxu0
      %v999 = vadd.f32 0.0, %v998
      %v1000 = vpop.f32.mrb[0].mxu0
      %1001 = vmatprep.mubr.bf16.mxu0 0
      %1002 = vmatmul.mubr.bf16.gmra.mrb[0].mxu0 %v473
      %v1003 = vpop.f32.mrb[0].mxu0
      %v1004 = vadd.f32 0.0, %v1003
      %v1005 = vpop.f32.mrb[0].mxu0
      %v1006 = vpop.f32.mrb[0].mxu0
      %v1007 = vadd.f32 0.0, %v1006
      %v1008 = vpop.f32.mrb[0].mxu0
      %1009 = vmatprep.mubr.bf16.mxu0 0
      %1010 = vmatmul.mubr.bf16.gmra.mrb[0].mxu0 %v476
      %v1011 = vpop.f32.mrb[0].mxu0
      %v1012 = vadd.f32 0.0, %v1011
      %v1013 = vpop.f32.mrb[0].mxu0
      %v1014 = vpop.f32.mrb[0].mxu0
      %v1015 = vadd.f32 0.0, %v1014
      %v1016 = vpop.f32.mrb[0].mxu0
      %1017 = vmatprep.mubr.bf16.mxu0 0
      %1018 = vmatmul.mubr.bf16.gmra.mrb[0].mxu0 %v479
      %v1019 = vpop.f32.mrb[0].mxu0
      %v1020 = vadd.f32 0.0, %v1019
      %v1021 = vpop.f32.mrb[0].mxu0
      %v1022 = vpop.f32.mrb[0].mxu0
      %v1023 = vadd.f32 0.0, %v1022
      %v1024 = vpop.f32.mrb[0].mxu0
      %1025 = vmatprep.mubr.bf16.mxu0 0
      %1026 = vmatmul.mubr.bf16.gmra.mrb[0].mxu0 %v482
      %v1027 = vpop.f32.mrb[0].mxu0
      %v1028 = vadd.f32 0.0, %v1027
      %v1029 = vpop.f32.mrb[0].mxu0
      %v1030 = vpop.f32.mrb[0].mxu0
      %v1031 = vadd.f32 0.0, %v1030
      %v1032 = vpop.f32.mrb[0].mxu0
      %1033 = vmatprep.mubr.bf16.mxu0 0
      %1034 = vmatmul.mubr.bf16.gmra.mrb[0].mxu0 %v485
      %v1035 = vpop.f32.mrb[0].mxu0
      %v1036 = vadd.f32 0.0, %v1035
      %v1037 = vpop.f32.mrb[0].mxu0
      %v1038 = vpop.f32.mrb[0].mxu0
      %v1039 = vadd.f32 0.0, %v1038
      %v1040 = vpop.f32.mrb[0].mxu0
      %1041 = vmatprep.mubr.bf16.mxu0 0
      %1042 = vmatmul.mubr.bf16.gmra.mrb[0].mxu0 %v488
      %v1043 = vpop.f32.mrb[0].mxu0
      %v1044 = vadd.f32 0.0, %v1043
      %v1045 = vpop.f32.mrb[0].mxu0
      %v1046 = vpop.f32.mrb[0].mxu0
      %v1047 = vadd.f32 0.0, %v1046
      %v1048 = vpop.f32.mrb[0].mxu0
      %1049 = vmatprep.mubr.bf16.mxu0 0
      %1050 = vmatmul.mubr.bf16.gmra.mrb[0].mxu0 %v491
      %v1051 = vpop.f32.mrb[0].mxu0
      %v1052 = vadd.f32 0.0, %v1051
      %v1053 = vpop.f32.mrb[0].mxu0
      %v1054 = vpop.f32.mrb[0].mxu0
      %v1055 = vadd.f32 0.0, %v1054
      %v1056 = vpop.f32.mrb[0].mxu0
      %1057 = vmatprep.mubr.bf16.mxu0 0
      %1058 = vmatmul.mubr.bf16.gmra.mrb[0].mxu0 %v494
      %v1059 = vpop.f32.mrb[0].mxu0
      %v1060 = vadd.f32 0.0, %v1059
      %v1061 = vpop.f32.mrb[0].mxu0
      %v1062 = vpop.f32.mrb[0].mxu0
      %v1063 = vadd.f32 0.0, %v1062
      %v1064 = vpop.f32.mrb[0].mxu0
      %1065 = vmatprep.mubr.bf16.mxu0 0
      %1066 = vmatmul.mubr.bf16.gmra.mrb[0].mxu0 %v497
      %v1067 = vpop.f32.mrb[0].mxu0
      %v1068 = vadd.f32 0.0, %v1067
      %v1069 = vpop.f32.mrb[0].mxu0
      %v1070 = vpop.f32.mrb[0].mxu0
      %v1071 = vadd.f32 0.0, %v1070
      %v1072 = vpop.f32.mrb[0].mxu0
      %1073 = vmatprep.mubr.bf16.mxu0 0
      %1074 = vmatmul.mubr.bf16.gmra.mrb[0].mxu0 %v500
      %v1075 = vpop.f32.mrb[0].mxu0
      %v1076 = vadd.f32 0.0, %v1075
      %v1077 = vpop.f32.mrb[0].mxu0
      %v1078 = vpop.f32.mrb[0].mxu0
      %v1079 = vadd.f32 0.0, %v1078
      %v1080 = vpop.f32.mrb[0].mxu0
      %1081 = vmatprep.mubr.bf16.mxu0 0
      %1082 = vmatmul.mubr.bf16.gmra.mrb[0].mxu0 %v503
      %v1083 = vpop.f32.mrb[0].mxu0
      %v1084 = vadd.f32 0.0, %v1083
      %v1085 = vpop.f32.mrb[0].mxu0
      %v1086 = vpop.f32.mrb[0].mxu0
      %v1087 = vadd.f32 0.0, %v1086
      %v1088 = vpop.f32.mrb[0].mxu0
      %1089 = vmatprep.mubr.bf16.mxu0 0
      %1090 = vmatmul.mubr.bf16.gmra.mrb[0].mxu0 %v506
      %v1091 = vpop.f32.mrb[0].mxu0
      %v1092 = vadd.f32 0.0, %v1091
      %v1093 = vpop.f32.mrb[0].mxu0
      %v1094 = vpop.f32.mrb[0].mxu0
      %v1095 = vadd.f32 0.0, %v1094
      %v1096 = vpop.f32.mrb[0].mxu0
      %1097 = vmatprep.mubr.bf16.mxu0 0
      %1098 = vmatmul.mubr.bf16.gmra.mrb[0].mxu0 %v509
      %v1099 = vpop.f32.mrb[0].mxu0
      %v1100 = vadd.f32 0.0, %v1099
      %v1101 = vpop.f32.mrb[0].mxu0
      %v1102 = vpop.f32.mrb[0].mxu0
      %v1103 = vadd.f32 0.0, %v1102
      %v1104 = vpop.f32.mrb[0].mxu0
      %1105 = vmatprep.mubr.bf16.mxu0 0
      %1106 = vmatmul.mubr.bf16.gmra.mrb[0].mxu0 %v512
      %v1107 = vpop.f32.mrb[0].mxu0
      %v1108 = vadd.f32 0.0, %v1107
      %v1109 = vpop.f32.mrb[0].mxu0
      %v1110 = vpop.f32.mrb[0].mxu0
      %v1111 = vadd.f32 0.0, %v1110
      %v1112 = vpop.f32.mrb[0].mxu0
      %1113 = vmatprep.mubr.bf16.mxu0 0
      %1114 = vmatmul.mubr.bf16.gmra.mrb[0].mxu0 %v515
      %v1115 = vpop.f32.mrb[0].mxu0
      %v1116 = vadd.f32 0.0, %v1115
      %v1117 = vpop.f32.mrb[0].mxu0
      %v1118 = vpop.f32.mrb[0].mxu0
      %v1119 = vadd.f32 0.0, %v1118
      %v1120 = vpop.f32.mrb[0].mxu0
      %1121 = vmatprep.mubr.bf16.mxu0 0
      %1122 = vmatmul.mubr.bf16.gmra.mrb[0].mxu0 %v518
      %v1123 = vpop.f32.mrb[0].mxu0
      %v1124 = vadd.f32 0.0, %v1123
      %v1125 = vpop.f32.mrb[0].mxu0
      %v1126 = vpop.f32.mrb[0].mxu0
      %v1127 = vadd.f32 0.0, %v1126
      %v1128 = vpop.f32.mrb[0].mxu0
      %1129 = vmatprep.mubr.bf16.mxu0 0
      %1130 = vmatmul.mubr.bf16.gmra.mrb[0].mxu0 %v521
      %v1131 = vpop.f32.mrb[0].mxu0
      %v1132 = vadd.f32 0.0, %v1131
      %v1133 = vpop.f32.mrb[0].mxu0
      %v1134 = vpop.f32.mrb[0].mxu0
      %v1135 = vadd.f32 0.0, %v1134
      %v1136 = vpop.f32.mrb[0].mxu0
      %1137 = vmatprep.mubr.bf16.mxu0 0
      %1138 = vmatmul.mubr.bf16.gmra.mrb[0].mxu0 %v524
      %v1139 = vpop.f32.mrb[0].mxu0
      %v1140 = vadd.f32 0.0, %v1139
      %v1141 = vpop.f32.mrb[0].mxu0
      %v1142 = vpop.f32.mrb[0].mxu0
      %v1143 = vadd.f32 0.0, %v1142
      %v1144 = vpop.f32.mrb[0].mxu0
      %1145 = vmatprep.mubr.bf16.mxu0 0
      %1146 = vmatmul.mubr.bf16.gmra.mrb[0].mxu0 %v527
      %v1147 = vpop.f32.mrb[0].mxu0
      %v1148 = vadd.f32 0.0, %v1147
      %v1149 = vpop.f32.mrb[0].mxu0
      %v1150 = vpop.f32.mrb[0].mxu0
      %v1151 = vadd.f32 0.0, %v1150
      %v1152 = vpop.f32.mrb[0].mxu0
      %1153 = vmatprep.mubr.bf16.mxu0 0
      %1154 = vmatmul.mubr.bf16.gmra.mrb[0].mxu0 %v530
      %v1155 = vpop.f32.mrb[0].mxu0
      %v1156 = vadd.f32 0.0, %v1155
      %v1157 = vpop.f32.mrb[0].mxu0
      %v1158 = vpop.f32.mrb[0].mxu0
      %v1159 = vadd.f32 0.0, %v1158
      %v1160 = vpop.f32.mrb[0].mxu0
      %1161 = vmatprep.mubr.bf16.mxu0 0
      %1162 = vmatmul.mubr.bf16.gmra.mrb[0].mxu0 %v533
      %v1163 = vpop.f32.mrb[0].mxu0
      %v1164 = vadd.f32 0.0, %v1163
      %v1165 = vpop.f32.mrb[0].mxu0
      %v1166 = vpop.f32.mrb[0].mxu0
      %v1167 = vadd.f32 0.0, %v1166
      %v1168 = vpop.f32.mrb[0].mxu0
      %1169 = vmatprep.mubr.bf16.mxu0 0
      %1170 = vmatmul.mubr.bf16.gmra.mrb[0].mxu0 %v536
      %v1171 = vpop.f32.mrb[0].mxu0
      %v1172 = vadd.f32 0.0, %v1171
      %v1173 = vpop.f32.mrb[0].mxu0
      %v1174 = vpop.f32.mrb[0].mxu0
      %v1175 = vadd.f32 0.0, %v1174
      %v1176 = vpop.f32.mrb[0].mxu0
      %1177 = vmatprep.mubr.bf16.mxu0 0
      %1178 = vmatmul.mubr.bf16.gmra.mrb[0].mxu0 %v539
      %v1179 = vpop.f32.mrb[0].mxu0
      %v1180 = vadd.f32 0.0, %v1179
      %v1181 = vpop.f32.mrb[0].mxu0
      %v1182 = vpop.f32.mrb[0].mxu0
      %v1183 = vadd.f32 0.0, %v1182
      %v1184 = vpop.f32.mrb[0].mxu0
      %1185 = vmatprep.mubr.bf16.mxu0 0
      %1186 = vmatmul.mubr.bf16.gmra.mrb[0].mxu0 %v542
      %v1187 = vpop.f32.mrb[0].mxu0
      %v1188 = vadd.f32 0.0, %v1187
      %v1189 = vpop.f32.mrb[0].mxu0
      %v1190 = vpop.f32.mrb[0].mxu0
      %v1191 = vadd.f32 0.0, %v1190
      %v1192 = vpop.f32.mrb[0].mxu0
      %1193 = vmatprep.mubr.bf16.mxu0 0
      %1194 = vmatmul.mubr.bf16.gmra.mrb[0].mxu0 %v545
      %v1195 = vpop.f32.mrb[0].mxu0
      %v1196 = vadd.f32 0.0, %v1195
      %v1197 = vpop.f32.mrb[0].mxu0
      %v1198 = vpop.f32.mrb[0].mxu0
      %v1199 = vadd.f32 0.0, %v1198
      %v1200 = vpop.f32.mrb[0].mxu0
      %1201 = vmatprep.mubr.bf16.mxu0 0
      %1202 = vmatmul.mubr.bf16.gmra.mrb[0].mxu0 %v548
      %v1203 = vpop.f32.mrb[0].mxu0
      %v1204 = vadd.f32 0.0, %v1203
      %v1205 = vpop.f32.mrb[0].mxu0
      %v1206 = vpop.f32.mrb[0].mxu0
      %v1207 = vadd.f32 0.0, %v1206
      %v1208 = vpop.f32.mrb[0].mxu0
      %1209 = vmatprep.mubr.bf16.mxu0 0
      %1210 = vmatmul.mubr.bf16.gmra.mrb[0].mxu0 %v551
      %v1211 = vpop.f32.mrb[0].mxu0
      %v1212 = vadd.f32 0.0, %v1211
      %v1213 = vpop.f32.mrb[0].mxu0
      %v1214 = vpop.f32.mrb[0].mxu0
      %v1215 = vadd.f32 0.0, %v1214
      %v1216 = vpop.f32.mrb[0].mxu0
      %1217 = vmatprep.mubr.bf16.mxu0 0
      %1218 = vmatmul.mubr.bf16.gmra.mrb[0].mxu0 %v554
      %v1219 = vpop.f32.mrb[0].mxu0
      %v1220 = vadd.f32 0.0, %v1219
      %v1221 = vpop.f32.mrb[0].mxu0
      %v1222 = vpop.f32.mrb[0].mxu0
      %v1223 = vadd.f32 0.0, %v1222
      %v1224 = vpop.f32.mrb[0].mxu0
      %1225 = vdwg.mxu0
      %v1226 = vmax.f32 %v595, %v940
      %v1227 = vmax.f32 %v598, %v943
      %v1228 = vmax.f32 %v603, %v948
      %v1229 = vmax.f32 %v606, %v951
      %v1230 = vmax.f32 %v611, %v956
      %v1231 = vmax.f32 %v614, %v959
      %v1232 = vmax.f32 %v619, %v964
      %v1233 = vmax.f32 %v622, %v967
      %v1234 = vmax.f32 %v627, %v972
      %v1235 = vmax.f32 %v630, %v975
      %v1236 = vmax.f32 %v635, %v980
      %v1237 = vmax.f32 %v638, %v983
      %v1238 = vmax.f32 %v643, %v988
      %v1239 = vmax.f32 %v646, %v991
      %v1240 = vmax.f32 %v651, %v996
      %v1241 = vmax.f32 %v654, %v999
      %v1242 = vmax.f32 %v659, %v1004
      %v1243 = vmax.f32 %v662, %v1007
      %v1244 = vmax.f32 %v667, %v1012
      %v1245 = vmax.f32 %v670, %v1015
      %v1246 = vmax.f32 %v675, %v1020
      %v1247 = vmax.f32 %v678, %v1023
      %v1248 = vmax.f32 %v683, %v1028
      %v1249 = vmax.f32 %v686, %v1031
      %v1250 = vmax.f32 %v691, %v1036
      %v1251 = vmax.f32 %v694, %v1039
      %v1252 = vmax.f32 %v699, %v1044
      %v1253 = vmax.f32 %v702, %v1047
      %v1254 = vmax.f32 %v707, %v1052
      %v1255 = vmax.f32 %v710, %v1055
      %v1256 = vmax.f32 %v715, %v1060
      %v1257 = vmax.f32 %v718, %v1063
      %v1258 = vmax.f32 %v723, %v1068
      %v1259 = vmax.f32 %v726, %v1071
      %v1260 = vmax.f32 %v731, %v1076
      %v1261 = vmax.f32 %v734, %v1079
      %v1262 = vmax.f32 %v739, %v1084
      %v1263 = vmax.f32 %v742, %v1087
      %v1264 = vmax.f32 %v747, %v1092
      %v1265 = vmax.f32 %v750, %v1095
      %v1266 = vmax.f32 %v755, %v1100
      %v1267 = vmax.f32 %v758, %v1103
      %v1268 = vmax.f32 %v763, %v1108
      %v1269 = vmax.f32 %v766, %v1111
      %v1270 = vmax.f32 %v771, %v1116
      %v1271 = vmax.f32 %v774, %v1119
      %v1272 = vmax.f32 %v779, %v1124
      %v1273 = vmax.f32 %v782, %v1127
      %v1274 = vmax.f32 %v787, %v1132
      %v1275 = vmax.f32 %v790, %v1135
      %v1276 = vmax.f32 %v795, %v1140
      %v1277 = vmax.f32 %v798, %v1143
      %v1278 = vmax.f32 %v803, %v1148
      %v1279 = vmax.f32 %v806, %v1151
      %v1280 = vmax.f32 %v811, %v1156
      %v1281 = vmax.f32 %v814, %v1159
      %v1282 = vmax.f32 %v819, %v1164
      %v1283 = vmax.f32 %v822, %v1167
      %v1284 = vmax.f32 %v827, %v1172
      %v1285 = vmax.f32 %v830, %v1175
      %v1286 = vmax.f32 %v835, %v1180
      %v1287 = vmax.f32 %v838, %v1183
      %v1288 = vmax.f32 %v843, %v1188
      %v1289 = vmax.f32 %v846, %v1191
      %v1290 = vmax.f32 %v851, %v1196
      %v1291 = vmax.f32 %v854, %v1199
      %v1292 = vmax.f32 %v859, %v1204
      %v1293 = vmax.f32 %v862, %v1207
      %v1294 = vmax.f32 %v867, %v1212
      %v1295 = vmax.f32 %v870, %v1215
      %v1296 = vmax.f32 %v875, %v1220
      %v1297 = vmax.f32 %v878, %v1223
      %s1298 = scalar_lea.vmem %s1, 40
      %v1299 = vld [vmem:[%s1298] sm:$0xf]
      %v1300 = vld [vmem:[%s1298 + $0x4] sm:$0xf]
      %v1301 = vld [vmem:[%s1298 + $0x8] sm:$0xf]
      %v1302 = vld [vmem:[%s1298 + $0xc] sm:$0xf]
      %v1303 = vld [vmem:[%s1298 + $0x10] sm:$0x3]
      %v1309 = vunpack.c.l.b16 %v1299
      %v1310 = vunpack.c.l.b16 %v1300
      %v1311 = vunpack.c.l.b16 %v1301
      %v1312 = vunpack.c.l.b16 %v1302
      %v1313 = vunpack.c.l.b16 %v1303
      %v1314 = vpack.c.b16 %v1310, %v1309
      %v1315 = vpack.c.b16 %v1312, %v1311
      %v1316 = vpack.c.b16 %v1313, %v1313
      %v1320 = vsel %vm556, %v1316, 0
      %1322 = vmatprep.subr.bf16.mxu0 0
      %1323 = vmatpush1.bf16.msra.mxu0 %v1314
      %1324 = vmatprep.subr.bf16.mxu0 0
      %1325 = vmatpush1.bf16.msra.mxu0 %v1315
      %1326 = vmatprep.subr.bf16.mxu0 0
      %1327 = vmatpush1.bf16.msra.mxu0 %v1320
      %1328 = vmatprep.subr.bf16.mxu0 0
      %1329 = vmatpush1.bf16.msra.mxu0 0
      %1330 = vmatprep.subr.bf16.mxu0 0
      %1331 = vmatpush1.bf16.msra.mxu0 0
      %1332 = vmatprep.subr.bf16.mxu0 0
      %1333 = vmatpush1.bf16.msra.mxu0 0
      %1334 = vmatprep.subr.bf16.mxu0 0
      %1335 = vmatpush1.bf16.msra.mxu0 0
      %1336 = vmatprep.subr.bf16.mxu0 0
      %1337 = vmatpush1.bf16.msra.mxu0 0
      %1338 = vmatprep.subr.bf16.mxu0 0
      %1339 = vmatpush1.bf16.msra.mxu0 0
      %1340 = vmatprep.subr.bf16.mxu0 0
      %1341 = vmatpush1.bf16.msra.mxu0 0
      %1342 = vmatprep.subr.bf16.mxu0 0
      %1343 = vmatpush1.bf16.msra.mxu0 0
      %1344 = vmatprep.subr.bf16.mxu0 0
      %1345 = vmatpush1.bf16.msra.mxu0 0
      %1346 = vmatprep.subr.bf16.mxu0 0
      %1347 = vmatpush1.bf16.msra.mxu0 0
      %1348 = vmatprep.subr.bf16.mxu0 0
      %1349 = vmatpush1.bf16.msra.mxu0 0
      %1350 = vmatprep.subr.bf16.mxu0 0
      %1351 = vmatpush1.bf16.msra.mxu0 0
      %1352 = vmatprep.subr.bf16.mxu0 0
      %1353 = vmatpush1.bf16.msra.mxu0 0
      %1354 = vmatprep.mubr.bf16.mxu0 0
      %1355 = vmatmul.mubr.bf16.gmra.mrb[0].mxu0 %v449
      %v1356 = vpop.f32.mrb[0].mxu0
      %v1357 = vadd.f32 0.0, %v1356
      %v1358 = vpop.f32.mrb[0].mxu0
      %v1359 = vpop.f32.mrb[0].mxu0
      %v1360 = vadd.f32 0.0, %v1359
      %v1361 = vpop.f32.mrb[0].mxu0
      %1362 = vmatprep.mubr.bf16.mxu0 0
      %1363 = vmatmul.mubr.bf16.gmra.mrb[0].mxu0 %v452
      %v1364 = vpop.f32.mrb[0].mxu0
      %v1365 = vadd.f32 0.0, %v1364
      %v1366 = vpop.f32.mrb[0].mxu0
      %v1367 = vpop.f32.mrb[0].mxu0
      %v1368 = vadd.f32 0.0, %v1367
      %v1369 = vpop.f32.mrb[0].mxu0
      %1370 = vmatprep.mubr.bf16.mxu0 0
      %1371 = vmatmul.mubr.bf16.gmra.mrb[0].mxu0 %v455
      %v1372 = vpop.f32.mrb[0].mxu0
      %v1373 = vadd.f32 0.0, %v1372
      %v1374 = vpop.f32.mrb[0].mxu0
      %v1375 = vpop.f32.mrb[0].mxu0
      %v1376 = vadd.f32 0.0, %v1375
      %v1377 = vpop.f32.mrb[0].mxu0
      %1378 = vmatprep.mubr.bf16.mxu0 0
      %1379 = vmatmul.mubr.bf16.gmra.mrb[0].mxu0 %v458
      %v1380 = vpop.f32.mrb[0].mxu0
      %v1381 = vadd.f32 0.0, %v1380
      %v1382 = vpop.f32.mrb[0].mxu0
      %v1383 = vpop.f32.mrb[0].mxu0
      %v1384 = vadd.f32 0.0, %v1383
      %v1385 = vpop.f32.mrb[0].mxu0
      %1386 = vmatprep.mubr.bf16.mxu0 0
      %1387 = vmatmul.mubr.bf16.gmra.mrb[0].mxu0 %v461
      %v1388 = vpop.f32.mrb[0].mxu0
      %v1389 = vadd.f32 0.0, %v1388
      %v1390 = vpop.f32.mrb[0].mxu0
      %v1391 = vpop.f32.mrb[0].mxu0
      %v1392 = vadd.f32 0.0, %v1391
      %v1393 = vpop.f32.mrb[0].mxu0
      %1394 = vmatprep.mubr.bf16.mxu0 0
      %1395 = vmatmul.mubr.bf16.gmra.mrb[0].mxu0 %v464
      %v1396 = vpop.f32.mrb[0].mxu0
      %v1397 = vadd.f32 0.0, %v1396
      %v1398 = vpop.f32.mrb[0].mxu0
      %v1399 = vpop.f32.mrb[0].mxu0
      %v1400 = vadd.f32 0.0, %v1399
      %v1401 = vpop.f32.mrb[0].mxu0
      %1402 = vmatprep.mubr.bf16.mxu0 0
      %1403 = vmatmul.mubr.bf16.gmra.mrb[0].mxu0 %v467
      %v1404 = vpop.f32.mrb[0].mxu0
      %v1405 = vadd.f32 0.0, %v1404
      %v1406 = vpop.f32.mrb[0].mxu0
      %v1407 = vpop.f32.mrb[0].mxu0
      %v1408 = vadd.f32 0.0, %v1407
      %v1409 = vpop.f32.mrb[0].mxu0
      %1410 = vmatprep.mubr.bf16.mxu0 0
      %1411 = vmatmul.mubr.bf16.gmra.mrb[0].mxu0 %v470
      %v1412 = vpop.f32.mrb[0].mxu0
      %v1413 = vadd.f32 0.0, %v1412
      %v1414 = vpop.f32.mrb[0].mxu0
      %v1415 = vpop.f32.mrb[0].mxu0
      %v1416 = vadd.f32 0.0, %v1415
      %v1417 = vpop.f32.mrb[0].mxu0
      %1418 = vmatprep.mubr.bf16.mxu0 0
      %1419 = vmatmul.mubr.bf16.gmra.mrb[0].mxu0 %v473
      %v1420 = vpop.f32.mrb[0].mxu0
      %v1421 = vadd.f32 0.0, %v1420
      %v1422 = vpop.f32.mrb[0].mxu0
      %v1423 = vpop.f32.mrb[0].mxu0
      %v1424 = vadd.f32 0.0, %v1423
      %v1425 = vpop.f32.mrb[0].mxu0
      %1426 = vmatprep.mubr.bf16.mxu0 0
      %1427 = vmatmul.mubr.bf16.gmra.mrb[0].mxu0 %v476
      %v1428 = vpop.f32.mrb[0].mxu0
      %v1429 = vadd.f32 0.0, %v1428
      %v1430 = vpop.f32.mrb[0].mxu0
      %v1431 = vpop.f32.mrb[0].mxu0
      %v1432 = vadd.f32 0.0, %v1431
      %v1433 = vpop.f32.mrb[0].mxu0
      %1434 = vmatprep.mubr.bf16.mxu0 0
      %1435 = vmatmul.mubr.bf16.gmra.mrb[0].mxu0 %v479
      %v1436 = vpop.f32.mrb[0].mxu0
      %v1437 = vadd.f32 0.0, %v1436
      %v1438 = vpop.f32.mrb[0].mxu0
      %v1439 = vpop.f32.mrb[0].mxu0
      %v1440 = vadd.f32 0.0, %v1439
      %v1441 = vpop.f32.mrb[0].mxu0
      %1442 = vmatprep.mubr.bf16.mxu0 0
      %1443 = vmatmul.mubr.bf16.gmra.mrb[0].mxu0 %v482
      %v1444 = vpop.f32.mrb[0].mxu0
      %v1445 = vadd.f32 0.0, %v1444
      %v1446 = vpop.f32.mrb[0].mxu0
      %v1447 = vpop.f32.mrb[0].mxu0
      %v1448 = vadd.f32 0.0, %v1447
      %v1449 = vpop.f32.mrb[0].mxu0
      %1450 = vmatprep.mubr.bf16.mxu0 0
      %1451 = vmatmul.mubr.bf16.gmra.mrb[0].mxu0 %v485
      %v1452 = vpop.f32.mrb[0].mxu0
      %v1453 = vadd.f32 0.0, %v1452
      %v1454 = vpop.f32.mrb[0].mxu0
      %v1455 = vpop.f32.mrb[0].mxu0
      %v1456 = vadd.f32 0.0, %v1455
      %v1457 = vpop.f32.mrb[0].mxu0
      %1458 = vmatprep.mubr.bf16.mxu0 0
      %1459 = vmatmul.mubr.bf16.gmra.mrb[0].mxu0 %v488
      %v1460 = vpop.f32.mrb[0].mxu0
      %v1461 = vadd.f32 0.0, %v1460
      %v1462 = vpop.f32.mrb[0].mxu0
      %v1463 = vpop.f32.mrb[0].mxu0
      %v1464 = vadd.f32 0.0, %v1463
      %v1465 = vpop.f32.mrb[0].mxu0
      %1466 = vmatprep.mubr.bf16.mxu0 0
      %1467 = vmatmul.mubr.bf16.gmra.mrb[0].mxu0 %v491
      %v1468 = vpop.f32.mrb[0].mxu0
      %v1469 = vadd.f32 0.0, %v1468
      %v1470 = vpop.f32.mrb[0].mxu0
      %v1471 = vpop.f32.mrb[0].mxu0
      %v1472 = vadd.f32 0.0, %v1471
      %v1473 = vpop.f32.mrb[0].mxu0
      %1474 = vmatprep.mubr.bf16.mxu0 0
      %1475 = vmatmul.mubr.bf16.gmra.mrb[0].mxu0 %v494
      %v1476 = vpop.f32.mrb[0].mxu0
      %v1477 = vadd.f32 0.0, %v1476
      %v1478 = vpop.f32.mrb[0].mxu0
      %v1479 = vpop.f32.mrb[0].mxu0
      %v1480 = vadd.f32 0.0, %v1479
      %v1481 = vpop.f32.mrb[0].mxu0
      %1482 = vmatprep.mubr.bf16.mxu0 0
      %1483 = vmatmul.mubr.bf16.gmra.mrb[0].mxu0 %v497
      %v1484 = vpop.f32.mrb[0].mxu0
      %v1485 = vadd.f32 0.0, %v1484
      %v1486 = vpop.f32.mrb[0].mxu0
      %v1487 = vpop.f32.mrb[0].mxu0
      %v1488 = vadd.f32 0.0, %v1487
      %v1489 = vpop.f32.mrb[0].mxu0
      %1490 = vmatprep.mubr.bf16.mxu0 0
      %1491 = vmatmul.mubr.bf16.gmra.mrb[0].mxu0 %v500
      %v1492 = vpop.f32.mrb[0].mxu0
      %v1493 = vadd.f32 0.0, %v1492
      %v1494 = vpop.f32.mrb[0].mxu0
      %v1495 = vpop.f32.mrb[0].mxu0
      %v1496 = vadd.f32 0.0, %v1495
      %v1497 = vpop.f32.mrb[0].mxu0
      %1498 = vmatprep.mubr.bf16.mxu0 0
      %1499 = vmatmul.mubr.bf16.gmra.mrb[0].mxu0 %v503
      %v1500 = vpop.f32.mrb[0].mxu0
      %v1501 = vadd.f32 0.0, %v1500
      %v1502 = vpop.f32.mrb[0].mxu0
      %v1503 = vpop.f32.mrb[0].mxu0
      %v1504 = vadd.f32 0.0, %v1503
      %v1505 = vpop.f32.mrb[0].mxu0
      %1506 = vmatprep.mubr.bf16.mxu0 0
      %1507 = vmatmul.mubr.bf16.gmra.mrb[0].mxu0 %v506
      %v1508 = vpop.f32.mrb[0].mxu0
      %v1509 = vadd.f32 0.0, %v1508
      %v1510 = vpop.f32.mrb[0].mxu0
      %v1511 = vpop.f32.mrb[0].mxu0
      %v1512 = vadd.f32 0.0, %v1511
      %v1513 = vpop.f32.mrb[0].mxu0
      %1514 = vmatprep.mubr.bf16.mxu0 0
      %1515 = vmatmul.mubr.bf16.gmra.mrb[0].mxu0 %v509
      %v1516 = vpop.f32.mrb[0].mxu0
      %v1517 = vadd.f32 0.0, %v1516
      %v1518 = vpop.f32.mrb[0].mxu0
      %v1519 = vpop.f32.mrb[0].mxu0
      %v1520 = vadd.f32 0.0, %v1519
      %v1521 = vpop.f32.mrb[0].mxu0
      %1522 = vmatprep.mubr.bf16.mxu0 0
      %1523 = vmatmul.mubr.bf16.gmra.mrb[0].mxu0 %v512
      %v1524 = vpop.f32.mrb[0].mxu0
      %v1525 = vadd.f32 0.0, %v1524
      %v1526 = vpop.f32.mrb[0].mxu0
      %v1527 = vpop.f32.mrb[0].mxu0
      %v1528 = vadd.f32 0.0, %v1527
      %v1529 = vpop.f32.mrb[0].mxu0
      %1530 = vmatprep.mubr.bf16.mxu0 0
      %1531 = vmatmul.mubr.bf16.gmra.mrb[0].mxu0 %v515
      %v1532 = vpop.f32.mrb[0].mxu0
      %v1533 = vadd.f32 0.0, %v1532
      %v1534 = vpop.f32.mrb[0].mxu0
      %v1535 = vpop.f32.mrb[0].mxu0
      %v1536 = vadd.f32 0.0, %v1535
      %v1537 = vpop.f32.mrb[0].mxu0
      %1538 = vmatprep.mubr.bf16.mxu0 0
      %1539 = vmatmul.mubr.bf16.gmra.mrb[0].mxu0 %v518
      %v1540 = vpop.f32.mrb[0].mxu0
      %v1541 = vadd.f32 0.0, %v1540
      %v1542 = vpop.f32.mrb[0].mxu0
      %v1543 = vpop.f32.mrb[0].mxu0
      %v1544 = vadd.f32 0.0, %v1543
      %v1545 = vpop.f32.mrb[0].mxu0
      %1546 = vmatprep.mubr.bf16.mxu0 0
      %1547 = vmatmul.mubr.bf16.gmra.mrb[0].mxu0 %v521
      %v1548 = vpop.f32.mrb[0].mxu0
      %v1549 = vadd.f32 0.0, %v1548
      %v1550 = vpop.f32.mrb[0].mxu0
      %v1551 = vpop.f32.mrb[0].mxu0
      %v1552 = vadd.f32 0.0, %v1551
      %v1553 = vpop.f32.mrb[0].mxu0
      %1554 = vmatprep.mubr.bf16.mxu0 0
      %1555 = vmatmul.mubr.bf16.gmra.mrb[0].mxu0 %v524
      %v1556 = vpop.f32.mrb[0].mxu0
      %v1557 = vadd.f32 0.0, %v1556
      %v1558 = vpop.f32.mrb[0].mxu0
      %v1559 = vpop.f32.mrb[0].mxu0
      %v1560 = vadd.f32 0.0, %v1559
      %v1561 = vpop.f32.mrb[0].mxu0
      %1562 = vmatprep.mubr.bf16.mxu0 0
      %1563 = vmatmul.mubr.bf16.gmra.mrb[0].mxu0 %v527
      %v1564 = vpop.f32.mrb[0].mxu0
      %v1565 = vadd.f32 0.0, %v1564
      %v1566 = vpop.f32.mrb[0].mxu0
      %v1567 = vpop.f32.mrb[0].mxu0
      %v1568 = vadd.f32 0.0, %v1567
      %v1569 = vpop.f32.mrb[0].mxu0
      %1570 = vmatprep.mubr.bf16.mxu0 0
      %1571 = vmatmul.mubr.bf16.gmra.mrb[0].mxu0 %v530
      %v1572 = vpop.f32.mrb[0].mxu0
      %v1573 = vadd.f32 0.0, %v1572
      %v1574 = vpop.f32.mrb[0].mxu0
      %v1575 = vpop.f32.mrb[0].mxu0
      %v1576 = vadd.f32 0.0, %v1575
      %v1577 = vpop.f32.mrb[0].mxu0
      %1578 = vmatprep.mubr.bf16.mxu0 0
      %1579 = vmatmul.mubr.bf16.gmra.mrb[0].mxu0 %v533
      %v1580 = vpop.f32.mrb[0].mxu0
      %v1581 = vadd.f32 0.0, %v1580
      %v1582 = vpop.f32.mrb[0].mxu0
      %v1583 = vpop.f32.mrb[0].mxu0
      %v1584 = vadd.f32 0.0, %v1583
      %v1585 = vpop.f32.mrb[0].mxu0
      %1586 = vmatprep.mubr.bf16.mxu0 0
      %1587 = vmatmul.mubr.bf16.gmra.mrb[0].mxu0 %v536
      %v1588 = vpop.f32.mrb[0].mxu0
      %v1589 = vadd.f32 0.0, %v1588
      %v1590 = vpop.f32.mrb[0].mxu0
      %v1591 = vpop.f32.mrb[0].mxu0
      %v1592 = vadd.f32 0.0, %v1591
      %v1593 = vpop.f32.mrb[0].mxu0
      %1594 = vmatprep.mubr.bf16.mxu0 0
      %1595 = vmatmul.mubr.bf16.gmra.mrb[0].mxu0 %v539
      %v1596 = vpop.f32.mrb[0].mxu0
      %v1597 = vadd.f32 0.0, %v1596
      %v1598 = vpop.f32.mrb[0].mxu0
      %v1599 = vpop.f32.mrb[0].mxu0
      %v1600 = vadd.f32 0.0, %v1599
      %v1601 = vpop.f32.mrb[0].mxu0
      %1602 = vmatprep.mubr.bf16.mxu0 0
      %1603 = vmatmul.mubr.bf16.gmra.mrb[0].mxu0 %v542
      %v1604 = vpop.f32.mrb[0].mxu0
      %v1605 = vadd.f32 0.0, %v1604
      %v1606 = vpop.f32.mrb[0].mxu0
      %v1607 = vpop.f32.mrb[0].mxu0
      %v1608 = vadd.f32 0.0, %v1607
      %v1609 = vpop.f32.mrb[0].mxu0
      %1610 = vmatprep.mubr.bf16.mxu0 0
      %1611 = vmatmul.mubr.bf16.gmra.mrb[0].mxu0 %v545
      %v1612 = vpop.f32.mrb[0].mxu0
      %v1613 = vadd.f32 0.0, %v1612
      %v1614 = vpop.f32.mrb[0].mxu0
      %v1615 = vpop.f32.mrb[0].mxu0
      %v1616 = vadd.f32 0.0, %v1615
      %v1617 = vpop.f32.mrb[0].mxu0
      %1618 = vmatprep.mubr.bf16.mxu0 0
      %1619 = vmatmul.mubr.bf16.gmra.mrb[0].mxu0 %v548
      %v1620 = vpop.f32.mrb[0].mxu0
      %v1621 = vadd.f32 0.0, %v1620
      %v1622 = vpop.f32.mrb[0].mxu0
      %v1623 = vpop.f32.mrb[0].mxu0
      %v1624 = vadd.f32 0.0, %v1623
      %v1625 = vpop.f32.mrb[0].mxu0
      %1626 = vmatprep.mubr.bf16.mxu0 0
      %1627 = vmatmul.mubr.bf16.gmra.mrb[0].mxu0 %v551
      %v1628 = vpop.f32.mrb[0].mxu0
      %v1629 = vadd.f32 0.0, %v1628
      %v1630 = vpop.f32.mrb[0].mxu0
      %v1631 = vpop.f32.mrb[0].mxu0
      %v1632 = vadd.f32 0.0, %v1631
      %v1633 = vpop.f32.mrb[0].mxu0
      %1634 = vmatprep.mubr.bf16.mxu0 0
      %1635 = vmatmul.mubr.bf16.gmra.mrb[0].mxu0 %v554
      %v1636 = vpop.f32.mrb[0].mxu0
      %v1637 = vadd.f32 0.0, %v1636
      %v1638 = vpop.f32.mrb[0].mxu0
      %v1639 = vpop.f32.mrb[0].mxu0
      %v1640 = vadd.f32 0.0, %v1639
      %v1641 = vpop.f32.mrb[0].mxu0
      %1642 = vdwg.mxu0
      %v1643 = vmax.f32 %v1226, %v1357
      %v1644 = vmax.f32 %v1227, %v1360
      %v1645 = vmax.f32 %v1228, %v1365
      %v1646 = vmax.f32 %v1229, %v1368
      %v1647 = vmax.f32 %v1230, %v1373
      %v1648 = vmax.f32 %v1231, %v1376
      %v1649 = vmax.f32 %v1232, %v1381
      %v1650 = vmax.f32 %v1233, %v1384
      %v1651 = vmax.f32 %v1234, %v1389
      %v1652 = vmax.f32 %v1235, %v1392
      %v1653 = vmax.f32 %v1236, %v1397
      %v1654 = vmax.f32 %v1237, %v1400
      %v1655 = vmax.f32 %v1238, %v1405
      %v1656 = vmax.f32 %v1239, %v1408
      %v1657 = vmax.f32 %v1240, %v1413
      %v1658 = vmax.f32 %v1241, %v1416
      %v1659 = vmax.f32 %v1242, %v1421
      %v1660 = vmax.f32 %v1243, %v1424
      %v1661 = vmax.f32 %v1244, %v1429
      %v1662 = vmax.f32 %v1245, %v1432
      %v1663 = vmax.f32 %v1246, %v1437
      %v1664 = vmax.f32 %v1247, %v1440
      %v1665 = vmax.f32 %v1248, %v1445
      %v1666 = vmax.f32 %v1249, %v1448
      %v1667 = vmax.f32 %v1250, %v1453
      %v1668 = vmax.f32 %v1251, %v1456
      %v1669 = vmax.f32 %v1252, %v1461
      %v1670 = vmax.f32 %v1253, %v1464
      %v1671 = vmax.f32 %v1254, %v1469
      %v1672 = vmax.f32 %v1255, %v1472
      %v1673 = vmax.f32 %v1256, %v1477
      %v1674 = vmax.f32 %v1257, %v1480
      %v1675 = vmax.f32 %v1258, %v1485
      %v1676 = vmax.f32 %v1259, %v1488
      %v1677 = vmax.f32 %v1260, %v1493
      %v1678 = vmax.f32 %v1261, %v1496
      %v1679 = vmax.f32 %v1262, %v1501
      %v1680 = vmax.f32 %v1263, %v1504
      %v1681 = vmax.f32 %v1264, %v1509
      %v1682 = vmax.f32 %v1265, %v1512
      %v1683 = vmax.f32 %v1266, %v1517
      %v1684 = vmax.f32 %v1267, %v1520
      %v1685 = vmax.f32 %v1268, %v1525
      %v1686 = vmax.f32 %v1269, %v1528
      %v1687 = vmax.f32 %v1270, %v1533
      %v1688 = vmax.f32 %v1271, %v1536
      %v1689 = vmax.f32 %v1272, %v1541
      %v1690 = vmax.f32 %v1273, %v1544
      %v1691 = vmax.f32 %v1274, %v1549
      %v1692 = vmax.f32 %v1275, %v1552
      %v1693 = vmax.f32 %v1276, %v1557
      %v1694 = vmax.f32 %v1277, %v1560
      %v1695 = vmax.f32 %v1278, %v1565
      %v1696 = vmax.f32 %v1279, %v1568
      %v1697 = vmax.f32 %v1280, %v1573
      %v1698 = vmax.f32 %v1281, %v1576
      %v1699 = vmax.f32 %v1282, %v1581
      %v1700 = vmax.f32 %v1283, %v1584
      %v1701 = vmax.f32 %v1284, %v1589
      %v1702 = vmax.f32 %v1285, %v1592
      %v1703 = vmax.f32 %v1286, %v1597
      %v1704 = vmax.f32 %v1287, %v1600
      %v1705 = vmax.f32 %v1288, %v1605
      %v1706 = vmax.f32 %v1289, %v1608
      %v1707 = vmax.f32 %v1290, %v1613
      %v1708 = vmax.f32 %v1291, %v1616
      %v1709 = vmax.f32 %v1292, %v1621
      %v1710 = vmax.f32 %v1293, %v1624
      %v1711 = vmax.f32 %v1294, %v1629
      %v1712 = vmax.f32 %v1295, %v1632
      %v1713 = vmax.f32 %v1296, %v1637
      %v1714 = vmax.f32 %v1297, %v1640
      %s1715 = scalar_lea.vmem %s1, 60
      %v1716 = vld [vmem:[%s1715] sm:$0xf]
      %v1717 = vld [vmem:[%s1715 + $0x4] sm:$0xf]
      %v1718 = vld [vmem:[%s1715 + $0x8] sm:$0xf]
      %v1719 = vld [vmem:[%s1715 + $0xc] sm:$0xf]
      %v1720 = vld [vmem:[%s1715 + $0x10] sm:$0x3]
      %v1726 = vunpack.c.l.b16 %v1716
      %v1727 = vunpack.c.l.b16 %v1717
      %v1728 = vunpack.c.l.b16 %v1718
      %v1729 = vunpack.c.l.b16 %v1719
      %v1730 = vunpack.c.l.b16 %v1720
      %v1731 = vpack.c.b16 %v1727, %v1726
      %v1732 = vpack.c.b16 %v1729, %v1728
      %v1733 = vpack.c.b16 %v1730, %v1730
      %v1737 = vsel %vm556, %v1733, 0
      %1739 = vmatprep.subr.bf16.mxu0 0
      %1740 = vmatpush1.bf16.msra.mxu0 %v1731
      %1741 = vmatprep.subr.bf16.mxu0 0
      %1742 = vmatpush1.bf16.msra.mxu0 %v1732
      %1743 = vmatprep.subr.bf16.mxu0 0
      %1744 = vmatpush1.bf16.msra.mxu0 %v1737
      %1745 = vmatprep.subr.bf16.mxu0 0
      %1746 = vmatpush1.bf16.msra.mxu0 0
      %1747 = vmatprep.subr.bf16.mxu0 0
      %1748 = vmatpush1.bf16.msra.mxu0 0
      %1749 = vmatprep.subr.bf16.mxu0 0
      %1750 = vmatpush1.bf16.msra.mxu0 0
      %1751 = vmatprep.subr.bf16.mxu0 0
      %1752 = vmatpush1.bf16.msra.mxu0 0
      %1753 = vmatprep.subr.bf16.mxu0 0
      %1754 = vmatpush1.bf16.msra.mxu0 0
      %1755 = vmatprep.subr.bf16.mxu0 0
      %1756 = vmatpush1.bf16.msra.mxu0 0
      %1757 = vmatprep.subr.bf16.mxu0 0
      %1758 = vmatpush1.bf16.msra.mxu0 0
      %1759 = vmatprep.subr.bf16.mxu0 0
      %1760 = vmatpush1.bf16.msra.mxu0 0
      %1761 = vmatprep.subr.bf16.mxu0 0
      %1762 = vmatpush1.bf16.msra.mxu0 0
      %1763 = vmatprep.subr.bf16.mxu0 0
      %1764 = vmatpush1.bf16.msra.mxu0 0
      %1765 = vmatprep.subr.bf16.mxu0 0
      %1766 = vmatpush1.bf16.msra.mxu0 0
      %1767 = vmatprep.subr.bf16.mxu0 0
      %1768 = vmatpush1.bf16.msra.mxu0 0
      %1769 = vmatprep.subr.bf16.mxu0 0
      %1770 = vmatpush1.bf16.msra.mxu0 0
      %1771 = vmatprep.mubr.bf16.mxu0 0
      %1772 = vmatmul.mubr.bf16.gmra.mrb[0].mxu0 %v449
      %v1773 = vpop.f32.mrb[0].mxu0
      %v1774 = vadd.f32 0.0, %v1773
      %v1775 = vpop.f32.mrb[0].mxu0
      %v1776 = vpop.f32.mrb[0].mxu0
      %v1777 = vadd.f32 0.0, %v1776
      %v1778 = vpop.f32.mrb[0].mxu0
      %1779 = vmatprep.mubr.bf16.mxu0 0
      %1780 = vmatmul.mubr.bf16.gmra.mrb[0].mxu0 %v452
      %v1781 = vpop.f32.mrb[0].mxu0
      %v1782 = vadd.f32 0.0, %v1781
      %v1783 = vpop.f32.mrb[0].mxu0
      %v1784 = vpop.f32.mrb[0].mxu0
      %v1785 = vadd.f32 0.0, %v1784
      %v1786 = vpop.f32.mrb[0].mxu0
      %1787 = vmatprep.mubr.bf16.mxu0 0
      %1788 = vmatmul.mubr.bf16.gmra.mrb[0].mxu0 %v455
      %v1789 = vpop.f32.mrb[0].mxu0
      %v1790 = vadd.f32 0.0, %v1789
      %v1791 = vpop.f32.mrb[0].mxu0
      %v1792 = vpop.f32.mrb[0].mxu0
      %v1793 = vadd.f32 0.0, %v1792
      %v1794 = vpop.f32.mrb[0].mxu0
      %1795 = vmatprep.mubr.bf16.mxu0 0
      %1796 = vmatmul.mubr.bf16.gmra.mrb[0].mxu0 %v458
      %v1797 = vpop.f32.mrb[0].mxu0
      %v1798 = vadd.f32 0.0, %v1797
      %v1799 = vpop.f32.mrb[0].mxu0
      %v1800 = vpop.f32.mrb[0].mxu0
      %v1801 = vadd.f32 0.0, %v1800
      %v1802 = vpop.f32.mrb[0].mxu0
      %1803 = vmatprep.mubr.bf16.mxu0 0
      %1804 = vmatmul.mubr.bf16.gmra.mrb[0].mxu0 %v461
      %v1805 = vpop.f32.mrb[0].mxu0
      %v1806 = vadd.f32 0.0, %v1805
      %v1807 = vpop.f32.mrb[0].mxu0
      %v1808 = vpop.f32.mrb[0].mxu0
      %v1809 = vadd.f32 0.0, %v1808
      %v1810 = vpop.f32.mrb[0].mxu0
      %1811 = vmatprep.mubr.bf16.mxu0 0
      %1812 = vmatmul.mubr.bf16.gmra.mrb[0].mxu0 %v464
      %v1813 = vpop.f32.mrb[0].mxu0
      %v1814 = vadd.f32 0.0, %v1813
      %v1815 = vpop.f32.mrb[0].mxu0
      %v1816 = vpop.f32.mrb[0].mxu0
      %v1817 = vadd.f32 0.0, %v1816
      %v1818 = vpop.f32.mrb[0].mxu0
      %1819 = vmatprep.mubr.bf16.mxu0 0
      %1820 = vmatmul.mubr.bf16.gmra.mrb[0].mxu0 %v467
      %v1821 = vpop.f32.mrb[0].mxu0
      %v1822 = vadd.f32 0.0, %v1821
      %v1823 = vpop.f32.mrb[0].mxu0
      %v1824 = vpop.f32.mrb[0].mxu0
      %v1825 = vadd.f32 0.0, %v1824
      %v1826 = vpop.f32.mrb[0].mxu0
      %1827 = vmatprep.mubr.bf16.mxu0 0
      %1828 = vmatmul.mubr.bf16.gmra.mrb[0].mxu0 %v470
      %v1829 = vpop.f32.mrb[0].mxu0
      %v1830 = vadd.f32 0.0, %v1829
      %v1831 = vpop.f32.mrb[0].mxu0
      %v1832 = vpop.f32.mrb[0].mxu0
      %v1833 = vadd.f32 0.0, %v1832
      %v1834 = vpop.f32.mrb[0].mxu0
      %1835 = vmatprep.mubr.bf16.mxu0 0
      %1836 = vmatmul.mubr.bf16.gmra.mrb[0].mxu0 %v473
      %v1837 = vpop.f32.mrb[0].mxu0
      %v1838 = vadd.f32 0.0, %v1837
      %v1839 = vpop.f32.mrb[0].mxu0
      %v1840 = vpop.f32.mrb[0].mxu0
      %v1841 = vadd.f32 0.0, %v1840
      %v1842 = vpop.f32.mrb[0].mxu0
      %1843 = vmatprep.mubr.bf16.mxu0 0
      %1844 = vmatmul.mubr.bf16.gmra.mrb[0].mxu0 %v476
      %v1845 = vpop.f32.mrb[0].mxu0
      %v1846 = vadd.f32 0.0, %v1845
      %v1847 = vpop.f32.mrb[0].mxu0
      %v1848 = vpop.f32.mrb[0].mxu0
      %v1849 = vadd.f32 0.0, %v1848
      %v1850 = vpop.f32.mrb[0].mxu0
      %1851 = vmatprep.mubr.bf16.mxu0 0
      %1852 = vmatmul.mubr.bf16.gmra.mrb[0].mxu0 %v479
      %v1853 = vpop.f32.mrb[0].mxu0
      %v1854 = vadd.f32 0.0, %v1853
      %v1855 = vpop.f32.mrb[0].mxu0
      %v1856 = vpop.f32.mrb[0].mxu0
      %v1857 = vadd.f32 0.0, %v1856
      %v1858 = vpop.f32.mrb[0].mxu0
      %1859 = vmatprep.mubr.bf16.mxu0 0
      %1860 = vmatmul.mubr.bf16.gmra.mrb[0].mxu0 %v482
      %v1861 = vpop.f32.mrb[0].mxu0
      %v1862 = vadd.f32 0.0, %v1861
      %v1863 = vpop.f32.mrb[0].mxu0
      %v1864 = vpop.f32.mrb[0].mxu0
      %v1865 = vadd.f32 0.0, %v1864
      %v1866 = vpop.f32.mrb[0].mxu0
      %1867 = vmatprep.mubr.bf16.mxu0 0
      %1868 = vmatmul.mubr.bf16.gmra.mrb[0].mxu0 %v485
      %v1869 = vpop.f32.mrb[0].mxu0
      %v1870 = vadd.f32 0.0, %v1869
      %v1871 = vpop.f32.mrb[0].mxu0
      %v1872 = vpop.f32.mrb[0].mxu0
      %v1873 = vadd.f32 0.0, %v1872
      %v1874 = vpop.f32.mrb[0].mxu0
      %1875 = vmatprep.mubr.bf16.mxu0 0
      %1876 = vmatmul.mubr.bf16.gmra.mrb[0].mxu0 %v488
      %v1877 = vpop.f32.mrb[0].mxu0
      %v1878 = vadd.f32 0.0, %v1877
      %v1879 = vpop.f32.mrb[0].mxu0
      %v1880 = vpop.f32.mrb[0].mxu0
      %v1881 = vadd.f32 0.0, %v1880
      %v1882 = vpop.f32.mrb[0].mxu0
      %1883 = vmatprep.mubr.bf16.mxu0 0
      %1884 = vmatmul.mubr.bf16.gmra.mrb[0].mxu0 %v491
      %v1885 = vpop.f32.mrb[0].mxu0
      %v1886 = vadd.f32 0.0, %v1885
      %v1887 = vpop.f32.mrb[0].mxu0
      %v1888 = vpop.f32.mrb[0].mxu0
      %v1889 = vadd.f32 0.0, %v1888
      %v1890 = vpop.f32.mrb[0].mxu0
      %1891 = vmatprep.mubr.bf16.mxu0 0
      %1892 = vmatmul.mubr.bf16.gmra.mrb[0].mxu0 %v494
      %v1893 = vpop.f32.mrb[0].mxu0
      %v1894 = vadd.f32 0.0, %v1893
      %v1895 = vpop.f32.mrb[0].mxu0
      %v1896 = vpop.f32.mrb[0].mxu0
      %v1897 = vadd.f32 0.0, %v1896
      %v1898 = vpop.f32.mrb[0].mxu0
      %1899 = vmatprep.mubr.bf16.mxu0 0
      %1900 = vmatmul.mubr.bf16.gmra.mrb[0].mxu0 %v497
      %v1901 = vpop.f32.mrb[0].mxu0
      %v1902 = vadd.f32 0.0, %v1901
      %v1903 = vpop.f32.mrb[0].mxu0
      %v1904 = vpop.f32.mrb[0].mxu0
      %v1905 = vadd.f32 0.0, %v1904
      %v1906 = vpop.f32.mrb[0].mxu0
      %1907 = vmatprep.mubr.bf16.mxu0 0
      %1908 = vmatmul.mubr.bf16.gmra.mrb[0].mxu0 %v500
      %v1909 = vpop.f32.mrb[0].mxu0
      %v1910 = vadd.f32 0.0, %v1909
      %v1911 = vpop.f32.mrb[0].mxu0
      %v1912 = vpop.f32.mrb[0].mxu0
      %v1913 = vadd.f32 0.0, %v1912
      %v1914 = vpop.f32.mrb[0].mxu0
      %1915 = vmatprep.mubr.bf16.mxu0 0
      %1916 = vmatmul.mubr.bf16.gmra.mrb[0].mxu0 %v503
      %v1917 = vpop.f32.mrb[0].mxu0
      %v1918 = vadd.f32 0.0, %v1917
      %v1919 = vpop.f32.mrb[0].mxu0
      %v1920 = vpop.f32.mrb[0].mxu0
      %v1921 = vadd.f32 0.0, %v1920
      %v1922 = vpop.f32.mrb[0].mxu0
      %1923 = vmatprep.mubr.bf16.mxu0 0
      %1924 = vmatmul.mubr.bf16.gmra.mrb[0].mxu0 %v506
      %v1925 = vpop.f32.mrb[0].mxu0
      %v1926 = vadd.f32 0.0, %v1925
      %v1927 = vpop.f32.mrb[0].mxu0
      %v1928 = vpop.f32.mrb[0].mxu0
      %v1929 = vadd.f32 0.0, %v1928
      %v1930 = vpop.f32.mrb[0].mxu0
      %1931 = vmatprep.mubr.bf16.mxu0 0
      %1932 = vmatmul.mubr.bf16.gmra.mrb[0].mxu0 %v509
      %v1933 = vpop.f32.mrb[0].mxu0
      %v1934 = vadd.f32 0.0, %v1933
      %v1935 = vpop.f32.mrb[0].mxu0
      %v1936 = vpop.f32.mrb[0].mxu0
      %v1937 = vadd.f32 0.0, %v1936
      %v1938 = vpop.f32.mrb[0].mxu0
      %1939 = vmatprep.mubr.bf16.mxu0 0
      %1940 = vmatmul.mubr.bf16.gmra.mrb[0].mxu0 %v512
      %v1941 = vpop.f32.mrb[0].mxu0
      %v1942 = vadd.f32 0.0, %v1941
      %v1943 = vpop.f32.mrb[0].mxu0
      %v1944 = vpop.f32.mrb[0].mxu0
      %v1945 = vadd.f32 0.0, %v1944
      %v1946 = vpop.f32.mrb[0].mxu0
      %1947 = vmatprep.mubr.bf16.mxu0 0
      %1948 = vmatmul.mubr.bf16.gmra.mrb[0].mxu0 %v515
      %v1949 = vpop.f32.mrb[0].mxu0
      %v1950 = vadd.f32 0.0, %v1949
      %v1951 = vpop.f32.mrb[0].mxu0
      %v1952 = vpop.f32.mrb[0].mxu0
      %v1953 = vadd.f32 0.0, %v1952
      %v1954 = vpop.f32.mrb[0].mxu0
      %1955 = vmatprep.mubr.bf16.mxu0 0
      %1956 = vmatmul.mubr.bf16.gmra.mrb[0].mxu0 %v518
      %v1957 = vpop.f32.mrb[0].mxu0
      %v1958 = vadd.f32 0.0, %v1957
      %v1959 = vpop.f32.mrb[0].mxu0
      %v1960 = vpop.f32.mrb[0].mxu0
      %v1961 = vadd.f32 0.0, %v1960
      %v1962 = vpop.f32.mrb[0].mxu0
      %1963 = vmatprep.mubr.bf16.mxu0 0
      %1964 = vmatmul.mubr.bf16.gmra.mrb[0].mxu0 %v521
      %v1965 = vpop.f32.mrb[0].mxu0
      %v1966 = vadd.f32 0.0, %v1965
      %v1967 = vpop.f32.mrb[0].mxu0
      %v1968 = vpop.f32.mrb[0].mxu0
      %v1969 = vadd.f32 0.0, %v1968
      %v1970 = vpop.f32.mrb[0].mxu0
      %1971 = vmatprep.mubr.bf16.mxu0 0
      %1972 = vmatmul.mubr.bf16.gmra.mrb[0].mxu0 %v524
      %v1973 = vpop.f32.mrb[0].mxu0
      %v1974 = vadd.f32 0.0, %v1973
      %v1975 = vpop.f32.mrb[0].mxu0
      %v1976 = vpop.f32.mrb[0].mxu0
      %v1977 = vadd.f32 0.0, %v1976
      %v1978 = vpop.f32.mrb[0].mxu0
      %1979 = vmatprep.mubr.bf16.mxu0 0
      %1980 = vmatmul.mubr.bf16.gmra.mrb[0].mxu0 %v527
      %v1981 = vpop.f32.mrb[0].mxu0
      %v1982 = vadd.f32 0.0, %v1981
      %v1983 = vpop.f32.mrb[0].mxu0
      %v1984 = vpop.f32.mrb[0].mxu0
      %v1985 = vadd.f32 0.0, %v1984
      %v1986 = vpop.f32.mrb[0].mxu0
      %1987 = vmatprep.mubr.bf16.mxu0 0
      %1988 = vmatmul.mubr.bf16.gmra.mrb[0].mxu0 %v530
      %v1989 = vpop.f32.mrb[0].mxu0
      %v1990 = vadd.f32 0.0, %v1989
      %v1991 = vpop.f32.mrb[0].mxu0
      %v1992 = vpop.f32.mrb[0].mxu0
      %v1993 = vadd.f32 0.0, %v1992
      %v1994 = vpop.f32.mrb[0].mxu0
      %1995 = vmatprep.mubr.bf16.mxu0 0
      %1996 = vmatmul.mubr.bf16.gmra.mrb[0].mxu0 %v533
      %v1997 = vpop.f32.mrb[0].mxu0
      %v1998 = vadd.f32 0.0, %v1997
      %v1999 = vpop.f32.mrb[0].mxu0
      %v2000 = vpop.f32.mrb[0].mxu0
      %v2001 = vadd.f32 0.0, %v2000
      %v2002 = vpop.f32.mrb[0].mxu0
      %2003 = vmatprep.mubr.bf16.mxu0 0
      %2004 = vmatmul.mubr.bf16.gmra.mrb[0].mxu0 %v536
      %v2005 = vpop.f32.mrb[0].mxu0
      %v2006 = vadd.f32 0.0, %v2005
      %v2007 = vpop.f32.mrb[0].mxu0
      %v2008 = vpop.f32.mrb[0].mxu0
      %v2009 = vadd.f32 0.0, %v2008
      %v2010 = vpop.f32.mrb[0].mxu0
      %2011 = vmatprep.mubr.bf16.mxu0 0
      %2012 = vmatmul.mubr.bf16.gmra.mrb[0].mxu0 %v539
      %v2013 = vpop.f32.mrb[0].mxu0
      %v2014 = vadd.f32 0.0, %v2013
      %v2015 = vpop.f32.mrb[0].mxu0
      %v2016 = vpop.f32.mrb[0].mxu0
      %v2017 = vadd.f32 0.0, %v2016
      %v2018 = vpop.f32.mrb[0].mxu0
      %2019 = vmatprep.mubr.bf16.mxu0 0
      %2020 = vmatmul.mubr.bf16.gmra.mrb[0].mxu0 %v542
      %v2021 = vpop.f32.mrb[0].mxu0
      %v2022 = vadd.f32 0.0, %v2021
      %v2023 = vpop.f32.mrb[0].mxu0
      %v2024 = vpop.f32.mrb[0].mxu0
      %v2025 = vadd.f32 0.0, %v2024
      %v2026 = vpop.f32.mrb[0].mxu0
      %2027 = vmatprep.mubr.bf16.mxu0 0
      %2028 = vmatmul.mubr.bf16.gmra.mrb[0].mxu0 %v545
      %v2029 = vpop.f32.mrb[0].mxu0
      %v2030 = vadd.f32 0.0, %v2029
      %v2031 = vpop.f32.mrb[0].mxu0
      %v2032 = vpop.f32.mrb[0].mxu0
      %v2033 = vadd.f32 0.0, %v2032
      %v2034 = vpop.f32.mrb[0].mxu0
      %2035 = vmatprep.mubr.bf16.mxu0 0
      %2036 = vmatmul.mubr.bf16.gmra.mrb[0].mxu0 %v548
      %v2037 = vpop.f32.mrb[0].mxu0
      %v2038 = vadd.f32 0.0, %v2037
      %v2039 = vpop.f32.mrb[0].mxu0
      %v2040 = vpop.f32.mrb[0].mxu0
      %v2041 = vadd.f32 0.0, %v2040
      %v2042 = vpop.f32.mrb[0].mxu0
      %2043 = vmatprep.mubr.bf16.mxu0 0
      %2044 = vmatmul.mubr.bf16.gmra.mrb[0].mxu0 %v551
      %v2045 = vpop.f32.mrb[0].mxu0
      %v2046 = vadd.f32 0.0, %v2045
      %v2047 = vpop.f32.mrb[0].mxu0
      %v2048 = vpop.f32.mrb[0].mxu0
      %v2049 = vadd.f32 0.0, %v2048
      %v2050 = vpop.f32.mrb[0].mxu0
      %2051 = vmatprep.mubr.bf16.mxu0 0
      %2052 = vmatmul.mubr.bf16.gmra.mrb[0].mxu0 %v554
      %v2053 = vpop.f32.mrb[0].mxu0
      %v2054 = vadd.f32 0.0, %v2053
      %v2055 = vpop.f32.mrb[0].mxu0
      %v2056 = vpop.f32.mrb[0].mxu0
      %v2057 = vadd.f32 0.0, %v2056
      %v2058 = vpop.f32.mrb[0].mxu0
      %2059 = vdwg.mxu0
      %v2060 = vmax.f32 %v1643, %v1774
      %v2061 = vmax.f32 %v1644, %v1777
      %v2062 = vmax.f32 %v1645, %v1782
      %v2063 = vmax.f32 %v1646, %v1785
      %v2064 = vmax.f32 %v1647, %v1790
      %v2065 = vmax.f32 %v1648, %v1793
      %v2066 = vmax.f32 %v1649, %v1798
      %v2067 = vmax.f32 %v1650, %v1801
      %v2068 = vmax.f32 %v1651, %v1806
      %v2069 = vmax.f32 %v1652, %v1809
      %v2070 = vmax.f32 %v1653, %v1814
      %v2071 = vmax.f32 %v1654, %v1817
      %v2072 = vmax.f32 %v1655, %v1822
      %v2073 = vmax.f32 %v1656, %v1825
      %v2074 = vmax.f32 %v1657, %v1830
      %v2075 = vmax.f32 %v1658, %v1833
      %v2076 = vmax.f32 %v1659, %v1838
      %v2077 = vmax.f32 %v1660, %v1841
      %v2078 = vmax.f32 %v1661, %v1846
      %v2079 = vmax.f32 %v1662, %v1849
      %v2080 = vmax.f32 %v1663, %v1854
      %v2081 = vmax.f32 %v1664, %v1857
      %v2082 = vmax.f32 %v1665, %v1862
      %v2083 = vmax.f32 %v1666, %v1865
      %v2084 = vmax.f32 %v1667, %v1870
      %v2085 = vmax.f32 %v1668, %v1873
      %v2086 = vmax.f32 %v1669, %v1878
      %v2087 = vmax.f32 %v1670, %v1881
      %v2088 = vmax.f32 %v1671, %v1886
      %v2089 = vmax.f32 %v1672, %v1889
      %v2090 = vmax.f32 %v1673, %v1894
      %v2091 = vmax.f32 %v1674, %v1897
      %v2092 = vmax.f32 %v1675, %v1902
      %v2093 = vmax.f32 %v1676, %v1905
      %v2094 = vmax.f32 %v1677, %v1910
      %v2095 = vmax.f32 %v1678, %v1913
      %v2096 = vmax.f32 %v1679, %v1918
      %v2097 = vmax.f32 %v1680, %v1921
      %v2098 = vmax.f32 %v1681, %v1926
      %v2099 = vmax.f32 %v1682, %v1929
      %v2100 = vmax.f32 %v1683, %v1934
      %v2101 = vmax.f32 %v1684, %v1937
      %v2102 = vmax.f32 %v1685, %v1942
      %v2103 = vmax.f32 %v1686, %v1945
      %v2104 = vmax.f32 %v1687, %v1950
      %v2105 = vmax.f32 %v1688, %v1953
      %v2106 = vmax.f32 %v1689, %v1958
      %v2107 = vmax.f32 %v1690, %v1961
      %v2108 = vmax.f32 %v1691, %v1966
      %v2109 = vmax.f32 %v1692, %v1969
      %v2110 = vmax.f32 %v1693, %v1974
      %v2111 = vmax.f32 %v1694, %v1977
      %v2112 = vmax.f32 %v1695, %v1982
      %v2113 = vmax.f32 %v1696, %v1985
      %v2114 = vmax.f32 %v1697, %v1990
      %v2115 = vmax.f32 %v1698, %v1993
      %v2116 = vmax.f32 %v1699, %v1998
      %v2117 = vmax.f32 %v1700, %v2001
      %v2118 = vmax.f32 %v1701, %v2006
      %v2119 = vmax.f32 %v1702, %v2009
      %v2120 = vmax.f32 %v1703, %v2014
      %v2121 = vmax.f32 %v1704, %v2017
      %v2122 = vmax.f32 %v1705, %v2022
      %v2123 = vmax.f32 %v1706, %v2025
      %v2124 = vmax.f32 %v1707, %v2030
      %v2125 = vmax.f32 %v1708, %v2033
      %v2126 = vmax.f32 %v1709, %v2038
      %v2127 = vmax.f32 %v1710, %v2041
      %v2128 = vmax.f32 %v1711, %v2046
      %v2129 = vmax.f32 %v1712, %v2049
      %v2130 = vmax.f32 %v1713, %v2054
      %v2131 = vmax.f32 %v1714, %v2057
      %v2132 = vld [vmem:[%s2] sm:$0x1]
      %v2134 = vlaneseq
      %v2135 = vshrl.u32 %v2134, 7
      %v2136 = vsub.s32 0, %v2135
      %v2137 = vrot.slane %v2132, %v2136
      %v2139 = vadd.f32 %v2060, %v2137
      %v2140 = vadd.f32 %v2061, %v2137
      %v2141 = vadd.f32 %v2062, %v2137
      %v2142 = vadd.f32 %v2063, %v2137
      %v2143 = vadd.f32 %v2064, %v2137
      %v2144 = vadd.f32 %v2065, %v2137
      %v2145 = vadd.f32 %v2066, %v2137
      %v2146 = vadd.f32 %v2067, %v2137
      %v2147 = vadd.f32 %v2068, %v2137
      %v2148 = vadd.f32 %v2069, %v2137
      %v2149 = vadd.f32 %v2070, %v2137
      %v2150 = vadd.f32 %v2071, %v2137
      %v2151 = vadd.f32 %v2072, %v2137
      %v2152 = vadd.f32 %v2073, %v2137
      %v2153 = vadd.f32 %v2074, %v2137
      %v2154 = vadd.f32 %v2075, %v2137
      %v2155 = vadd.f32 %v2076, %v2137
      %v2156 = vadd.f32 %v2077, %v2137
      %v2157 = vadd.f32 %v2078, %v2137
      %v2158 = vadd.f32 %v2079, %v2137
      %v2159 = vadd.f32 %v2080, %v2137
      %v2160 = vadd.f32 %v2081, %v2137
      %v2161 = vadd.f32 %v2082, %v2137
      %v2162 = vadd.f32 %v2083, %v2137
      %v2163 = vadd.f32 %v2084, %v2137
      %v2164 = vadd.f32 %v2085, %v2137
      %v2165 = vadd.f32 %v2086, %v2137
      %v2166 = vadd.f32 %v2087, %v2137
      %v2167 = vadd.f32 %v2088, %v2137
      %v2168 = vadd.f32 %v2089, %v2137
      %v2169 = vadd.f32 %v2090, %v2137
      %v2170 = vadd.f32 %v2091, %v2137
      %v2171 = vadd.f32 %v2092, %v2137
      %v2172 = vadd.f32 %v2093, %v2137
      %v2173 = vadd.f32 %v2094, %v2137
      %v2174 = vadd.f32 %v2095, %v2137
      %v2175 = vadd.f32 %v2096, %v2137
      %v2176 = vadd.f32 %v2097, %v2137
      %v2177 = vadd.f32 %v2098, %v2137
      %v2178 = vadd.f32 %v2099, %v2137
      %v2179 = vadd.f32 %v2100, %v2137
      %v2180 = vadd.f32 %v2101, %v2137
      %v2181 = vadd.f32 %v2102, %v2137
      %v2182 = vadd.f32 %v2103, %v2137
      %v2183 = vadd.f32 %v2104, %v2137
      %v2184 = vadd.f32 %v2105, %v2137
      %v2185 = vadd.f32 %v2106, %v2137
      %v2186 = vadd.f32 %v2107, %v2137
      %v2187 = vadd.f32 %v2108, %v2137
      %v2188 = vadd.f32 %v2109, %v2137
      %v2189 = vadd.f32 %v2110, %v2137
      %v2190 = vadd.f32 %v2111, %v2137
      %v2191 = vadd.f32 %v2112, %v2137
      %v2192 = vadd.f32 %v2113, %v2137
      %v2193 = vadd.f32 %v2114, %v2137
      %v2194 = vadd.f32 %v2115, %v2137
      %v2195 = vadd.f32 %v2116, %v2137
      %v2196 = vadd.f32 %v2117, %v2137
      %v2197 = vadd.f32 %v2118, %v2137
      %v2198 = vadd.f32 %v2119, %v2137
      %v2199 = vadd.f32 %v2120, %v2137
      %v2200 = vadd.f32 %v2121, %v2137
      %v2201 = vadd.f32 %v2122, %v2137
      %v2202 = vadd.f32 %v2123, %v2137
      %v2203 = vadd.f32 %v2124, %v2137
      %v2204 = vadd.f32 %v2125, %v2137
      %v2205 = vadd.f32 %v2126, %v2137
      %v2206 = vadd.f32 %v2127, %v2137
      %v2207 = vadd.f32 %v2128, %v2137
      %v2208 = vadd.f32 %v2129, %v2137
      %v2209 = vadd.f32 %v2130, %v2137
      %v2210 = vadd.f32 %v2131, %v2137
      %v2211 = vmax.f32 %v2139, 0.0
      %v2212 = vmax.f32 %v2140, 0.0
      %v2213 = vmax.f32 %v2141, 0.0
      %v2214 = vmax.f32 %v2142, 0.0
      %v2215 = vmax.f32 %v2143, 0.0
      %v2216 = vmax.f32 %v2144, 0.0
      %v2217 = vmax.f32 %v2145, 0.0
      %v2218 = vmax.f32 %v2146, 0.0
      %v2219 = vmax.f32 %v2147, 0.0
      %v2220 = vmax.f32 %v2148, 0.0
      %v2221 = vmax.f32 %v2149, 0.0
      %v2222 = vmax.f32 %v2150, 0.0
      %v2223 = vmax.f32 %v2151, 0.0
      %v2224 = vmax.f32 %v2152, 0.0
      %v2225 = vmax.f32 %v2153, 0.0
      %v2226 = vmax.f32 %v2154, 0.0
      %v2227 = vmax.f32 %v2155, 0.0
      %v2228 = vmax.f32 %v2156, 0.0
      %v2229 = vmax.f32 %v2157, 0.0
      %v2230 = vmax.f32 %v2158, 0.0
      %v2231 = vmax.f32 %v2159, 0.0
      %v2232 = vmax.f32 %v2160, 0.0
      %v2233 = vmax.f32 %v2161, 0.0
      %v2234 = vmax.f32 %v2162, 0.0
      %v2235 = vmax.f32 %v2163, 0.0
      %v2236 = vmax.f32 %v2164, 0.0
      %v2237 = vmax.f32 %v2165, 0.0
      %v2238 = vmax.f32 %v2166, 0.0
      %v2239 = vmax.f32 %v2167, 0.0
      %v2240 = vmax.f32 %v2168, 0.0
      %v2241 = vmax.f32 %v2169, 0.0
      %v2242 = vmax.f32 %v2170, 0.0
      %v2243 = vmax.f32 %v2171, 0.0
      %v2244 = vmax.f32 %v2172, 0.0
      %v2245 = vmax.f32 %v2173, 0.0
      %v2246 = vmax.f32 %v2174, 0.0
      %v2247 = vmax.f32 %v2175, 0.0
      %v2248 = vmax.f32 %v2176, 0.0
      %v2249 = vmax.f32 %v2177, 0.0
      %v2250 = vmax.f32 %v2178, 0.0
      %v2251 = vmax.f32 %v2179, 0.0
      %v2252 = vmax.f32 %v2180, 0.0
      %v2253 = vmax.f32 %v2181, 0.0
      %v2254 = vmax.f32 %v2182, 0.0
      %v2255 = vmax.f32 %v2183, 0.0
      %v2256 = vmax.f32 %v2184, 0.0
      %v2257 = vmax.f32 %v2185, 0.0
      %v2258 = vmax.f32 %v2186, 0.0
      %v2259 = vmax.f32 %v2187, 0.0
      %v2260 = vmax.f32 %v2188, 0.0
      %v2261 = vmax.f32 %v2189, 0.0
      %v2262 = vmax.f32 %v2190, 0.0
      %v2263 = vmax.f32 %v2191, 0.0
      %v2264 = vmax.f32 %v2192, 0.0
      %v2265 = vmax.f32 %v2193, 0.0
      %v2266 = vmax.f32 %v2194, 0.0
      %v2267 = vmax.f32 %v2195, 0.0
      %v2268 = vmax.f32 %v2196, 0.0
      %v2269 = vmax.f32 %v2197, 0.0
      %v2270 = vmax.f32 %v2198, 0.0
      %v2271 = vmax.f32 %v2199, 0.0
      %v2272 = vmax.f32 %v2200, 0.0
      %v2273 = vmax.f32 %v2201, 0.0
      %v2274 = vmax.f32 %v2202, 0.0
      %v2275 = vmax.f32 %v2203, 0.0
      %v2276 = vmax.f32 %v2204, 0.0
      %v2277 = vmax.f32 %v2205, 0.0
      %v2278 = vmax.f32 %v2206, 0.0
      %v2279 = vmax.f32 %v2207, 0.0
      %v2280 = vmax.f32 %v2208, 0.0
      %v2281 = vmax.f32 %v2209, 0.0
      %v2282 = vmax.f32 %v2210, 0.0
      %v2283 = vpack.c.bf16 %v2212, %v2211
      %v2284 = vpack.c.bf16 %v2214, %v2213
      %v2285 = vpack.c.bf16 %v2216, %v2215
      %v2286 = vpack.c.bf16 %v2218, %v2217
      %v2287 = vpack.c.bf16 %v2220, %v2219
      %v2288 = vpack.c.bf16 %v2222, %v2221
      %v2289 = vpack.c.bf16 %v2224, %v2223
      %v2290 = vpack.c.bf16 %v2226, %v2225
      %v2291 = vpack.c.bf16 %v2228, %v2227
      %v2292 = vpack.c.bf16 %v2230, %v2229
      %v2293 = vpack.c.bf16 %v2232, %v2231
      %v2294 = vpack.c.bf16 %v2234, %v2233
      %v2295 = vpack.c.bf16 %v2236, %v2235
      %v2296 = vpack.c.bf16 %v2238, %v2237
      %v2297 = vpack.c.bf16 %v2240, %v2239
      %v2298 = vpack.c.bf16 %v2242, %v2241
      %v2299 = vpack.c.bf16 %v2244, %v2243
      %v2300 = vpack.c.bf16 %v2246, %v2245
      %v2301 = vpack.c.bf16 %v2248, %v2247
      %v2302 = vpack.c.bf16 %v2250, %v2249
      %v2303 = vpack.c.bf16 %v2252, %v2251
      %v2304 = vpack.c.bf16 %v2254, %v2253
      %v2305 = vpack.c.bf16 %v2256, %v2255
      %v2306 = vpack.c.bf16 %v2258, %v2257
      %v2307 = vpack.c.bf16 %v2260, %v2259
      %v2308 = vpack.c.bf16 %v2262, %v2261
      %v2309 = vpack.c.bf16 %v2264, %v2263
      %v2310 = vpack.c.bf16 %v2266, %v2265
      %v2311 = vpack.c.bf16 %v2268, %v2267
      %v2312 = vpack.c.bf16 %v2270, %v2269
      %v2313 = vpack.c.bf16 %v2272, %v2271
      %v2314 = vpack.c.bf16 %v2274, %v2273
      %v2315 = vpack.c.bf16 %v2276, %v2275
      %v2316 = vpack.c.bf16 %v2278, %v2277
      %v2317 = vpack.c.bf16 %v2280, %v2279
      %v2318 = vpack.c.bf16 %v2282, %v2281
      %v2355 = vunpack.c.l.b16 %v2283
      %v2356 = vunpack.c.h.b16 %v2283
      %v2357 = vunpack.c.l.b16 %v2284
      %v2358 = vunpack.c.h.b16 %v2284
      %v2359 = vunpack.c.l.b16 %v2285
      %v2360 = vunpack.c.h.b16 %v2285
      %v2361 = vunpack.c.l.b16 %v2286
      %v2362 = vunpack.c.h.b16 %v2286
      %v2363 = vunpack.c.l.b16 %v2287
      %v2364 = vunpack.c.h.b16 %v2287
      %v2365 = vunpack.c.l.b16 %v2288
      %v2366 = vunpack.c.h.b16 %v2288
      %v2367 = vunpack.c.l.b16 %v2289
      %v2368 = vunpack.c.h.b16 %v2289
      %v2369 = vunpack.c.l.b16 %v2290
      %v2370 = vunpack.c.h.b16 %v2290
      %v2371 = vunpack.c.l.b16 %v2291
      %v2372 = vunpack.c.h.b16 %v2291
      %v2373 = vunpack.c.l.b16 %v2292
      %v2374 = vunpack.c.h.b16 %v2292
      %v2375 = vunpack.c.l.b16 %v2293
      %v2376 = vunpack.c.h.b16 %v2293
      %v2377 = vunpack.c.l.b16 %v2294
      %v2378 = vunpack.c.h.b16 %v2294
      %v2379 = vunpack.c.l.b16 %v2295
      %v2380 = vunpack.c.h.b16 %v2295
      %v2381 = vunpack.c.l.b16 %v2296
      %v2382 = vunpack.c.h.b16 %v2296
      %v2383 = vunpack.c.l.b16 %v2297
      %v2384 = vunpack.c.h.b16 %v2297
      %v2385 = vunpack.c.l.b16 %v2298
      %v2386 = vunpack.c.h.b16 %v2298
      %v2387 = vunpack.c.l.b16 %v2299
      %v2388 = vunpack.c.h.b16 %v2299
      %v2389 = vunpack.c.l.b16 %v2300
      %v2390 = vunpack.c.h.b16 %v2300
      %v2391 = vunpack.c.l.b16 %v2301
      %v2392 = vunpack.c.h.b16 %v2301
      %v2393 = vunpack.c.l.b16 %v2302
      %v2394 = vunpack.c.h.b16 %v2302
      %v2395 = vunpack.c.l.b16 %v2303
      %v2396 = vunpack.c.h.b16 %v2303
      %v2397 = vunpack.c.l.b16 %v2304
      %v2398 = vunpack.c.h.b16 %v2304
      %v2399 = vunpack.c.l.b16 %v2305
      %v2400 = vunpack.c.h.b16 %v2305
      %v2401 = vunpack.c.l.b16 %v2306
      %v2402 = vunpack.c.h.b16 %v2306
      %v2403 = vunpack.c.l.b16 %v2307
      %v2404 = vunpack.c.h.b16 %v2307
      %v2405 = vunpack.c.l.b16 %v2308
      %v2406 = vunpack.c.h.b16 %v2308
      %v2407 = vunpack.c.l.b16 %v2309
      %v2408 = vunpack.c.h.b16 %v2309
      %v2409 = vunpack.c.l.b16 %v2310
      %v2410 = vunpack.c.h.b16 %v2310
      %v2411 = vunpack.c.l.b16 %v2311
      %v2412 = vunpack.c.h.b16 %v2311
      %v2413 = vunpack.c.l.b16 %v2312
      %v2414 = vunpack.c.h.b16 %v2312
      %v2415 = vunpack.c.l.b16 %v2313
      %v2416 = vunpack.c.h.b16 %v2313
      %v2417 = vunpack.c.l.b16 %v2314
      %v2418 = vunpack.c.h.b16 %v2314
      %v2419 = vunpack.c.l.b16 %v2315
      %v2420 = vunpack.c.h.b16 %v2315
      %v2421 = vunpack.c.l.b16 %v2316
      %v2422 = vunpack.c.h.b16 %v2316
      %v2423 = vunpack.c.l.b16 %v2317
      %v2424 = vunpack.c.h.b16 %v2317
      %v2425 = vunpack.c.l.b16 %v2318
      %v2426 = vunpack.c.h.b16 %v2318
      %v2427 = vpack.c.b16 %v2355, %v2355
      %v2428 = vpack.c.b16 %v2356, %v2356
      %v2429 = vpack.c.b16 %v2357, %v2357
      %v2430 = vpack.c.b16 %v2358, %v2358
      %v2431 = vpack.c.b16 %v2359, %v2359
      %v2432 = vpack.c.b16 %v2360, %v2360
      %v2433 = vpack.c.b16 %v2361, %v2361
      %v2434 = vpack.c.b16 %v2362, %v2362
      %v2435 = vpack.c.b16 %v2363, %v2363
      %v2436 = vpack.c.b16 %v2364, %v2364
      %v2437 = vpack.c.b16 %v2365, %v2365
      %v2438 = vpack.c.b16 %v2366, %v2366
      %v2439 = vpack.c.b16 %v2367, %v2367
      %v2440 = vpack.c.b16 %v2368, %v2368
      %v2441 = vpack.c.b16 %v2369, %v2369
      %v2442 = vpack.c.b16 %v2370, %v2370
      %v2443 = vpack.c.b16 %v2371, %v2371
      %v2444 = vpack.c.b16 %v2372, %v2372
      %v2445 = vpack.c.b16 %v2373, %v2373
      %v2446 = vpack.c.b16 %v2374, %v2374
      %v2447 = vpack.c.b16 %v2375, %v2375
      %v2448 = vpack.c.b16 %v2376, %v2376
      %v2449 = vpack.c.b16 %v2377, %v2377
      %v2450 = vpack.c.b16 %v2378, %v2378
      %v2451 = vpack.c.b16 %v2379, %v2379
      %v2452 = vpack.c.b16 %v2380, %v2380
      %v2453 = vpack.c.b16 %v2381, %v2381
      %v2454 = vpack.c.b16 %v2382, %v2382
      %v2455 = vpack.c.b16 %v2383, %v2383
      %v2456 = vpack.c.b16 %v2384, %v2384
      %v2457 = vpack.c.b16 %v2385, %v2385
      %v2458 = vpack.c.b16 %v2386, %v2386
      %v2459 = vpack.c.b16 %v2387, %v2387
      %v2460 = vpack.c.b16 %v2388, %v2388
      %v2461 = vpack.c.b16 %v2389, %v2389
      %v2462 = vpack.c.b16 %v2390, %v2390
      %v2463 = vpack.c.b16 %v2391, %v2391
      %v2464 = vpack.c.b16 %v2392, %v2392
      %v2465 = vpack.c.b16 %v2393, %v2393
      %v2466 = vpack.c.b16 %v2394, %v2394
      %v2467 = vpack.c.b16 %v2395, %v2395
      %v2468 = vpack.c.b16 %v2396, %v2396
      %v2469 = vpack.c.b16 %v2397, %v2397
      %v2470 = vpack.c.b16 %v2398, %v2398
      %v2471 = vpack.c.b16 %v2399, %v2399
      %v2472 = vpack.c.b16 %v2400, %v2400
      %v2473 = vpack.c.b16 %v2401, %v2401
      %v2474 = vpack.c.b16 %v2402, %v2402
      %v2475 = vpack.c.b16 %v2403, %v2403
      %v2476 = vpack.c.b16 %v2404, %v2404
      %v2477 = vpack.c.b16 %v2405, %v2405
      %v2478 = vpack.c.b16 %v2406, %v2406
      %v2479 = vpack.c.b16 %v2407, %v2407
      %v2480 = vpack.c.b16 %v2408, %v2408
      %v2481 = vpack.c.b16 %v2409, %v2409
      %v2482 = vpack.c.b16 %v2410, %v2410
      %v2483 = vpack.c.b16 %v2411, %v2411
      %v2484 = vpack.c.b16 %v2412, %v2412
      %v2485 = vpack.c.b16 %v2413, %v2413
      %v2486 = vpack.c.b16 %v2414, %v2414
      %v2487 = vpack.c.b16 %v2415, %v2415
      %v2488 = vpack.c.b16 %v2416, %v2416
      %v2489 = vpack.c.b16 %v2417, %v2417
      %v2490 = vpack.c.b16 %v2418, %v2418
      %v2491 = vpack.c.b16 %v2419, %v2419
      %v2492 = vpack.c.b16 %v2420, %v2420
      %v2493 = vpack.c.b16 %v2421, %v2421
      %v2494 = vpack.c.b16 %v2422, %v2422
      %v2495 = vpack.c.b16 %v2423, %v2423
      %v2496 = vpack.c.b16 %v2424, %v2424
      %v2497 = vpack.c.b16 %v2425, %v2425
      %v2498 = vpack.c.b16 %v2426, %v2426
      %vm2571 = vcmask 257024
      %2572 = vst.msk [vmem:[%s172] sm:$0xf] %vm2571, %v2427
      %2573 = vst.msk [vmem:[%s172 + $0x4] sm:$0xf] %vm2571, %v2428
      %2574 = vst.msk [vmem:[%s172 + $0x8] sm:$0xf] %vm2571, %v2429
      %2575 = vst.msk [vmem:[%s172 + $0xc] sm:$0xf] %vm2571, %v2430
      %2576 = vst.msk [vmem:[%s172 + $0x10] sm:$0xf] %vm2571, %v2431
      %2577 = vst.msk [vmem:[%s172 + $0x14] sm:$0xf] %vm2571, %v2432
      %2578 = vst.msk [vmem:[%s172 + $0x18] sm:$0xf] %vm2571, %v2433
      %2579 = vst.msk [vmem:[%s172 + $0x1c] sm:$0xf] %vm2571, %v2434
      %2580 = vst.msk [vmem:[%s172 + $0x20] sm:$0xf] %vm2571, %v2435
      %2581 = vst.msk [vmem:[%s172 + $0x24] sm:$0xf] %vm2571, %v2436
      %2582 = vst.msk [vmem:[%s172 + $0x28] sm:$0xf] %vm2571, %v2437
      %2583 = vst.msk [vmem:[%s172 + $0x2c] sm:$0xf] %vm2571, %v2438
      %2584 = vst.msk [vmem:[%s172 + $0x30] sm:$0xf] %vm2571, %v2439
      %2585 = vst.msk [vmem:[%s172 + $0x34] sm:$0xf] %vm2571, %v2440
      %2586 = vst.msk [vmem:[%s172 + $0x38] sm:$0xf] %vm2571, %v2441
      %2587 = vst.msk [vmem:[%s172 + $0x3c] sm:$0xf] %vm2571, %v2442
      %2588 = vst.msk [vmem:[%s172 + $0x40] sm:$0xf] %vm2571, %v2443
      %2589 = vst.msk [vmem:[%s172 + $0x44] sm:$0xf] %vm2571, %v2444
      %2590 = vst.msk [vmem:[%s172 + $0x48] sm:$0xf] %vm2571, %v2445
      %2591 = vst.msk [vmem:[%s172 + $0x4c] sm:$0xf] %vm2571, %v2446
      %2592 = vst.msk [vmem:[%s172 + $0x50] sm:$0xf] %vm2571, %v2447
      %2593 = vst.msk [vmem:[%s172 + $0x54] sm:$0xf] %vm2571, %v2448
      %2594 = vst.msk [vmem:[%s172 + $0x58] sm:$0xf] %vm2571, %v2449
      %2595 = vst.msk [vmem:[%s172 + $0x5c] sm:$0xf] %vm2571, %v2450
      %2596 = vst.msk [vmem:[%s172 + $0x60] sm:$0xf] %vm2571, %v2451
      %2597 = vst.msk [vmem:[%s172 + $0x64] sm:$0xf] %vm2571, %v2452
      %2598 = vst.msk [vmem:[%s172 + $0x68] sm:$0xf] %vm2571, %v2453
      %2599 = vst.msk [vmem:[%s172 + $0x6c] sm:$0xf] %vm2571, %v2454
      %2600 = vst.msk [vmem:[%s172 + $0x70] sm:$0xf] %vm2571, %v2455
      %2601 = vst.msk [vmem:[%s172 + $0x74] sm:$0xf] %vm2571, %v2456
      %2602 = vst.msk [vmem:[%s172 + $0x78] sm:$0xf] %vm2571, %v2457
      %2603 = vst.msk [vmem:[%s172 + $0x7c] sm:$0xf] %vm2571, %v2458
      %2604 = vst.msk [vmem:[%s172 + $0x80] sm:$0xf] %vm2571, %v2459
      %2605 = vst.msk [vmem:[%s172 + $0x84] sm:$0xf] %vm2571, %v2460
      %2606 = vst.msk [vmem:[%s172 + $0x88] sm:$0xf] %vm2571, %v2461
      %2607 = vst.msk [vmem:[%s172 + $0x8c] sm:$0xf] %vm2571, %v2462
      %2608 = vst.msk [vmem:[%s172 + $0x90] sm:$0xf] %vm2571, %v2463
      %2609 = vst.msk [vmem:[%s172 + $0x94] sm:$0xf] %vm2571, %v2464
      %2610 = vst.msk [vmem:[%s172 + $0x98] sm:$0xf] %vm2571, %v2465
      %2611 = vst.msk [vmem:[%s172 + $0x9c] sm:$0xf] %vm2571, %v2466
      %2612 = vst.msk [vmem:[%s172 + $0xa0] sm:$0xf] %vm2571, %v2467
      %2613 = vst.msk [vmem:[%s172 + $0xa4] sm:$0xf] %vm2571, %v2468
      %2614 = vst.msk [vmem:[%s172 + $0xa8] sm:$0xf] %vm2571, %v2469
      %2615 = vst.msk [vmem:[%s172 + $0xac] sm:$0xf] %vm2571, %v2470
      %2616 = vst.msk [vmem:[%s172 + $0xb0] sm:$0xf] %vm2571, %v2471
      %2617 = vst.msk [vmem:[%s172 + $0xb4] sm:$0xf] %vm2571, %v2472
      %2618 = vst.msk [vmem:[%s172 + $0xb8] sm:$0xf] %vm2571, %v2473
      %2619 = vst.msk [vmem:[%s172 + $0xbc] sm:$0xf] %vm2571, %v2474
      %2620 = vst.msk [vmem:[%s172 + $0xc0] sm:$0xf] %vm2571, %v2475
      %2621 = vst.msk [vmem:[%s172 + $0xc4] sm:$0xf] %vm2571, %v2476
      %2622 = vst.msk [vmem:[%s172 + $0xc8] sm:$0xf] %vm2571, %v2477
      %2623 = vst.msk [vmem:[%s172 + $0xcc] sm:$0xf] %vm2571, %v2478
      %2624 = vst.msk [vmem:[%s172 + $0xd0] sm:$0xf] %vm2571, %v2479
      %2625 = vst.msk [vmem:[%s172 + $0xd4] sm:$0xf] %vm2571, %v2480
      %2626 = vst.msk [vmem:[%s172 + $0xd8] sm:$0xf] %vm2571, %v2481
      %2627 = vst.msk [vmem:[%s172 + $0xdc] sm:$0xf] %vm2571, %v2482
      %2628 = vst.msk [vmem:[%s172 + $0xe0] sm:$0xf] %vm2571, %v2483
      %2629 = vst.msk [vmem:[%s172 + $0xe4] sm:$0xf] %vm2571, %v2484
      %2630 = vst.msk [vmem:[%s172 + $0xe8] sm:$0xf] %vm2571, %v2485
      %2631 = vst.msk [vmem:[%s172 + $0xec] sm:$0xf] %vm2571, %v2486
      %2632 = vst.msk [vmem:[%s172 + $0xf0] sm:$0xf] %vm2571, %v2487
      %2633 = vst.msk [vmem:[%s172 + $0xf4] sm:$0xf] %vm2571, %v2488
      %2634 = vst.msk [vmem:[%s172 + $0xf8] sm:$0xf] %vm2571, %v2489
      %2635 = vst.msk [vmem:[%s172 + $0xfc] sm:$0xf] %vm2571, %v2490
      %2636 = vst.msk [vmem:[%s172 + $0x100] sm:$0xf] %vm2571, %v2491
      %2637 = vst.msk [vmem:[%s172 + $0x104] sm:$0xf] %vm2571, %v2492
      %2638 = vst.msk [vmem:[%s172 + $0x108] sm:$0xf] %vm2571, %v2493
      %2639 = vst.msk [vmem:[%s172 + $0x10c] sm:$0xf] %vm2571, %v2494
      %2640 = vst.msk [vmem:[%s172 + $0x110] sm:$0xf] %vm2571, %v2495
      %2641 = vst.msk [vmem:[%s172 + $0x114] sm:$0xf] %vm2571, %v2496
      %2642 = vst.msk [vmem:[%s172 + $0x118] sm:$0xf] %vm2571, %v2497
      %2643 = vst.msk [vmem:[%s172 + $0x11c] sm:$0xf] %vm2571, %v2498
      %s2644 = smul.u32 72, %s14
      %p2645 = scmp.lt.s32.totalorder %s2644, 143
      %s2646 = scalar_select %p2645, %s2644, 143
      %s2647 = smul.addr %s2646, 4
      %s2648 = scalar_lea.vmem %s3, %s2647
      // Predicated region
      $region33: #{fedavg_cnn_forward.3} parent=31 // pred_check
        %p2649 = pneg %p100
      $region34: #{fedavg_cnn_forward.3} parent=31 // pred_check_branch
        %2651 = sbr.rel (%p2649) target = $region36
      $region35: #{fedavg_cnn_forward.3} parent=31 // pred_region
        %s2652 = smul.u32 72, %s14
      $region36: #{fedavg_cnn_forward.3} parent=31 // pred_fallthru
        _
    $region32: #{fedavg_cnn_forward.3} parent=5 // pred_fallthru
      _
    %p2653 = scmp.le.s32.totalorder 2, %s9
    // Predicated region
    $region37: #{fedavg_cnn_forward.3} parent=5 // pred_check
      %p2654 = pneg %p2653
    $region38: #{fedavg_cnn_forward.3} parent=5 // pred_check_branch
      %2656 = sbr.rel (%p2654) target = $region40
    $region39: #{fedavg_cnn_forward.3} parent=5 // pred_region
      %s2657 = ssub.s32 %s9, 2
      // Predicated region
      $region41: #{fedavg_cnn_forward.3} parent=39 // pred_check
        %p2658 = pneg %p106
      $region42: #{fedavg_cnn_forward.3} parent=39 // pred_check_branch
        %2660 = sbr.rel (%p2658) target = $region44
      $region43: #{fedavg_cnn_forward.3} parent=39 // pred_region
        %s2661 = smul.u32 72, %s15
        %p2662 = scmp.lt.s32.totalorder %s2661, 143
        %s2663 = scalar_select %p2662, %s2661, 143
        %s2664 = smul.addr %s2663, 4
        %s2665 = scalar_lea.vmem %s3, %s2664
      $region44: #{fedavg_cnn_forward.3} parent=39 // pred_fallthru
        _
    $region40: #{fedavg_cnn_forward.3} parent=5 // pred_fallthru
      _
  $region6: #{fedavg_cnn_forward.3} parent=0 // loop_footer
    %s13 = sadd.s32 1, %s9
  $region7: #{fedavg_cnn_forward.3} parent=0 // loop_footer_branch
    %8 = sbr.rel target = $region3
  $region8: #{fedavg_cnn_forward.3} parent=0 // loop_exit
    _

// kernel: fedavg_cnn_forward.4
$region0: #{fedavg_cnn_forward.4}
  #allocation0 [shape = 'u32[]', space=smem, size = 0x4, offset = 0x4, fixed_abs, tag = 'smem constant byte address 0x4 - core index']
  #allocation1 [shape = 'u32[144,128]{1,0:T(1,128)}', space=vmem, size = 0x12000, scoped, tag = 'internal scratch']
  %s0 = inlined_call_operand.vmem [shape: bf16[128,1152], index: 0, kind: input, shape index: {}]
  %s1 = inlined_call_operand.vmem [shape: bf16[4,1152,64], index: 1, kind: input, shape index: {}]
  %s2 = inlined_call_operand.vmem [shape: f32[1,64], index: 2, kind: input, shape index: {}]
  %s3 = inlined_call_operand.vmem [shape: bf16[128,64], index: 3, kind: output, shape index: {}]
  %s4 = sld [smem:[#allocation0]]
  $region22: #{fedavg_cnn_forward.4} parent=0
    _
  %s6 = ssub.s32 1, %s4
  %s7 = scalar_select 0, %s6, %s4
  // Predicated region
  $region2: #{fedavg_cnn_forward.4} parent=0 // pred_check
    _
  $region3: #{fedavg_cnn_forward.4} parent=0 // pred_check_branch
    %9 = sbr.rel (0) target = $region5
  $region4: #{fedavg_cnn_forward.4} parent=0 // pred_region
    _
  $region5: #{fedavg_cnn_forward.4} parent=0 // pred_fallthru
    _
  // Predicated region
  $region6: #{fedavg_cnn_forward.4} parent=0 // pred_check
    _
  $region7: #{fedavg_cnn_forward.4} parent=0 // pred_check_branch
    %11 = sbr.rel (0) target = $region9
  $region8: #{fedavg_cnn_forward.4} parent=0 // pred_region
    _
  $region9: #{fedavg_cnn_forward.4} parent=0 // pred_fallthru
    _
  // Predicated region
  $region10: #{fedavg_cnn_forward.4} parent=0 // pred_check
    _
  $region11: #{fedavg_cnn_forward.4} parent=0 // pred_check_branch
    %13 = sbr.rel (0) target = $region13
  $region12: #{fedavg_cnn_forward.4} parent=0 // pred_region
    _
  $region13: #{fedavg_cnn_forward.4} parent=0 // pred_fallthru
    _
  %v15 = vld [vmem:[%s0] sm:$0xff]
  %v16 = vld [vmem:[%s0 + $0x8] sm:$0xff]
  %v17 = vld [vmem:[%s0 + $0x10] sm:$0xff]
  %v18 = vld [vmem:[%s0 + $0x18] sm:$0xff]
  %v19 = vld [vmem:[%s0 + $0x20] sm:$0xf]
  %v20 = vld [vmem:[%s0 + $0x24] sm:$0xff]
  %v21 = vld [vmem:[%s0 + $0x2c] sm:$0xff]
  %v22 = vld [vmem:[%s0 + $0x34] sm:$0xff]
  %v23 = vld [vmem:[%s0 + $0x3c] sm:$0xff]
  %v24 = vld [vmem:[%s0 + $0x44] sm:$0xf]
  %v25 = vld [vmem:[%s0 + $0x48] sm:$0xff]
  %v26 = vld [vmem:[%s0 + $0x50] sm:$0xff]
  %v27 = vld [vmem:[%s0 + $0x58] sm:$0xff]
  %v28 = vld [vmem:[%s0 + $0x60] sm:$0xff]
  %v29 = vld [vmem:[%s0 + $0x68] sm:$0xf]
  %v30 = vld [vmem:[%s0 + $0x6c] sm:$0xff]
  %v31 = vld [vmem:[%s0 + $0x74] sm:$0xff]
  %v32 = vld [vmem:[%s0 + $0x7c] sm:$0xff]
  %v33 = vld [vmem:[%s0 + $0x84] sm:$0xff]
  %v34 = vld [vmem:[%s0 + $0x8c] sm:$0xf]
  %v35 = vld [vmem:[%s0 + $0x90] sm:$0xff]
  %v36 = vld [vmem:[%s0 + $0x98] sm:$0xff]
  %v37 = vld [vmem:[%s0 + $0xa0] sm:$0xff]
  %v38 = vld [vmem:[%s0 + $0xa8] sm:$0xff]
  %v39 = vld [vmem:[%s0 + $0xb0] sm:$0xf]
  %v40 = vld [vmem:[%s0 + $0xb4] sm:$0xff]
  %v41 = vld [vmem:[%s0 + $0xbc] sm:$0xff]
  %v42 = vld [vmem:[%s0 + $0xc4] sm:$0xff]
  %v43 = vld [vmem:[%s0 + $0xcc] sm:$0xff]
  %v44 = vld [vmem:[%s0 + $0xd4] sm:$0xf]
  %v45 = vld [vmem:[%s0 + $0xd8] sm:$0xff]
  %v46 = vld [vmem:[%s0 + $0xe0] sm:$0xff]
  %v47 = vld [vmem:[%s0 + $0xe8] sm:$0xff]
  %v48 = vld [vmem:[%s0 + $0xf0] sm:$0xff]
  %v49 = vld [vmem:[%s0 + $0xf8] sm:$0xf]
  %v50 = vld [vmem:[%s0 + $0xfc] sm:$0xff]
  %v51 = vld [vmem:[%s0 + $0x104] sm:$0xff]
  %v52 = vld [vmem:[%s0 + $0x10c] sm:$0xff]
  %v53 = vld [vmem:[%s0 + $0x114] sm:$0xff]
  %v54 = vld [vmem:[%s0 + $0x11c] sm:$0xf]
  %v55 = vld [vmem:[%s0 + $0x120] sm:$0xff]
  %v56 = vld [vmem:[%s0 + $0x128] sm:$0xff]
  %v57 = vld [vmem:[%s0 + $0x130] sm:$0xff]
  %v58 = vld [vmem:[%s0 + $0x138] sm:$0xff]
  %v59 = vld [vmem:[%s0 + $0x140] sm:$0xf]
  %v60 = vld [vmem:[%s0 + $0x144] sm:$0xff]
  %v61 = vld [vmem:[%s0 + $0x14c] sm:$0xff]
  %v62 = vld [vmem:[%s0 + $0x154] sm:$0xff]
  %v63 = vld [vmem:[%s0 + $0x15c] sm:$0xff]
  %v64 = vld [vmem:[%s0 + $0x164] sm:$0xf]
  %v65 = vld [vmem:[%s0 + $0x168] sm:$0xff]
  %v66 = vld [vmem:[%s0 + $0x170] sm:$0xff]
  %v67 = vld [vmem:[%s0 + $0x178] sm:$0xff]
  %v68 = vld [vmem:[%s0 + $0x180] sm:$0xff]
  %v69 = vld [vmem:[%s0 + $0x188] sm:$0xf]
  %v70 = vld [vmem:[%s0 + $0x18c] sm:$0xff]
  %v71 = vld [vmem:[%s0 + $0x194] sm:$0xff]
  %v72 = vld [vmem:[%s0 + $0x19c] sm:$0xff]
  %v73 = vld [vmem:[%s0 + $0x1a4] sm:$0xff]
  %v74 = vld [vmem:[%s0 + $0x1ac] sm:$0xf]
  %v75 = vld [vmem:[%s0 + $0x1b0] sm:$0xff]
  %v76 = vld [vmem:[%s0 + $0x1b8] sm:$0xff]
  %v77 = vld [vmem:[%s0 + $0x1c0] sm:$0xff]
  %v78 = vld [vmem:[%s0 + $0x1c8] sm:$0xff]
  %v79 = vld [vmem:[%s0 + $0x1d0] sm:$0xf]
  %v80 = vld [vmem:[%s0 + $0x1d4] sm:$0xff]
  %v81 = vld [vmem:[%s0 + $0x1dc] sm:$0xff]
  %v82 = vld [vmem:[%s0 + $0x1e4] sm:$0xff]
  %v83 = vld [vmem:[%s0 + $0x1ec] sm:$0xff]
  %v84 = vld [vmem:[%s0 + $0x1f4] sm:$0xf]
  %v85 = vld [vmem:[%s0 + $0x1f8] sm:$0xff]
  %v86 = vld [vmem:[%s0 + $0x200] sm:$0xff]
  %v87 = vld [vmem:[%s0 + $0x208] sm:$0xff]
  %v88 = vld [vmem:[%s0 + $0x210] sm:$0xff]
  %v89 = vld [vmem:[%s0 + $0x218] sm:$0xf]
  %v90 = vld [vmem:[%s0 + $0x21c] sm:$0xff]
  %v91 = vld [vmem:[%s0 + $0x224] sm:$0xff]
  %v92 = vld [vmem:[%s0 + $0x22c] sm:$0xff]
  %v93 = vld [vmem:[%s0 + $0x234] sm:$0xff]
  %v94 = vld [vmem:[%s0 + $0x23c] sm:$0xf]
  %v95 = vld [vmem:[%s1] sm:$0xf]
  %v96 = vld [vmem:[%s1 + $0x4] sm:$0xf]
  %v97 = vld [vmem:[%s1 + $0x8] sm:$0xf]
  %v98 = vld [vmem:[%s1 + $0xc] sm:$0xf]
  %v99 = vld [vmem:[%s1 + $0x10] sm:$0xf]
  %v100 = vld [vmem:[%s1 + $0x14] sm:$0xf]
  %v101 = vld [vmem:[%s1 + $0x18] sm:$0xf]
  %v102 = vld [vmem:[%s1 + $0x1c] sm:$0xf]
  %v103 = vld [vmem:[%s1 + $0x20] sm:$0xf]
  %v104 = vld [vmem:[%s1 + $0x24] sm:$0xf]
  %v105 = vld [vmem:[%s1 + $0x28] sm:$0xf]
  %v106 = vld [vmem:[%s1 + $0x2c] sm:$0xf]
  %v107 = vld [vmem:[%s1 + $0x30] sm:$0xf]
  %v108 = vld [vmem:[%s1 + $0x34] sm:$0xf]
  %v109 = vld [vmem:[%s1 + $0x38] sm:$0xf]
  %v110 = vld [vmem:[%s1 + $0x3c] sm:$0xf]
  %v111 = vld [vmem:[%s1 + $0x40] sm:$0xf]
  %v112 = vld [vmem:[%s1 + $0x44] sm:$0xf]
  %v113 = vld [vmem:[%s1 + $0x48] sm:$0xf]
  %v114 = vld [vmem:[%s1 + $0x4c] sm:$0xf]
  %v115 = vld [vmem:[%s1 + $0x50] sm:$0xf]
  %v116 = vld [vmem:[%s1 + $0x54] sm:$0xf]
  %v117 = vld [vmem:[%s1 + $0x58] sm:$0xf]
  %v118 = vld [vmem:[%s1 + $0x5c] sm:$0xf]
  %v119 = vld [vmem:[%s1 + $0x60] sm:$0xf]
  %v120 = vld [vmem:[%s1 + $0x64] sm:$0xf]
  %v121 = vld [vmem:[%s1 + $0x68] sm:$0xf]
  %v122 = vld [vmem:[%s1 + $0x6c] sm:$0xf]
  %v123 = vld [vmem:[%s1 + $0x70] sm:$0xf]
  %v124 = vld [vmem:[%s1 + $0x74] sm:$0xf]
  %v125 = vld [vmem:[%s1 + $0x78] sm:$0xf]
  %v126 = vld [vmem:[%s1 + $0x7c] sm:$0xf]
  %v127 = vld [vmem:[%s1 + $0x80] sm:$0xf]
  %v128 = vld [vmem:[%s1 + $0x84] sm:$0xf]
  %v129 = vld [vmem:[%s1 + $0x88] sm:$0xf]
  %v130 = vld [vmem:[%s1 + $0x8c] sm:$0xf]
  %v131 = vld [vmem:[%s1 + $0x90] sm:$0xf]
  %v132 = vld [vmem:[%s1 + $0x94] sm:$0xf]
  %v133 = vld [vmem:[%s1 + $0x98] sm:$0xf]
  %v134 = vld [vmem:[%s1 + $0x9c] sm:$0xf]
  %v135 = vld [vmem:[%s1 + $0xa0] sm:$0xf]
  %v136 = vld [vmem:[%s1 + $0xa4] sm:$0xf]
  %v137 = vld [vmem:[%s1 + $0xa8] sm:$0xf]
  %v138 = vld [vmem:[%s1 + $0xac] sm:$0xf]
  %v139 = vld [vmem:[%s1 + $0xb0] sm:$0xf]
  %v140 = vld [vmem:[%s1 + $0xb4] sm:$0xf]
  %v141 = vld [vmem:[%s1 + $0xb8] sm:$0xf]
  %v142 = vld [vmem:[%s1 + $0xbc] sm:$0xf]
  %v143 = vld [vmem:[%s1 + $0xc0] sm:$0xf]
  %v144 = vld [vmem:[%s1 + $0xc4] sm:$0xf]
  %v145 = vld [vmem:[%s1 + $0xc8] sm:$0xf]
  %v146 = vld [vmem:[%s1 + $0xcc] sm:$0xf]
  %v147 = vld [vmem:[%s1 + $0xd0] sm:$0xf]
  %v148 = vld [vmem:[%s1 + $0xd4] sm:$0xf]
  %v149 = vld [vmem:[%s1 + $0xd8] sm:$0xf]
  %v150 = vld [vmem:[%s1 + $0xdc] sm:$0xf]
  %v151 = vld [vmem:[%s1 + $0xe0] sm:$0xf]
  %v152 = vld [vmem:[%s1 + $0xe4] sm:$0xf]
  %v153 = vld [vmem:[%s1 + $0xe8] sm:$0xf]
  %v154 = vld [vmem:[%s1 + $0xec] sm:$0xf]
  %v155 = vld [vmem:[%s1 + $0xf0] sm:$0xf]
  %v156 = vld [vmem:[%s1 + $0xf4] sm:$0xf]
  %v157 = vld [vmem:[%s1 + $0xf8] sm:$0xf]
  %v158 = vld [vmem:[%s1 + $0xfc] sm:$0xf]
  %v159 = vld [vmem:[%s1 + $0x100] sm:$0xf]
  %v160 = vld [vmem:[%s1 + $0x104] sm:$0xf]
  %v161 = vld [vmem:[%s1 + $0x108] sm:$0xf]
  %v162 = vld [vmem:[%s1 + $0x10c] sm:$0xf]
  %v163 = vld [vmem:[%s1 + $0x110] sm:$0xf]
  %v164 = vld [vmem:[%s1 + $0x114] sm:$0xf]
  %v165 = vld [vmem:[%s1 + $0x118] sm:$0xf]
  %v166 = vld [vmem:[%s1 + $0x11c] sm:$0xf]
  %v167 = vld [vmem:[%s1 + $0x120] sm:$0xf]
  %v168 = vld [vmem:[%s1 + $0x124] sm:$0xf]
  %v169 = vld [vmem:[%s1 + $0x128] sm:$0xf]
  %v170 = vld [vmem:[%s1 + $0x12c] sm:$0xf]
  %v171 = vld [vmem:[%s1 + $0x130] sm:$0xf]
  %v172 = vld [vmem:[%s1 + $0x134] sm:$0xf]
  %v173 = vld [vmem:[%s1 + $0x138] sm:$0xf]
  %v174 = vld [vmem:[%s1 + $0x13c] sm:$0xf]
  %v175 = vld [vmem:[%s1 + $0x140] sm:$0xf]
  %v176 = vld [vmem:[%s1 + $0x144] sm:$0xf]
  %v177 = vld [vmem:[%s1 + $0x148] sm:$0xf]
  %v178 = vld [vmem:[%s1 + $0x14c] sm:$0xf]
  %v179 = vld [vmem:[%s1 + $0x150] sm:$0xf]
  %v180 = vld [vmem:[%s1 + $0x154] sm:$0xf]
  %v181 = vld [vmem:[%s1 + $0x158] sm:$0xf]
  %v182 = vld [vmem:[%s1 + $0x15c] sm:$0xf]
  %v183 = vld [vmem:[%s1 + $0x160] sm:$0xf]
  %v184 = vld [vmem:[%s1 + $0x164] sm:$0xf]
  %v185 = vld [vmem:[%s1 + $0x168] sm:$0xf]
  %v186 = vld [vmem:[%s1 + $0x16c] sm:$0xf]
  %v187 = vld [vmem:[%s1 + $0x170] sm:$0xf]
  %v188 = vld [vmem:[%s1 + $0x174] sm:$0xf]
  %v189 = vld [vmem:[%s1 + $0x178] sm:$0xf]
  %v190 = vld [vmem:[%s1 + $0x17c] sm:$0xf]
  %v191 = vld [vmem:[%s1 + $0x180] sm:$0xf]
  %v192 = vld [vmem:[%s1 + $0x184] sm:$0xf]
  %v193 = vld [vmem:[%s1 + $0x188] sm:$0xf]
  %v194 = vld [vmem:[%s1 + $0x18c] sm:$0xf]
  %v195 = vld [vmem:[%s1 + $0x190] sm:$0xf]
  %v196 = vld [vmem:[%s1 + $0x194] sm:$0xf]
  %v197 = vld [vmem:[%s1 + $0x198] sm:$0xf]
  %v198 = vld [vmem:[%s1 + $0x19c] sm:$0xf]
  %v199 = vld [vmem:[%s1 + $0x1a0] sm:$0xf]
  %v200 = vld [vmem:[%s1 + $0x1a4] sm:$0xf]
  %v201 = vld [vmem:[%s1 + $0x1a8] sm:$0xf]
  %v202 = vld [vmem:[%s1 + $0x1ac] sm:$0xf]
  %v203 = vld [vmem:[%s1 + $0x1b0] sm:$0xf]
  %v204 = vld [vmem:[%s1 + $0x1b4] sm:$0xf]
  %v205 = vld [vmem:[%s1 + $0x1b8] sm:$0xf]
  %v206 = vld [vmem:[%s1 + $0x1bc] sm:$0xf]
  %v207 = vld [vmem:[%s1 + $0x1c0] sm:$0xf]
  %v208 = vld [vmem:[%s1 + $0x1c4] sm:$0xf]
  %v209 = vld [vmem:[%s1 + $0x1c8] sm:$0xf]
  %v210 = vld [vmem:[%s1 + $0x1cc] sm:$0xf]
  %v211 = vld [vmem:[%s1 + $0x1d0] sm:$0xf]
  %v212 = vld [vmem:[%s1 + $0x1d4] sm:$0xf]
  %v213 = vld [vmem:[%s1 + $0x1d8] sm:$0xf]
  %v214 = vld [vmem:[%s1 + $0x1dc] sm:$0xf]
  %v215 = vld [vmem:[%s1 + $0x1e0] sm:$0xf]
  %v216 = vld [vmem:[%s1 + $0x1e4] sm:$0xf]
  %v217 = vld [vmem:[%s1 + $0x1e8] sm:$0xf]
  %v218 = vld [vmem:[%s1 + $0x1ec] sm:$0xf]
  %v219 = vld [vmem:[%s1 + $0x1f0] sm:$0xf]
  %v220 = vld [vmem:[%s1 + $0x1f4] sm:$0xf]
  %v221 = vld [vmem:[%s1 + $0x1f8] sm:$0xf]
  %v222 = vld [vmem:[%s1 + $0x1fc] sm:$0xf]
  %v223 = vld [vmem:[%s1 + $0x200] sm:$0xf]
  %v224 = vld [vmem:[%s1 + $0x204] sm:$0xf]
  %v225 = vld [vmem:[%s1 + $0x208] sm:$0xf]
  %v226 = vld [vmem:[%s1 + $0x20c] sm:$0xf]
  %v227 = vld [vmem:[%s1 + $0x210] sm:$0xf]
  %v228 = vld [vmem:[%s1 + $0x214] sm:$0xf]
  %v229 = vld [vmem:[%s1 + $0x218] sm:$0xf]
  %v230 = vld [vmem:[%s1 + $0x21c] sm:$0xf]
  %v231 = vld [vmem:[%s1 + $0x220] sm:$0xf]
  %v232 = vld [vmem:[%s1 + $0x224] sm:$0xf]
  %v233 = vld [vmem:[%s1 + $0x228] sm:$0xf]
  %v234 = vld [vmem:[%s1 + $0x22c] sm:$0xf]
  %v235 = vld [vmem:[%s1 + $0x230] sm:$0xf]
  %v236 = vld [vmem:[%s1 + $0x234] sm:$0xf]
  %v237 = vld [vmem:[%s1 + $0x238] sm:$0xf]
  %v238 = vld [vmem:[%s1 + $0x23c] sm:$0xf]
  %v319 = vunpack.c.l.b16 %v15
  %v320 = vunpack.c.h.b16 %v15
  %v321 = vunpack.c.l.b16 %v16
  %v322 = vunpack.c.h.b16 %v16
  %v323 = vunpack.c.l.b16 %v17
  %v324 = vunpack.c.h.b16 %v17
  %v325 = vunpack.c.l.b16 %v18
  %v326 = vunpack.c.h.b16 %v18
  %v327 = vunpack.c.l.b16 %v19
  %v328 = vunpack.c.l.b16 %v20
  %v329 = vunpack.c.h.b16 %v20
  %v330 = vunpack.c.l.b16 %v21
  %v331 = vunpack.c.h.b16 %v21
  %v332 = vunpack.c.l.b16 %v22
  %v333 = vunpack.c.h.b16 %v22
  %v334 = vunpack.c.l.b16 %v23
  %v335 = vunpack.c.h.b16 %v23
  %v336 = vunpack.c.l.b16 %v24
  %v337 = vunpack.c.l.b16 %v25
  %v338 = vunpack.c.h.b16 %v25
  %v339 = vunpack.c.l.b16 %v26
  %v340 = vunpack.c.h.b16 %v26
  %v341 = vunpack.c.l.b16 %v27
  %v342 = vunpack.c.h.b16 %v27
  %v343 = vunpack.c.l.b16 %v28
  %v344 = vunpack.c.h.b16 %v28
  %v345 = vunpack.c.l.b16 %v29
  %v346 = vunpack.c.l.b16 %v30
  %v347 = vunpack.c.h.b16 %v30
  %v348 = vunpack.c.l.b16 %v31
  %v349 = vunpack.c.h.b16 %v31
  %v350 = vunpack.c.l.b16 %v32
  %v351 = vunpack.c.h.b16 %v32
  %v352 = vunpack.c.l.b16 %v33
  %v353 = vunpack.c.h.b16 %v33
  %v354 = vunpack.c.l.b16 %v34
  %v355 = vunpack.c.l.b16 %v35
  %v356 = vunpack.c.h.b16 %v35
  %v357 = vunpack.c.l.b16 %v36
  %v358 = vunpack.c.h.b16 %v36
  %v359 = vunpack.c.l.b16 %v37
  %v360 = vunpack.c.h.b16 %v37
  %v361 = vunpack.c.l.b16 %v38
  %v362 = vunpack.c.h.b16 %v38
  %v363 = vunpack.c.l.b16 %v39
  %v364 = vunpack.c.l.b16 %v40
  %v365 = vunpack.c.h.b16 %v40
  %v366 = vunpack.c.l.b16 %v41
  %v367 = vunpack.c.h.b16 %v41
  %v368 = vunpack.c.l.b16 %v42
  %v369 = vunpack.c.h.b16 %v42
  %v370 = vunpack.c.l.b16 %v43
  %v371 = vunpack.c.h.b16 %v43
  %v372 = vunpack.c.l.b16 %v44
  %v373 = vunpack.c.l.b16 %v45
  %v374 = vunpack.c.h.b16 %v45
  %v375 = vunpack.c.l.b16 %v46
  %v376 = vunpack.c.h.b16 %v46
  %v377 = vunpack.c.l.b16 %v47
  %v378 = vunpack.c.h.b16 %v47
  %v379 = vunpack.c.l.b16 %v48
  %v380 = vunpack.c.h.b16 %v48
  %v381 = vunpack.c.l.b16 %v49
  %v382 = vunpack.c.l.b16 %v50
  %v383 = vunpack.c.h.b16 %v50
  %v384 = vunpack.c.l.b16 %v51
  %v385 = vunpack.c.h.b16 %v51
  %v386 = vunpack.c.l.b16 %v52
  %v387 = vunpack.c.h.b16 %v52
  %v388 = vunpack.c.l.b16 %v53
  %v389 = vunpack.c.h.b16 %v53
  %v390 = vunpack.c.l.b16 %v54
  %v391 = vunpack.c.l.b16 %v55
  %v392 = vunpack.c.h.b16 %v55
  %v393 = vunpack.c.l.b16 %v56
  %v394 = vunpack.c.h.b16 %v56
  %v395 = vunpack.c.l.b16 %v57
  %v396 = vunpack.c.h.b16 %v57
  %v397 = vunpack.c.l.b16 %v58
  %v398 = vunpack.c.h.b16 %v58
  %v399 = vunpack.c.l.b16 %v59
  %v400 = vunpack.c.l.b16 %v60
  %v401 = vunpack.c.h.b16 %v60
  %v402 = vunpack.c.l.b16 %v61
  %v403 = vunpack.c.h.b16 %v61
  %v404 = vunpack.c.l.b16 %v62
  %v405 = vunpack.c.h.b16 %v62
  %v406 = vunpack.c.l.b16 %v63
  %v407 = vunpack.c.h.b16 %v63
  %v408 = vunpack.c.l.b16 %v64
  %v409 = vunpack.c.l.b16 %v65
  %v410 = vunpack.c.h.b16 %v65
  %v411 = vunpack.c.l.b16 %v66
  %v412 = vunpack.c.h.b16 %v66
  %v413 = vunpack.c.l.b16 %v67
  %v414 = vunpack.c.h.b16 %v67
  %v415 = vunpack.c.l.b16 %v68
  %v416 = vunpack.c.h.b16 %v68
  %v417 = vunpack.c.l.b16 %v69
  %v418 = vunpack.c.l.b16 %v70
  %v419 = vunpack.c.h.b16 %v70
  %v420 = vunpack.c.l.b16 %v71
  %v421 = vunpack.c.h.b16 %v71
  %v422 = vunpack.c.l.b16 %v72
  %v423 = vunpack.c.h.b16 %v72
  %v424 = vunpack.c.l.b16 %v73
  %v425 = vunpack.c.h.b16 %v73
  %v426 = vunpack.c.l.b16 %v74
  %v427 = vunpack.c.l.b16 %v75
  %v428 = vunpack.c.h.b16 %v75
  %v429 = vunpack.c.l.b16 %v76
  %v430 = vunpack.c.h.b16 %v76
  %v431 = vunpack.c.l.b16 %v77
  %v432 = vunpack.c.h.b16 %v77
  %v433 = vunpack.c.l.b16 %v78
  %v434 = vunpack.c.h.b16 %v78
  %v435 = vunpack.c.l.b16 %v79
  %v436 = vunpack.c.l.b16 %v80
  %v437 = vunpack.c.h.b16 %v80
  %v438 = vunpack.c.l.b16 %v81
  %v439 = vunpack.c.h.b16 %v81
  %v440 = vunpack.c.l.b16 %v82
  %v441 = vunpack.c.h.b16 %v82
  %v442 = vunpack.c.l.b16 %v83
  %v443 = vunpack.c.h.b16 %v83
  %v444 = vunpack.c.l.b16 %v84
  %v445 = vunpack.c.l.b16 %v85
  %v446 = vunpack.c.h.b16 %v85
  %v447 = vunpack.c.l.b16 %v86
  %v448 = vunpack.c.h.b16 %v86
  %v449 = vunpack.c.l.b16 %v87
  %v450 = vunpack.c.h.b16 %v87
  %v451 = vunpack.c.l.b16 %v88
  %v452 = vunpack.c.h.b16 %v88
  %v453 = vunpack.c.l.b16 %v89
  %v454 = vunpack.c.l.b16 %v90
  %v455 = vunpack.c.h.b16 %v90
  %v456 = vunpack.c.l.b16 %v91
  %v457 = vunpack.c.h.b16 %v91
  %v458 = vunpack.c.l.b16 %v92
  %v459 = vunpack.c.h.b16 %v92
  %v460 = vunpack.c.l.b16 %v93
  %v461 = vunpack.c.h.b16 %v93
  %v462 = vunpack.c.l.b16 %v94
  %v463 = vpack.c.b16 %v328, %v319
  %v464 = vpack.c.b16 %v329, %v320
  %v465 = vpack.c.b16 %v330, %v321
  %v466 = vpack.c.b16 %v331, %v322
  %v467 = vpack.c.b16 %v332, %v323
  %v468 = vpack.c.b16 %v333, %v324
  %v469 = vpack.c.b16 %v334, %v325
  %v470 = vpack.c.b16 %v335, %v326
  %v471 = vpack.c.b16 %v336, %v327
  %v472 = vpack.c.b16 %v346, %v337
  %v473 = vpack.c.b16 %v347, %v338
  %v474 = vpack.c.b16 %v348, %v339
  %v475 = vpack.c.b16 %v349, %v340
  %v476 = vpack.c.b16 %v350, %v341
  %v477 = vpack.c.b16 %v351, %v342
  %v478 = vpack.c.b16 %v352, %v343
  %v479 = vpack.c.b16 %v353, %v344
  %v480 = vpack.c.b16 %v354, %v345
  %v481 = vpack.c.b16 %v364, %v355
  %v482 = vpack.c.b16 %v365, %v356
  %v483 = vpack.c.b16 %v366, %v357
  %v484 = vpack.c.b16 %v367, %v358
  %v485 = vpack.c.b16 %v368, %v359
  %v486 = vpack.c.b16 %v369, %v360
  %v487 = vpack.c.b16 %v370, %v361
  %v488 = vpack.c.b16 %v371, %v362
  %v489 = vpack.c.b16 %v372, %v363
  %v490 = vpack.c.b16 %v382, %v373
  %v491 = vpack.c.b16 %v383, %v374
  %v492 = vpack.c.b16 %v384, %v375
  %v493 = vpack.c.b16 %v385, %v376
  %v494 = vpack.c.b16 %v386, %v377
  %v495 = vpack.c.b16 %v387, %v378
  %v496 = vpack.c.b16 %v388, %v379
  %v497 = vpack.c.b16 %v389, %v380
  %v498 = vpack.c.b16 %v390, %v381
  %v499 = vpack.c.b16 %v400, %v391
  %v500 = vpack.c.b16 %v401, %v392
  %v501 = vpack.c.b16 %v402, %v393
  %v502 = vpack.c.b16 %v403, %v394
  %v503 = vpack.c.b16 %v404, %v395
  %v504 = vpack.c.b16 %v405, %v396
  %v505 = vpack.c.b16 %v406, %v397
  %v506 = vpack.c.b16 %v407, %v398
  %v507 = vpack.c.b16 %v408, %v399
  %v508 = vpack.c.b16 %v418, %v409
  %v509 = vpack.c.b16 %v419, %v410
  %v510 = vpack.c.b16 %v420, %v411
  %v511 = vpack.c.b16 %v421, %v412
  %v512 = vpack.c.b16 %v422, %v413
  %v513 = vpack.c.b16 %v423, %v414
  %v514 = vpack.c.b16 %v424, %v415
  %v515 = vpack.c.b16 %v425, %v416
  %v516 = vpack.c.b16 %v426, %v417
  %v517 = vpack.c.b16 %v436, %v427
  %v518 = vpack.c.b16 %v437, %v428
  %v519 = vpack.c.b16 %v438, %v429
  %v520 = vpack.c.b16 %v439, %v430
  %v521 = vpack.c.b16 %v440, %v431
  %v522 = vpack.c.b16 %v441, %v432
  %v523 = vpack.c.b16 %v442, %v433
  %v524 = vpack.c.b16 %v443, %v434
  %v525 = vpack.c.b16 %v444, %v435
  %v526 = vpack.c.b16 %v454, %v445
  %v527 = vpack.c.b16 %v455, %v446
  %v528 = vpack.c.b16 %v456, %v447
  %v529 = vpack.c.b16 %v457, %v448
  %v530 = vpack.c.b16 %v458, %v449
  %v531 = vpack.c.b16 %v459, %v450
  %v532 = vpack.c.b16 %v460, %v451
  %v533 = vpack.c.b16 %v461, %v452
  %v534 = vpack.c.b16 %v462, %v453
  %v751 = vunpack.c.l.b16 %v95
  %v752 = vunpack.c.l.b16 %v96
  %v753 = vunpack.c.l.b16 %v97
  %v754 = vunpack.c.l.b16 %v98
  %v755 = vunpack.c.l.b16 %v99
  %v756 = vunpack.c.l.b16 %v100
  %v757 = vunpack.c.l.b16 %v101
  %v758 = vunpack.c.l.b16 %v102
  %v759 = vunpack.c.l.b16 %v103
  %v760 = vunpack.c.l.b16 %v104
  %v761 = vunpack.c.l.b16 %v105
  %v762 = vunpack.c.l.b16 %v106
  %v763 = vunpack.c.l.b16 %v107
  %v764 = vunpack.c.l.b16 %v108
  %v765 = vunpack.c.l.b16 %v109
  %v766 = vunpack.c.l.b16 %v110
  %v767 = vunpack.c.l.b16 %v111
  %v768 = vunpack.c.l.b16 %v112
  %v769 = vunpack.c.l.b16 %v113
  %v770 = vunpack.c.l.b16 %v114
  %v771 = vunpack.c.l.b16 %v115
  %v772 = vunpack.c.l.b16 %v116
  %v773 = vunpack.c.l.b16 %v117
  %v774 = vunpack.c.l.b16 %v118
  %v775 = vunpack.c.l.b16 %v119
  %v776 = vunpack.c.l.b16 %v120
  %v777 = vunpack.c.l.b16 %v121
  %v778 = vunpack.c.l.b16 %v122
  %v779 = vunpack.c.l.b16 %v123
  %v780 = vunpack.c.l.b16 %v124
  %v781 = vunpack.c.l.b16 %v125
  %v782 = vunpack.c.l.b16 %v126
  %v783 = vunpack.c.l.b16 %v127
  %v784 = vunpack.c.l.b16 %v128
  %v785 = vunpack.c.l.b16 %v129
  %v786 = vunpack.c.l.b16 %v130
  %v787 = vunpack.c.l.b16 %v131
  %v788 = vunpack.c.l.b16 %v132
  %v789 = vunpack.c.l.b16 %v133
  %v790 = vunpack.c.l.b16 %v134
  %v791 = vunpack.c.l.b16 %v135
  %v792 = vunpack.c.l.b16 %v136
  %v793 = vunpack.c.l.b16 %v137
  %v794 = vunpack.c.l.b16 %v138
  %v795 = vunpack.c.l.b16 %v139
  %v796 = vunpack.c.l.b16 %v140
  %v797 = vunpack.c.l.b16 %v141
  %v798 = vunpack.c.l.b16 %v142
  %v799 = vunpack.c.l.b16 %v143
  %v800 = vunpack.c.l.b16 %v144
  %v801 = vunpack.c.l.b16 %v145
  %v802 = vunpack.c.l.b16 %v146
  %v803 = vunpack.c.l.b16 %v147
  %v804 = vunpack.c.l.b16 %v148
  %v805 = vunpack.c.l.b16 %v149
  %v806 = vunpack.c.l.b16 %v150
  %v807 = vunpack.c.l.b16 %v151
  %v808 = vunpack.c.l.b16 %v152
  %v809 = vunpack.c.l.b16 %v153
  %v810 = vunpack.c.l.b16 %v154
  %v811 = vunpack.c.l.b16 %v155
  %v812 = vunpack.c.l.b16 %v156
  %v813 = vunpack.c.l.b16 %v157
  %v814 = vunpack.c.l.b16 %v158
  %v815 = vunpack.c.l.b16 %v159
  %v816 = vunpack.c.l.b16 %v160
  %v817 = vunpack.c.l.b16 %v161
  %v818 = vunpack.c.l.b16 %v162
  %v819 = vunpack.c.l.b16 %v163
  %v820 = vunpack.c.l.b16 %v164
  %v821 = vunpack.c.l.b16 %v165
  %v822 = vunpack.c.l.b16 %v166
  %v823 = vunpack.c.l.b16 %v167
  %v824 = vunpack.c.l.b16 %v168
  %v825 = vunpack.c.l.b16 %v169
  %v826 = vunpack.c.l.b16 %v170
  %v827 = vunpack.c.l.b16 %v171
  %v828 = vunpack.c.l.b16 %v172
  %v829 = vunpack.c.l.b16 %v173
  %v830 = vunpack.c.l.b16 %v174
  %v831 = vunpack.c.l.b16 %v175
  %v832 = vunpack.c.l.b16 %v176
  %v833 = vunpack.c.l.b16 %v177
  %v834 = vunpack.c.l.b16 %v178
  %v835 = vunpack.c.l.b16 %v179
  %v836 = vunpack.c.l.b16 %v180
  %v837 = vunpack.c.l.b16 %v181
  %v838 = vunpack.c.l.b16 %v182
  %v839 = vunpack.c.l.b16 %v183
  %v840 = vunpack.c.l.b16 %v184
  %v841 = vunpack.c.l.b16 %v185
  %v842 = vunpack.c.l.b16 %v186
  %v843 = vunpack.c.l.b16 %v187
  %v844 = vunpack.c.l.b16 %v188
  %v845 = vunpack.c.l.b16 %v189
  %v846 = vunpack.c.l.b16 %v190
  %v847 = vunpack.c.l.b16 %v191
  %v848 = vunpack.c.l.b16 %v192
  %v849 = vunpack.c.l.b16 %v193
  %v850 = vunpack.c.l.b16 %v194
  %v851 = vunpack.c.l.b16 %v195
  %v852 = vunpack.c.l.b16 %v196
  %v853 = vunpack.c.l.b16 %v197
  %v854 = vunpack.c.l.b16 %v198
  %v855 = vunpack.c.l.b16 %v199
  %v856 = vunpack.c.l.b16 %v200
  %v857 = vunpack.c.l.b16 %v201
  %v858 = vunpack.c.l.b16 %v202
  %v859 = vunpack.c.l.b16 %v203
  %v860 = vunpack.c.l.b16 %v204
  %v861 = vunpack.c.l.b16 %v205
  %v862 = vunpack.c.l.b16 %v206
  %v863 = vunpack.c.l.b16 %v207
  %v864 = vunpack.c.l.b16 %v208
  %v865 = vunpack.c.l.b16 %v209
  %v866 = vunpack.c.l.b16 %v210
  %v867 = vunpack.c.l.b16 %v211
  %v868 = vunpack.c.l.b16 %v212
  %v869 = vunpack.c.l.b16 %v213
  %v870 = vunpack.c.l.b16 %v214
  %v871 = vunpack.c.l.b16 %v215
  %v872 = vunpack.c.l.b16 %v216
  %v873 = vunpack.c.l.b16 %v217
  %v874 = vunpack.c.l.b16 %v218
  %v875 = vunpack.c.l.b16 %v219
  %v876 = vunpack.c.l.b16 %v220
  %v877 = vunpack.c.l.b16 %v221
  %v878 = vunpack.c.l.b16 %v222
  %v879 = vunpack.c.l.b16 %v223
  %v880 = vunpack.c.l.b16 %v224
  %v881 = vunpack.c.l.b16 %v225
  %v882 = vunpack.c.l.b16 %v226
  %v883 = vunpack.c.l.b16 %v227
  %v884 = vunpack.c.l.b16 %v228
  %v885 = vunpack.c.l.b16 %v229
  %v886 = vunpack.c.l.b16 %v230
  %v887 = vunpack.c.l.b16 %v231
  %v888 = vunpack.c.l.b16 %v232
  %v889 = vunpack.c.l.b16 %v233
  %v890 = vunpack.c.l.b16 %v234
  %v891 = vunpack.c.l.b16 %v235
  %v892 = vunpack.c.l.b16 %v236
  %v893 = vunpack.c.l.b16 %v237
  %v894 = vunpack.c.l.b16 %v238
  %v895 = vpack.c.b16 %v752, %v751
  %v896 = vpack.c.b16 %v754, %v753
  %v897 = vpack.c.b16 %v756, %v755
  %v898 = vpack.c.b16 %v758, %v757
  %v899 = vpack.c.b16 %v760, %v759
  %v900 = vpack.c.b16 %v762, %v761
  %v901 = vpack.c.b16 %v764, %v763
  %v902 = vpack.c.b16 %v766, %v765
  %v903 = vpack.c.b16 %v768, %v767
  %v904 = vpack.c.b16 %v770, %v769
  %v905 = vpack.c.b16 %v772, %v771
  %v906 = vpack.c.b16 %v774, %v773
  %v907 = vpack.c.b16 %v776, %v775
  %v908 = vpack.c.b16 %v778, %v777
  %v909 = vpack.c.b16 %v780, %v779
  %v910 = vpack.c.b16 %v782, %v781
  %v911 = vpack.c.b16 %v784, %v783
  %v912 = vpack.c.b16 %v786, %v785
  %v913 = vpack.c.b16 %v788, %v787
  %v914 = vpack.c.b16 %v790, %v789
  %v915 = vpack.c.b16 %v792, %v791
  %v916 = vpack.c.b16 %v794, %v793
  %v917 = vpack.c.b16 %v796, %v795
  %v918 = vpack.c.b16 %v798, %v797
  %v919 = vpack.c.b16 %v800, %v799
  %v920 = vpack.c.b16 %v802, %v801
  %v921 = vpack.c.b16 %v804, %v803
  %v922 = vpack.c.b16 %v806, %v805
  %v923 = vpack.c.b16 %v808, %v807
  %v924 = vpack.c.b16 %v810, %v809
  %v925 = vpack.c.b16 %v812, %v811
  %v926 = vpack.c.b16 %v814, %v813
  %v927 = vpack.c.b16 %v816, %v815
  %v928 = vpack.c.b16 %v818, %v817
  %v929 = vpack.c.b16 %v820, %v819
  %v930 = vpack.c.b16 %v822, %v821
  %v931 = vpack.c.b16 %v824, %v823
  %v932 = vpack.c.b16 %v826, %v825
  %v933 = vpack.c.b16 %v828, %v827
  %v934 = vpack.c.b16 %v830, %v829
  %v935 = vpack.c.b16 %v832, %v831
  %v936 = vpack.c.b16 %v834, %v833
  %v937 = vpack.c.b16 %v836, %v835
  %v938 = vpack.c.b16 %v838, %v837
  %v939 = vpack.c.b16 %v840, %v839
  %v940 = vpack.c.b16 %v842, %v841
  %v941 = vpack.c.b16 %v844, %v843
  %v942 = vpack.c.b16 %v846, %v845
  %v943 = vpack.c.b16 %v848, %v847
  %v944 = vpack.c.b16 %v850, %v849
  %v945 = vpack.c.b16 %v852, %v851
  %v946 = vpack.c.b16 %v854, %v853
  %v947 = vpack.c.b16 %v856, %v855
  %v948 = vpack.c.b16 %v858, %v857
  %v949 = vpack.c.b16 %v860, %v859
  %v950 = vpack.c.b16 %v862, %v861
  %v951 = vpack.c.b16 %v864, %v863
  %v952 = vpack.c.b16 %v866, %v865
  %v953 = vpack.c.b16 %v868, %v867
  %v954 = vpack.c.b16 %v870, %v869
  %v955 = vpack.c.b16 %v872, %v871
  %v956 = vpack.c.b16 %v874, %v873
  %v957 = vpack.c.b16 %v876, %v875
  %v958 = vpack.c.b16 %v878, %v877
  %v959 = vpack.c.b16 %v880, %v879
  %v960 = vpack.c.b16 %v882, %v881
  %v961 = vpack.c.b16 %v884, %v883
  %v962 = vpack.c.b16 %v886, %v885
  %v963 = vpack.c.b16 %v888, %v887
  %v964 = vpack.c.b16 %v890, %v889
  %v965 = vpack.c.b16 %v892, %v891
  %v966 = vpack.c.b16 %v894, %v893
  %1039 = vmatprep.subr.bf16.mxu0 0
  %1040 = vmatpush1.bf16.msra.mxu0 %v895
  %1041 = vmatprep.subr.bf16.mxu0 0
  %1042 = vmatpush1.bf16.msra.mxu0 %v896
  %1043 = vmatprep.subr.bf16.mxu0 0
  %1044 = vmatpush1.bf16.msra.mxu0 %v897
  %1045 = vmatprep.subr.bf16.mxu0 0
  %1046 = vmatpush1.bf16.msra.mxu0 %v898
  %1047 = vmatprep.subr.bf16.mxu0 0
  %1048 = vmatpush1.bf16.msra.mxu0 %v899
  %1049 = vmatprep.subr.bf16.mxu0 0
  %1050 = vmatpush1.bf16.msra.mxu0 %v900
  %1051 = vmatprep.subr.bf16.mxu0 0
  %1052 = vmatpush1.bf16.msra.mxu0 %v901
  %1053 = vmatprep.subr.bf16.mxu0 0
  %1054 = vmatpush1.bf16.msra.mxu0 %v902
  %1055 = vmatprep.subr.bf16.mxu0 0
  %1056 = vmatpush1.bf16.msra.mxu0 %v903
  %1057 = vmatprep.subr.bf16.mxu0 0
  %1058 = vmatpush1.bf16.msra.mxu0 %v904
  %1059 = vmatprep.subr.bf16.mxu0 0
  %1060 = vmatpush1.bf16.msra.mxu0 %v905
  %1061 = vmatprep.subr.bf16.mxu0 0
  %1062 = vmatpush1.bf16.msra.mxu0 %v906
  %1063 = vmatprep.subr.bf16.mxu0 0
  %1064 = vmatpush1.bf16.msra.mxu0 %v907
  %1065 = vmatprep.subr.bf16.mxu0 0
  %1066 = vmatpush1.bf16.msra.mxu0 %v908
  %1067 = vmatprep.subr.bf16.mxu0 0
  %1068 = vmatpush1.bf16.msra.mxu0 %v909
  %1069 = vmatprep.subr.bf16.mxu0 0
  %1070 = vmatpush1.bf16.msra.mxu0 %v910
  %1071 = vmatprep.mubr.bf16.mxu0 %v464
  %1072 = vmatmul.mubr.bf16.gmra.mrb[0].mxu0 %v463
  %v1073 = vpop.f32.mrb[0].mxu0
  %v1074 = vadd.f32 0.0, %v1073
  %v1075 = vpop.f32.mrb[0].mxu0
  %v1076 = vpop.f32.mrb[0].mxu0
  %v1077 = vadd.f32 0.0, %v1076
  %v1078 = vpop.f32.mrb[0].mxu0
  %1079 = vmatprep.mubr.bf16.mxu0 %v473
  %1080 = vmatmul.mubr.bf16.gmra.mrb[0].mxu0 %v472
  %v1081 = vpop.f32.mrb[0].mxu0
  %v1082 = vadd.f32 0.0, %v1081
  %v1083 = vpop.f32.mrb[0].mxu0
  %v1084 = vpop.f32.mrb[0].mxu0
  %v1085 = vadd.f32 0.0, %v1084
  %v1086 = vpop.f32.mrb[0].mxu0
  %1087 = vmatprep.mubr.bf16.mxu0 %v482
  %1088 = vmatmul.mubr.bf16.gmra.mrb[0].mxu0 %v481
  %v1089 = vpop.f32.mrb[0].mxu0
  %v1090 = vadd.f32 0.0, %v1089
  %v1091 = vpop.f32.mrb[0].mxu0
  %v1092 = vpop.f32.mrb[0].mxu0
  %v1093 = vadd.f32 0.0, %v1092
  %v1094 = vpop.f32.mrb[0].mxu0
  %1095 = vmatprep.mubr.bf16.mxu0 %v491
  %1096 = vmatmul.mubr.bf16.gmra.mrb[0].mxu0 %v490
  %v1097 = vpop.f32.mrb[0].mxu0
  %v1098 = vadd.f32 0.0, %v1097
  %v1099 = vpop.f32.mrb[0].mxu0
  %v1100 = vpop.f32.mrb[0].mxu0
  %v1101 = vadd.f32 0.0, %v1100
  %v1102 = vpop.f32.mrb[0].mxu0
  %1103 = vmatprep.mubr.bf16.mxu0 %v500
  %1104 = vmatmul.mubr.bf16.gmra.mrb[0].mxu0 %v499
  %v1105 = vpop.f32.mrb[0].mxu0
  %v1106 = vadd.f32 0.0, %v1105
  %v1107 = vpop.f32.mrb[0].mxu0
  %v1108 = vpop.f32.mrb[0].mxu0
  %v1109 = vadd.f32 0.0, %v1108
  %v1110 = vpop.f32.mrb[0].mxu0
  %1111 = vmatprep.mubr.bf16.mxu0 %v509
  %1112 = vmatmul.mubr.bf16.gmra.mrb[0].mxu0 %v508
  %v1113 = vpop.f32.mrb[0].mxu0
  %v1114 = vadd.f32 0.0, %v1113
  %v1115 = vpop.f32.mrb[0].mxu0
  %v1116 = vpop.f32.mrb[0].mxu0
  %v1117 = vadd.f32 0.0, %v1116
  %v1118 = vpop.f32.mrb[0].mxu0
  %1119 = vmatprep.mubr.bf16.mxu0 %v518
  %1120 = vmatmul.mubr.bf16.gmra.mrb[0].mxu0 %v517
  %v1121 = vpop.f32.mrb[0].mxu0
  %v1122 = vadd.f32 0.0, %v1121
  %v1123 = vpop.f32.mrb[0].mxu0
  %v1124 = vpop.f32.mrb[0].mxu0
  %v1125 = vadd.f32 0.0, %v1124
  %v1126 = vpop.f32.mrb[0].mxu0
  %1127 = vmatprep.mubr.bf16.mxu0 %v527
  %1128 = vmatmul.mubr.bf16.gmra.mrb[0].mxu0 %v526
  %v1129 = vpop.f32.mrb[0].mxu0
  %v1130 = vadd.f32 0.0, %v1129
  %v1131 = vpop.f32.mrb[0].mxu0
  %v1132 = vpop.f32.mrb[0].mxu0
  %v1133 = vadd.f32 0.0, %v1132
  %v1134 = vpop.f32.mrb[0].mxu0
  %1135 = vdwg.mxu0
  %1136 = vmatprep.subr.bf16.mxu0 0
  %1137 = vmatpush1.bf16.msra.mxu0 %v911
  %1138 = vmatprep.subr.bf16.mxu0 0
  %1139 = vmatpush1.bf16.msra.mxu0 %v912
  %1140 = vmatprep.subr.bf16.mxu0 0
  %1141 = vmatpush1.bf16.msra.mxu0 %v913
  %1142 = vmatprep.subr.bf16.mxu0 0
  %1143 = vmatpush1.bf16.msra.mxu0 %v914
  %1144 = vmatprep.subr.bf16.mxu0 0
  %1145 = vmatpush1.bf16.msra.mxu0 %v915
  %1146 = vmatprep.subr.bf16.mxu0 0
  %1147 = vmatpush1.bf16.msra.mxu0 %v916
  %1148 = vmatprep.subr.bf16.mxu0 0
  %1149 = vmatpush1.bf16.msra.mxu0 %v917
  %1150 = vmatprep.subr.bf16.mxu0 0
  %1151 = vmatpush1.bf16.msra.mxu0 %v918
  %1152 = vmatprep.subr.bf16.mxu0 0
  %1153 = vmatpush1.bf16.msra.mxu0 %v919
  %1154 = vmatprep.subr.bf16.mxu0 0
  %1155 = vmatpush1.bf16.msra.mxu0 %v920
  %1156 = vmatprep.subr.bf16.mxu0 0
  %1157 = vmatpush1.bf16.msra.mxu0 %v921
  %1158 = vmatprep.subr.bf16.mxu0 0
  %1159 = vmatpush1.bf16.msra.mxu0 %v922
  %1160 = vmatprep.subr.bf16.mxu0 0
  %1161 = vmatpush1.bf16.msra.mxu0 %v923
  %1162 = vmatprep.subr.bf16.mxu0 0
  %1163 = vmatpush1.bf16.msra.mxu0 %v924
  %1164 = vmatprep.subr.bf16.mxu0 0
  %1165 = vmatpush1.bf16.msra.mxu0 %v925
  %1166 = vmatprep.subr.bf16.mxu0 0
  %1167 = vmatpush1.bf16.msra.mxu0 %v926
  %1168 = vmatprep.mubr.bf16.mxu0 %v466
  %1169 = vmatmul.mubr.bf16.gmra.mrb[0].mxu0 %v465
  %v1170 = vpop.f32.mrb[0].mxu0
  %v1171 = vadd.f32 %v1074, %v1170
  %v1172 = vpop.f32.mrb[0].mxu0
  %v1173 = vpop.f32.mrb[0].mxu0
  %v1174 = vadd.f32 %v1077, %v1173
  %v1175 = vpop.f32.mrb[0].mxu0
  %1176 = vmatprep.mubr.bf16.mxu0 %v475
  %1177 = vmatmul.mubr.bf16.gmra.mrb[0].mxu0 %v474
  %v1178 = vpop.f32.mrb[0].mxu0
  %v1179 = vadd.f32 %v1082, %v1178
  %v1180 = vpop.f32.mrb[0].mxu0
  %v1181 = vpop.f32.mrb[0].mxu0
  %v1182 = vadd.f32 %v1085, %v1181
  %v1183 = vpop.f32.mrb[0].mxu0
  %1184 = vmatprep.mubr.bf16.mxu0 %v484
  %1185 = vmatmul.mubr.bf16.gmra.mrb[0].mxu0 %v483
  %v1186 = vpop.f32.mrb[0].mxu0
  %v1187 = vadd.f32 %v1090, %v1186
  %v1188 = vpop.f32.mrb[0].mxu0
  %v1189 = vpop.f32.mrb[0].mxu0
  %v1190 = vadd.f32 %v1093, %v1189
  %v1191 = vpop.f32.mrb[0].mxu0
  %1192 = vmatprep.mubr.bf16.mxu0 %v493
  %1193 = vmatmul.mubr.bf16.gmra.mrb[0].mxu0 %v492
  %v1194 = vpop.f32.mrb[0].mxu0
  %v1195 = vadd.f32 %v1098, %v1194
  %v1196 = vpop.f32.mrb[0].mxu0
  %v1197 = vpop.f32.mrb[0].mxu0
  %v1198 = vadd.f32 %v1101, %v1197
  %v1199 = vpop.f32.mrb[0].mxu0
  %1200 = vmatprep.mubr.bf16.mxu0 %v502
  %1201 = vmatmul.mubr.bf16.gmra.mrb[0].mxu0 %v501
  %v1202 = vpop.f32.mrb[0].mxu0
  %v1203 = vadd.f32 %v1106, %v1202
  %v1204 = vpop.f32.mrb[0].mxu0
  %v1205 = vpop.f32.mrb[0].mxu0
  %v1206 = vadd.f32 %v1109, %v1205
  %v1207 = vpop.f32.mrb[0].mxu0
  %1208 = vmatprep.mubr.bf16.mxu0 %v511
  %1209 = vmatmul.mubr.bf16.gmra.mrb[0].mxu0 %v510
  %v1210 = vpop.f32.mrb[0].mxu0
  %v1211 = vadd.f32 %v1114, %v1210
  %v1212 = vpop.f32.mrb[0].mxu0
  %v1213 = vpop.f32.mrb[0].mxu0
  %v1214 = vadd.f32 %v1117, %v1213
  %v1215 = vpop.f32.mrb[0].mxu0
  %1216 = vmatprep.mubr.bf16.mxu0 %v520
  %1217 = vmatmul.mubr.bf16.gmra.mrb[0].mxu0 %v519
  %v1218 = vpop.f32.mrb[0].mxu0
  %v1219 = vadd.f32 %v1122, %v1218
  %v1220 = vpop.f32.mrb[0].mxu0
  %v1221 = vpop.f32.mrb[0].mxu0
  %v1222 = vadd.f32 %v1125, %v1221
  %v1223 = vpop.f32.mrb[0].mxu0
  %1224 = vmatprep.mubr.bf16.mxu0 %v529
  %1225 = vmatmul.mubr.bf16.gmra.mrb[0].mxu0 %v528
  %v1226 = vpop.f32.mrb[0].mxu0
  %v1227 = vadd.f32 %v1130, %v1226
  %v1228 = vpop.f32.mrb[0].mxu0
  %v1229 = vpop.f32.mrb[0].mxu0
  %v1230 = vadd.f32 %v1133, %v1229
  %v1231 = vpop.f32.mrb[0].mxu0
  %1232 = vdwg.mxu0
  %1233 = vmatprep.subr.bf16.mxu0 0
  %1234 = vmatpush1.bf16.msra.mxu0 %v927
  %1235 = vmatprep.subr.bf16.mxu0 0
  %1236 = vmatpush1.bf16.msra.mxu0 %v928
  %1237 = vmatprep.subr.bf16.mxu0 0
  %1238 = vmatpush1.bf16.msra.mxu0 %v929
  %1239 = vmatprep.subr.bf16.mxu0 0
  %1240 = vmatpush1.bf16.msra.mxu0 %v930
  %1241 = vmatprep.subr.bf16.mxu0 0
  %1242 = vmatpush1.bf16.msra.mxu0 %v931
  %1243 = vmatprep.subr.bf16.mxu0 0
  %1244 = vmatpush1.bf16.msra.mxu0 %v932
  %1245 = vmatprep.subr.bf16.mxu0 0
  %1246 = vmatpush1.bf16.msra.mxu0 %v933
  %1247 = vmatprep.subr.bf16.mxu0 0
  %1248 = vmatpush1.bf16.msra.mxu0 %v934
  %1249 = vmatprep.subr.bf16.mxu0 0
  %1250 = vmatpush1.bf16.msra.mxu0 %v935
  %1251 = vmatprep.subr.bf16.mxu0 0
  %1252 = vmatpush1.bf16.msra.mxu0 %v936
  %1253 = vmatprep.subr.bf16.mxu0 0
  %1254 = vmatpush1.bf16.msra.mxu0 %v937
  %1255 = vmatprep.subr.bf16.mxu0 0
  %1256 = vmatpush1.bf16.msra.mxu0 %v938
  %1257 = vmatprep.subr.bf16.mxu0 0
  %1258 = vmatpush1.bf16.msra.mxu0 %v939
  %1259 = vmatprep.subr.bf16.mxu0 0
  %1260 = vmatpush1.bf16.msra.mxu0 %v940
  %1261 = vmatprep.subr.bf16.mxu0 0
  %1262 = vmatpush1.bf16.msra.mxu0 %v941
  %1263 = vmatprep.subr.bf16.mxu0 0
  %1264 = vmatpush1.bf16.msra.mxu0 %v942
  %1265 = vmatprep.mubr.bf16.mxu0 %v468
  %1266 = vmatmul.mubr.bf16.gmra.mrb[0].mxu0 %v467
  %v1267 = vpop.f32.mrb[0].mxu0
  %v1268 = vadd.f32 %v1171, %v1267
  %v1269 = vpop.f32.mrb[0].mxu0
  %v1270 = vpop.f32.mrb[0].mxu0
  %v1271 = vadd.f32 %v1174, %v1270
  %v1272 = vpop.f32.mrb[0].mxu0
  %1273 = vmatprep.mubr.bf16.mxu0 %v477
  %1274 = vmatmul.mubr.bf16.gmra.mrb[0].mxu0 %v476
  %v1275 = vpop.f32.mrb[0].mxu0
  %v1276 = vadd.f32 %v1179, %v1275
  %v1277 = vpop.f32.mrb[0].mxu0
  %v1278 = vpop.f32.mrb[0].mxu0
  %v1279 = vadd.f32 %v1182, %v1278
  %v1280 = vpop.f32.mrb[0].mxu0
  %1281 = vmatprep.mubr.bf16.mxu0 %v486
  %1282 = vmatmul.mubr.bf16.gmra.mrb[0].mxu0 %v485
  %v1283 = vpop.f32.mrb[0].mxu0
  %v1284 = vadd.f32 %v1187, %v1283
  %v1285 = vpop.f32.mrb[0].mxu0
  %v1286 = vpop.f32.mrb[0].mxu0
  %v1287 = vadd.f32 %v1190, %v1286
  %v1288 = vpop.f32.mrb[0].mxu0
  %1289 = vmatprep.mubr.bf16.mxu0 %v495
  %1290 = vmatmul.mubr.bf16.gmra.mrb[0].mxu0 %v494
  %v1291 = vpop.f32.mrb[0].mxu0
  %v1292 = vadd.f32 %v1195, %v1291
  %v1293 = vpop.f32.mrb[0].mxu0
  %v1294 = vpop.f32.mrb[0].mxu0
  %v1295 = vadd.f32 %v1198, %v1294
  %v1296 = vpop.f32.mrb[0].mxu0
  %1297 = vmatprep.mubr.bf16.mxu0 %v504
  %1298 = vmatmul.mubr.bf16.gmra.mrb[0].mxu0 %v503
  %v1299 = vpop.f32.mrb[0].mxu0
  %v1300 = vadd.f32 %v1203, %v1299
  %v1301 = vpop.f32.mrb[0].mxu0
  %v1302 = vpop.f32.mrb[0].mxu0
  %v1303 = vadd.f32 %v1206, %v1302
  %v1304 = vpop.f32.mrb[0].mxu0
  %1305 = vmatprep.mubr.bf16.mxu0 %v513
  %1306 = vmatmul.mubr.bf16.gmra.mrb[0].mxu0 %v512
  %v1307 = vpop.f32.mrb[0].mxu0
  %v1308 = vadd.f32 %v1211, %v1307
  %v1309 = vpop.f32.mrb[0].mxu0
  %v1310 = vpop.f32.mrb[0].mxu0
  %v1311 = vadd.f32 %v1214, %v1310
  %v1312 = vpop.f32.mrb[0].mxu0
  %1313 = vmatprep.mubr.bf16.mxu0 %v522
  %1314 = vmatmul.mubr.bf16.gmra.mrb[0].mxu0 %v521
  %v1315 = vpop.f32.mrb[0].mxu0
  %v1316 = vadd.f32 %v1219, %v1315
  %v1317 = vpop.f32.mrb[0].mxu0
  %v1318 = vpop.f32.mrb[0].mxu0
  %v1319 = vadd.f32 %v1222, %v1318
  %v1320 = vpop.f32.mrb[0].mxu0
  %1321 = vmatprep.mubr.bf16.mxu0 %v531
  %1322 = vmatmul.mubr.bf16.gmra.mrb[0].mxu0 %v530
  %v1323 = vpop.f32.mrb[0].mxu0
  %v1324 = vadd.f32 %v1227, %v1323
  %v1325 = vpop.f32.mrb[0].mxu0
  %v1326 = vpop.f32.mrb[0].mxu0
  %v1327 = vadd.f32 %v1230, %v1326
  %v1328 = vpop.f32.mrb[0].mxu0
  %1329 = vdwg.mxu0
  %1330 = vmatprep.subr.bf16.mxu0 0
  %1331 = vmatpush1.bf16.msra.mxu0 %v943
  %1332 = vmatprep.subr.bf16.mxu0 0
  %1333 = vmatpush1.bf16.msra.mxu0 %v944
  %1334 = vmatprep.subr.bf16.mxu0 0
  %1335 = vmatpush1.bf16.msra.mxu0 %v945
  %1336 = vmatprep.subr.bf16.mxu0 0
  %1337 = vmatpush1.bf16.msra.mxu0 %v946
  %1338 = vmatprep.subr.bf16.mxu0 0
  %1339 = vmatpush1.bf16.msra.mxu0 %v947
  %1340 = vmatprep.subr.bf16.mxu0 0
  %1341 = vmatpush1.bf16.msra.mxu0 %v948
  %1342 = vmatprep.subr.bf16.mxu0 0
  %1343 = vmatpush1.bf16.msra.mxu0 %v949
  %1344 = vmatprep.subr.bf16.mxu0 0
  %1345 = vmatpush1.bf16.msra.mxu0 %v950
  %1346 = vmatprep.subr.bf16.mxu0 0
  %1347 = vmatpush1.bf16.msra.mxu0 %v951
  %1348 = vmatprep.subr.bf16.mxu0 0
  %1349 = vmatpush1.bf16.msra.mxu0 %v952
  %1350 = vmatprep.subr.bf16.mxu0 0
  %1351 = vmatpush1.bf16.msra.mxu0 %v953
  %1352 = vmatprep.subr.bf16.mxu0 0
  %1353 = vmatpush1.bf16.msra.mxu0 %v954
  %1354 = vmatprep.subr.bf16.mxu0 0
  %1355 = vmatpush1.bf16.msra.mxu0 %v955
  %1356 = vmatprep.subr.bf16.mxu0 0
  %1357 = vmatpush1.bf16.msra.mxu0 %v956
  %1358 = vmatprep.subr.bf16.mxu0 0
  %1359 = vmatpush1.bf16.msra.mxu0 %v957
  %1360 = vmatprep.subr.bf16.mxu0 0
  %1361 = vmatpush1.bf16.msra.mxu0 %v958
  %1362 = vmatprep.mubr.bf16.mxu0 %v470
  %1363 = vmatmul.mubr.bf16.gmra.mrb[0].mxu0 %v469
  %v1364 = vpop.f32.mrb[0].mxu0
  %v1365 = vadd.f32 %v1268, %v1364
  %v1366 = vpop.f32.mrb[0].mxu0
  %v1367 = vpop.f32.mrb[0].mxu0
  %v1368 = vadd.f32 %v1271, %v1367
  %v1369 = vpop.f32.mrb[0].mxu0
  %1370 = vmatprep.mubr.bf16.mxu0 %v479
  %1371 = vmatmul.mubr.bf16.gmra.mrb[0].mxu0 %v478
  %v1372 = vpop.f32.mrb[0].mxu0
  %v1373 = vadd.f32 %v1276, %v1372
  %v1374 = vpop.f32.mrb[0].mxu0
  %v1375 = vpop.f32.mrb[0].mxu0
  %v1376 = vadd.f32 %v1279, %v1375
  %v1377 = vpop.f32.mrb[0].mxu0
  %1378 = vmatprep.mubr.bf16.mxu0 %v488
  %1379 = vmatmul.mubr.bf16.gmra.mrb[0].mxu0 %v487
  %v1380 = vpop.f32.mrb[0].mxu0
  %v1381 = vadd.f32 %v1284, %v1380
  %v1382 = vpop.f32.mrb[0].mxu0
  %v1383 = vpop.f32.mrb[0].mxu0
  %v1384 = vadd.f32 %v1287, %v1383
  %v1385 = vpop.f32.mrb[0].mxu0
  %1386 = vmatprep.mubr.bf16.mxu0 %v497
  %1387 = vmatmul.mubr.bf16.gmra.mrb[0].mxu0 %v496
  %v1388 = vpop.f32.mrb[0].mxu0
  %v1389 = vadd.f32 %v1292, %v1388
  %v1390 = vpop.f32.mrb[0].mxu0
  %v1391 = vpop.f32.mrb[0].mxu0
  %v1392 = vadd.f32 %v1295, %v1391
  %v1393 = vpop.f32.mrb[0].mxu0
  %1394 = vmatprep.mubr.bf16.mxu0 %v506
  %1395 = vmatmul.mubr.bf16.gmra.mrb[0].mxu0 %v505
  %v1396 = vpop.f32.mrb[0].mxu0
  %v1397 = vadd.f32 %v1300, %v1396
  %v1398 = vpop.f32.mrb[0].mxu0
  %v1399 = vpop.f32.mrb[0].mxu0
  %v1400 = vadd.f32 %v1303, %v1399
  %v1401 = vpop.f32.mrb[0].mxu0
  %1402 = vmatprep.mubr.bf16.mxu0 %v515
  %1403 = vmatmul.mubr.bf16.gmra.mrb[0].mxu0 %v514
  %v1404 = vpop.f32.mrb[0].mxu0
  %v1405 = vadd.f32 %v1308, %v1404
  %v1406 = vpop.f32.mrb[0].mxu0
  %v1407 = vpop.f32.mrb[0].mxu0
  %v1408 = vadd.f32 %v1311, %v1407
  %v1409 = vpop.f32.mrb[0].mxu0
  %1410 = vmatprep.mubr.bf16.mxu0 %v524
  %1411 = vmatmul.mubr.bf16.gmra.mrb[0].mxu0 %v523
  %v1412 = vpop.f32.mrb[0].mxu0
  %v1413 = vadd.f32 %v1316, %v1412
  %v1414 = vpop.f32.mrb[0].mxu0
  %v1415 = vpop.f32.mrb[0].mxu0
  %v1416 = vadd.f32 %v1319, %v1415
  %v1417 = vpop.f32.mrb[0].mxu0
  %1418 = vmatprep.mubr.bf16.mxu0 %v533
  %1419 = vmatmul.mubr.bf16.gmra.mrb[0].mxu0 %v532
  %v1420 = vpop.f32.mrb[0].mxu0
  %v1421 = vadd.f32 %v1324, %v1420
  %v1422 = vpop.f32.mrb[0].mxu0
  %v1423 = vpop.f32.mrb[0].mxu0
  %v1424 = vadd.f32 %v1327, %v1423
  %v1425 = vpop.f32.mrb[0].mxu0
  %1426 = vdwg.mxu0
  %1427 = vmatprep.subr.bf16.mxu0 0
  %1428 = vmatpush1.bf16.msra.mxu0 %v959
  %1429 = vmatprep.subr.bf16.mxu0 0
  %1430 = vmatpush1.bf16.msra.mxu0 %v960
  %1431 = vmatprep.subr.bf16.mxu0 0
  %1432 = vmatpush1.bf16.msra.mxu0 %v961
  %1433 = vmatprep.subr.bf16.mxu0 0
  %1434 = vmatpush1.bf16.msra.mxu0 %v962
  %1435 = vmatprep.subr.bf16.mxu0 0
  %1436 = vmatpush1.bf16.msra.mxu0 %v963
  %1437 = vmatprep.subr.bf16.mxu0 0
  %1438 = vmatpush1.bf16.msra.mxu0 %v964
  %1439 = vmatprep.subr.bf16.mxu0 0
  %1440 = vmatpush1.bf16.msra.mxu0 %v965
  %1441 = vmatprep.subr.bf16.mxu0 0
  %1442 = vmatpush1.bf16.msra.mxu0 %v966
  %1443 = vmatprep.subr.bf16.mxu0 0
  %1444 = vmatpush1.bf16.msra.mxu0 0
  %1445 = vmatprep.subr.bf16.mxu0 0
  %1446 = vmatpush1.bf16.msra.mxu0 0
  %1447 = vmatprep.subr.bf16.mxu0 0
  %1448 = vmatpush1.bf16.msra.mxu0 0
  %1449 = vmatprep.subr.bf16.mxu0 0
  %1450 = vmatpush1.bf16.msra.mxu0 0
  %1451 = vmatprep.subr.bf16.mxu0 0
  %1452 = vmatpush1.bf16.msra.mxu0 0
  %1453 = vmatprep.subr.bf16.mxu0 0
  %1454 = vmatpush1.bf16.msra.mxu0 0
  %1455 = vmatprep.subr.bf16.mxu0 0
  %1456 = vmatpush1.bf16.msra.mxu0 0
  %1457 = vmatprep.subr.bf16.mxu0 0
  %1458 = vmatpush1.bf16.msra.mxu0 0
  %1459 = vmatprep.mubr.bf16.mxu0 0
  %1460 = vmatmul.mubr.bf16.gmra.mrb[0].mxu0 %v471
  %v1461 = vpop.f32.mrb[0].mxu0
  %v1462 = vadd.f32 %v1365, %v1461
  %v1463 = vpop.f32.mrb[0].mxu0
  %v1464 = vpop.f32.mrb[0].mxu0
  %v1465 = vadd.f32 %v1368, %v1464
  %v1466 = vpop.f32.mrb[0].mxu0
  %1467 = vmatprep.mubr.bf16.mxu0 0
  %1468 = vmatmul.mubr.bf16.gmra.mrb[0].mxu0 %v480
  %v1469 = vpop.f32.mrb[0].mxu0
  %v1470 = vadd.f32 %v1373, %v1469
  %v1471 = vpop.f32.mrb[0].mxu0
  %v1472 = vpop.f32.mrb[0].mxu0
  %v1473 = vadd.f32 %v1376, %v1472
  %v1474 = vpop.f32.mrb[0].mxu0
  %1475 = vmatprep.mubr.bf16.mxu0 0
  %1476 = vmatmul.mubr.bf16.gmra.mrb[0].mxu0 %v489
  %v1477 = vpop.f32.mrb[0].mxu0
  %v1478 = vadd.f32 %v1381, %v1477
  %v1479 = vpop.f32.mrb[0].mxu0
  %v1480 = vpop.f32.mrb[0].mxu0
  %v1481 = vadd.f32 %v1384, %v1480
  %v1482 = vpop.f32.mrb[0].mxu0
  %1483 = vmatprep.mubr.bf16.mxu0 0
  %1484 = vmatmul.mubr.bf16.gmra.mrb[0].mxu0 %v498
  %v1485 = vpop.f32.mrb[0].mxu0
  %v1486 = vadd.f32 %v1389, %v1485
  %v1487 = vpop.f32.mrb[0].mxu0
  %v1488 = vpop.f32.mrb[0].mxu0
  %v1489 = vadd.f32 %v1392, %v1488
  %v1490 = vpop.f32.mrb[0].mxu0
  %1491 = vmatprep.mubr.bf16.mxu0 0
  %1492 = vmatmul.mubr.bf16.gmra.mrb[0].mxu0 %v507
  %v1493 = vpop.f32.mrb[0].mxu0
  %v1494 = vadd.f32 %v1397, %v1493
  %v1495 = vpop.f32.mrb[0].mxu0
  %v1496 = vpop.f32.mrb[0].mxu0
  %v1497 = vadd.f32 %v1400, %v1496
  %v1498 = vpop.f32.mrb[0].mxu0
  %1499 = vmatprep.mubr.bf16.mxu0 0
  %1500 = vmatmul.mubr.bf16.gmra.mrb[0].mxu0 %v516
  %v1501 = vpop.f32.mrb[0].mxu0
  %v1502 = vadd.f32 %v1405, %v1501
  %v1503 = vpop.f32.mrb[0].mxu0
  %v1504 = vpop.f32.mrb[0].mxu0
  %v1505 = vadd.f32 %v1408, %v1504
  %v1506 = vpop.f32.mrb[0].mxu0
  %1507 = vmatprep.mubr.bf16.mxu0 0
  %1508 = vmatmul.mubr.bf16.gmra.mrb[0].mxu0 %v525
  %v1509 = vpop.f32.mrb[0].mxu0
  %v1510 = vadd.f32 %v1413, %v1509
  %v1511 = vpop.f32.mrb[0].mxu0
  %v1512 = vpop.f32.mrb[0].mxu0
  %v1513 = vadd.f32 %v1416, %v1512
  %v1514 = vpop.f32.mrb[0].mxu0
  %1515 = vmatprep.mubr.bf16.mxu0 0
  %1516 = vmatmul.mubr.bf16.gmra.mrb[0].mxu0 %v534
  %v1517 = vpop.f32.mrb[0].mxu0
  %v1518 = vadd.f32 %v1421, %v1517
  %v1519 = vpop.f32.mrb[0].mxu0
  %v1520 = vpop.f32.mrb[0].mxu0
  %v1521 = vadd.f32 %v1424, %v1520
  %v1522 = vpop.f32.mrb[0].mxu0
  %1523 = vdwg.mxu0
  %s1524 = scalar_lea.vmem %s1, 576
  %v1525 = vld [vmem:[%s1524] sm:$0xf]
  %v1526 = vld [vmem:[%s1524 + $0x4] sm:$0xf]
  %v1527 = vld [vmem:[%s1524 + $0x8] sm:$0xf]
  %v1528 = vld [vmem:[%s1524 + $0xc] sm:$0xf]
  %v1529 = vld [vmem:[%s1524 + $0x10] sm:$0xf]
  %v1530 = vld [vmem:[%s1524 + $0x14] sm:$0xf]
  %v1531 = vld [vmem:[%s1524 + $0x18] sm:$0xf]
  %v1532 = vld [vmem:[%s1524 + $0x1c] sm:$0xf]
  %v1533 = vld [vmem:[%s1524 + $0x20] sm:$0xf]
  %v1534 = vld [vmem:[%s1524 + $0x24] sm:$0xf]
  %v1535 = vld [vmem:[%s1524 + $0x28] sm:$0xf]
  %v1536 = vld [vmem:[%s1524 + $0x2c] sm:$0xf]
  %v1537 = vld [vmem:[%s1524 + $0x30] sm:$0xf]
  %v1538 = vld [vmem:[%s1524 + $0x34] sm:$0xf]
  %v1539 = vld [vmem:[%s1524 + $0x38] sm:$0xf]
  %v1540 = vld [vmem:[%s1524 + $0x3c] sm:$0xf]
  %v1541 = vld [vmem:[%s1524 + $0x40] sm:$0xf]
  %v1542 = vld [vmem:[%s1524 + $0x44] sm:$0xf]
  %v1543 = vld [vmem:[%s1524 + $0x48] sm:$0xf]
  %v1544 = vld [vmem:[%s1524 + $0x4c] sm:$0xf]
  %v1545 = vld [vmem:[%s1524 + $0x50] sm:$0xf]
  %v1546 = vld [vmem:[%s1524 + $0x54] sm:$0xf]
  %v1547 = vld [vmem:[%s1524 + $0x58] sm:$0xf]
  %v1548 = vld [vmem:[%s1524 + $0x5c] sm:$0xf]
  %v1549 = vld [vmem:[%s1524 + $0x60] sm:$0xf]
  %v1550 = vld [vmem:[%s1524 + $0x64] sm:$0xf]
  %v1551 = vld [vmem:[%s1524 + $0x68] sm:$0xf]
  %v1552 = vld [vmem:[%s1524 + $0x6c] sm:$0xf]
  %v1553 = vld [vmem:[%s1524 + $0x70] sm:$0xf]
  %v1554 = vld [vmem:[%s1524 + $0x74] sm:$0xf]
  %v1555 = vld [vmem:[%s1524 + $0x78] sm:$0xf]
  %v1556 = vld [vmem:[%s1524 + $0x7c] sm:$0xf]
  %v1557 = vld [vmem:[%s1524 + $0x80] sm:$0xf]
  %v1558 = vld [vmem:[%s1524 + $0x84] sm:$0xf]
  %v1559 = vld [vmem:[%s1524 + $0x88] sm:$0xf]
  %v1560 = vld [vmem:[%s1524 + $0x8c] sm:$0xf]
  %v1561 = vld [vmem:[%s1524 + $0x90] sm:$0xf]
  %v1562 = vld [vmem:[%s1524 + $0x94] sm:$0xf]
  %v1563 = vld [vmem:[%s1524 + $0x98] sm:$0xf]
  %v1564 = vld [vmem:[%s1524 + $0x9c] sm:$0xf]
  %v1565 = vld [vmem:[%s1524 + $0xa0] sm:$0xf]
  %v1566 = vld [vmem:[%s1524 + $0xa4] sm:$0xf]
  %v1567 = vld [vmem:[%s1524 + $0xa8] sm:$0xf]
  %v1568 = vld [vmem:[%s1524 + $0xac] sm:$0xf]
  %v1569 = vld [vmem:[%s1524 + $0xb0] sm:$0xf]
  %v1570 = vld [vmem:[%s1524 + $0xb4] sm:$0xf]
  %v1571 = vld [vmem:[%s1524 + $0xb8] sm:$0xf]
  %v1572 = vld [vmem:[%s1524 + $0xbc] sm:$0xf]
  %v1573 = vld [vmem:[%s1524 + $0xc0] sm:$0xf]
  %v1574 = vld [vmem:[%s1524 + $0xc4] sm:$0xf]
  %v1575 = vld [vmem:[%s1524 + $0xc8] sm:$0xf]
  %v1576 = vld [vmem:[%s1524 + $0xcc] sm:$0xf]
  %v1577 = vld [vmem:[%s1524 + $0xd0] sm:$0xf]
  %v1578 = vld [vmem:[%s1524 + $0xd4] sm:$0xf]
  %v1579 = vld [vmem:[%s1524 + $0xd8] sm:$0xf]
  %v1580 = vld [vmem:[%s1524 + $0xdc] sm:$0xf]
  %v1581 = vld [vmem:[%s1524 + $0xe0] sm:$0xf]
  %v1582 = vld [vmem:[%s1524 + $0xe4] sm:$0xf]
  %v1583 = vld [vmem:[%s1524 + $0xe8] sm:$0xf]
  %v1584 = vld [vmem:[%s1524 + $0xec] sm:$0xf]
  %v1585 = vld [vmem:[%s1524 + $0xf0] sm:$0xf]
  %v1586 = vld [vmem:[%s1524 + $0xf4] sm:$0xf]
  %v1587 = vld [vmem:[%s1524 + $0xf8] sm:$0xf]
  %v1588 = vld [vmem:[%s1524 + $0xfc] sm:$0xf]
  %v1589 = vld [vmem:[%s1524 + $0x100] sm:$0xf]
  %v1590 = vld [vmem:[%s1524 + $0x104] sm:$0xf]
  %v1591 = vld [vmem:[%s1524 + $0x108] sm:$0xf]
  %v1592 = vld [vmem:[%s1524 + $0x10c] sm:$0xf]
  %v1593 = vld [vmem:[%s1524 + $0x110] sm:$0xf]
  %v1594 = vld [vmem:[%s1524 + $0x114] sm:$0xf]
  %v1595 = vld [vmem:[%s1524 + $0x118] sm:$0xf]
  %v1596 = vld [vmem:[%s1524 + $0x11c] sm:$0xf]
  %v1597 = vld [vmem:[%s1524 + $0x120] sm:$0xf]
  %v1598 = vld [vmem:[%s1524 + $0x124] sm:$0xf]
  %v1599 = vld [vmem:[%s1524 + $0x128] sm:$0xf]
  %v1600 = vld [vmem:[%s1524 + $0x12c] sm:$0xf]
  %v1601 = vld [vmem:[%s1524 + $0x130] sm:$0xf]
  %v1602 = vld [vmem:[%s1524 + $0x134] sm:$0xf]
  %v1603 = vld [vmem:[%s1524 + $0x138] sm:$0xf]
  %v1604 = vld [vmem:[%s1524 + $0x13c] sm:$0xf]
  %v1605 = vld [vmem:[%s1524 + $0x140] sm:$0xf]
  %v1606 = vld [vmem:[%s1524 + $0x144] sm:$0xf]
  %v1607 = vld [vmem:[%s1524 + $0x148] sm:$0xf]
  %v1608 = vld [vmem:[%s1524 + $0x14c] sm:$0xf]
  %v1609 = vld [vmem:[%s1524 + $0x150] sm:$0xf]
  %v1610 = vld [vmem:[%s1524 + $0x154] sm:$0xf]
  %v1611 = vld [vmem:[%s1524 + $0x158] sm:$0xf]
  %v1612 = vld [vmem:[%s1524 + $0x15c] sm:$0xf]
  %v1613 = vld [vmem:[%s1524 + $0x160] sm:$0xf]
  %v1614 = vld [vmem:[%s1524 + $0x164] sm:$0xf]
  %v1615 = vld [vmem:[%s1524 + $0x168] sm:$0xf]
  %v1616 = vld [vmem:[%s1524 + $0x16c] sm:$0xf]
  %v1617 = vld [vmem:[%s1524 + $0x170] sm:$0xf]
  %v1618 = vld [vmem:[%s1524 + $0x174] sm:$0xf]
  %v1619 = vld [vmem:[%s1524 + $0x178] sm:$0xf]
  %v1620 = vld [vmem:[%s1524 + $0x17c] sm:$0xf]
  %v1621 = vld [vmem:[%s1524 + $0x180] sm:$0xf]
  %v1622 = vld [vmem:[%s1524 + $0x184] sm:$0xf]
  %v1623 = vld [vmem:[%s1524 + $0x188] sm:$0xf]
  %v1624 = vld [vmem:[%s1524 + $0x18c] sm:$0xf]
  %v1625 = vld [vmem:[%s1524 + $0x190] sm:$0xf]
  %v1626 = vld [vmem:[%s1524 + $0x194] sm:$0xf]
  %v1627 = vld [vmem:[%s1524 + $0x198] sm:$0xf]
  %v1628 = vld [vmem:[%s1524 + $0x19c] sm:$0xf]
  %v1629 = vld [vmem:[%s1524 + $0x1a0] sm:$0xf]
  %v1630 = vld [vmem:[%s1524 + $0x1a4] sm:$0xf]
  %v1631 = vld [vmem:[%s1524 + $0x1a8] sm:$0xf]
  %v1632 = vld [vmem:[%s1524 + $0x1ac] sm:$0xf]
  %v1633 = vld [vmem:[%s1524 + $0x1b0] sm:$0xf]
  %v1634 = vld [vmem:[%s1524 + $0x1b4] sm:$0xf]
  %v1635 = vld [vmem:[%s1524 + $0x1b8] sm:$0xf]
  %v1636 = vld [vmem:[%s1524 + $0x1bc] sm:$0xf]
  %v1637 = vld [vmem:[%s1524 + $0x1c0] sm:$0xf]
  %v1638 = vld [vmem:[%s1524 + $0x1c4] sm:$0xf]
  %v1639 = vld [vmem:[%s1524 + $0x1c8] sm:$0xf]
  %v1640 = vld [vmem:[%s1524 + $0x1cc] sm:$0xf]
  %v1641 = vld [vmem:[%s1524 + $0x1d0] sm:$0xf]
  %v1642 = vld [vmem:[%s1524 + $0x1d4] sm:$0xf]
  %v1643 = vld [vmem:[%s1524 + $0x1d8] sm:$0xf]
  %v1644 = vld [vmem:[%s1524 + $0x1dc] sm:$0xf]
  %v1645 = vld [vmem:[%s1524 + $0x1e0] sm:$0xf]
  %v1646 = vld [vmem:[%s1524 + $0x1e4] sm:$0xf]
  %v1647 = vld [vmem:[%s1524 + $0x1e8] sm:$0xf]
  %v1648 = vld [vmem:[%s1524 + $0x1ec] sm:$0xf]
  %v1649 = vld [vmem:[%s1524 + $0x1f0] sm:$0xf]
  %v1650 = vld [vmem:[%s1524 + $0x1f4] sm:$0xf]
  %v1651 = vld [vmem:[%s1524 + $0x1f8] sm:$0xf]
  %v1652 = vld [vmem:[%s1524 + $0x1fc] sm:$0xf]
  %v1653 = vld [vmem:[%s1524 + $0x200] sm:$0xf]
  %v1654 = vld [vmem:[%s1524 + $0x204] sm:$0xf]
  %v1655 = vld [vmem:[%s1524 + $0x208] sm:$0xf]
  %v1656 = vld [vmem:[%s1524 + $0x20c] sm:$0xf]
  %v1657 = vld [vmem:[%s1524 + $0x210] sm:$0xf]
  %v1658 = vld [vmem:[%s1524 + $0x214] sm:$0xf]
  %v1659 = vld [vmem:[%s1524 + $0x218] sm:$0xf]
  %v1660 = vld [vmem:[%s1524 + $0x21c] sm:$0xf]
  %v1661 = vld [vmem:[%s1524 + $0x220] sm:$0xf]
  %v1662 = vld [vmem:[%s1524 + $0x224] sm:$0xf]
  %v1663 = vld [vmem:[%s1524 + $0x228] sm:$0xf]
  %v1664 = vld [vmem:[%s1524 + $0x22c] sm:$0xf]
  %v1665 = vld [vmem:[%s1524 + $0x230] sm:$0xf]
  %v1666 = vld [vmem:[%s1524 + $0x234] sm:$0xf]
  %v1667 = vld [vmem:[%s1524 + $0x238] sm:$0xf]
  %v1668 = vld [vmem:[%s1524 + $0x23c] sm:$0xf]
  %v1813 = vunpack.c.l.b16 %v1525
  %v1814 = vunpack.c.l.b16 %v1526
  %v1815 = vunpack.c.l.b16 %v1527
  %v1816 = vunpack.c.l.b16 %v1528
  %v1817 = vunpack.c.l.b16 %v1529
  %v1818 = vunpack.c.l.b16 %v1530
  %v1819 = vunpack.c.l.b16 %v1531
  %v1820 = vunpack.c.l.b16 %v1532
  %v1821 = vunpack.c.l.b16 %v1533
  %v1822 = vunpack.c.l.b16 %v1534
  %v1823 = vunpack.c.l.b16 %v1535
  %v1824 = vunpack.c.l.b16 %v1536
  %v1825 = vunpack.c.l.b16 %v1537
  %v1826 = vunpack.c.l.b16 %v1538
  %v1827 = vunpack.c.l.b16 %v1539
  %v1828 = vunpack.c.l.b16 %v1540
  %v1829 = vunpack.c.l.b16 %v1541
  %v1830 = vunpack.c.l.b16 %v1542
  %v1831 = vunpack.c.l.b16 %v1543
  %v1832 = vunpack.c.l.b16 %v1544
  %v1833 = vunpack.c.l.b16 %v1545
  %v1834 = vunpack.c.l.b16 %v1546
  %v1835 = vunpack.c.l.b16 %v1547
  %v1836 = vunpack.c.l.b16 %v1548
  %v1837 = vunpack.c.l.b16 %v1549
  %v1838 = vunpack.c.l.b16 %v1550
  %v1839 = vunpack.c.l.b16 %v1551
  %v1840 = vunpack.c.l.b16 %v1552
  %v1841 = vunpack.c.l.b16 %v1553
  %v1842 = vunpack.c.l.b16 %v1554
  %v1843 = vunpack.c.l.b16 %v1555
  %v1844 = vunpack.c.l.b16 %v1556
  %v1845 = vunpack.c.l.b16 %v1557
  %v1846 = vunpack.c.l.b16 %v1558
  %v1847 = vunpack.c.l.b16 %v1559
  %v1848 = vunpack.c.l.b16 %v1560
  %v1849 = vunpack.c.l.b16 %v1561
  %v1850 = vunpack.c.l.b16 %v1562
  %v1851 = vunpack.c.l.b16 %v1563
  %v1852 = vunpack.c.l.b16 %v1564
  %v1853 = vunpack.c.l.b16 %v1565
  %v1854 = vunpack.c.l.b16 %v1566
  %v1855 = vunpack.c.l.b16 %v1567
  %v1856 = vunpack.c.l.b16 %v1568
  %v1857 = vunpack.c.l.b16 %v1569
  %v1858 = vunpack.c.l.b16 %v1570
  %v1859 = vunpack.c.l.b16 %v1571
  %v1860 = vunpack.c.l.b16 %v1572
  %v1861 = vunpack.c.l.b16 %v1573
  %v1862 = vunpack.c.l.b16 %v1574
  %v1863 = vunpack.c.l.b16 %v1575
  %v1864 = vunpack.c.l.b16 %v1576
  %v1865 = vunpack.c.l.b16 %v1577
  %v1866 = vunpack.c.l.b16 %v1578
  %v1867 = vunpack.c.l.b16 %v1579
  %v1868 = vunpack.c.l.b16 %v1580
  %v1869 = vunpack.c.l.b16 %v1581
  %v1870 = vunpack.c.l.b16 %v1582
  %v1871 = vunpack.c.l.b16 %v1583
  %v1872 = vunpack.c.l.b16 %v1584
  %v1873 = vunpack.c.l.b16 %v1585
  %v1874 = vunpack.c.l.b16 %v1586
  %v1875 = vunpack.c.l.b16 %v1587
  %v1876 = vunpack.c.l.b16 %v1588
  %v1877 = vunpack.c.l.b16 %v1589
  %v1878 = vunpack.c.l.b16 %v1590
  %v1879 = vunpack.c.l.b16 %v1591
  %v1880 = vunpack.c.l.b16 %v1592
  %v1881 = vunpack.c.l.b16 %v1593
  %v1882 = vunpack.c.l.b16 %v1594
  %v1883 = vunpack.c.l.b16 %v1595
  %v1884 = vunpack.c.l.b16 %v1596
  %v1885 = vunpack.c.l.b16 %v1597
  %v1886 = vunpack.c.l.b16 %v1598
  %v1887 = vunpack.c.l.b16 %v1599
  %v1888 = vunpack.c.l.b16 %v1600
  %v1889 = vunpack.c.l.b16 %v1601
  %v1890 = vunpack.c.l.b16 %v1602
  %v1891 = vunpack.c.l.b16 %v1603
  %v1892 = vunpack.c.l.b16 %v1604
  %v1893 = vunpack.c.l.b16 %v1605
  %v1894 = vunpack.c.l.b16 %v1606
  %v1895 = vunpack.c.l.b16 %v1607
  %v1896 = vunpack.c.l.b16 %v1608
  %v1897 = vunpack.c.l.b16 %v1609
  %v1898 = vunpack.c.l.b16 %v1610
  %v1899 = vunpack.c.l.b16 %v1611
  %v1900 = vunpack.c.l.b16 %v1612
  %v1901 = vunpack.c.l.b16 %v1613
  %v1902 = vunpack.c.l.b16 %v1614
  %v1903 = vunpack.c.l.b16 %v1615
  %v1904 = vunpack.c.l.b16 %v1616
  %v1905 = vunpack.c.l.b16 %v1617
  %v1906 = vunpack.c.l.b16 %v1618
  %v1907 = vunpack.c.l.b16 %v1619
  %v1908 = vunpack.c.l.b16 %v1620
  %v1909 = vunpack.c.l.b16 %v1621
  %v1910 = vunpack.c.l.b16 %v1622
  %v1911 = vunpack.c.l.b16 %v1623
  %v1912 = vunpack.c.l.b16 %v1624
  %v1913 = vunpack.c.l.b16 %v1625
  %v1914 = vunpack.c.l.b16 %v1626
  %v1915 = vunpack.c.l.b16 %v1627
  %v1916 = vunpack.c.l.b16 %v1628
  %v1917 = vunpack.c.l.b16 %v1629
  %v1918 = vunpack.c.l.b16 %v1630
  %v1919 = vunpack.c.l.b16 %v1631
  %v1920 = vunpack.c.l.b16 %v1632
  %v1921 = vunpack.c.l.b16 %v1633
  %v1922 = vunpack.c.l.b16 %v1634
  %v1923 = vunpack.c.l.b16 %v1635
  %v1924 = vunpack.c.l.b16 %v1636
  %v1925 = vunpack.c.l.b16 %v1637
  %v1926 = vunpack.c.l.b16 %v1638
  %v1927 = vunpack.c.l.b16 %v1639
  %v1928 = vunpack.c.l.b16 %v1640
  %v1929 = vunpack.c.l.b16 %v1641
  %v1930 = vunpack.c.l.b16 %v1642
  %v1931 = vunpack.c.l.b16 %v1643
  %v1932 = vunpack.c.l.b16 %v1644
  %v1933 = vunpack.c.l.b16 %v1645
  %v1934 = vunpack.c.l.b16 %v1646
  %v1935 = vunpack.c.l.b16 %v1647
  %v1936 = vunpack.c.l.b16 %v1648
  %v1937 = vunpack.c.l.b16 %v1649
  %v1938 = vunpack.c.l.b16 %v1650
  %v1939 = vunpack.c.l.b16 %v1651
  %v1940 = vunpack.c.l.b16 %v1652
  %v1941 = vunpack.c.l.b16 %v1653
  %v1942 = vunpack.c.l.b16 %v1654
  %v1943 = vunpack.c.l.b16 %v1655
  %v1944 = vunpack.c.l.b16 %v1656
  %v1945 = vunpack.c.l.b16 %v1657
  %v1946 = vunpack.c.l.b16 %v1658
  %v1947 = vunpack.c.l.b16 %v1659
  %v1948 = vunpack.c.l.b16 %v1660
  %v1949 = vunpack.c.l.b16 %v1661
  %v1950 = vunpack.c.l.b16 %v1662
  %v1951 = vunpack.c.l.b16 %v1663
  %v1952 = vunpack.c.l.b16 %v1664
  %v1953 = vunpack.c.l.b16 %v1665
  %v1954 = vunpack.c.l.b16 %v1666
  %v1955 = vunpack.c.l.b16 %v1667
  %v1956 = vunpack.c.l.b16 %v1668
  %v1957 = vpack.c.b16 %v1814, %v1813
  %v1958 = vpack.c.b16 %v1816, %v1815
  %v1959 = vpack.c.b16 %v1818, %v1817
  %v1960 = vpack.c.b16 %v1820, %v1819
  %v1961 = vpack.c.b16 %v1822, %v1821
  %v1962 = vpack.c.b16 %v1824, %v1823
  %v1963 = vpack.c.b16 %v1826, %v1825
  %v1964 = vpack.c.b16 %v1828, %v1827
  %v1965 = vpack.c.b16 %v1830, %v1829
  %v1966 = vpack.c.b16 %v1832, %v1831
  %v1967 = vpack.c.b16 %v1834, %v1833
  %v1968 = vpack.c.b16 %v1836, %v1835
  %v1969 = vpack.c.b16 %v1838, %v1837
  %v1970 = vpack.c.b16 %v1840, %v1839
  %v1971 = vpack.c.b16 %v1842, %v1841
  %v1972 = vpack.c.b16 %v1844, %v1843
  %v1973 = vpack.c.b16 %v1846, %v1845
  %v1974 = vpack.c.b16 %v1848, %v1847
  %v1975 = vpack.c.b16 %v1850, %v1849
  %v1976 = vpack.c.b16 %v1852, %v1851
  %v1977 = vpack.c.b16 %v1854, %v1853
  %v1978 = vpack.c.b16 %v1856, %v1855
  %v1979 = vpack.c.b16 %v1858, %v1857
  %v1980 = vpack.c.b16 %v1860, %v1859
  %v1981 = vpack.c.b16 %v1862, %v1861
  %v1982 = vpack.c.b16 %v1864, %v1863
  %v1983 = vpack.c.b16 %v1866, %v1865
  %v1984 = vpack.c.b16 %v1868, %v1867
  %v1985 = vpack.c.b16 %v1870, %v1869
  %v1986 = vpack.c.b16 %v1872, %v1871
  %v1987 = vpack.c.b16 %v1874, %v1873
  %v1988 = vpack.c.b16 %v1876, %v1875
  %v1989 = vpack.c.b16 %v1878, %v1877
  %v1990 = vpack.c.b16 %v1880, %v1879
  %v1991 = vpack.c.b16 %v1882, %v1881
  %v1992 = vpack.c.b16 %v1884, %v1883
  %v1993 = vpack.c.b16 %v1886, %v1885
  %v1994 = vpack.c.b16 %v1888, %v1887
  %v1995 = vpack.c.b16 %v1890, %v1889
  %v1996 = vpack.c.b16 %v1892, %v1891
  %v1997 = vpack.c.b16 %v1894, %v1893
  %v1998 = vpack.c.b16 %v1896, %v1895
  %v1999 = vpack.c.b16 %v1898, %v1897
  %v2000 = vpack.c.b16 %v1900, %v1899
  %v2001 = vpack.c.b16 %v1902, %v1901
  %v2002 = vpack.c.b16 %v1904, %v1903
  %v2003 = vpack.c.b16 %v1906, %v1905
  %v2004 = vpack.c.b16 %v1908, %v1907
  %v2005 = vpack.c.b16 %v1910, %v1909
  %v2006 = vpack.c.b16 %v1912, %v1911
  %v2007 = vpack.c.b16 %v1914, %v1913
  %v2008 = vpack.c.b16 %v1916, %v1915
  %v2009 = vpack.c.b16 %v1918, %v1917
  %v2010 = vpack.c.b16 %v1920, %v1919
  %v2011 = vpack.c.b16 %v1922, %v1921
  %v2012 = vpack.c.b16 %v1924, %v1923
  %v2013 = vpack.c.b16 %v1926, %v1925
  %v2014 = vpack.c.b16 %v1928, %v1927
  %v2015 = vpack.c.b16 %v1930, %v1929
  %v2016 = vpack.c.b16 %v1932, %v1931
  %v2017 = vpack.c.b16 %v1934, %v1933
  %v2018 = vpack.c.b16 %v1936, %v1935
  %v2019 = vpack.c.b16 %v1938, %v1937
  %v2020 = vpack.c.b16 %v1940, %v1939
  %v2021 = vpack.c.b16 %v1942, %v1941
  %v2022 = vpack.c.b16 %v1944, %v1943
  %v2023 = vpack.c.b16 %v1946, %v1945
  %v2024 = vpack.c.b16 %v1948, %v1947
  %v2025 = vpack.c.b16 %v1950, %v1949
  %v2026 = vpack.c.b16 %v1952, %v1951
  %v2027 = vpack.c.b16 %v1954, %v1953
  %v2028 = vpack.c.b16 %v1956, %v1955
  %2101 = vmatprep.subr.bf16.mxu0 0
  %2102 = vmatpush1.bf16.msra.mxu0 %v1957
  %2103 = vmatprep.subr.bf16.mxu0 0
  %2104 = vmatpush1.bf16.msra.mxu0 %v1958
  %2105 = vmatprep.subr.bf16.mxu0 0
  %2106 = vmatpush1.bf16.msra.mxu0 %v1959
  %2107 = vmatprep.subr.bf16.mxu0 0
  %2108 = vmatpush1.bf16.msra.mxu0 %v1960
  %2109 = vmatprep.subr.bf16.mxu0 0
  %2110 = vmatpush1.bf16.msra.mxu0 %v1961
  %2111 = vmatprep.subr.bf16.mxu0 0
  %2112 = vmatpush1.bf16.msra.mxu0 %v1962
  %2113 = vmatprep.subr.bf16.mxu0 0
  %2114 = vmatpush1.bf16.msra.mxu0 %v1963
  %2115 = vmatprep.subr.bf16.mxu0 0
  %2116 = vmatpush1.bf16.msra.mxu0 %v1964
  %2117 = vmatprep.subr.bf16.mxu0 0
  %2118 = vmatpush1.bf16.msra.mxu0 %v1965
  %2119 = vmatprep.subr.bf16.mxu0 0
  %2120 = vmatpush1.bf16.msra.mxu0 %v1966
  %2121 = vmatprep.subr.bf16.mxu0 0
  %2122 = vmatpush1.bf16.msra.mxu0 %v1967
  %2123 = vmatprep.subr.bf16.mxu0 0
  %2124 = vmatpush1.bf16.msra.mxu0 %v1968
  %2125 = vmatprep.subr.bf16.mxu0 0
  %2126 = vmatpush1.bf16.msra.mxu0 %v1969
  %2127 = vmatprep.subr.bf16.mxu0 0
  %2128 = vmatpush1.bf16.msra.mxu0 %v1970
  %2129 = vmatprep.subr.bf16.mxu0 0
  %2130 = vmatpush1.bf16.msra.mxu0 %v1971
  %2131 = vmatprep.subr.bf16.mxu0 0
  %2132 = vmatpush1.bf16.msra.mxu0 %v1972
  %2133 = vmatprep.mubr.bf16.mxu0 %v464
  %2134 = vmatmul.mubr.bf16.gmra.mrb[0].mxu0 %v463
  %v2135 = vpop.f32.mrb[0].mxu0
  %v2136 = vadd.f32 0.0, %v2135
  %v2137 = vpop.f32.mrb[0].mxu0
  %v2138 = vpop.f32.mrb[0].mxu0
  %v2139 = vadd.f32 0.0, %v2138
  %v2140 = vpop.f32.mrb[0].mxu0
  %2141 = vmatprep.mubr.bf16.mxu0 %v473
  %2142 = vmatmul.mubr.bf16.gmra.mrb[0].mxu0 %v472
  %v2143 = vpop.f32.mrb[0].mxu0
  %v2144 = vadd.f32 0.0, %v2143
  %v2145 = vpop.f32.mrb[0].mxu0
  %v2146 = vpop.f32.mrb[0].mxu0
  %v2147 = vadd.f32 0.0, %v2146
  %v2148 = vpop.f32.mrb[0].mxu0
  %2149 = vmatprep.mubr.bf16.mxu0 %v482
  %2150 = vmatmul.mubr.bf16.gmra.mrb[0].mxu0 %v481
  %v2151 = vpop.f32.mrb[0].mxu0
  %v2152 = vadd.f32 0.0, %v2151
  %v2153 = vpop.f32.mrb[0].mxu0
  %v2154 = vpop.f32.mrb[0].mxu0
  %v2155 = vadd.f32 0.0, %v2154
  %v2156 = vpop.f32.mrb[0].mxu0
  %2157 = vmatprep.mubr.bf16.mxu0 %v491
  %2158 = vmatmul.mubr.bf16.gmra.mrb[0].mxu0 %v490
  %v2159 = vpop.f32.mrb[0].mxu0
  %v2160 = vadd.f32 0.0, %v2159
  %v2161 = vpop.f32.mrb[0].mxu0
  %v2162 = vpop.f32.mrb[0].mxu0
  %v2163 = vadd.f32 0.0, %v2162
  %v2164 = vpop.f32.mrb[0].mxu0
  %2165 = vmatprep.mubr.bf16.mxu0 %v500
  %2166 = vmatmul.mubr.bf16.gmra.mrb[0].mxu0 %v499
  %v2167 = vpop.f32.mrb[0].mxu0
  %v2168 = vadd.f32 0.0, %v2167
  %v2169 = vpop.f32.mrb[0].mxu0
  %v2170 = vpop.f32.mrb[0].mxu0
  %v2171 = vadd.f32 0.0, %v2170
  %v2172 = vpop.f32.mrb[0].mxu0
  %2173 = vmatprep.mubr.bf16.mxu0 %v509
  %2174 = vmatmul.mubr.bf16.gmra.mrb[0].mxu0 %v508
  %v2175 = vpop.f32.mrb[0].mxu0
  %v2176 = vadd.f32 0.0, %v2175
  %v2177 = vpop.f32.mrb[0].mxu0
  %v2178 = vpop.f32.mrb[0].mxu0
  %v2179 = vadd.f32 0.0, %v2178
  %v2180 = vpop.f32.mrb[0].mxu0
  %2181 = vmatprep.mubr.bf16.mxu0 %v518
  %2182 = vmatmul.mubr.bf16.gmra.mrb[0].mxu0 %v517
  %v2183 = vpop.f32.mrb[0].mxu0
  %v2184 = vadd.f32 0.0, %v2183
  %v2185 = vpop.f32.mrb[0].mxu0
  %v2186 = vpop.f32.mrb[0].mxu0
  %v2187 = vadd.f32 0.0, %v2186
  %v2188 = vpop.f32.mrb[0].mxu0
  %2189 = vmatprep.mubr.bf16.mxu0 %v527
  %2190 = vmatmul.mubr.bf16.gmra.mrb[0].mxu0 %v526
  %v2191 = vpop.f32.mrb[0].mxu0
  %v2192 = vadd.f32 0.0, %v2191
  %v2193 = vpop.f32.mrb[0].mxu0
  %v2194 = vpop.f32.mrb[0].mxu0
  %v2195 = vadd.f32 0.0, %v2194
  %v2196 = vpop.f32.mrb[0].mxu0
  %2197 = vdwg.mxu0
  %2198 = vmatprep.subr.bf16.mxu0 0
  %2199 = vmatpush1.bf16.msra.mxu0 %v1973
  %2200 = vmatprep.subr.bf16.mxu0 0
  %2201 = vmatpush1.bf16.msra.mxu0 %v1974
  %2202 = vmatprep.subr.bf16.mxu0 0
  %2203 = vmatpush1.bf16.msra.mxu0 %v1975
  %2204 = vmatprep.subr.bf16.mxu0 0
  %2205 = vmatpush1.bf16.msra.mxu0 %v1976
  %2206 = vmatprep.subr.bf16.mxu0 0
  %2207 = vmatpush1.bf16.msra.mxu0 %v1977
  %2208 = vmatprep.subr.bf16.mxu0 0
  %2209 = vmatpush1.bf16.msra.mxu0 %v1978
  %2210 = vmatprep.subr.bf16.mxu0 0
  %2211 = vmatpush1.bf16.msra.mxu0 %v1979
  %2212 = vmatprep.subr.bf16.mxu0 0
  %2213 = vmatpush1.bf16.msra.mxu0 %v1980
  %2214 = vmatprep.subr.bf16.mxu0 0
  %2215 = vmatpush1.bf16.msra.mxu0 %v1981
  %2216 = vmatprep.subr.bf16.mxu0 0
  %2217 = vmatpush1.bf16.msra.mxu0 %v1982
  %2218 = vmatprep.subr.bf16.mxu0 0
  %2219 = vmatpush1.bf16.msra.mxu0 %v1983
  %2220 = vmatprep.subr.bf16.mxu0 0
  %2221 = vmatpush1.bf16.msra.mxu0 %v1984
  %2222 = vmatprep.subr.bf16.mxu0 0
  %2223 = vmatpush1.bf16.msra.mxu0 %v1985
  %2224 = vmatprep.subr.bf16.mxu0 0
  %2225 = vmatpush1.bf16.msra.mxu0 %v1986
  %2226 = vmatprep.subr.bf16.mxu0 0
  %2227 = vmatpush1.bf16.msra.mxu0 %v1987
  %2228 = vmatprep.subr.bf16.mxu0 0
  %2229 = vmatpush1.bf16.msra.mxu0 %v1988
  %2230 = vmatprep.mubr.bf16.mxu0 %v466
  %2231 = vmatmul.mubr.bf16.gmra.mrb[0].mxu0 %v465
  %v2232 = vpop.f32.mrb[0].mxu0
  %v2233 = vadd.f32 %v2136, %v2232
  %v2234 = vpop.f32.mrb[0].mxu0
  %v2235 = vpop.f32.mrb[0].mxu0
  %v2236 = vadd.f32 %v2139, %v2235
  %v2237 = vpop.f32.mrb[0].mxu0
  %2238 = vmatprep.mubr.bf16.mxu0 %v475
  %2239 = vmatmul.mubr.bf16.gmra.mrb[0].mxu0 %v474
  %v2240 = vpop.f32.mrb[0].mxu0
  %v2241 = vadd.f32 %v2144, %v2240
  %v2242 = vpop.f32.mrb[0].mxu0
  %v2243 = vpop.f32.mrb[0].mxu0
  %v2244 = vadd.f32 %v2147, %v2243
  %v2245 = vpop.f32.mrb[0].mxu0
  %2246 = vmatprep.mubr.bf16.mxu0 %v484
  %2247 = vmatmul.mubr.bf16.gmra.mrb[0].mxu0 %v483
  %v2248 = vpop.f32.mrb[0].mxu0
  %v2249 = vadd.f32 %v2152, %v2248
  %v2250 = vpop.f32.mrb[0].mxu0
  %v2251 = vpop.f32.mrb[0].mxu0
  %v2252 = vadd.f32 %v2155, %v2251
  %v2253 = vpop.f32.mrb[0].mxu0
  %2254 = vmatprep.mubr.bf16.mxu0 %v493
  %2255 = vmatmul.mubr.bf16.gmra.mrb[0].mxu0 %v492
  %v2256 = vpop.f32.mrb[0].mxu0
  %v2257 = vadd.f32 %v2160, %v2256
  %v2258 = vpop.f32.mrb[0].mxu0
  %v2259 = vpop.f32.mrb[0].mxu0
  %v2260 = vadd.f32 %v2163, %v2259
  %v2261 = vpop.f32.mrb[0].mxu0
  %2262 = vmatprep.mubr.bf16.mxu0 %v502
  %2263 = vmatmul.mubr.bf16.gmra.mrb[0].mxu0 %v501
  %v2264 = vpop.f32.mrb[0].mxu0
  %v2265 = vadd.f32 %v2168, %v2264
  %v2266 = vpop.f32.mrb[0].mxu0
  %v2267 = vpop.f32.mrb[0].mxu0
  %v2268 = vadd.f32 %v2171, %v2267
  %v2269 = vpop.f32.mrb[0].mxu0
  %2270 = vmatprep.mubr.bf16.mxu0 %v511
  %2271 = vmatmul.mubr.bf16.gmra.mrb[0].mxu0 %v510
  %v2272 = vpop.f32.mrb[0].mxu0
  %v2273 = vadd.f32 %v2176, %v2272
  %v2274 = vpop.f32.mrb[0].mxu0
  %v2275 = vpop.f32.mrb[0].mxu0
  %v2276 = vadd.f32 %v2179, %v2275
  %v2277 = vpop.f32.mrb[0].mxu0
  %2278 = vmatprep.mubr.bf16.mxu0 %v520
  %2279 = vmatmul.mubr.bf16.gmra.mrb[0].mxu0 %v519
  %v2280 = vpop.f32.mrb[0].mxu0
  %v2281 = vadd.f32 %v2184, %v2280
  %v2282 = vpop.f32.mrb[0].mxu0
  %v2283 = vpop.f32.mrb[0].mxu0
  %v2284 = vadd.f32 %v2187, %v2283
  %v2285 = vpop.f32.mrb[0].mxu0
  %2286 = vmatprep.mubr.bf16.mxu0 %v529
  %2287 = vmatmul.mubr.bf16.gmra.mrb[0].mxu0 %v528
  %v2288 = vpop.f32.mrb[0].mxu0
  %v2289 = vadd.f32 %v2192, %v2288
  %v2290 = vpop.f32.mrb[0].mxu0
  %v2291 = vpop.f32.mrb[0].mxu0
  %v2292 = vadd.f32 %v2195, %v2291
  %v2293 = vpop.f32.mrb[0].mxu0
  %2294 = vdwg.mxu0
  %2295 = vmatprep.subr.bf16.mxu0 0
  %2296 = vmatpush1.bf16.msra.mxu0 %v1989
  %2297 = vmatprep.subr.bf16.mxu0 0
  %2298 = vmatpush1.bf16.msra.mxu0 %v1990
  %2299 = vmatprep.subr.bf16.mxu0 0
  %2300 = vmatpush1.bf16.msra.mxu0 %v1991
  %2301 = vmatprep.subr.bf16.mxu0 0
  %2302 = vmatpush1.bf16.msra.mxu0 %v1992
  %2303 = vmatprep.subr.bf16.mxu0 0
  %2304 = vmatpush1.bf16.msra.mxu0 %v1993
  %2305 = vmatprep.subr.bf16.mxu0 0
  %2306 = vmatpush1.bf16.msra.mxu0 %v1994
  %2307 = vmatprep.subr.bf16.mxu0 0
  %2308 = vmatpush1.bf16.msra.mxu0 %v1995
  %2309 = vmatprep.subr.bf16.mxu0 0
  %2310 = vmatpush1.bf16.msra.mxu0 %v1996
  %2311 = vmatprep.subr.bf16.mxu0 0
  %2312 = vmatpush1.bf16.msra.mxu0 %v1997
  %2313 = vmatprep.subr.bf16.mxu0 0
  %2314 = vmatpush1.bf16.msra.mxu0 %v1998
  %2315 = vmatprep.subr.bf16.mxu0 0
  %2316 = vmatpush1.bf16.msra.mxu0 %v1999
  %2317 = vmatprep.subr.bf16.mxu0 0
  %2318 = vmatpush1.bf16.msra.mxu0 %v2000
  %2319 = vmatprep.subr.bf16.mxu0 0
  %2320 = vmatpush1.bf16.msra.mxu0 %v2001
  %2321 = vmatprep.subr.bf16.mxu0 0
  %2322 = vmatpush1.bf16.msra.mxu0 %v2002
  %2323 = vmatprep.subr.bf16.mxu0 0
  %2324 = vmatpush1.bf16.msra.mxu0 %v2003
  %2325 = vmatprep.subr.bf16.mxu0 0
  %2326 = vmatpush1.bf16.msra.mxu0 %v2004
  %2327 = vmatprep.mubr.bf16.mxu0 %v468
  %2328 = vmatmul.mubr.bf16.gmra.mrb[0].mxu0 %v467
  %v2329 = vpop.f32.mrb[0].mxu0
  %v2330 = vadd.f32 %v2233, %v2329
  %v2331 = vpop.f32.mrb[0].mxu0
  %v2332 = vpop.f32.mrb[0].mxu0
  %v2333 = vadd.f32 %v2236, %v2332
  %v2334 = vpop.f32.mrb[0].mxu0
  %2335 = vmatprep.mubr.bf16.mxu0 %v477
  %2336 = vmatmul.mubr.bf16.gmra.mrb[0].mxu0 %v476
  %v2337 = vpop.f32.mrb[0].mxu0
  %v2338 = vadd.f32 %v2241, %v2337
  %v2339 = vpop.f32.mrb[0].mxu0
  %v2340 = vpop.f32.mrb[0].mxu0
  %v2341 = vadd.f32 %v2244, %v2340
  %v2342 = vpop.f32.mrb[0].mxu0
  %2343 = vmatprep.mubr.bf16.mxu0 %v486
  %2344 = vmatmul.mubr.bf16.gmra.mrb[0].mxu0 %v485
  %v2345 = vpop.f32.mrb[0].mxu0
  %v2346 = vadd.f32 %v2249, %v2345
  %v2347 = vpop.f32.mrb[0].mxu0
  %v2348 = vpop.f32.mrb[0].mxu0
  %v2349 = vadd.f32 %v2252, %v2348
  %v2350 = vpop.f32.mrb[0].mxu0
  %2351 = vmatprep.mubr.bf16.mxu0 %v495
  %2352 = vmatmul.mubr.bf16.gmra.mrb[0].mxu0 %v494
  %v2353 = vpop.f32.mrb[0].mxu0
  %v2354 = vadd.f32 %v2257, %v2353
  %v2355 = vpop.f32.mrb[0].mxu0
  %v2356 = vpop.f32.mrb[0].mxu0
  %v2357 = vadd.f32 %v2260, %v2356
  %v2358 = vpop.f32.mrb[0].mxu0
  %2359 = vmatprep.mubr.bf16.mxu0 %v504
  %2360 = vmatmul.mubr.bf16.gmra.mrb[0].mxu0 %v503
  %v2361 = vpop.f32.mrb[0].mxu0
  %v2362 = vadd.f32 %v2265, %v2361
  %v2363 = vpop.f32.mrb[0].mxu0
  %v2364 = vpop.f32.mrb[0].mxu0
  %v2365 = vadd.f32 %v2268, %v2364
  %v2366 = vpop.f32.mrb[0].mxu0
  %2367 = vmatprep.mubr.bf16.mxu0 %v513
  %2368 = vmatmul.mubr.bf16.gmra.mrb[0].mxu0 %v512
  %v2369 = vpop.f32.mrb[0].mxu0
  %v2370 = vadd.f32 %v2273, %v2369
  %v2371 = vpop.f32.mrb[0].mxu0
  %v2372 = vpop.f32.mrb[0].mxu0
  %v2373 = vadd.f32 %v2276, %v2372
  %v2374 = vpop.f32.mrb[0].mxu0
  %2375 = vmatprep.mubr.bf16.mxu0 %v522
  %2376 = vmatmul.mubr.bf16.gmra.mrb[0].mxu0 %v521
  %v2377 = vpop.f32.mrb[0].mxu0
  %v2378 = vadd.f32 %v2281, %v2377
  %v2379 = vpop.f32.mrb[0].mxu0
  %v2380 = vpop.f32.mrb[0].mxu0
  %v2381 = vadd.f32 %v2284, %v2380
  %v2382 = vpop.f32.mrb[0].mxu0
  %2383 = vmatprep.mubr.bf16.mxu0 %v531
  %2384 = vmatmul.mubr.bf16.gmra.mrb[0].mxu0 %v530
  %v2385 = vpop.f32.mrb[0].mxu0
  %v2386 = vadd.f32 %v2289, %v2385
  %v2387 = vpop.f32.mrb[0].mxu0
  %v2388 = vpop.f32.mrb[0].mxu0
  %v2389 = vadd.f32 %v2292, %v2388
  %v2390 = vpop.f32.mrb[0].mxu0
  %2391 = vdwg.mxu0
  %2392 = vmatprep.subr.bf16.mxu0 0
  %2393 = vmatpush1.bf16.msra.mxu0 %v2005
  %2394 = vmatprep.subr.bf16.mxu0 0
  %2395 = vmatpush1.bf16.msra.mxu0 %v2006
  %2396 = vmatprep.subr.bf16.mxu0 0
  %2397 = vmatpush1.bf16.msra.mxu0 %v2007
  %2398 = vmatprep.subr.bf16.mxu0 0
  %2399 = vmatpush1.bf16.msra.mxu0 %v2008
  %2400 = vmatprep.subr.bf16.mxu0 0
  %2401 = vmatpush1.bf16.msra.mxu0 %v2009
  %2402 = vmatprep.subr.bf16.mxu0 0
  %2403 = vmatpush1.bf16.msra.mxu0 %v2010
  %2404 = vmatprep.subr.bf16.mxu0 0
  %2405 = vmatpush1.bf16.msra.mxu0 %v2011
  %2406 = vmatprep.subr.bf16.mxu0 0
  %2407 = vmatpush1.bf16.msra.mxu0 %v2012
  %2408 = vmatprep.subr.bf16.mxu0 0
  %2409 = vmatpush1.bf16.msra.mxu0 %v2013
  %2410 = vmatprep.subr.bf16.mxu0 0
  %2411 = vmatpush1.bf16.msra.mxu0 %v2014
  %2412 = vmatprep.subr.bf16.mxu0 0
  %2413 = vmatpush1.bf16.msra.mxu0 %v2015
  %2414 = vmatprep.subr.bf16.mxu0 0
  %2415 = vmatpush1.bf16.msra.mxu0 %v2016
  %2416 = vmatprep.subr.bf16.mxu0 0
  %2417 = vmatpush1.bf16.msra.mxu0 %v2017
  %2418 = vmatprep.subr.bf16.mxu0 0
  %2419 = vmatpush1.bf16.msra.mxu0 %v2018
  %2420 = vmatprep.subr.bf16.mxu0 0
  %2421 = vmatpush1.bf16.msra.mxu0 %v2019
  %2422 = vmatprep.subr.bf16.mxu0 0
  %2423 = vmatpush1.bf16.msra.mxu0 %v2020
  %2424 = vmatprep.mubr.bf16.mxu0 %v470
  %2425 = vmatmul.mubr.bf16.gmra.mrb[0].mxu0 %v469
  %v2426 = vpop.f32.mrb[0].mxu0
  %v2427 = vadd.f32 %v2330, %v2426
  %v2428 = vpop.f32.mrb[0].mxu0
  %v2429 = vpop.f32.mrb[0].mxu0
  %v2430 = vadd.f32 %v2333, %v2429
  %v2431 = vpop.f32.mrb[0].mxu0
  %2432 = vmatprep.mubr.bf16.mxu0 %v479
  %2433 = vmatmul.mubr.bf16.gmra.mrb[0].mxu0 %v478
  %v2434 = vpop.f32.mrb[0].mxu0
  %v2435 = vadd.f32 %v2338, %v2434
  %v2436 = vpop.f32.mrb[0].mxu0
  %v2437 = vpop.f32.mrb[0].mxu0
  %v2438 = vadd.f32 %v2341, %v2437
  %v2439 = vpop.f32.mrb[0].mxu0
  %2440 = vmatprep.mubr.bf16.mxu0 %v488
  %2441 = vmatmul.mubr.bf16.gmra.mrb[0].mxu0 %v487
  %v2442 = vpop.f32.mrb[0].mxu0
  %v2443 = vadd.f32 %v2346, %v2442
  %v2444 = vpop.f32.mrb[0].mxu0
  %v2445 = vpop.f32.mrb[0].mxu0
  %v2446 = vadd.f32 %v2349, %v2445
  %v2447 = vpop.f32.mrb[0].mxu0
  %2448 = vmatprep.mubr.bf16.mxu0 %v497
  %2449 = vmatmul.mubr.bf16.gmra.mrb[0].mxu0 %v496
  %v2450 = vpop.f32.mrb[0].mxu0
  %v2451 = vadd.f32 %v2354, %v2450
  %v2452 = vpop.f32.mrb[0].mxu0
  %v2453 = vpop.f32.mrb[0].mxu0
  %v2454 = vadd.f32 %v2357, %v2453
  %v2455 = vpop.f32.mrb[0].mxu0
  %2456 = vmatprep.mubr.bf16.mxu0 %v506
  %2457 = vmatmul.mubr.bf16.gmra.mrb[0].mxu0 %v505
  %v2458 = vpop.f32.mrb[0].mxu0
  %v2459 = vadd.f32 %v2362, %v2458
  %v2460 = vpop.f32.mrb[0].mxu0
  %v2461 = vpop.f32.mrb[0].mxu0
  %v2462 = vadd.f32 %v2365, %v2461
  %v2463 = vpop.f32.mrb[0].mxu0
  %2464 = vmatprep.mubr.bf16.mxu0 %v515
  %2465 = vmatmul.mubr.bf16.gmra.mrb[0].mxu0 %v514
  %v2466 = vpop.f32.mrb[0].mxu0
  %v2467 = vadd.f32 %v2370, %v2466
  %v2468 = vpop.f32.mrb[0].mxu0
  %v2469 = vpop.f32.mrb[0].mxu0
  %v2470 = vadd.f32 %v2373, %v2469
  %v2471 = vpop.f32.mrb[0].mxu0
  %2472 = vmatprep.mubr.bf16.mxu0 %v524
  %2473 = vmatmul.mubr.bf16.gmra.mrb[0].mxu0 %v523
  %v2474 = vpop.f32.mrb[0].mxu0
  %v2475 = vadd.f32 %v2378, %v2474
  %v2476 = vpop.f32.mrb[0].mxu0
  %v2477 = vpop.f32.mrb[0].mxu0
  %v2478 = vadd.f32 %v2381, %v2477
  %v2479 = vpop.f32.mrb[0].mxu0
  %2480 = vmatprep.mubr.bf16.mxu0 %v533
  %2481 = vmatmul.mubr.bf16.gmra.mrb[0].mxu0 %v532
  %v2482 = vpop.f32.mrb[0].mxu0
  %v2483 = vadd.f32 %v2386, %v2482
  %v2484 = vpop.f32.mrb[0].mxu0
  %v2485 = vpop.f32.mrb[0].mxu0
  %v2486 = vadd.f32 %v2389, %v2485
  %v2487 = vpop.f32.mrb[0].mxu0
  %2488 = vdwg.mxu0
  %2489 = vmatprep.subr.bf16.mxu0 0
  %2490 = vmatpush1.bf16.msra.mxu0 %v2021
  %2491 = vmatprep.subr.bf16.mxu0 0
  %2492 = vmatpush1.bf16.msra.mxu0 %v2022
  %2493 = vmatprep.subr.bf16.mxu0 0
  %2494 = vmatpush1.bf16.msra.mxu0 %v2023
  %2495 = vmatprep.subr.bf16.mxu0 0
  %2496 = vmatpush1.bf16.msra.mxu0 %v2024
  %2497 = vmatprep.subr.bf16.mxu0 0
  %2498 = vmatpush1.bf16.msra.mxu0 %v2025
  %2499 = vmatprep.subr.bf16.mxu0 0
  %2500 = vmatpush1.bf16.msra.mxu0 %v2026
  %2501 = vmatprep.subr.bf16.mxu0 0
  %2502 = vmatpush1.bf16.msra.mxu0 %v2027
  %2503 = vmatprep.subr.bf16.mxu0 0
  %2504 = vmatpush1.bf16.msra.mxu0 %v2028
  %2505 = vmatprep.subr.bf16.mxu0 0
  %2506 = vmatpush1.bf16.msra.mxu0 0
  %2507 = vmatprep.subr.bf16.mxu0 0
  %2508 = vmatpush1.bf16.msra.mxu0 0
  %2509 = vmatprep.subr.bf16.mxu0 0
  %2510 = vmatpush1.bf16.msra.mxu0 0
  %2511 = vmatprep.subr.bf16.mxu0 0
  %2512 = vmatpush1.bf16.msra.mxu0 0
  %2513 = vmatprep.subr.bf16.mxu0 0
  %2514 = vmatpush1.bf16.msra.mxu0 0
  %2515 = vmatprep.subr.bf16.mxu0 0
  %2516 = vmatpush1.bf16.msra.mxu0 0
  %2517 = vmatprep.subr.bf16.mxu0 0
  %2518 = vmatpush1.bf16.msra.mxu0 0
  %2519 = vmatprep.subr.bf16.mxu0 0
  %2520 = vmatpush1.bf16.msra.mxu0 0
  %2521 = vmatprep.mubr.bf16.mxu0 0
  %2522 = vmatmul.mubr.bf16.gmra.mrb[0].mxu0 %v471
  %v2523 = vpop.f32.mrb[0].mxu0
  %v2524 = vadd.f32 %v2427, %v2523
  %v2525 = vpop.f32.mrb[0].mxu0
  %v2526 = vpop.f32.mrb[0].mxu0
  %v2527 = vadd.f32 %v2430, %v2526
  %v2528 = vpop.f32.mrb[0].mxu0
  %2529 = vmatprep.mubr.bf16.mxu0 0
  %2530 = vmatmul.mubr.bf16.gmra.mrb[0].mxu0 %v480
  %v2531 = vpop.f32.mrb[0].mxu0
  %v2532 = vadd.f32 %v2435, %v2531
  %v2533 = vpop.f32.mrb[0].mxu0
  %v2534 = vpop.f32.mrb[0].mxu0
  %v2535 = vadd.f32 %v2438, %v2534
  %v2536 = vpop.f32.mrb[0].mxu0
  %2537 = vmatprep.mubr.bf16.mxu0 0
  %2538 = vmatmul.mubr.bf16.gmra.mrb[0].mxu0 %v489
  %v2539 = vpop.f32.mrb[0].mxu0
  %v2540 = vadd.f32 %v2443, %v2539
  %v2541 = vpop.f32.mrb[0].mxu0
  %v2542 = vpop.f32.mrb[0].mxu0
  %v2543 = vadd.f32 %v2446, %v2542
  %v2544 = vpop.f32.mrb[0].mxu0
  %2545 = vmatprep.mubr.bf16.mxu0 0
  %2546 = vmatmul.mubr.bf16.gmra.mrb[0].mxu0 %v498
  %v2547 = vpop.f32.mrb[0].mxu0
  %v2548 = vadd.f32 %v2451, %v2547
  %v2549 = vpop.f32.mrb[0].mxu0
  %v2550 = vpop.f32.mrb[0].mxu0
  %v2551 = vadd.f32 %v2454, %v2550
  %v2552 = vpop.f32.mrb[0].mxu0
  %2553 = vmatprep.mubr.bf16.mxu0 0
  %2554 = vmatmul.mubr.bf16.gmra.mrb[0].mxu0 %v507
  %v2555 = vpop.f32.mrb[0].mxu0
  %v2556 = vadd.f32 %v2459, %v2555
  %v2557 = vpop.f32.mrb[0].mxu0
  %v2558 = vpop.f32.mrb[0].mxu0
  %v2559 = vadd.f32 %v2462, %v2558
  %v2560 = vpop.f32.mrb[0].mxu0
  %2561 = vmatprep.mubr.bf16.mxu0 0
  %2562 = vmatmul.mubr.bf16.gmra.mrb[0].mxu0 %v516
  %v2563 = vpop.f32.mrb[0].mxu0
  %v2564 = vadd.f32 %v2467, %v2563
  %v2565 = vpop.f32.mrb[0].mxu0
  %v2566 = vpop.f32.mrb[0].mxu0
  %v2567 = vadd.f32 %v2470, %v2566
  %v2568 = vpop.f32.mrb[0].mxu0
  %2569 = vmatprep.mubr.bf16.mxu0 0
  %2570 = vmatmul.mubr.bf16.gmra.mrb[0].mxu0 %v525
  %v2571 = vpop.f32.mrb[0].mxu0
  %v2572 = vadd.f32 %v2475, %v2571
  %v2573 = vpop.f32.mrb[0].mxu0
  %v2574 = vpop.f32.mrb[0].mxu0
  %v2575 = vadd.f32 %v2478, %v2574
  %v2576 = vpop.f32.mrb[0].mxu0
  %2577 = vmatprep.mubr.bf16.mxu0 0
  %2578 = vmatmul.mubr.bf16.gmra.mrb[0].mxu0 %v534
  %v2579 = vpop.f32.mrb[0].mxu0
  %v2580 = vadd.f32 %v2483, %v2579
  %v2581 = vpop.f32.mrb[0].mxu0
  %v2582 = vpop.f32.mrb[0].mxu0
  %v2583 = vadd.f32 %v2486, %v2582
  %v2584 = vpop.f32.mrb[0].mxu0
  %2585 = vdwg.mxu0
  %v2586 = vmax.f32 %v1462, %v2524
  %v2587 = vmax.f32 %v1465, %v2527
  %v2588 = vmax.f32 %v1470, %v2532
  %v2589 = vmax.f32 %v1473, %v2535
  %v2590 = vmax.f32 %v1478, %v2540
  %v2591 = vmax.f32 %v1481, %v2543
  %v2592 = vmax.f32 %v1486, %v2548
  %v2593 = vmax.f32 %v1489, %v2551
  %v2594 = vmax.f32 %v1494, %v2556
  %v2595 = vmax.f32 %v1497, %v2559
  %v2596 = vmax.f32 %v1502, %v2564
  %v2597 = vmax.f32 %v1505, %v2567
  %v2598 = vmax.f32 %v1510, %v2572
  %v2599 = vmax.f32 %v1513, %v2575
  %v2600 = vmax.f32 %v1518, %v2580
  %v2601 = vmax.f32 %v1521, %v2583
  %s2602 = scalar_lea.vmem %s1, 1152
  %v2603 = vld [vmem:[%s2602] sm:$0xf]
  %v2604 = vld [vmem:[%s2602 + $0x4] sm:$0xf]
  %v2605 = vld [vmem:[%s2602 + $0x8] sm:$0xf]
  %v2606 = vld [vmem:[%s2602 + $0xc] sm:$0xf]
  %v2607 = vld [vmem:[%s2602 + $0x10] sm:$0xf]
  %v2608 = vld [vmem:[%s2602 + $0x14] sm:$0xf]
  %v2609 = vld [vmem:[%s2602 + $0x18] sm:$0xf]
  %v2610 = vld [vmem:[%s2602 + $0x1c] sm:$0xf]
  %v2611 = vld [vmem:[%s2602 + $0x20] sm:$0xf]
  %v2612 = vld [vmem:[%s2602 + $0x24] sm:$0xf]
  %v2613 = vld [vmem:[%s2602 + $0x28] sm:$0xf]
  %v2614 = vld [vmem:[%s2602 + $0x2c] sm:$0xf]
  %v2615 = vld [vmem:[%s2602 + $0x30] sm:$0xf]
  %v2616 = vld [vmem:[%s2602 + $0x34] sm:$0xf]
  %v2617 = vld [vmem:[%s2602 + $0x38] sm:$0xf]
  %v2618 = vld [vmem:[%s2602 + $0x3c] sm:$0xf]
  %v2619 = vld [vmem:[%s2602 + $0x40] sm:$0xf]
  %v2620 = vld [vmem:[%s2602 + $0x44] sm:$0xf]
  %v2621 = vld [vmem:[%s2602 + $0x48] sm:$0xf]
  %v2622 = vld [vmem:[%s2602 + $0x4c] sm:$0xf]
  %v2623 = vld [vmem:[%s2602 + $0x50] sm:$0xf]
  %v2624 = vld [vmem:[%s2602 + $0x54] sm:$0xf]
  %v2625 = vld [vmem:[%s2602 + $0x58] sm:$0xf]
  %v2626 = vld [vmem:[%s2602 + $0x5c] sm:$0xf]
  %v2627 = vld [vmem:[%s2602 + $0x60] sm:$0xf]
  %v2628 = vld [vmem:[%s2602 + $0x64] sm:$0xf]
  %v2629 = vld [vmem:[%s2602 + $0x68] sm:$0xf]
  %v2630 = vld [vmem:[%s2602 + $0x6c] sm:$0xf]
  %v2631 = vld [vmem:[%s2602 + $0x70] sm:$0xf]
  %v2632 = vld [vmem:[%s2602 + $0x74] sm:$0xf]
  %v2633 = vld [vmem:[%s2602 + $0x78] sm:$0xf]
  %v2634 = vld [vmem:[%s2602 + $0x7c] sm:$0xf]
  %v2635 = vld [vmem:[%s2602 + $0x80] sm:$0xf]
  %v2636 = vld [vmem:[%s2602 + $0x84] sm:$0xf]
  %v2637 = vld [vmem:[%s2602 + $0x88] sm:$0xf]
  %v2638 = vld [vmem:[%s2602 + $0x8c] sm:$0xf]
  %v2639 = vld [vmem:[%s2602 + $0x90] sm:$0xf]
  %v2640 = vld [vmem:[%s2602 + $0x94] sm:$0xf]
  %v2641 = vld [vmem:[%s2602 + $0x98] sm:$0xf]
  %v2642 = vld [vmem:[%s2602 + $0x9c] sm:$0xf]
  %v2643 = vld [vmem:[%s2602 + $0xa0] sm:$0xf]
  %v2644 = vld [vmem:[%s2602 + $0xa4] sm:$0xf]
  %v2645 = vld [vmem:[%s2602 + $0xa8] sm:$0xf]
  %v2646 = vld [vmem:[%s2602 + $0xac] sm:$0xf]
  %v2647 = vld [vmem:[%s2602 + $0xb0] sm:$0xf]
  %v2648 = vld [vmem:[%s2602 + $0xb4] sm:$0xf]
  %v2649 = vld [vmem:[%s2602 + $0xb8] sm:$0xf]
  %v2650 = vld [vmem:[%s2602 + $0xbc] sm:$0xf]
  %v2651 = vld [vmem:[%s2602 + $0xc0] sm:$0xf]
  %v2652 = vld [vmem:[%s2602 + $0xc4] sm:$0xf]
  %v2653 = vld [vmem:[%s2602 + $0xc8] sm:$0xf]
  %v2654 = vld [vmem:[%s2602 + $0xcc] sm:$0xf]
  %v2655 = vld [vmem:[%s2602 + $0xd0] sm:$0xf]
  %v2656 = vld [vmem:[%s2602 + $0xd4] sm:$0xf]
  %v2657 = vld [vmem:[%s2602 + $0xd8] sm:$0xf]
  %v2658 = vld [vmem:[%s2602 + $0xdc] sm:$0xf]
  %v2659 = vld [vmem:[%s2602 + $0xe0] sm:$0xf]
  %v2660 = vld [vmem:[%s2602 + $0xe4] sm:$0xf]
  %v2661 = vld [vmem:[%s2602 + $0xe8] sm:$0xf]
  %v2662 = vld [vmem:[%s2602 + $0xec] sm:$0xf]
  %v2663 = vld [vmem:[%s2602 + $0xf0] sm:$0xf]
  %v2664 = vld [vmem:[%s2602 + $0xf4] sm:$0xf]
  %v2665 = vld [vmem:[%s2602 + $0xf8] sm:$0xf]
  %v2666 = vld [vmem:[%s2602 + $0xfc] sm:$0xf]
  %v2667 = vld [vmem:[%s2602 + $0x100] sm:$0xf]
  %v2668 = vld [vmem:[%s2602 + $0x104] sm:$0xf]
  %v2669 = vld [vmem:[%s2602 + $0x108] sm:$0xf]
  %v2670 = vld [vmem:[%s2602 + $0x10c] sm:$0xf]
  %v2671 = vld [vmem:[%s2602 + $0x110] sm:$0xf]
  %v2672 = vld [vmem:[%s2602 + $0x114] sm:$0xf]
  %v2673 = vld [vmem:[%s2602 + $0x118] sm:$0xf]
  %v2674 = vld [vmem:[%s2602 + $0x11c] sm:$0xf]
  %v2675 = vld [vmem:[%s2602 + $0x120] sm:$0xf]
  %v2676 = vld [vmem:[%s2602 + $0x124] sm:$0xf]
  %v2677 = vld [vmem:[%s2602 + $0x128] sm:$0xf]
  %v2678 = vld [vmem:[%s2602 + $0x12c] sm:$0xf]
  %v2679 = vld [vmem:[%s2602 + $0x130] sm:$0xf]
  %v2680 = vld [vmem:[%s2602 + $0x134] sm:$0xf]
  %v2681 = vld [vmem:[%s2602 + $0x138] sm:$0xf]
  %v2682 = vld [vmem:[%s2602 + $0x13c] sm:$0xf]
  %v2683 = vld [vmem:[%s2602 + $0x140] sm:$0xf]
  %v2684 = vld [vmem:[%s2602 + $0x144] sm:$0xf]
  %v2685 = vld [vmem:[%s2602 + $0x148] sm:$0xf]
  %v2686 = vld [vmem:[%s2602 + $0x14c] sm:$0xf]
  %v2687 = vld [vmem:[%s2602 + $0x150] sm:$0xf]
  %v2688 = vld [vmem:[%s2602 + $0x154] sm:$0xf]
  %v2689 = vld [vmem:[%s2602 + $0x158] sm:$0xf]
  %v2690 = vld [vmem:[%s2602 + $0x15c] sm:$0xf]
  %v2691 = vld [vmem:[%s2602 + $0x160] sm:$0xf]
  %v2692 = vld [vmem:[%s2602 + $0x164] sm:$0xf]
  %v2693 = vld [vmem:[%s2602 + $0x168] sm:$0xf]
  %v2694 = vld [vmem:[%s2602 + $0x16c] sm:$0xf]
  %v2695 = vld [vmem:[%s2602 + $0x170] sm:$0xf]
  %v2696 = vld [vmem:[%s2602 + $0x174] sm:$0xf]
  %v2697 = vld [vmem:[%s2602 + $0x178] sm:$0xf]
  %v2698 = vld [vmem:[%s2602 + $0x17c] sm:$0xf]
  %v2699 = vld [vmem:[%s2602 + $0x180] sm:$0xf]
  %v2700 = vld [vmem:[%s2602 + $0x184] sm:$0xf]
  %v2701 = vld [vmem:[%s2602 + $0x188] sm:$0xf]
  %v2702 = vld [vmem:[%s2602 + $0x18c] sm:$0xf]
  %v2703 = vld [vmem:[%s2602 + $0x190] sm:$0xf]
  %v2704 = vld [vmem:[%s2602 + $0x194] sm:$0xf]
  %v2705 = vld [vmem:[%s2602 + $0x198] sm:$0xf]
  %v2706 = vld [vmem:[%s2602 + $0x19c] sm:$0xf]
  %v2707 = vld [vmem:[%s2602 + $0x1a0] sm:$0xf]
  %v2708 = vld [vmem:[%s2602 + $0x1a4] sm:$0xf]
  %v2709 = vld [vmem:[%s2602 + $0x1a8] sm:$0xf]
  %v2710 = vld [vmem:[%s2602 + $0x1ac] sm:$0xf]
  %v2711 = vld [vmem:[%s2602 + $0x1b0] sm:$0xf]
  %v2712 = vld [vmem:[%s2602 + $0x1b4] sm:$0xf]
  %v2713 = vld [vmem:[%s2602 + $0x1b8] sm:$0xf]
  %v2714 = vld [vmem:[%s2602 + $0x1bc] sm:$0xf]
  %v2715 = vld [vmem:[%s2602 + $0x1c0] sm:$0xf]
  %v2716 = vld [vmem:[%s2602 + $0x1c4] sm:$0xf]
  %v2717 = vld [vmem:[%s2602 + $0x1c8] sm:$0xf]
  %v2718 = vld [vmem:[%s2602 + $0x1cc] sm:$0xf]
  %v2719 = vld [vmem:[%s2602 + $0x1d0] sm:$0xf]
  %v2720 = vld [vmem:[%s2602 + $0x1d4] sm:$0xf]
  %v2721 = vld [vmem:[%s2602 + $0x1d8] sm:$0xf]
  %v2722 = vld [vmem:[%s2602 + $0x1dc] sm:$0xf]
  %v2723 = vld [vmem:[%s2602 + $0x1e0] sm:$0xf]
  %v2724 = vld [vmem:[%s2602 + $0x1e4] sm:$0xf]
  %v2725 = vld [vmem:[%s2602 + $0x1e8] sm:$0xf]
  %v2726 = vld [vmem:[%s2602 + $0x1ec] sm:$0xf]
  %v2727 = vld [vmem:[%s2602 + $0x1f0] sm:$0xf]
  %v2728 = vld [vmem:[%s2602 + $0x1f4] sm:$0xf]
  %v2729 = vld [vmem:[%s2602 + $0x1f8] sm:$0xf]
  %v2730 = vld [vmem:[%s2602 + $0x1fc] sm:$0xf]
  %v2731 = vld [vmem:[%s2602 + $0x200] sm:$0xf]
  %v2732 = vld [vmem:[%s2602 + $0x204] sm:$0xf]
  %v2733 = vld [vmem:[%s2602 + $0x208] sm:$0xf]
  %v2734 = vld [vmem:[%s2602 + $0x20c] sm:$0xf]
  %v2735 = vld [vmem:[%s2602 + $0x210] sm:$0xf]
  %v2736 = vld [vmem:[%s2602 + $0x214] sm:$0xf]
  %v2737 = vld [vmem:[%s2602 + $0x218] sm:$0xf]
  %v2738 = vld [vmem:[%s2602 + $0x21c] sm:$0xf]
  %v2739 = vld [vmem:[%s2602 + $0x220] sm:$0xf]
  %v2740 = vld [vmem:[%s2602 + $0x224] sm:$0xf]
  %v2741 = vld [vmem:[%s2602 + $0x228] sm:$0xf]
  %v2742 = vld [vmem:[%s2602 + $0x22c] sm:$0xf]
  %v2743 = vld [vmem:[%s2602 + $0x230] sm:$0xf]
  %v2744 = vld [vmem:[%s2602 + $0x234] sm:$0xf]
  %v2745 = vld [vmem:[%s2602 + $0x238] sm:$0xf]
  %v2746 = vld [vmem:[%s2602 + $0x23c] sm:$0xf]
  %v2891 = vunpack.c.l.b16 %v2603
  %v2892 = vunpack.c.l.b16 %v2604
  %v2893 = vunpack.c.l.b16 %v2605
  %v2894 = vunpack.c.l.b16 %v2606
  %v2895 = vunpack.c.l.b16 %v2607
  %v2896 = vunpack.c.l.b16 %v2608
  %v2897 = vunpack.c.l.b16 %v2609
  %v2898 = vunpack.c.l.b16 %v2610
  %v2899 = vunpack.c.l.b16 %v2611
  %v2900 = vunpack.c.l.b16 %v2612
  %v2901 = vunpack.c.l.b16 %v2613
  %v2902 = vunpack.c.l.b16 %v2614
  %v2903 = vunpack.c.l.b16 %v2615
  %v2904 = vunpack.c.l.b16 %v2616
  %v2905 = vunpack.c.l.b16 %v2617
  %v2906 = vunpack.c.l.b16 %v2618
  %v2907 = vunpack.c.l.b16 %v2619
  %v2908 = vunpack.c.l.b16 %v2620
  %v2909 = vunpack.c.l.b16 %v2621
  %v2910 = vunpack.c.l.b16 %v2622
  %v2911 = vunpack.c.l.b16 %v2623
  %v2912 = vunpack.c.l.b16 %v2624
  %v2913 = vunpack.c.l.b16 %v2625
  %v2914 = vunpack.c.l.b16 %v2626
  %v2915 = vunpack.c.l.b16 %v2627
  %v2916 = vunpack.c.l.b16 %v2628
  %v2917 = vunpack.c.l.b16 %v2629
  %v2918 = vunpack.c.l.b16 %v2630
  %v2919 = vunpack.c.l.b16 %v2631
  %v2920 = vunpack.c.l.b16 %v2632
  %v2921 = vunpack.c.l.b16 %v2633
  %v2922 = vunpack.c.l.b16 %v2634
  %v2923 = vunpack.c.l.b16 %v2635
  %v2924 = vunpack.c.l.b16 %v2636
  %v2925 = vunpack.c.l.b16 %v2637
  %v2926 = vunpack.c.l.b16 %v2638
  %v2927 = vunpack.c.l.b16 %v2639
  %v2928 = vunpack.c.l.b16 %v2640
  %v2929 = vunpack.c.l.b16 %v2641
  %v2930 = vunpack.c.l.b16 %v2642
  %v2931 = vunpack.c.l.b16 %v2643
  %v2932 = vunpack.c.l.b16 %v2644
  %v2933 = vunpack.c.l.b16 %v2645
  %v2934 = vunpack.c.l.b16 %v2646
  %v2935 = vunpack.c.l.b16 %v2647
  %v2936 = vunpack.c.l.b16 %v2648
  %v2937 = vunpack.c.l.b16 %v2649
  %v2938 = vunpack.c.l.b16 %v2650
  %v2939 = vunpack.c.l.b16 %v2651
  %v2940 = vunpack.c.l.b16 %v2652
  %v2941 = vunpack.c.l.b16 %v2653
  %v2942 = vunpack.c.l.b16 %v2654
  %v2943 = vunpack.c.l.b16 %v2655
  %v2944 = vunpack.c.l.b16 %v2656
  %v2945 = vunpack.c.l.b16 %v2657
  %v2946 = vunpack.c.l.b16 %v2658
  %v2947 = vunpack.c.l.b16 %v2659
  %v2948 = vunpack.c.l.b16 %v2660
  %v2949 = vunpack.c.l.b16 %v2661
  %v2950 = vunpack.c.l.b16 %v2662
  %v2951 = vunpack.c.l.b16 %v2663
  %v2952 = vunpack.c.l.b16 %v2664
  %v2953 = vunpack.c.l.b16 %v2665
  %v2954 = vunpack.c.l.b16 %v2666
  %v2955 = vunpack.c.l.b16 %v2667
  %v2956 = vunpack.c.l.b16 %v2668
  %v2957 = vunpack.c.l.b16 %v2669
  %v2958 = vunpack.c.l.b16 %v2670
  %v2959 = vunpack.c.l.b16 %v2671
  %v2960 = vunpack.c.l.b16 %v2672
  %v2961 = vunpack.c.l.b16 %v2673
  %v2962 = vunpack.c.l.b16 %v2674
  %v2963 = vunpack.c.l.b16 %v2675
  %v2964 = vunpack.c.l.b16 %v2676
  %v2965 = vunpack.c.l.b16 %v2677
  %v2966 = vunpack.c.l.b16 %v2678
  %v2967 = vunpack.c.l.b16 %v2679
  %v2968 = vunpack.c.l.b16 %v2680
  %v2969 = vunpack.c.l.b16 %v2681
  %v2970 = vunpack.c.l.b16 %v2682
  %v2971 = vunpack.c.l.b16 %v2683
  %v2972 = vunpack.c.l.b16 %v2684
  %v2973 = vunpack.c.l.b16 %v2685
  %v2974 = vunpack.c.l.b16 %v2686
  %v2975 = vunpack.c.l.b16 %v2687
  %v2976 = vunpack.c.l.b16 %v2688
  %v2977 = vunpack.c.l.b16 %v2689
  %v2978 = vunpack.c.l.b16 %v2690
  %v2979 = vunpack.c.l.b16 %v2691
  %v2980 = vunpack.c.l.b16 %v2692
  %v2981 = vunpack.c.l.b16 %v2693
  %v2982 = vunpack.c.l.b16 %v2694
  %v2983 = vunpack.c.l.b16 %v2695
  %v2984 = vunpack.c.l.b16 %v2696
  %v2985 = vunpack.c.l.b16 %v2697
  %v2986 = vunpack.c.l.b16 %v2698
  %v2987 = vunpack.c.l.b16 %v2699
  %v2988 = vunpack.c.l.b16 %v2700
  %v2989 = vunpack.c.l.b16 %v2701
  %v2990 = vunpack.c.l.b16 %v2702
  %v2991 = vunpack.c.l.b16 %v2703
  %v2992 = vunpack.c.l.b16 %v2704
  %v2993 = vunpack.c.l.b16 %v2705
  %v2994 = vunpack.c.l.b16 %v2706
  %v2995 = vunpack.c.l.b16 %v2707
  %v2996 = vunpack.c.l.b16 %v2708
  %v2997 = vunpack.c.l.b16 %v2709
  %v2998 = vunpack.c.l.b16 %v2710
  %v2999 = vunpack.c.l.b16 %v2711
  %v3000 = vunpack.c.l.b16 %v2712
  %v3001 = vunpack.c.l.b16 %v2713
  %v3002 = vunpack.c.l.b16 %v2714
  %v3003 = vunpack.c.l.b16 %v2715
  %v3004 = vunpack.c.l.b16 %v2716
  %v3005 = vunpack.c.l.b16 %v2717
  %v3006 = vunpack.c.l.b16 %v2718
  %v3007 = vunpack.c.l.b16 %v2719
  %v3008 = vunpack.c.l.b16 %v2720
  %v3009 = vunpack.c.l.b16 %v2721
  %v3010 = vunpack.c.l.b16 %v2722
  %v3011 = vunpack.c.l.b16 %v2723
  %v3012 = vunpack.c.l.b16 %v2724
  %v3013 = vunpack.c.l.b16 %v2725
  %v3014 = vunpack.c.l.b16 %v2726
  %v3015 = vunpack.c.l.b16 %v2727
  %v3016 = vunpack.c.l.b16 %v2728
  %v3017 = vunpack.c.l.b16 %v2729
  %v3018 = vunpack.c.l.b16 %v2730
  %v3019 = vunpack.c.l.b16 %v2731
  %v3020 = vunpack.c.l.b16 %v2732
  %v3021 = vunpack.c.l.b16 %v2733
  %v3022 = vunpack.c.l.b16 %v2734
  %v3023 = vunpack.c.l.b16 %v2735
  %v3024 = vunpack.c.l.b16 %v2736
  %v3025 = vunpack.c.l.b16 %v2737
  %v3026 = vunpack.c.l.b16 %v2738
  %v3027 = vunpack.c.l.b16 %v2739
  %v3028 = vunpack.c.l.b16 %v2740
  %v3029 = vunpack.c.l.b16 %v2741
  %v3030 = vunpack.c.l.b16 %v2742
  %v3031 = vunpack.c.l.b16 %v2743
  %v3032 = vunpack.c.l.b16 %v2744
  %v3033 = vunpack.c.l.b16 %v2745
  %v3034 = vunpack.c.l.b16 %v2746
  %v3035 = vpack.c.b16 %v2892, %v2891
  %v3036 = vpack.c.b16 %v2894, %v2893
  %v3037 = vpack.c.b16 %v2896, %v2895
  %v3038 = vpack.c.b16 %v2898, %v2897
  %v3039 = vpack.c.b16 %v2900, %v2899
  %v3040 = vpack.c.b16 %v2902, %v2901
  %v3041 = vpack.c.b16 %v2904, %v2903
  %v3042 = vpack.c.b16 %v2906, %v2905
  %v3043 = vpack.c.b16 %v2908, %v2907
  %v3044 = vpack.c.b16 %v2910, %v2909
  %v3045 = vpack.c.b16 %v2912, %v2911
  %v3046 = vpack.c.b16 %v2914, %v2913
  %v3047 = vpack.c.b16 %v2916, %v2915
  %v3048 = vpack.c.b16 %v2918, %v2917
  %v3049 = vpack.c.b16 %v2920, %v2919
  %v3050 = vpack.c.b16 %v2922, %v2921
  %v3051 = vpack.c.b16 %v2924, %v2923
  %v3052 = vpack.c.b16 %v2926, %v2925
  %v3053 = vpack.c.b16 %v2928, %v2927
  %v3054 = vpack.c.b16 %v2930, %v2929
  %v3055 = vpack.c.b16 %v2932, %v2931
  %v3056 = vpack.c.b16 %v2934, %v2933
  %v3057 = vpack.c.b16 %v2936, %v2935
  %v3058 = vpack.c.b16 %v2938, %v2937
  %v3059 = vpack.c.b16 %v2940, %v2939
  %v3060 = vpack.c.b16 %v2942, %v2941
  %v3061 = vpack.c.b16 %v2944, %v2943
  %v3062 = vpack.c.b16 %v2946, %v2945
  %v3063 = vpack.c.b16 %v2948, %v2947
  %v3064 = vpack.c.b16 %v2950, %v2949
  %v3065 = vpack.c.b16 %v2952, %v2951
  %v3066 = vpack.c.b16 %v2954, %v2953
  %v3067 = vpack.c.b16 %v2956, %v2955
  %v3068 = vpack.c.b16 %v2958, %v2957
  %v3069 = vpack.c.b16 %v2960, %v2959
  %v3070 = vpack.c.b16 %v2962, %v2961
  %v3071 = vpack.c.b16 %v2964, %v2963
  %v3072 = vpack.c.b16 %v2966, %v2965
  %v3073 = vpack.c.b16 %v2968, %v2967
  %v3074 = vpack.c.b16 %v2970, %v2969
  %v3075 = vpack.c.b16 %v2972, %v2971
  %v3076 = vpack.c.b16 %v2974, %v2973
  %v3077 = vpack.c.b16 %v2976, %v2975
  %v3078 = vpack.c.b16 %v2978, %v2977
  %v3079 = vpack.c.b16 %v2980, %v2979
  %v3080 = vpack.c.b16 %v2982, %v2981
  %v3081 = vpack.c.b16 %v2984, %v2983
  %v3082 = vpack.c.b16 %v2986, %v2985
  %v3083 = vpack.c.b16 %v2988, %v2987
  %v3084 = vpack.c.b16 %v2990, %v2989
  %v3085 = vpack.c.b16 %v2992, %v2991
  %v3086 = vpack.c.b16 %v2994, %v2993
  %v3087 = vpack.c.b16 %v2996, %v2995
  %v3088 = vpack.c.b16 %v2998, %v2997
  %v3089 = vpack.c.b16 %v3000, %v2999
  %v3090 = vpack.c.b16 %v3002, %v3001
  %v3091 = vpack.c.b16 %v3004, %v3003
  %v3092 = vpack.c.b16 %v3006, %v3005
  %v3093 = vpack.c.b16 %v3008, %v3007
  %v3094 = vpack.c.b16 %v3010, %v3009
  %v3095 = vpack.c.b16 %v3012, %v3011
  %v3096 = vpack.c.b16 %v3014, %v3013
  %v3097 = vpack.c.b16 %v3016, %v3015
  %v3098 = vpack.c.b16 %v3018, %v3017
  %v3099 = vpack.c.b16 %v3020, %v3019
  %v3100 = vpack.c.b16 %v3022, %v3021
  %v3101 = vpack.c.b16 %v3024, %v3023
  %v3102 = vpack.c.b16 %v3026, %v3025
  %v3103 = vpack.c.b16 %v3028, %v3027
  %v3104 = vpack.c.b16 %v3030, %v3029
  %v3105 = vpack.c.b16 %v3032, %v3031
  %v3106 = vpack.c.b16 %v3034, %v3033
  %3179 = vmatprep.subr.bf16.mxu0 0
  %3180 = vmatpush1.bf16.msra.mxu0 %v3035
  %3181 = vmatprep.subr.bf16.mxu0 0
  %3182 = vmatpush1.bf16.msra.mxu0 %v3036
  %3183 = vmatprep.subr.bf16.mxu0 0
  %3184 = vmatpush1.bf16.msra.mxu0 %v3037
  %3185 = vmatprep.subr.bf16.mxu0 0
  %3186 = vmatpush1.bf16.msra.mxu0 %v3038
  %3187 = vmatprep.subr.bf16.mxu0 0
  %3188 = vmatpush1.bf16.msra.mxu0 %v3039
  %3189 = vmatprep.subr.bf16.mxu0 0
  %3190 = vmatpush1.bf16.msra.mxu0 %v3040
  %3191 = vmatprep.subr.bf16.mxu0 0
  %3192 = vmatpush1.bf16.msra.mxu0 %v3041
  %3193 = vmatprep.subr.bf16.mxu0 0
  %3194 = vmatpush1.bf16.msra.mxu0 %v3042
  %3195 = vmatprep.subr.bf16.mxu0 0
  %3196 = vmatpush1.bf16.msra.mxu0 %v3043
  %3197 = vmatprep.subr.bf16.mxu0 0
  %3198 = vmatpush1.bf16.msra.mxu0 %v3044
  %3199 = vmatprep.subr.bf16.mxu0 0
  %3200 = vmatpush1.bf16.msra.mxu0 %v3045
  %3201 = vmatprep.subr.bf16.mxu0 0
  %3202 = vmatpush1.bf16.msra.mxu0 %v3046
  %3203 = vmatprep.subr.bf16.mxu0 0
  %3204 = vmatpush1.bf16.msra.mxu0 %v3047
  %3205 = vmatprep.subr.bf16.mxu0 0
  %3206 = vmatpush1.bf16.msra.mxu0 %v3048
  %3207 = vmatprep.subr.bf16.mxu0 0
  %3208 = vmatpush1.bf16.msra.mxu0 %v3049
  %3209 = vmatprep.subr.bf16.mxu0 0
  %3210 = vmatpush1.bf16.msra.mxu0 %v3050
  %3211 = vmatprep.mubr.bf16.mxu0 %v464
  %3212 = vmatmul.mubr.bf16.gmra.mrb[0].mxu0 %v463
  %v3213 = vpop.f32.mrb[0].mxu0
  %v3214 = vadd.f32 0.0, %v3213
  %v3215 = vpop.f32.mrb[0].mxu0
  %v3216 = vpop.f32.mrb[0].mxu0
  %v3217 = vadd.f32 0.0, %v3216
  %v3218 = vpop.f32.mrb[0].mxu0
  %3219 = vmatprep.mubr.bf16.mxu0 %v473
  %3220 = vmatmul.mubr.bf16.gmra.mrb[0].mxu0 %v472
  %v3221 = vpop.f32.mrb[0].mxu0
  %v3222 = vadd.f32 0.0, %v3221
  %v3223 = vpop.f32.mrb[0].mxu0
  %v3224 = vpop.f32.mrb[0].mxu0
  %v3225 = vadd.f32 0.0, %v3224
  %v3226 = vpop.f32.mrb[0].mxu0
  %3227 = vmatprep.mubr.bf16.mxu0 %v482
  %3228 = vmatmul.mubr.bf16.gmra.mrb[0].mxu0 %v481
  %v3229 = vpop.f32.mrb[0].mxu0
  %v3230 = vadd.f32 0.0, %v3229
  %v3231 = vpop.f32.mrb[0].mxu0
  %v3232 = vpop.f32.mrb[0].mxu0
  %v3233 = vadd.f32 0.0, %v3232
  %v3234 = vpop.f32.mrb[0].mxu0
  %3235 = vmatprep.mubr.bf16.mxu0 %v491
  %3236 = vmatmul.mubr.bf16.gmra.mrb[0].mxu0 %v490
  %v3237 = vpop.f32.mrb[0].mxu0
  %v3238 = vadd.f32 0.0, %v3237
  %v3239 = vpop.f32.mrb[0].mxu0
  %v3240 = vpop.f32.mrb[0].mxu0
  %v3241 = vadd.f32 0.0, %v3240
  %v3242 = vpop.f32.mrb[0].mxu0
  %3243 = vmatprep.mubr.bf16.mxu0 %v500
  %3244 = vmatmul.mubr.bf16.gmra.mrb[0].mxu0 %v499
  %v3245 = vpop.f32.mrb[0].mxu0
  %v3246 = vadd.f32 0.0, %v3245
  %v3247 = vpop.f32.mrb[0].mxu0
  %v3248 = vpop.f32.mrb[0].mxu0
  %v3249 = vadd.f32 0.0, %v3248
  %v3250 = vpop.f32.mrb[0].mxu0
  %3251 = vmatprep.mubr.bf16.mxu0 %v509
  %3252 = vmatmul.mubr.bf16.gmra.mrb[0].mxu0 %v508
  %v3253 = vpop.f32.mrb[0].mxu0
  %v3254 = vadd.f32 0.0, %v3253
  %v3255 = vpop.f32.mrb[0].mxu0
  %v3256 = vpop.f32.mrb[0].mxu0
  %v3257 = vadd.f32 0.0, %v3256
  %v3258 = vpop.f32.mrb[0].mxu0
  %3259 = vmatprep.mubr.bf16.mxu0 %v518
  %3260 = vmatmul.mubr.bf16.gmra.mrb[0].mxu0 %v517
  %v3261 = vpop.f32.mrb[0].mxu0
  %v3262 = vadd.f32 0.0, %v3261
  %v3263 = vpop.f32.mrb[0].mxu0
  %v3264 = vpop.f32.mrb[0].mxu0
  %v3265 = vadd.f32 0.0, %v3264
  %v3266 = vpop.f32.mrb[0].mxu0
  %3267 = vmatprep.mubr.bf16.mxu0 %v527
  %3268 = vmatmul.mubr.bf16.gmra.mrb[0].mxu0 %v526
  %v3269 = vpop.f32.mrb[0].mxu0
  %v3270 = vadd.f32 0.0, %v3269
  %v3271 = vpop.f32.mrb[0].mxu0
  %v3272 = vpop.f32.mrb[0].mxu0
  %v3273 = vadd.f32 0.0, %v3272
  %v3274 = vpop.f32.mrb[0].mxu0
  %3275 = vdwg.mxu0
  %3276 = vmatprep.subr.bf16.mxu0 0
  %3277 = vmatpush1.bf16.msra.mxu0 %v3051
  %3278 = vmatprep.subr.bf16.mxu0 0
  %3279 = vmatpush1.bf16.msra.mxu0 %v3052
  %3280 = vmatprep.subr.bf16.mxu0 0
  %3281 = vmatpush1.bf16.msra.mxu0 %v3053
  %3282 = vmatprep.subr.bf16.mxu0 0
  %3283 = vmatpush1.bf16.msra.mxu0 %v3054
  %3284 = vmatprep.subr.bf16.mxu0 0
  %3285 = vmatpush1.bf16.msra.mxu0 %v3055
  %3286 = vmatprep.subr.bf16.mxu0 0
  %3287 = vmatpush1.bf16.msra.mxu0 %v3056
  %3288 = vmatprep.subr.bf16.mxu0 0
  %3289 = vmatpush1.bf16.msra.mxu0 %v3057
  %3290 = vmatprep.subr.bf16.mxu0 0
  %3291 = vmatpush1.bf16.msra.mxu0 %v3058
  %3292 = vmatprep.subr.bf16.mxu0 0
  %3293 = vmatpush1.bf16.msra.mxu0 %v3059
  %3294 = vmatprep.subr.bf16.mxu0 0
  %3295 = vmatpush1.bf16.msra.mxu0 %v3060
  %3296 = vmatprep.subr.bf16.mxu0 0
  %3297 = vmatpush1.bf16.msra.mxu0 %v3061
  %3298 = vmatprep.subr.bf16.mxu0 0
  %3299 = vmatpush1.bf16.msra.mxu0 %v3062
  %3300 = vmatprep.subr.bf16.mxu0 0
  %3301 = vmatpush1.bf16.msra.mxu0 %v3063
  %3302 = vmatprep.subr.bf16.mxu0 0
  %3303 = vmatpush1.bf16.msra.mxu0 %v3064
  %3304 = vmatprep.subr.bf16.mxu0 0
  %3305 = vmatpush1.bf16.msra.mxu0 %v3065
  %3306 = vmatprep.subr.bf16.mxu0 0
  %3307 = vmatpush1.bf16.msra.mxu0 %v3066
  %3308 = vmatprep.mubr.bf16.mxu0 %v466
  %3309 = vmatmul.mubr.bf16.gmra.mrb[0].mxu0 %v465
  %v3310 = vpop.f32.mrb[0].mxu0
  %v3311 = vadd.f32 %v3214, %v3310
  %v3312 = vpop.f32.mrb[0].mxu0
  %v3313 = vpop.f32.mrb[0].mxu0
  %v3314 = vadd.f32 %v3217, %v3313
  %v3315 = vpop.f32.mrb[0].mxu0
  %3316 = vmatprep.mubr.bf16.mxu0 %v475
  %3317 = vmatmul.mubr.bf16.gmra.mrb[0].mxu0 %v474
  %v3318 = vpop.f32.mrb[0].mxu0
  %v3319 = vadd.f32 %v3222, %v3318
  %v3320 = vpop.f32.mrb[0].mxu0
  %v3321 = vpop.f32.mrb[0].mxu0
  %v3322 = vadd.f32 %v3225, %v3321
  %v3323 = vpop.f32.mrb[0].mxu0
  %3324 = vmatprep.mubr.bf16.mxu0 %v484
  %3325 = vmatmul.mubr.bf16.gmra.mrb[0].mxu0 %v483
  %v3326 = vpop.f32.mrb[0].mxu0
  %v3327 = vadd.f32 %v3230, %v3326
  %v3328 = vpop.f32.mrb[0].mxu0
  %v3329 = vpop.f32.mrb[0].mxu0
  %v3330 = vadd.f32 %v3233, %v3329
  %v3331 = vpop.f32.mrb[0].mxu0
  %3332 = vmatprep.mubr.bf16.mxu0 %v493
  %3333 = vmatmul.mubr.bf16.gmra.mrb[0].mxu0 %v492
  %v3334 = vpop.f32.mrb[0].mxu0
  %v3335 = vadd.f32 %v3238, %v3334
  %v3336 = vpop.f32.mrb[0].mxu0
  %v3337 = vpop.f32.mrb[0].mxu0
  %v3338 = vadd.f32 %v3241, %v3337
  %v3339 = vpop.f32.mrb[0].mxu0
  %3340 = vmatprep.mubr.bf16.mxu0 %v502
  %3341 = vmatmul.mubr.bf16.gmra.mrb[0].mxu0 %v501
  %v3342 = vpop.f32.mrb[0].mxu0
  %v3343 = vadd.f32 %v3246, %v3342
  %v3344 = vpop.f32.mrb[0].mxu0
  %v3345 = vpop.f32.mrb[0].mxu0
  %v3346 = vadd.f32 %v3249, %v3345
  %v3347 = vpop.f32.mrb[0].mxu0
  %3348 = vmatprep.mubr.bf16.mxu0 %v511
  %3349 = vmatmul.mubr.bf16.gmra.mrb[0].mxu0 %v510
  %v3350 = vpop.f32.mrb[0].mxu0
  %v3351 = vadd.f32 %v3254, %v3350
  %v3352 = vpop.f32.mrb[0].mxu0
  %v3353 = vpop.f32.mrb[0].mxu0
  %v3354 = vadd.f32 %v3257, %v3353
  %v3355 = vpop.f32.mrb[0].mxu0
  %3356 = vmatprep.mubr.bf16.mxu0 %v520
  %3357 = vmatmul.mubr.bf16.gmra.mrb[0].mxu0 %v519
  %v3358 = vpop.f32.mrb[0].mxu0
  %v3359 = vadd.f32 %v3262, %v3358
  %v3360 = vpop.f32.mrb[0].mxu0
  %v3361 = vpop.f32.mrb[0].mxu0
  %v3362 = vadd.f32 %v3265, %v3361
  %v3363 = vpop.f32.mrb[0].mxu0
  %3364 = vmatprep.mubr.bf16.mxu0 %v529
  %3365 = vmatmul.mubr.bf16.gmra.mrb[0].mxu0 %v528
  %v3366 = vpop.f32.mrb[0].mxu0
  %v3367 = vadd.f32 %v3270, %v3366
  %v3368 = vpop.f32.mrb[0].mxu0
  %v3369 = vpop.f32.mrb[0].mxu0
  %v3370 = vadd.f32 %v3273, %v3369
  %v3371 = vpop.f32.mrb[0].mxu0
  %3372 = vdwg.mxu0
  %3373 = vmatprep.subr.bf16.mxu0 0
  %3374 = vmatpush1.bf16.msra.mxu0 %v3067
  %3375 = vmatprep.subr.bf16.mxu0 0
  %3376 = vmatpush1.bf16.msra.mxu0 %v3068
  %3377 = vmatprep.subr.bf16.mxu0 0
  %3378 = vmatpush1.bf16.msra.mxu0 %v3069
  %3379 = vmatprep.subr.bf16.mxu0 0
  %3380 = vmatpush1.bf16.msra.mxu0 %v3070
  %3381 = vmatprep.subr.bf16.mxu0 0
  %3382 = vmatpush1.bf16.msra.mxu0 %v3071
  %3383 = vmatprep.subr.bf16.mxu0 0
  %3384 = vmatpush1.bf16.msra.mxu0 %v3072
  %3385 = vmatprep.subr.bf16.mxu0 0
  %3386 = vmatpush1.bf16.msra.mxu0 %v3073
  %3387 = vmatprep.subr.bf16.mxu0 0
  %3388 = vmatpush1.bf16.msra.mxu0 %v3074
  %3389 = vmatprep.subr.bf16.mxu0 0
  %3390 = vmatpush1.bf16.msra.mxu0 %v3075
  %3391 = vmatprep.subr.bf16.mxu0 0
  %3392 = vmatpush1.bf16.msra.mxu0 %v3076
  %3393 = vmatprep.subr.bf16.mxu0 0
  %3394 = vmatpush1.bf16.msra.mxu0 %v3077
  %3395 = vmatprep.subr.bf16.mxu0 0
  %3396 = vmatpush1.bf16.msra.mxu0 %v3078
  %3397 = vmatprep.subr.bf16.mxu0 0
  %3398 = vmatpush1.bf16.msra.mxu0 %v3079
  %3399 = vmatprep.subr.bf16.mxu0 0
  %3400 = vmatpush1.bf16.msra.mxu0 %v3080
  %3401 = vmatprep.subr.bf16.mxu0 0
  %3402 = vmatpush1.bf16.msra.mxu0 %v3081
  %3403 = vmatprep.subr.bf16.mxu0 0
  %3404 = vmatpush1.bf16.msra.mxu0 %v3082
  %3405 = vmatprep.mubr.bf16.mxu0 %v468
  %3406 = vmatmul.mubr.bf16.gmra.mrb[0].mxu0 %v467
  %v3407 = vpop.f32.mrb[0].mxu0
  %v3408 = vadd.f32 %v3311, %v3407
  %v3409 = vpop.f32.mrb[0].mxu0
  %v3410 = vpop.f32.mrb[0].mxu0
  %v3411 = vadd.f32 %v3314, %v3410
  %v3412 = vpop.f32.mrb[0].mxu0
  %3413 = vmatprep.mubr.bf16.mxu0 %v477
  %3414 = vmatmul.mubr.bf16.gmra.mrb[0].mxu0 %v476
  %v3415 = vpop.f32.mrb[0].mxu0
  %v3416 = vadd.f32 %v3319, %v3415
  %v3417 = vpop.f32.mrb[0].mxu0
  %v3418 = vpop.f32.mrb[0].mxu0
  %v3419 = vadd.f32 %v3322, %v3418
  %v3420 = vpop.f32.mrb[0].mxu0
  %3421 = vmatprep.mubr.bf16.mxu0 %v486
  %3422 = vmatmul.mubr.bf16.gmra.mrb[0].mxu0 %v485
  %v3423 = vpop.f32.mrb[0].mxu0
  %v3424 = vadd.f32 %v3327, %v3423
  %v3425 = vpop.f32.mrb[0].mxu0
  %v3426 = vpop.f32.mrb[0].mxu0
  %v3427 = vadd.f32 %v3330, %v3426
  %v3428 = vpop.f32.mrb[0].mxu0
  %3429 = vmatprep.mubr.bf16.mxu0 %v495
  %3430 = vmatmul.mubr.bf16.gmra.mrb[0].mxu0 %v494
  %v3431 = vpop.f32.mrb[0].mxu0
  %v3432 = vadd.f32 %v3335, %v3431
  %v3433 = vpop.f32.mrb[0].mxu0
  %v3434 = vpop.f32.mrb[0].mxu0
  %v3435 = vadd.f32 %v3338, %v3434
  %v3436 = vpop.f32.mrb[0].mxu0
  %3437 = vmatprep.mubr.bf16.mxu0 %v504
  %3438 = vmatmul.mubr.bf16.gmra.mrb[0].mxu0 %v503
  %v3439 = vpop.f32.mrb[0].mxu0
  %v3440 = vadd.f32 %v3343, %v3439
  %v3441 = vpop.f32.mrb[0].mxu0
  %v3442 = vpop.f32.mrb[0].mxu0
  %v3443 = vadd.f32 %v3346, %v3442
  %v3444 = vpop.f32.mrb[0].mxu0
  %3445 = vmatprep.mubr.bf16.mxu0 %v513
  %3446 = vmatmul.mubr.bf16.gmra.mrb[0].mxu0 %v512
  %v3447 = vpop.f32.mrb[0].mxu0
  %v3448 = vadd.f32 %v3351, %v3447
  %v3449 = vpop.f32.mrb[0].mxu0
  %v3450 = vpop.f32.mrb[0].mxu0
  %v3451 = vadd.f32 %v3354, %v3450
  %v3452 = vpop.f32.mrb[0].mxu0
  %3453 = vmatprep.mubr.bf16.mxu0 %v522
  %3454 = vmatmul.mubr.bf16.gmra.mrb[0].mxu0 %v521
  %v3455 = vpop.f32.mrb[0].mxu0
  %v3456 = vadd.f32 %v3359, %v3455
  %v3457 = vpop.f32.mrb[0].mxu0
  %v3458 = vpop.f32.mrb[0].mxu0
  %v3459 = vadd.f32 %v3362, %v3458
  %v3460 = vpop.f32.mrb[0].mxu0
  %3461 = vmatprep.mubr.bf16.mxu0 %v531
  %3462 = vmatmul.mubr.bf16.gmra.mrb[0].mxu0 %v530
  %v3463 = vpop.f32.mrb[0].mxu0
  %v3464 = vadd.f32 %v3367, %v3463
  %v3465 = vpop.f32.mrb[0].mxu0
  %v3466 = vpop.f32.mrb[0].mxu0
  %v3467 = vadd.f32 %v3370, %v3466
  %v3468 = vpop.f32.mrb[0].mxu0
  %3469 = vdwg.mxu0
  %3470 = vmatprep.subr.bf16.mxu0 0
  %3471 = vmatpush1.bf16.msra.mxu0 %v3083
  %3472 = vmatprep.subr.bf16.mxu0 0
  %3473 = vmatpush1.bf16.msra.mxu0 %v3084
  %3474 = vmatprep.subr.bf16.mxu0 0
  %3475 = vmatpush1.bf16.msra.mxu0 %v3085
  %3476 = vmatprep.subr.bf16.mxu0 0
  %3477 = vmatpush1.bf16.msra.mxu0 %v3086
  %3478 = vmatprep.subr.bf16.mxu0 0
  %3479 = vmatpush1.bf16.msra.mxu0 %v3087
  %3480 = vmatprep.subr.bf16.mxu0 0
  %3481 = vmatpush1.bf16.msra.mxu0 %v3088
  %3482 = vmatprep.subr.bf16.mxu0 0
  %3483 = vmatpush1.bf16.msra.mxu0 %v3089
  %3484 = vmatprep.subr.bf16.mxu0 0
  %3485 = vmatpush1.bf16.msra.mxu0 %v3090
  %3486 = vmatprep.subr.bf16.mxu0 0
  %3487 = vmatpush1.bf16.msra.mxu0 %v3091
  %3488 = vmatprep.subr.bf16.mxu0 0
  %3489 = vmatpush1.bf16.msra.mxu0 %v3092
  %3490 = vmatprep.subr.bf16.mxu0 0
  %3491 = vmatpush1.bf16.msra.mxu0 %v3093
  %3492 = vmatprep.subr.bf16.mxu0 0
  %3493 = vmatpush1.bf16.msra.mxu0 %v3094
  %3494 = vmatprep.subr.bf16.mxu0 0
  %3495 = vmatpush1.bf16.msra.mxu0 %v3095
  %3496 = vmatprep.subr.bf16.mxu0 0
  %3497 = vmatpush1.bf16.msra.mxu0 %v3096
  %3498 = vmatprep.subr.bf16.mxu0 0
  %3499 = vmatpush1.bf16.msra.mxu0 %v3097
  %3500 = vmatprep.subr.bf16.mxu0 0
  %3501 = vmatpush1.bf16.msra.mxu0 %v3098
  %3502 = vmatprep.mubr.bf16.mxu0 %v470
  %3503 = vmatmul.mubr.bf16.gmra.mrb[0].mxu0 %v469
  %v3504 = vpop.f32.mrb[0].mxu0
  %v3505 = vadd.f32 %v3408, %v3504
  %v3506 = vpop.f32.mrb[0].mxu0
  %v3507 = vpop.f32.mrb[0].mxu0
  %v3508 = vadd.f32 %v3411, %v3507
  %v3509 = vpop.f32.mrb[0].mxu0
  %3510 = vmatprep.mubr.bf16.mxu0 %v479
  %3511 = vmatmul.mubr.bf16.gmra.mrb[0].mxu0 %v478
  %v3512 = vpop.f32.mrb[0].mxu0
  %v3513 = vadd.f32 %v3416, %v3512
  %v3514 = vpop.f32.mrb[0].mxu0
  %v3515 = vpop.f32.mrb[0].mxu0
  %v3516 = vadd.f32 %v3419, %v3515
  %v3517 = vpop.f32.mrb[0].mxu0
  %3518 = vmatprep.mubr.bf16.mxu0 %v488
  %3519 = vmatmul.mubr.bf16.gmra.mrb[0].mxu0 %v487
  %v3520 = vpop.f32.mrb[0].mxu0
  %v3521 = vadd.f32 %v3424, %v3520
  %v3522 = vpop.f32.mrb[0].mxu0
  %v3523 = vpop.f32.mrb[0].mxu0
  %v3524 = vadd.f32 %v3427, %v3523
  %v3525 = vpop.f32.mrb[0].mxu0
  %3526 = vmatprep.mubr.bf16.mxu0 %v497
  %3527 = vmatmul.mubr.bf16.gmra.mrb[0].mxu0 %v496
  %v3528 = vpop.f32.mrb[0].mxu0
  %v3529 = vadd.f32 %v3432, %v3528
  %v3530 = vpop.f32.mrb[0].mxu0
  %v3531 = vpop.f32.mrb[0].mxu0
  %v3532 = vadd.f32 %v3435, %v3531
  %v3533 = vpop.f32.mrb[0].mxu0
  %3534 = vmatprep.mubr.bf16.mxu0 %v506
  %3535 = vmatmul.mubr.bf16.gmra.mrb[0].mxu0 %v505
  %v3536 = vpop.f32.mrb[0].mxu0
  %v3537 = vadd.f32 %v3440, %v3536
  %v3538 = vpop.f32.mrb[0].mxu0
  %v3539 = vpop.f32.mrb[0].mxu0
  %v3540 = vadd.f32 %v3443, %v3539
  %v3541 = vpop.f32.mrb[0].mxu0
  %3542 = vmatprep.mubr.bf16.mxu0 %v515
  %3543 = vmatmul.mubr.bf16.gmra.mrb[0].mxu0 %v514
  %v3544 = vpop.f32.mrb[0].mxu0
  %v3545 = vadd.f32 %v3448, %v3544
  %v3546 = vpop.f32.mrb[0].mxu0
  %v3547 = vpop.f32.mrb[0].mxu0
  %v3548 = vadd.f32 %v3451, %v3547
  %v3549 = vpop.f32.mrb[0].mxu0
  %3550 = vmatprep.mubr.bf16.mxu0 %v524
  %3551 = vmatmul.mubr.bf16.gmra.mrb[0].mxu0 %v523
  %v3552 = vpop.f32.mrb[0].mxu0
  %v3553 = vadd.f32 %v3456, %v3552
  %v3554 = vpop.f32.mrb[0].mxu0
  %v3555 = vpop.f32.mrb[0].mxu0
  %v3556 = vadd.f32 %v3459, %v3555
  %v3557 = vpop.f32.mrb[0].mxu0
  %3558 = vmatprep.mubr.bf16.mxu0 %v533
  %3559 = vmatmul.mubr.bf16.gmra.mrb[0].mxu0 %v532
  %v3560 = vpop.f32.mrb[0].mxu0
  %v3561 = vadd.f32 %v3464, %v3560
  %v3562 = vpop.f32.mrb[0].mxu0
  %v3563 = vpop.f32.mrb[0].mxu0
  %v3564 = vadd.f32 %v3467, %v3563
  %v3565 = vpop.f32.mrb[0].mxu0
  %3566 = vdwg.mxu0
  %3567 = vmatprep.subr.bf16.mxu0 0
  %3568 = vmatpush1.bf16.msra.mxu0 %v3099
  %3569 = vmatprep.subr.bf16.mxu0 0
  %3570 = vmatpush1.bf16.msra.mxu0 %v3100
  %3571 = vmatprep.subr.bf16.mxu0 0
  %3572 = vmatpush1.bf16.msra.mxu0 %v3101
  %3573 = vmatprep.subr.bf16.mxu0 0
  %3574 = vmatpush1.bf16.msra.mxu0 %v3102
  %3575 = vmatprep.subr.bf16.mxu0 0
  %3576 = vmatpush1.bf16.msra.mxu0 %v3103
  %3577 = vmatprep.subr.bf16.mxu0 0
  %3578 = vmatpush1.bf16.msra.mxu0 %v3104
  %3579 = vmatprep.subr.bf16.mxu0 0
  %3580 = vmatpush1.bf16.msra.mxu0 %v3105
  %3581 = vmatprep.subr.bf16.mxu0 0
  %3582 = vmatpush1.bf16.msra.mxu0 %v3106
  %3583 = vmatprep.subr.bf16.mxu0 0
  %3584 = vmatpush1.bf16.msra.mxu0 0
  %3585 = vmatprep.subr.bf16.mxu0 0
  %3586 = vmatpush1.bf16.msra.mxu0 0
  %3587 = vmatprep.subr.bf16.mxu0 0
  %3588 = vmatpush1.bf16.msra.mxu0 0
  %3589 = vmatprep.subr.bf16.mxu0 0
  %3590 = vmatpush1.bf16.msra.mxu0 0
  %3591 = vmatprep.subr.bf16.mxu0 0
  %3592 = vmatpush1.bf16.msra.mxu0 0
  %3593 = vmatprep.subr.bf16.mxu0 0
  %3594 = vmatpush1.bf16.msra.mxu0 0
  %3595 = vmatprep.subr.bf16.mxu0 0
  %3596 = vmatpush1.bf16.msra.mxu0 0
  %3597 = vmatprep.subr.bf16.mxu0 0
  %3598 = vmatpush1.bf16.msra.mxu0 0
  %3599 = vmatprep.mubr.bf16.mxu0 0
  %3600 = vmatmul.mubr.bf16.gmra.mrb[0].mxu0 %v471
  %v3601 = vpop.f32.mrb[0].mxu0
  %v3602 = vadd.f32 %v3505, %v3601
  %v3603 = vpop.f32.mrb[0].mxu0
  %v3604 = vpop.f32.mrb[0].mxu0
  %v3605 = vadd.f32 %v3508, %v3604
  %v3606 = vpop.f32.mrb[0].mxu0
  %3607 = vmatprep.mubr.bf16.mxu0 0
  %3608 = vmatmul.mubr.bf16.gmra.mrb[0].mxu0 %v480
  %v3609 = vpop.f32.mrb[0].mxu0
  %v3610 = vadd.f32 %v3513, %v3609
  %v3611 = vpop.f32.mrb[0].mxu0
  %v3612 = vpop.f32.mrb[0].mxu0
  %v3613 = vadd.f32 %v3516, %v3612
  %v3614 = vpop.f32.mrb[0].mxu0
  %3615 = vmatprep.mubr.bf16.mxu0 0
  %3616 = vmatmul.mubr.bf16.gmra.mrb[0].mxu0 %v489
  %v3617 = vpop.f32.mrb[0].mxu0
  %v3618 = vadd.f32 %v3521, %v3617
  %v3619 = vpop.f32.mrb[0].mxu0
  %v3620 = vpop.f32.mrb[0].mxu0
  %v3621 = vadd.f32 %v3524, %v3620
  %v3622 = vpop.f32.mrb[0].mxu0
  %3623 = vmatprep.mubr.bf16.mxu0 0
  %3624 = vmatmul.mubr.bf16.gmra.mrb[0].mxu0 %v498
  %v3625 = vpop.f32.mrb[0].mxu0
  %v3626 = vadd.f32 %v3529, %v3625
  %v3627 = vpop.f32.mrb[0].mxu0
  %v3628 = vpop.f32.mrb[0].mxu0
  %v3629 = vadd.f32 %v3532, %v3628
  %v3630 = vpop.f32.mrb[0].mxu0
  %3631 = vmatprep.mubr.bf16.mxu0 0
  %3632 = vmatmul.mubr.bf16.gmra.mrb[0].mxu0 %v507
  %v3633 = vpop.f32.mrb[0].mxu0
  %v3634 = vadd.f32 %v3537, %v3633
  %v3635 = vpop.f32.mrb[0].mxu0
  %v3636 = vpop.f32.mrb[0].mxu0
  %v3637 = vadd.f32 %v3540, %v3636
  %v3638 = vpop.f32.mrb[0].mxu0
  %3639 = vmatprep.mubr.bf16.mxu0 0
  %3640 = vmatmul.mubr.bf16.gmra.mrb[0].mxu0 %v516
  %v3641 = vpop.f32.mrb[0].mxu0
  %v3642 = vadd.f32 %v3545, %v3641
  %v3643 = vpop.f32.mrb[0].mxu0
  %v3644 = vpop.f32.mrb[0].mxu0
  %v3645 = vadd.f32 %v3548, %v3644
  %v3646 = vpop.f32.mrb[0].mxu0
  %3647 = vmatprep.mubr.bf16.mxu0 0
  %3648 = vmatmul.mubr.bf16.gmra.mrb[0].mxu0 %v525
  %v3649 = vpop.f32.mrb[0].mxu0
  %v3650 = vadd.f32 %v3553, %v3649
  %v3651 = vpop.f32.mrb[0].mxu0
  %v3652 = vpop.f32.mrb[0].mxu0
  %v3653 = vadd.f32 %v3556, %v3652
  %v3654 = vpop.f32.mrb[0].mxu0
  %3655 = vmatprep.mubr.bf16.mxu0 0
  %3656 = vmatmul.mubr.bf16.gmra.mrb[0].mxu0 %v534
  %v3657 = vpop.f32.mrb[0].mxu0
  %v3658 = vadd.f32 %v3561, %v3657
  %v3659 = vpop.f32.mrb[0].mxu0
  %v3660 = vpop.f32.mrb[0].mxu0
  %v3661 = vadd.f32 %v3564, %v3660
  %v3662 = vpop.f32.mrb[0].mxu0
  %3663 = vdwg.mxu0
  %v3664 = vmax.f32 %v2586, %v3602
  %v3665 = vmax.f32 %v2587, %v3605
  %v3666 = vmax.f32 %v2588, %v3610
  %v3667 = vmax.f32 %v2589, %v3613
  %v3668 = vmax.f32 %v2590, %v3618
  %v3669 = vmax.f32 %v2591, %v3621
  %v3670 = vmax.f32 %v2592, %v3626
  %v3671 = vmax.f32 %v2593, %v3629
  %v3672 = vmax.f32 %v2594, %v3634
  %v3673 = vmax.f32 %v2595, %v3637
  %v3674 = vmax.f32 %v2596, %v3642
  %v3675 = vmax.f32 %v2597, %v3645
  %v3676 = vmax.f32 %v2598, %v3650
  %v3677 = vmax.f32 %v2599, %v3653
  %v3678 = vmax.f32 %v2600, %v3658
  %v3679 = vmax.f32 %v2601, %v3661
  %s3680 = scalar_lea.vmem %s1, 1728
  %v3681 = vld [vmem:[%s3680] sm:$0xf]
  %v3682 = vld [vmem:[%s3680 + $0x4] sm:$0xf]
  %v3683 = vld [vmem:[%s3680 + $0x8] sm:$0xf]
  %v3684 = vld [vmem:[%s3680 + $0xc] sm:$0xf]
  %v3685 = vld [vmem:[%s3680 + $0x10] sm:$0xf]
  %v3686 = vld [vmem:[%s3680 + $0x14] sm:$0xf]
  %v3687 = vld [vmem:[%s3680 + $0x18] sm:$0xf]
  %v3688 = vld [vmem:[%s3680 + $0x1c] sm:$0xf]
  %v3689 = vld [vmem:[%s3680 + $0x20] sm:$0xf]
  %v3690 = vld [vmem:[%s3680 + $0x24] sm:$0xf]
  %v3691 = vld [vmem:[%s3680 + $0x28] sm:$0xf]
  %v3692 = vld [vmem:[%s3680 + $0x2c] sm:$0xf]
  %v3693 = vld [vmem:[%s3680 + $0x30] sm:$0xf]
  %v3694 = vld [vmem:[%s3680 + $0x34] sm:$0xf]
  %v3695 = vld [vmem:[%s3680 + $0x38] sm:$0xf]
  %v3696 = vld [vmem:[%s3680 + $0x3c] sm:$0xf]
  %v3697 = vld [vmem:[%s3680 + $0x40] sm:$0xf]
  %v3698 = vld [vmem:[%s3680 + $0x44] sm:$0xf]
  %v3699 = vld [vmem:[%s3680 + $0x48] sm:$0xf]
  %v3700 = vld [vmem:[%s3680 + $0x4c] sm:$0xf]
  %v3701 = vld [vmem:[%s3680 + $0x50] sm:$0xf]
  %v3702 = vld [vmem:[%s3680 + $0x54] sm:$0xf]
  %v3703 = vld [vmem:[%s3680 + $0x58] sm:$0xf]
  %v3704 = vld [vmem:[%s3680 + $0x5c] sm:$0xf]
  %v3705 = vld [vmem:[%s3680 + $0x60] sm:$0xf]
  %v3706 = vld [vmem:[%s3680 + $0x64] sm:$0xf]
  %v3707 = vld [vmem:[%s3680 + $0x68] sm:$0xf]
  %v3708 = vld [vmem:[%s3680 + $0x6c] sm:$0xf]
  %v3709 = vld [vmem:[%s3680 + $0x70] sm:$0xf]
  %v3710 = vld [vmem:[%s3680 + $0x74] sm:$0xf]
  %v3711 = vld [vmem:[%s3680 + $0x78] sm:$0xf]
  %v3712 = vld [vmem:[%s3680 + $0x7c] sm:$0xf]
  %v3713 = vld [vmem:[%s3680 + $0x80] sm:$0xf]
  %v3714 = vld [vmem:[%s3680 + $0x84] sm:$0xf]
  %v3715 = vld [vmem:[%s3680 + $0x88] sm:$0xf]
  %v3716 = vld [vmem:[%s3680 + $0x8c] sm:$0xf]
  %v3717 = vld [vmem:[%s3680 + $0x90] sm:$0xf]
  %v3718 = vld [vmem:[%s3680 + $0x94] sm:$0xf]
  %v3719 = vld [vmem:[%s3680 + $0x98] sm:$0xf]
  %v3720 = vld [vmem:[%s3680 + $0x9c] sm:$0xf]
  %v3721 = vld [vmem:[%s3680 + $0xa0] sm:$0xf]
  %v3722 = vld [vmem:[%s3680 + $0xa4] sm:$0xf]
  %v3723 = vld [vmem:[%s3680 + $0xa8] sm:$0xf]
  %v3724 = vld [vmem:[%s3680 + $0xac] sm:$0xf]
  %v3725 = vld [vmem:[%s3680 + $0xb0] sm:$0xf]
  %v3726 = vld [vmem:[%s3680 + $0xb4] sm:$0xf]
  %v3727 = vld [vmem:[%s3680 + $0xb8] sm:$0xf]
  %v3728 = vld [vmem:[%s3680 + $0xbc] sm:$0xf]
  %v3729 = vld [vmem:[%s3680 + $0xc0] sm:$0xf]
  %v3730 = vld [vmem:[%s3680 + $0xc4] sm:$0xf]
  %v3731 = vld [vmem:[%s3680 + $0xc8] sm:$0xf]
  %v3732 = vld [vmem:[%s3680 + $0xcc] sm:$0xf]
  %v3733 = vld [vmem:[%s3680 + $0xd0] sm:$0xf]
  %v3734 = vld [vmem:[%s3680 + $0xd4] sm:$0xf]
  %v3735 = vld [vmem:[%s3680 + $0xd8] sm:$0xf]
  %v3736 = vld [vmem:[%s3680 + $0xdc] sm:$0xf]
  %v3737 = vld [vmem:[%s3680 + $0xe0] sm:$0xf]
  %v3738 = vld [vmem:[%s3680 + $0xe4] sm:$0xf]
  %v3739 = vld [vmem:[%s3680 + $0xe8] sm:$0xf]
  %v3740 = vld [vmem:[%s3680 + $0xec] sm:$0xf]
  %v3741 = vld [vmem:[%s3680 + $0xf0] sm:$0xf]
  %v3742 = vld [vmem:[%s3680 + $0xf4] sm:$0xf]
  %v3743 = vld [vmem:[%s3680 + $0xf8] sm:$0xf]
  %v3744 = vld [vmem:[%s3680 + $0xfc] sm:$0xf]
  %v3745 = vld [vmem:[%s3680 + $0x100] sm:$0xf]
  %v3746 = vld [vmem:[%s3680 + $0x104] sm:$0xf]
  %v3747 = vld [vmem:[%s3680 + $0x108] sm:$0xf]
  %v3748 = vld [vmem:[%s3680 + $0x10c] sm:$0xf]
  %v3749 = vld [vmem:[%s3680 + $0x110] sm:$0xf]
  %v3750 = vld [vmem:[%s3680 + $0x114] sm:$0xf]
  %v3751 = vld [vmem:[%s3680 + $0x118] sm:$0xf]
  %v3752 = vld [vmem:[%s3680 + $0x11c] sm:$0xf]
  %v3753 = vld [vmem:[%s3680 + $0x120] sm:$0xf]
  %v3754 = vld [vmem:[%s3680 + $0x124] sm:$0xf]
  %v3755 = vld [vmem:[%s3680 + $0x128] sm:$0xf]
  %v3756 = vld [vmem:[%s3680 + $0x12c] sm:$0xf]
  %v3757 = vld [vmem:[%s3680 + $0x130] sm:$0xf]
  %v3758 = vld [vmem:[%s3680 + $0x134] sm:$0xf]
  %v3759 = vld [vmem:[%s3680 + $0x138] sm:$0xf]
  %v3760 = vld [vmem:[%s3680 + $0x13c] sm:$0xf]
  %v3761 = vld [vmem:[%s3680 + $0x140] sm:$0xf]
  %v3762 = vld [vmem:[%s3680 + $0x144] sm:$0xf]
  %v3763 = vld [vmem:[%s3680 + $0x148] sm:$0xf]
  %v3764 = vld [vmem:[%s3680 + $0x14c] sm:$0xf]
  %v3765 = vld [vmem:[%s3680 + $0x150] sm:$0xf]
  %v3766 = vld [vmem:[%s3680 + $0x154] sm:$0xf]
  %v3767 = vld [vmem:[%s3680 + $0x158] sm:$0xf]
  %v3768 = vld [vmem:[%s3680 + $0x15c] sm:$0xf]
  %v3769 = vld [vmem:[%s3680 + $0x160] sm:$0xf]
  %v3770 = vld [vmem:[%s3680 + $0x164] sm:$0xf]
  %v3771 = vld [vmem:[%s3680 + $0x168] sm:$0xf]
  %v3772 = vld [vmem:[%s3680 + $0x16c] sm:$0xf]
  %v3773 = vld [vmem:[%s3680 + $0x170] sm:$0xf]
  %v3774 = vld [vmem:[%s3680 + $0x174] sm:$0xf]
  %v3775 = vld [vmem:[%s3680 + $0x178] sm:$0xf]
  %v3776 = vld [vmem:[%s3680 + $0x17c] sm:$0xf]
  %v3777 = vld [vmem:[%s3680 + $0x180] sm:$0xf]
  %v3778 = vld [vmem:[%s3680 + $0x184] sm:$0xf]
  %v3779 = vld [vmem:[%s3680 + $0x188] sm:$0xf]
  %v3780 = vld [vmem:[%s3680 + $0x18c] sm:$0xf]
  %v3781 = vld [vmem:[%s3680 + $0x190] sm:$0xf]
  %v3782 = vld [vmem:[%s3680 + $0x194] sm:$0xf]
  %v3783 = vld [vmem:[%s3680 + $0x198] sm:$0xf]
  %v3784 = vld [vmem:[%s3680 + $0x19c] sm:$0xf]
  %v3785 = vld [vmem:[%s3680 + $0x1a0] sm:$0xf]
  %v3786 = vld [vmem:[%s3680 + $0x1a4] sm:$0xf]
  %v3787 = vld [vmem:[%s3680 + $0x1a8] sm:$0xf]
  %v3788 = vld [vmem:[%s3680 + $0x1ac] sm:$0xf]
  %v3789 = vld [vmem:[%s3680 + $0x1b0] sm:$0xf]
  %v3790 = vld [vmem:[%s3680 + $0x1b4] sm:$0xf]
  %v3791 = vld [vmem:[%s3680 + $0x1b8] sm:$0xf]
  %v3792 = vld [vmem:[%s3680 + $0x1bc] sm:$0xf]
  %v3793 = vld [vmem:[%s3680 + $0x1c0] sm:$0xf]
  %v3794 = vld [vmem:[%s3680 + $0x1c4] sm:$0xf]
  %v3795 = vld [vmem:[%s3680 + $0x1c8] sm:$0xf]
  %v3796 = vld [vmem:[%s3680 + $0x1cc] sm:$0xf]
  %v3797 = vld [vmem:[%s3680 + $0x1d0] sm:$0xf]
  %v3798 = vld [vmem:[%s3680 + $0x1d4] sm:$0xf]
  %v3799 = vld [vmem:[%s3680 + $0x1d8] sm:$0xf]
  %v3800 = vld [vmem:[%s3680 + $0x1dc] sm:$0xf]
  %v3801 = vld [vmem:[%s3680 + $0x1e0] sm:$0xf]
  %v3802 = vld [vmem:[%s3680 + $0x1e4] sm:$0xf]
  %v3803 = vld [vmem:[%s3680 + $0x1e8] sm:$0xf]
  %v3804 = vld [vmem:[%s3680 + $0x1ec] sm:$0xf]
  %v3805 = vld [vmem:[%s3680 + $0x1f0] sm:$0xf]
  %v3806 = vld [vmem:[%s3680 + $0x1f4] sm:$0xf]
  %v3807 = vld [vmem:[%s3680 + $0x1f8] sm:$0xf]
  %v3808 = vld [vmem:[%s3680 + $0x1fc] sm:$0xf]
  %v3809 = vld [vmem:[%s3680 + $0x200] sm:$0xf]
  %v3810 = vld [vmem:[%s3680 + $0x204] sm:$0xf]
  %v3811 = vld [vmem:[%s3680 + $0x208] sm:$0xf]
  %v3812 = vld [vmem:[%s3680 + $0x20c] sm:$0xf]
  %v3813 = vld [vmem:[%s3680 + $0x210] sm:$0xf]
  %v3814 = vld [vmem:[%s3680 + $0x214] sm:$0xf]
  %v3815 = vld [vmem:[%s3680 + $0x218] sm:$0xf]
  %v3816 = vld [vmem:[%s3680 + $0x21c] sm:$0xf]
  %v3817 = vld [vmem:[%s3680 + $0x220] sm:$0xf]
  %v3818 = vld [vmem:[%s3680 + $0x224] sm:$0xf]
  %v3819 = vld [vmem:[%s3680 + $0x228] sm:$0xf]
  %v3820 = vld [vmem:[%s3680 + $0x22c] sm:$0xf]
  %v3821 = vld [vmem:[%s3680 + $0x230] sm:$0xf]
  %v3822 = vld [vmem:[%s3680 + $0x234] sm:$0xf]
  %v3823 = vld [vmem:[%s3680 + $0x238] sm:$0xf]
  %v3824 = vld [vmem:[%s3680 + $0x23c] sm:$0xf]
  %v3969 = vunpack.c.l.b16 %v3681
  %v3970 = vunpack.c.l.b16 %v3682
  %v3971 = vunpack.c.l.b16 %v3683
  %v3972 = vunpack.c.l.b16 %v3684
  %v3973 = vunpack.c.l.b16 %v3685
  %v3974 = vunpack.c.l.b16 %v3686
  %v3975 = vunpack.c.l.b16 %v3687
  %v3976 = vunpack.c.l.b16 %v3688
  %v3977 = vunpack.c.l.b16 %v3689
  %v3978 = vunpack.c.l.b16 %v3690
  %v3979 = vunpack.c.l.b16 %v3691
  %v3980 = vunpack.c.l.b16 %v3692
  %v3981 = vunpack.c.l.b16 %v3693
  %v3982 = vunpack.c.l.b16 %v3694
  %v3983 = vunpack.c.l.b16 %v3695
  %v3984 = vunpack.c.l.b16 %v3696
  %v3985 = vunpack.c.l.b16 %v3697
  %v3986 = vunpack.c.l.b16 %v3698
  %v3987 = vunpack.c.l.b16 %v3699
  %v3988 = vunpack.c.l.b16 %v3700
  %v3989 = vunpack.c.l.b16 %v3701
  %v3990 = vunpack.c.l.b16 %v3702
  %v3991 = vunpack.c.l.b16 %v3703
  %v3992 = vunpack.c.l.b16 %v3704
  %v3993 = vunpack.c.l.b16 %v3705
  %v3994 = vunpack.c.l.b16 %v3706
  %v3995 = vunpack.c.l.b16 %v3707
  %v3996 = vunpack.c.l.b16 %v3708
  %v3997 = vunpack.c.l.b16 %v3709
  %v3998 = vunpack.c.l.b16 %v3710
  %v3999 = vunpack.c.l.b16 %v3711
  %v4000 = vunpack.c.l.b16 %v3712
  %v4001 = vunpack.c.l.b16 %v3713
  %v4002 = vunpack.c.l.b16 %v3714
  %v4003 = vunpack.c.l.b16 %v3715
  %v4004 = vunpack.c.l.b16 %v3716
  %v4005 = vunpack.c.l.b16 %v3717
  %v4006 = vunpack.c.l.b16 %v3718
  %v4007 = vunpack.c.l.b16 %v3719
  %v4008 = vunpack.c.l.b16 %v3720
  %v4009 = vunpack.c.l.b16 %v3721
  %v4010 = vunpack.c.l.b16 %v3722
  %v4011 = vunpack.c.l.b16 %v3723
  %v4012 = vunpack.c.l.b16 %v3724
  %v4013 = vunpack.c.l.b16 %v3725
  %v4014 = vunpack.c.l.b16 %v3726
  %v4015 = vunpack.c.l.b16 %v3727
  %v4016 = vunpack.c.l.b16 %v3728
  %v4017 = vunpack.c.l.b16 %v3729
  %v4018 = vunpack.c.l.b16 %v3730
  %v4019 = vunpack.c.l.b16 %v3731
  %v4020 = vunpack.c.l.b16 %v3732
  %v4021 = vunpack.c.l.b16 %v3733
  %v4022 = vunpack.c.l.b16 %v3734
  %v4023 = vunpack.c.l.b16 %v3735
  %v4024 = vunpack.c.l.b16 %v3736
  %v4025 = vunpack.c.l.b16 %v3737
  %v4026 = vunpack.c.l.b16 %v3738
  %v4027 = vunpack.c.l.b16 %v3739
  %v4028 = vunpack.c.l.b16 %v3740
  %v4029 = vunpack.c.l.b16 %v3741
  %v4030 = vunpack.c.l.b16 %v3742
  %v4031 = vunpack.c.l.b16 %v3743
  %v4032 = vunpack.c.l.b16 %v3744
  %v4033 = vunpack.c.l.b16 %v3745
  %v4034 = vunpack.c.l.b16 %v3746
  %v4035 = vunpack.c.l.b16 %v3747
  %v4036 = vunpack.c.l.b16 %v3748
  %v4037 = vunpack.c.l.b16 %v3749
  %v4038 = vunpack.c.l.b16 %v3750
  %v4039 = vunpack.c.l.b16 %v3751
  %v4040 = vunpack.c.l.b16 %v3752
  %v4041 = vunpack.c.l.b16 %v3753
  %v4042 = vunpack.c.l.b16 %v3754
  %v4043 = vunpack.c.l.b16 %v3755
  %v4044 = vunpack.c.l.b16 %v3756
  %v4045 = vunpack.c.l.b16 %v3757
  %v4046 = vunpack.c.l.b16 %v3758
  %v4047 = vunpack.c.l.b16 %v3759
  %v4048 = vunpack.c.l.b16 %v3760
  %v4049 = vunpack.c.l.b16 %v3761
  %v4050 = vunpack.c.l.b16 %v3762
  %v4051 = vunpack.c.l.b16 %v3763
  %v4052 = vunpack.c.l.b16 %v3764
  %v4053 = vunpack.c.l.b16 %v3765
  %v4054 = vunpack.c.l.b16 %v3766
  %v4055 = vunpack.c.l.b16 %v3767
  %v4056 = vunpack.c.l.b16 %v3768
  %v4057 = vunpack.c.l.b16 %v3769
  %v4058 = vunpack.c.l.b16 %v3770
  %v4059 = vunpack.c.l.b16 %v3771
  %v4060 = vunpack.c.l.b16 %v3772
  %v4061 = vunpack.c.l.b16 %v3773
  %v4062 = vunpack.c.l.b16 %v3774
  %v4063 = vunpack.c.l.b16 %v3775
  %v4064 = vunpack.c.l.b16 %v3776
  %v4065 = vunpack.c.l.b16 %v3777
  %v4066 = vunpack.c.l.b16 %v3778
  %v4067 = vunpack.c.l.b16 %v3779
  %v4068 = vunpack.c.l.b16 %v3780
  %v4069 = vunpack.c.l.b16 %v3781
  %v4070 = vunpack.c.l.b16 %v3782
  %v4071 = vunpack.c.l.b16 %v3783
  %v4072 = vunpack.c.l.b16 %v3784
  %v4073 = vunpack.c.l.b16 %v3785
  %v4074 = vunpack.c.l.b16 %v3786
  %v4075 = vunpack.c.l.b16 %v3787
  %v4076 = vunpack.c.l.b16 %v3788
  %v4077 = vunpack.c.l.b16 %v3789
  %v4078 = vunpack.c.l.b16 %v3790
  %v4079 = vunpack.c.l.b16 %v3791
  %v4080 = vunpack.c.l.b16 %v3792
  %v4081 = vunpack.c.l.b16 %v3793
  %v4082 = vunpack.c.l.b16 %v3794
  %v4083 = vunpack.c.l.b16 %v3795
  %v4084 = vunpack.c.l.b16 %v3796
  %v4085 = vunpack.c.l.b16 %v3797
  %v4086 = vunpack.c.l.b16 %v3798
  %v4087 = vunpack.c.l.b16 %v3799
  %v4088 = vunpack.c.l.b16 %v3800
  %v4089 = vunpack.c.l.b16 %v3801
  %v4090 = vunpack.c.l.b16 %v3802
  %v4091 = vunpack.c.l.b16 %v3803
  %v4092 = vunpack.c.l.b16 %v3804
  %v4093 = vunpack.c.l.b16 %v3805
  %v4094 = vunpack.c.l.b16 %v3806
  %v4095 = vunpack.c.l.b16 %v3807
  %v4096 = vunpack.c.l.b16 %v3808
  %v4097 = vunpack.c.l.b16 %v3809
  %v4098 = vunpack.c.l.b16 %v3810
  %v4099 = vunpack.c.l.b16 %v3811
  %v4100 = vunpack.c.l.b16 %v3812
  %v4101 = vunpack.c.l.b16 %v3813
  %v4102 = vunpack.c.l.b16 %v3814
  %v4103 = vunpack.c.l.b16 %v3815
  %v4104 = vunpack.c.l.b16 %v3816
  %v4105 = vunpack.c.l.b16 %v3817
  %v4106 = vunpack.c.l.b16 %v3818
  %v4107 = vunpack.c.l.b16 %v3819
  %v4108 = vunpack.c.l.b16 %v3820
  %v4109 = vunpack.c.l.b16 %v3821
  %v4110 = vunpack.c.l.b16 %v3822
  %v4111 = vunpack.c.l.b16 %v3823
  %v4112 = vunpack.c.l.b16 %v3824
  %v4113 = vpack.c.b16 %v3970, %v3969
  %v4114 = vpack.c.b16 %v3972, %v3971
  %v4115 = vpack.c.b16 %v3974, %v3973
  %v4116 = vpack.c.b16 %v3976, %v3975
  %v4117 = vpack.c.b16 %v3978, %v3977
  %v4118 = vpack.c.b16 %v3980, %v3979
  %v4119 = vpack.c.b16 %v3982, %v3981
  %v4120 = vpack.c.b16 %v3984, %v3983
  %v4121 = vpack.c.b16 %v3986, %v3985
  %v4122 = vpack.c.b16 %v3988, %v3987
  %v4123 = vpack.c.b16 %v3990, %v3989
  %v4124 = vpack.c.b16 %v3992, %v3991
  %v4125 = vpack.c.b16 %v3994, %v3993
  %v4126 = vpack.c.b16 %v3996, %v3995
  %v4127 = vpack.c.b16 %v3998, %v3997
  %v4128 = vpack.c.b16 %v4000, %v3999
  %v4129 = vpack.c.b16 %v4002, %v4001
  %v4130 = vpack.c.b16 %v4004, %v4003
  %v4131 = vpack.c.b16 %v4006, %v4005
  %v4132 = vpack.c.b16 %v4008, %v4007
  %v4133 = vpack.c.b16 %v4010, %v4009
  %v4134 = vpack.c.b16 %v4012, %v4011
  %v4135 = vpack.c.b16 %v4014, %v4013
  %v4136 = vpack.c.b16 %v4016, %v4015
  %v4137 = vpack.c.b16 %v4018, %v4017
  %v4138 = vpack.c.b16 %v4020, %v4019
  %v4139 = vpack.c.b16 %v4022, %v4021
  %v4140 = vpack.c.b16 %v4024, %v4023
  %v4141 = vpack.c.b16 %v4026, %v4025
  %v4142 = vpack.c.b16 %v4028, %v4027
  %v4143 = vpack.c.b16 %v4030, %v4029
  %v4144 = vpack.c.b16 %v4032, %v4031
  %v4145 = vpack.c.b16 %v4034, %v4033
  %v4146 = vpack.c.b16 %v4036, %v4035
  %v4147 = vpack.c.b16 %v4038, %v4037
  %v4148 = vpack.c.b16 %v4040, %v4039
  %v4149 = vpack.c.b16 %v4042, %v4041
  %v4150 = vpack.c.b16 %v4044, %v4043
  %v4151 = vpack.c.b16 %v4046, %v4045
  %v4152 = vpack.c.b16 %v4048, %v4047
  %v4153 = vpack.c.b16 %v4050, %v4049
  %v4154 = vpack.c.b16 %v4052, %v4051
  %v4155 = vpack.c.b16 %v4054, %v4053
  %v4156 = vpack.c.b16 %v4056, %v4055
  %v4157 = vpack.c.b16 %v4058, %v4057
  %v4158 = vpack.c.b16 %v4060, %v4059
  %v4159 = vpack.c.b16 %v4062, %v4061
  %v4160 = vpack.c.b16 %v4064, %v4063
  %v4161 = vpack.c.b16 %v4066, %v4065
  %v4162 = vpack.c.b16 %v4068, %v4067
  %v4163 = vpack.c.b16 %v4070, %v4069
  %v4164 = vpack.c.b16 %v4072, %v4071
  %v4165 = vpack.c.b16 %v4074, %v4073
  %v4166 = vpack.c.b16 %v4076, %v4075
  %v4167 = vpack.c.b16 %v4078, %v4077
  %v4168 = vpack.c.b16 %v4080, %v4079
  %v4169 = vpack.c.b16 %v4082, %v4081
  %v4170 = vpack.c.b16 %v4084, %v4083
  %v4171 = vpack.c.b16 %v4086, %v4085
  %v4172 = vpack.c.b16 %v4088, %v4087
  %v4173 = vpack.c.b16 %v4090, %v4089
  %v4174 = vpack.c.b16 %v4092, %v4091
  %v4175 = vpack.c.b16 %v4094, %v4093
  %v4176 = vpack.c.b16 %v4096, %v4095
  %v4177 = vpack.c.b16 %v4098, %v4097
  %v4178 = vpack.c.b16 %v4100, %v4099
  %v4179 = vpack.c.b16 %v4102, %v4101
  %v4180 = vpack.c.b16 %v4104, %v4103
  %v4181 = vpack.c.b16 %v4106, %v4105
  %v4182 = vpack.c.b16 %v4108, %v4107
  %v4183 = vpack.c.b16 %v4110, %v4109
  %v4184 = vpack.c.b16 %v4112, %v4111
  %4257 = vmatprep.subr.bf16.mxu0 0
  %4258 = vmatpush1.bf16.msra.mxu0 %v4113
  %4259 = vmatprep.subr.bf16.mxu0 0
  %4260 = vmatpush1.bf16.msra.mxu0 %v4114
  %4261 = vmatprep.subr.bf16.mxu0 0
  %4262 = vmatpush1.bf16.msra.mxu0 %v4115
  %4263 = vmatprep.subr.bf16.mxu0 0
  %4264 = vmatpush1.bf16.msra.mxu0 %v4116
  %4265 = vmatprep.subr.bf16.mxu0 0
  %4266 = vmatpush1.bf16.msra.mxu0 %v4117
  %4267 = vmatprep.subr.bf16.mxu0 0
  %4268 = vmatpush1.bf16.msra.mxu0 %v4118
  %4269 = vmatprep.subr.bf16.mxu0 0
  %4270 = vmatpush1.bf16.msra.mxu0 %v4119
  %4271 = vmatprep.subr.bf16.mxu0 0
  %4272 = vmatpush1.bf16.msra.mxu0 %v4120
  %4273 = vmatprep.subr.bf16.mxu0 0
  %4274 = vmatpush1.bf16.msra.mxu0 %v4121
  %4275 = vmatprep.subr.bf16.mxu0 0
  %4276 = vmatpush1.bf16.msra.mxu0 %v4122
  %4277 = vmatprep.subr.bf16.mxu0 0
  %4278 = vmatpush1.bf16.msra.mxu0 %v4123
  %4279 = vmatprep.subr.bf16.mxu0 0
  %4280 = vmatpush1.bf16.msra.mxu0 %v4124
  %4281 = vmatprep.subr.bf16.mxu0 0
  %4282 = vmatpush1.bf16.msra.mxu0 %v4125
  %4283 = vmatprep.subr.bf16.mxu0 0
  %4284 = vmatpush1.bf16.msra.mxu0 %v4126
  %4285 = vmatprep.subr.bf16.mxu0 0
  %4286 = vmatpush1.bf16.msra.mxu0 %v4127
  %4287 = vmatprep.subr.bf16.mxu0 0
  %4288 = vmatpush1.bf16.msra.mxu0 %v4128
  %4289 = vmatprep.mubr.bf16.mxu0 %v464
  %4290 = vmatmul.mubr.bf16.gmra.mrb[0].mxu0 %v463
  %v4291 = vpop.f32.mrb[0].mxu0
  %v4292 = vadd.f32 0.0, %v4291
  %v4293 = vpop.f32.mrb[0].mxu0
  %v4294 = vpop.f32.mrb[0].mxu0
  %v4295 = vadd.f32 0.0, %v4294
  %v4296 = vpop.f32.mrb[0].mxu0
  %4297 = vmatprep.mubr.bf16.mxu0 %v473
  %4298 = vmatmul.mubr.bf16.gmra.mrb[0].mxu0 %v472
  %v4299 = vpop.f32.mrb[0].mxu0
  %v4300 = vadd.f32 0.0, %v4299
  %v4301 = vpop.f32.mrb[0].mxu0
  %v4302 = vpop.f32.mrb[0].mxu0
  %v4303 = vadd.f32 0.0, %v4302
  %v4304 = vpop.f32.mrb[0].mxu0
  %4305 = vmatprep.mubr.bf16.mxu0 %v482
  %4306 = vmatmul.mubr.bf16.gmra.mrb[0].mxu0 %v481
  %v4307 = vpop.f32.mrb[0].mxu0
  %v4308 = vadd.f32 0.0, %v4307
  %v4309 = vpop.f32.mrb[0].mxu0
  %v4310 = vpop.f32.mrb[0].mxu0
  %v4311 = vadd.f32 0.0, %v4310
  %v4312 = vpop.f32.mrb[0].mxu0
  %4313 = vmatprep.mubr.bf16.mxu0 %v491
  %4314 = vmatmul.mubr.bf16.gmra.mrb[0].mxu0 %v490
  %v4315 = vpop.f32.mrb[0].mxu0
  %v4316 = vadd.f32 0.0, %v4315
  %v4317 = vpop.f32.mrb[0].mxu0
  %v4318 = vpop.f32.mrb[0].mxu0
  %v4319 = vadd.f32 0.0, %v4318
  %v4320 = vpop.f32.mrb[0].mxu0
  %4321 = vmatprep.mubr.bf16.mxu0 %v500
  %4322 = vmatmul.mubr.bf16.gmra.mrb[0].mxu0 %v499
  %v4323 = vpop.f32.mrb[0].mxu0
  %v4324 = vadd.f32 0.0, %v4323
  %v4325 = vpop.f32.mrb[0].mxu0
  %v4326 = vpop.f32.mrb[0].mxu0
  %v4327 = vadd.f32 0.0, %v4326
  %v4328 = vpop.f32.mrb[0].mxu0
  %4329 = vmatprep.mubr.bf16.mxu0 %v509
  %4330 = vmatmul.mubr.bf16.gmra.mrb[0].mxu0 %v508
  %v4331 = vpop.f32.mrb[0].mxu0
  %v4332 = vadd.f32 0.0, %v4331
  %v4333 = vpop.f32.mrb[0].mxu0
  %v4334 = vpop.f32.mrb[0].mxu0
  %v4335 = vadd.f32 0.0, %v4334
  %v4336 = vpop.f32.mrb[0].mxu0
  %4337 = vmatprep.mubr.bf16.mxu0 %v518
  %4338 = vmatmul.mubr.bf16.gmra.mrb[0].mxu0 %v517
  %v4339 = vpop.f32.mrb[0].mxu0
  %v4340 = vadd.f32 0.0, %v4339
  %v4341 = vpop.f32.mrb[0].mxu0
  %v4342 = vpop.f32.mrb[0].mxu0
  %v4343 = vadd.f32 0.0, %v4342
  %v4344 = vpop.f32.mrb[0].mxu0
  %4345 = vmatprep.mubr.bf16.mxu0 %v527
  %4346 = vmatmul.mubr.bf16.gmra.mrb[0].mxu0 %v526
  %v4347 = vpop.f32.mrb[0].mxu0
  %v4348 = vadd.f32 0.0, %v4347
  %v4349 = vpop.f32.mrb[0].mxu0
  %v4350 = vpop.f32.mrb[0].mxu0
  %v4351 = vadd.f32 0.0, %v4350
  %v4352 = vpop.f32.mrb[0].mxu0
  %4353 = vdwg.mxu0
  %4354 = vmatprep.subr.bf16.mxu0 0
  %4355 = vmatpush1.bf16.msra.mxu0 %v4129
  %4356 = vmatprep.subr.bf16.mxu0 0
  %4357 = vmatpush1.bf16.msra.mxu0 %v4130
  %4358 = vmatprep.subr.bf16.mxu0 0
  %4359 = vmatpush1.bf16.msra.mxu0 %v4131
  %4360 = vmatprep.subr.bf16.mxu0 0
  %4361 = vmatpush1.bf16.msra.mxu0 %v4132
  %4362 = vmatprep.subr.bf16.mxu0 0
  %4363 = vmatpush1.bf16.msra.mxu0 %v4133
  %4364 = vmatprep.subr.bf16.mxu0 0
  %4365 = vmatpush1.bf16.msra.mxu0 %v4134
  %4366 = vmatprep.subr.bf16.mxu0 0
  %4367 = vmatpush1.bf16.msra.mxu0 %v4135
  %4368 = vmatprep.subr.bf16.mxu0 0
  %4369 = vmatpush1.bf16.msra.mxu0 %v4136
  %4370 = vmatprep.subr.bf16.mxu0 0
  %4371 = vmatpush1.bf16.msra.mxu0 %v4137
  %4372 = vmatprep.subr.bf16.mxu0 0
  %4373 = vmatpush1.bf16.msra.mxu0 %v4138
  %4374 = vmatprep.subr.bf16.mxu0 0
  %4375 = vmatpush1.bf16.msra.mxu0 %v4139
  %4376 = vmatprep.subr.bf16.mxu0 0
  %4377 = vmatpush1.bf16.msra.mxu0 %v4140
  %4378 = vmatprep.subr.bf16.mxu0 0
  %4379 = vmatpush1.bf16.msra.mxu0 %v4141
  %4380 = vmatprep.subr.bf16.mxu0 0
  %4381 = vmatpush1.bf16.msra.mxu0 %v4142
  %4382 = vmatprep.subr.bf16.mxu0 0
  %4383 = vmatpush1.bf16.msra.mxu0 %v4143
  %4384 = vmatprep.subr.bf16.mxu0 0
  %4385 = vmatpush1.bf16.msra.mxu0 %v4144
  %4386 = vmatprep.mubr.bf16.mxu0 %v466
  %4387 = vmatmul.mubr.bf16.gmra.mrb[0].mxu0 %v465
  %v4388 = vpop.f32.mrb[0].mxu0
  %v4389 = vadd.f32 %v4292, %v4388
  %v4390 = vpop.f32.mrb[0].mxu0
  %v4391 = vpop.f32.mrb[0].mxu0
  %v4392 = vadd.f32 %v4295, %v4391
  %v4393 = vpop.f32.mrb[0].mxu0
  %4394 = vmatprep.mubr.bf16.mxu0 %v475
  %4395 = vmatmul.mubr.bf16.gmra.mrb[0].mxu0 %v474
  %v4396 = vpop.f32.mrb[0].mxu0
  %v4397 = vadd.f32 %v4300, %v4396
  %v4398 = vpop.f32.mrb[0].mxu0
  %v4399 = vpop.f32.mrb[0].mxu0
  %v4400 = vadd.f32 %v4303, %v4399
  %v4401 = vpop.f32.mrb[0].mxu0
  %4402 = vmatprep.mubr.bf16.mxu0 %v484
  %4403 = vmatmul.mubr.bf16.gmra.mrb[0].mxu0 %v483
  %v4404 = vpop.f32.mrb[0].mxu0
  %v4405 = vadd.f32 %v4308, %v4404
  %v4406 = vpop.f32.mrb[0].mxu0
  %v4407 = vpop.f32.mrb[0].mxu0
  %v4408 = vadd.f32 %v4311, %v4407
  %v4409 = vpop.f32.mrb[0].mxu0
  %4410 = vmatprep.mubr.bf16.mxu0 %v493
  %4411 = vmatmul.mubr.bf16.gmra.mrb[0].mxu0 %v492
  %v4412 = vpop.f32.mrb[0].mxu0
  %v4413 = vadd.f32 %v4316, %v4412
  %v4414 = vpop.f32.mrb[0].mxu0
  %v4415 = vpop.f32.mrb[0].mxu0
  %v4416 = vadd.f32 %v4319, %v4415
  %v4417 = vpop.f32.mrb[0].mxu0
  %4418 = vmatprep.mubr.bf16.mxu0 %v502
  %4419 = vmatmul.mubr.bf16.gmra.mrb[0].mxu0 %v501
  %v4420 = vpop.f32.mrb[0].mxu0
  %v4421 = vadd.f32 %v4324, %v4420
  %v4422 = vpop.f32.mrb[0].mxu0
  %v4423 = vpop.f32.mrb[0].mxu0
  %v4424 = vadd.f32 %v4327, %v4423
  %v4425 = vpop.f32.mrb[0].mxu0
  %4426 = vmatprep.mubr.bf16.mxu0 %v511
  %4427 = vmatmul.mubr.bf16.gmra.mrb[0].mxu0 %v510
  %v4428 = vpop.f32.mrb[0].mxu0
  %v4429 = vadd.f32 %v4332, %v4428
  %v4430 = vpop.f32.mrb[0].mxu0
  %v4431 = vpop.f32.mrb[0].mxu0
  %v4432 = vadd.f32 %v4335, %v4431
  %v4433 = vpop.f32.mrb[0].mxu0
  %4434 = vmatprep.mubr.bf16.mxu0 %v520
  %4435 = vmatmul.mubr.bf16.gmra.mrb[0].mxu0 %v519
  %v4436 = vpop.f32.mrb[0].mxu0
  %v4437 = vadd.f32 %v4340, %v4436
  %v4438 = vpop.f32.mrb[0].mxu0
  %v4439 = vpop.f32.mrb[0].mxu0
  %v4440 = vadd.f32 %v4343, %v4439
  %v4441 = vpop.f32.mrb[0].mxu0
  %4442 = vmatprep.mubr.bf16.mxu0 %v529
  %4443 = vmatmul.mubr.bf16.gmra.mrb[0].mxu0 %v528
  %v4444 = vpop.f32.mrb[0].mxu0
  %v4445 = vadd.f32 %v4348, %v4444
  %v4446 = vpop.f32.mrb[0].mxu0
  %v4447 = vpop.f32.mrb[0].mxu0
  %v4448 = vadd.f32 %v4351, %v4447
  %v4449 = vpop.f32.mrb[0].mxu0
  %4450 = vdwg.mxu0
  %4451 = vmatprep.subr.bf16.mxu0 0
  %4452 = vmatpush1.bf16.msra.mxu0 %v4145
  %4453 = vmatprep.subr.bf16.mxu0 0
  %4454 = vmatpush1.bf16.msra.mxu0 %v4146
  %4455 = vmatprep.subr.bf16.mxu0 0
  %4456 = vmatpush1.bf16.msra.mxu0 %v4147
  %4457 = vmatprep.subr.bf16.mxu0 0
  %4458 = vmatpush1.bf16.msra.mxu0 %v4148
  %4459 = vmatprep.subr.bf16.mxu0 0
  %4460 = vmatpush1.bf16.msra.mxu0 %v4149
  %4461 = vmatprep.subr.bf16.mxu0 0
  %4462 = vmatpush1.bf16.msra.mxu0 %v4150
  %4463 = vmatprep.subr.bf16.mxu0 0
  %4464 = vmatpush1.bf16.msra.mxu0 %v4151
  %4465 = vmatprep.subr.bf16.mxu0 0
  %4466 = vmatpush1.bf16.msra.mxu0 %v4152
  %4467 = vmatprep.subr.bf16.mxu0 0
  %4468 = vmatpush1.bf16.msra.mxu0 %v4153
  %4469 = vmatprep.subr.bf16.mxu0 0
  %4470 = vmatpush1.bf16.msra.mxu0 %v4154
  %4471 = vmatprep.subr.bf16.mxu0 0
  %4472 = vmatpush1.bf16.msra.mxu0 %v4155
  %4473 = vmatprep.subr.bf16.mxu0 0
  %4474 = vmatpush1.bf16.msra.mxu0 %v4156
  %4475 = vmatprep.subr.bf16.mxu0 0
  %4476 = vmatpush1.bf16.msra.mxu0 %v4157
  %4477 = vmatprep.subr.bf16.mxu0 0
  %4478 = vmatpush1.bf16.msra.mxu0 %v4158
  %4479 = vmatprep.subr.bf16.mxu0 0
  %4480 = vmatpush1.bf16.msra.mxu0 %v4159
  %4481 = vmatprep.subr.bf16.mxu0 0
  %4482 = vmatpush1.bf16.msra.mxu0 %v4160
  %4483 = vmatprep.mubr.bf16.mxu0 %v468
  %4484 = vmatmul.mubr.bf16.gmra.mrb[0].mxu0 %v467
  %v4485 = vpop.f32.mrb[0].mxu0
  %v4486 = vadd.f32 %v4389, %v4485
  %v4487 = vpop.f32.mrb[0].mxu0
  %v4488 = vpop.f32.mrb[0].mxu0
  %v4489 = vadd.f32 %v4392, %v4488
  %v4490 = vpop.f32.mrb[0].mxu0
  %4491 = vmatprep.mubr.bf16.mxu0 %v477
  %4492 = vmatmul.mubr.bf16.gmra.mrb[0].mxu0 %v476
  %v4493 = vpop.f32.mrb[0].mxu0
  %v4494 = vadd.f32 %v4397, %v4493
  %v4495 = vpop.f32.mrb[0].mxu0
  %v4496 = vpop.f32.mrb[0].mxu0
  %v4497 = vadd.f32 %v4400, %v4496
  %v4498 = vpop.f32.mrb[0].mxu0
  %4499 = vmatprep.mubr.bf16.mxu0 %v486
  %4500 = vmatmul.mubr.bf16.gmra.mrb[0].mxu0 %v485
  %v4501 = vpop.f32.mrb[0].mxu0
  %v4502 = vadd.f32 %v4405, %v4501
  %v4503 = vpop.f32.mrb[0].mxu0
  %v4504 = vpop.f32.mrb[0].mxu0
  %v4505 = vadd.f32 %v4408, %v4504
  %v4506 = vpop.f32.mrb[0].mxu0
  %4507 = vmatprep.mubr.bf16.mxu0 %v495
  %4508 = vmatmul.mubr.bf16.gmra.mrb[0].mxu0 %v494
  %v4509 = vpop.f32.mrb[0].mxu0
  %v4510 = vadd.f32 %v4413, %v4509
  %v4511 = vpop.f32.mrb[0].mxu0
  %v4512 = vpop.f32.mrb[0].mxu0
  %v4513 = vadd.f32 %v4416, %v4512
  %v4514 = vpop.f32.mrb[0].mxu0
  %4515 = vmatprep.mubr.bf16.mxu0 %v504
  %4516 = vmatmul.mubr.bf16.gmra.mrb[0].mxu0 %v503
  %v4517 = vpop.f32.mrb[0].mxu0
  %v4518 = vadd.f32 %v4421, %v4517
  %v4519 = vpop.f32.mrb[0].mxu0
  %v4520 = vpop.f32.mrb[0].mxu0
  %v4521 = vadd.f32 %v4424, %v4520
  %v4522 = vpop.f32.mrb[0].mxu0
  %4523 = vmatprep.mubr.bf16.mxu0 %v513
  %4524 = vmatmul.mubr.bf16.gmra.mrb[0].mxu0 %v512
  %v4525 = vpop.f32.mrb[0].mxu0
  %v4526 = vadd.f32 %v4429, %v4525
  %v4527 = vpop.f32.mrb[0].mxu0
  %v4528 = vpop.f32.mrb[0].mxu0
  %v4529 = vadd.f32 %v4432, %v4528
  %v4530 = vpop.f32.mrb[0].mxu0
  %4531 = vmatprep.mubr.bf16.mxu0 %v522
  %4532 = vmatmul.mubr.bf16.gmra.mrb[0].mxu0 %v521
  %v4533 = vpop.f32.mrb[0].mxu0
  %v4534 = vadd.f32 %v4437, %v4533
  %v4535 = vpop.f32.mrb[0].mxu0
  %v4536 = vpop.f32.mrb[0].mxu0
  %v4537 = vadd.f32 %v4440, %v4536
  %v4538 = vpop.f32.mrb[0].mxu0
  %4539 = vmatprep.mubr.bf16.mxu0 %v531
  %4540 = vmatmul.mubr.bf16.gmra.mrb[0].mxu0 %v530
  %v4541 = vpop.f32.mrb[0].mxu0
  %v4542 = vadd.f32 %v4445, %v4541
  %v4543 = vpop.f32.mrb[0].mxu0
  %v4544 = vpop.f32.mrb[0].mxu0
  %v4545 = vadd.f32 %v4448, %v4544
  %v4546 = vpop.f32.mrb[0].mxu0
  %4547 = vdwg.mxu0
  %4548 = vmatprep.subr.bf16.mxu0 0
  %4549 = vmatpush1.bf16.msra.mxu0 %v4161
  %4550 = vmatprep.subr.bf16.mxu0 0
  %4551 = vmatpush1.bf16.msra.mxu0 %v4162
  %4552 = vmatprep.subr.bf16.mxu0 0
  %4553 = vmatpush1.bf16.msra.mxu0 %v4163
  %4554 = vmatprep.subr.bf16.mxu0 0
  %4555 = vmatpush1.bf16.msra.mxu0 %v4164
  %4556 = vmatprep.subr.bf16.mxu0 0
  %4557 = vmatpush1.bf16.msra.mxu0 %v4165
  %4558 = vmatprep.subr.bf16.mxu0 0
  %4559 = vmatpush1.bf16.msra.mxu0 %v4166
  %4560 = vmatprep.subr.bf16.mxu0 0
  %4561 = vmatpush1.bf16.msra.mxu0 %v4167
  %4562 = vmatprep.subr.bf16.mxu0 0
  %4563 = vmatpush1.bf16.msra.mxu0 %v4168
  %4564 = vmatprep.subr.bf16.mxu0 0
  %4565 = vmatpush1.bf16.msra.mxu0 %v4169
  %4566 = vmatprep.subr.bf16.mxu0 0
  %4567 = vmatpush1.bf16.msra.mxu0 %v4170
  %4568 = vmatprep.subr.bf16.mxu0 0
  %4569 = vmatpush1.bf16.msra.mxu0 %v4171
  %4570 = vmatprep.subr.bf16.mxu0 0
  %4571 = vmatpush1.bf16.msra.mxu0 %v4172
  %4572 = vmatprep.subr.bf16.mxu0 0
  %4573 = vmatpush1.bf16.msra.mxu0 %v4173
  %4574 = vmatprep.subr.bf16.mxu0 0
  %4575 = vmatpush1.bf16.msra.mxu0 %v4174
  %4576 = vmatprep.subr.bf16.mxu0 0
  %4577 = vmatpush1.bf16.msra.mxu0 %v4175
  %4578 = vmatprep.subr.bf16.mxu0 0
  %4579 = vmatpush1.bf16.msra.mxu0 %v4176
  %4580 = vmatprep.mubr.bf16.mxu0 %v470
  %4581 = vmatmul.mubr.bf16.gmra.mrb[0].mxu0 %v469
  %v4582 = vpop.f32.mrb[0].mxu0
  %v4583 = vadd.f32 %v4486, %v4582
  %v4584 = vpop.f32.mrb[0].mxu0
  %v4585 = vpop.f32.mrb[0].mxu0
  %v4586 = vadd.f32 %v4489, %v4585
  %v4587 = vpop.f32.mrb[0].mxu0
  %4588 = vmatprep.mubr.bf16.mxu0 %v479
  %4589 = vmatmul.mubr.bf16.gmra.mrb[0].mxu0 %v478
  %v4590 = vpop.f32.mrb[0].mxu0
  %v4591 = vadd.f32 %v4494, %v4590
  %v4592 = vpop.f32.mrb[0].mxu0
  %v4593 = vpop.f32.mrb[0].mxu0
  %v4594 = vadd.f32 %v4497, %v4593
  %v4595 = vpop.f32.mrb[0].mxu0
  %4596 = vmatprep.mubr.bf16.mxu0 %v488
  %4597 = vmatmul.mubr.bf16.gmra.mrb[0].mxu0 %v487
  %v4598 = vpop.f32.mrb[0].mxu0
  %v4599 = vadd.f32 %v4502, %v4598
  %v4600 = vpop.f32.mrb[0].mxu0
  %v4601 = vpop.f32.mrb[0].mxu0
  %v4602 = vadd.f32 %v4505, %v4601
  %v4603 = vpop.f32.mrb[0].mxu0
  %4604 = vmatprep.mubr.bf16.mxu0 %v497
  %4605 = vmatmul.mubr.bf16.gmra.mrb[0].mxu0 %v496
  %v4606 = vpop.f32.mrb[0].mxu0
  %v4607 = vadd.f32 %v4510, %v4606
  %v4608 = vpop.f32.mrb[0].mxu0
  %v4609 = vpop.f32.mrb[0].mxu0
  %v4610 = vadd.f32 %v4513, %v4609
  %v4611 = vpop.f32.mrb[0].mxu0
  %4612 = vmatprep.mubr.bf16.mxu0 %v506
  %4613 = vmatmul.mubr.bf16.gmra.mrb[0].mxu0 %v505
  %v4614 = vpop.f32.mrb[0].mxu0
  %v4615 = vadd.f32 %v4518, %v4614
  %v4616 = vpop.f32.mrb[0].mxu0
  %v4617 = vpop.f32.mrb[0].mxu0
  %v4618 = vadd.f32 %v4521, %v4617
  %v4619 = vpop.f32.mrb[0].mxu0
  %4620 = vmatprep.mubr.bf16.mxu0 %v515
  %4621 = vmatmul.mubr.bf16.gmra.mrb[0].mxu0 %v514
  %v4622 = vpop.f32.mrb[0].mxu0
  %v4623 = vadd.f32 %v4526, %v4622
  %v4624 = vpop.f32.mrb[0].mxu0
  %v4625 = vpop.f32.mrb[0].mxu0
  %v4626 = vadd.f32 %v4529, %v4625
  %v4627 = vpop.f32.mrb[0].mxu0
  %4628 = vmatprep.mubr.bf16.mxu0 %v524
  %4629 = vmatmul.mubr.bf16.gmra.mrb[0].mxu0 %v523
  %v4630 = vpop.f32.mrb[0].mxu0
  %v4631 = vadd.f32 %v4534, %v4630
  %v4632 = vpop.f32.mrb[0].mxu0
  %v4633 = vpop.f32.mrb[0].mxu0
  %v4634 = vadd.f32 %v4537, %v4633
  %v4635 = vpop.f32.mrb[0].mxu0
  %4636 = vmatprep.mubr.bf16.mxu0 %v533
  %4637 = vmatmul.mubr.bf16.gmra.mrb[0].mxu0 %v532
  %v4638 = vpop.f32.mrb[0].mxu0
  %v4639 = vadd.f32 %v4542, %v4638
  %v4640 = vpop.f32.mrb[0].mxu0
  %v4641 = vpop.f32.mrb[0].mxu0
  %v4642 = vadd.f32 %v4545, %v4641
  %v4643 = vpop.f32.mrb[0].mxu0
  %4644 = vdwg.mxu0
  %4645 = vmatprep.subr.bf16.mxu0 0
  %4646 = vmatpush1.bf16.msra.mxu0 %v4177
  %4647 = vmatprep.subr.bf16.mxu0 0
  %4648 = vmatpush1.bf16.msra.mxu0 %v4178
  %4649 = vmatprep.subr.bf16.mxu0 0
  %4650 = vmatpush1.bf16.msra.mxu0 %v4179
  %4651 = vmatprep.subr.bf16.mxu0 0
  %4652 = vmatpush1.bf16.msra.mxu0 %v4180
  %4653 = vmatprep.subr.bf16.mxu0 0
  %4654 = vmatpush1.bf16.msra.mxu0 %v4181
  %4655 = vmatprep.subr.bf16.mxu0 0
  %4656 = vmatpush1.bf16.msra.mxu0 %v4182
  %4657 = vmatprep.subr.bf16.mxu0 0
  %4658 = vmatpush1.bf16.msra.mxu0 %v4183
  %4659 = vmatprep.subr.bf16.mxu0 0
  %4660 = vmatpush1.bf16.msra.mxu0 %v4184
  %4661 = vmatprep.subr.bf16.mxu0 0
  %4662 = vmatpush1.bf16.msra.mxu0 0
  %4663 = vmatprep.subr.bf16.mxu0 0
  %4664 = vmatpush1.bf16.msra.mxu0 0
  %4665 = vmatprep.subr.bf16.mxu0 0
  %4666 = vmatpush1.bf16.msra.mxu0 0
  %4667 = vmatprep.subr.bf16.mxu0 0
  %4668 = vmatpush1.bf16.msra.mxu0 0
  %4669 = vmatprep.subr.bf16.mxu0 0
  %4670 = vmatpush1.bf16.msra.mxu0 0
  %4671 = vmatprep.subr.bf16.mxu0 0
  %4672 = vmatpush1.bf16.msra.mxu0 0
  %4673 = vmatprep.subr.bf16.mxu0 0
  %4674 = vmatpush1.bf16.msra.mxu0 0
  %4675 = vmatprep.subr.bf16.mxu0 0
  %4676 = vmatpush1.bf16.msra.mxu0 0
  %4677 = vmatprep.mubr.bf16.mxu0 0
  %4678 = vmatmul.mubr.bf16.gmra.mrb[0].mxu0 %v471
  %v4679 = vpop.f32.mrb[0].mxu0
  %v4680 = vadd.f32 %v4583, %v4679
  %v4681 = vpop.f32.mrb[0].mxu0
  %v4682 = vpop.f32.mrb[0].mxu0
  %v4683 = vadd.f32 %v4586, %v4682
  %v4684 = vpop.f32.mrb[0].mxu0
  %4685 = vmatprep.mubr.bf16.mxu0 0
  %4686 = vmatmul.mubr.bf16.gmra.mrb[0].mxu0 %v480
  %v4687 = vpop.f32.mrb[0].mxu0
  %v4688 = vadd.f32 %v4591, %v4687
  %v4689 = vpop.f32.mrb[0].mxu0
  %v4690 = vpop.f32.mrb[0].mxu0
  %v4691 = vadd.f32 %v4594, %v4690
  %v4692 = vpop.f32.mrb[0].mxu0
  %4693 = vmatprep.mubr.bf16.mxu0 0
  %4694 = vmatmul.mubr.bf16.gmra.mrb[0].mxu0 %v489
  %v4695 = vpop.f32.mrb[0].mxu0
  %v4696 = vadd.f32 %v4599, %v4695
  %v4697 = vpop.f32.mrb[0].mxu0
  %v4698 = vpop.f32.mrb[0].mxu0
  %v4699 = vadd.f32 %v4602, %v4698
  %v4700 = vpop.f32.mrb[0].mxu0
  %4701 = vmatprep.mubr.bf16.mxu0 0
  %4702 = vmatmul.mubr.bf16.gmra.mrb[0].mxu0 %v498
  %v4703 = vpop.f32.mrb[0].mxu0
  %v4704 = vadd.f32 %v4607, %v4703
  %v4705 = vpop.f32.mrb[0].mxu0
  %v4706 = vpop.f32.mrb[0].mxu0
  %v4707 = vadd.f32 %v4610, %v4706
  %v4708 = vpop.f32.mrb[0].mxu0
  %4709 = vmatprep.mubr.bf16.mxu0 0
  %4710 = vmatmul.mubr.bf16.gmra.mrb[0].mxu0 %v507
  %v4711 = vpop.f32.mrb[0].mxu0
  %v4712 = vadd.f32 %v4615, %v4711
  %v4713 = vpop.f32.mrb[0].mxu0
  %v4714 = vpop.f32.mrb[0].mxu0
  %v4715 = vadd.f32 %v4618, %v4714
  %v4716 = vpop.f32.mrb[0].mxu0
  %4717 = vmatprep.mubr.bf16.mxu0 0
  %4718 = vmatmul.mubr.bf16.gmra.mrb[0].mxu0 %v516
  %v4719 = vpop.f32.mrb[0].mxu0
  %v4720 = vadd.f32 %v4623, %v4719
  %v4721 = vpop.f32.mrb[0].mxu0
  %v4722 = vpop.f32.mrb[0].mxu0
  %v4723 = vadd.f32 %v4626, %v4722
  %v4724 = vpop.f32.mrb[0].mxu0
  %4725 = vmatprep.mubr.bf16.mxu0 0
  %4726 = vmatmul.mubr.bf16.gmra.mrb[0].mxu0 %v525
  %v4727 = vpop.f32.mrb[0].mxu0
  %v4728 = vadd.f32 %v4631, %v4727
  %v4729 = vpop.f32.mrb[0].mxu0
  %v4730 = vpop.f32.mrb[0].mxu0
  %v4731 = vadd.f32 %v4634, %v4730
  %v4732 = vpop.f32.mrb[0].mxu0
  %4733 = vmatprep.mubr.bf16.mxu0 0
  %4734 = vmatmul.mubr.bf16.gmra.mrb[0].mxu0 %v534
  %v4735 = vpop.f32.mrb[0].mxu0
  %v4736 = vadd.f32 %v4639, %v4735
  %v4737 = vpop.f32.mrb[0].mxu0
  %v4738 = vpop.f32.mrb[0].mxu0
  %v4739 = vadd.f32 %v4642, %v4738
  %v4740 = vpop.f32.mrb[0].mxu0
  %4741 = vdwg.mxu0
  %v4742 = vmax.f32 %v3664, %v4680
  %v4743 = vmax.f32 %v3665, %v4683
  %v4744 = vmax.f32 %v3666, %v4688
  %v4745 = vmax.f32 %v3667, %v4691
  %v4746 = vmax.f32 %v3668, %v4696
  %v4747 = vmax.f32 %v3669, %v4699
  %v4748 = vmax.f32 %v3670, %v4704
  %v4749 = vmax.f32 %v3671, %v4707
  %v4750 = vmax.f32 %v3672, %v4712
  %v4751 = vmax.f32 %v3673, %v4715
  %v4752 = vmax.f32 %v3674, %v4720
  %v4753 = vmax.f32 %v3675, %v4723
  %v4754 = vmax.f32 %v3676, %v4728
  %v4755 = vmax.f32 %v3677, %v4731
  %v4756 = vmax.f32 %v3678, %v4736
  %v4757 = vmax.f32 %v3679, %v4739
  %v4758 = vld [vmem:[%s2] sm:$0x1]
  %v4760 = vlaneseq
  %v4761 = vshrl.u32 %v4760, 7
  %v4762 = vsub.s32 0, %v4761
  %v4763 = vrot.slane %v4758, %v4762
  %v4765 = vadd.f32 %v4742, %v4763
  %v4766 = vadd.f32 %v4743, %v4763
  %v4767 = vadd.f32 %v4744, %v4763
  %v4768 = vadd.f32 %v4745, %v4763
  %v4769 = vadd.f32 %v4746, %v4763
  %v4770 = vadd.f32 %v4747, %v4763
  %v4771 = vadd.f32 %v4748, %v4763
  %v4772 = vadd.f32 %v4749, %v4763
  %v4773 = vadd.f32 %v4750, %v4763
  %v4774 = vadd.f32 %v4751, %v4763
  %v4775 = vadd.f32 %v4752, %v4763
  %v4776 = vadd.f32 %v4753, %v4763
  %v4777 = vadd.f32 %v4754, %v4763
  %v4778 = vadd.f32 %v4755, %v4763
  %v4779 = vadd.f32 %v4756, %v4763
  %v4780 = vadd.f32 %v4757, %v4763
  %v4781 = vmax.f32 %v4765, 0.0
  %v4782 = vmax.f32 %v4766, 0.0
  %v4783 = vmax.f32 %v4767, 0.0
  %v4784 = vmax.f32 %v4768, 0.0
  %v4785 = vmax.f32 %v4769, 0.0
  %v4786 = vmax.f32 %v4770, 0.0
  %v4787 = vmax.f32 %v4771, 0.0
  %v4788 = vmax.f32 %v4772, 0.0
  %v4789 = vmax.f32 %v4773, 0.0
  %v4790 = vmax.f32 %v4774, 0.0
  %v4791 = vmax.f32 %v4775, 0.0
  %v4792 = vmax.f32 %v4776, 0.0
  %v4793 = vmax.f32 %v4777, 0.0
  %v4794 = vmax.f32 %v4778, 0.0
  %v4795 = vmax.f32 %v4779, 0.0
  %v4796 = vmax.f32 %v4780, 0.0
  %v4797 = vpack.c.bf16 %v4782, %v4781
  %v4798 = vpack.c.bf16 %v4784, %v4783
  %v4799 = vpack.c.bf16 %v4786, %v4785
  %v4800 = vpack.c.bf16 %v4788, %v4787
  %v4801 = vpack.c.bf16 %v4790, %v4789
  %v4802 = vpack.c.bf16 %v4792, %v4791
  %v4803 = vpack.c.bf16 %v4794, %v4793
  %v4804 = vpack.c.bf16 %v4796, %v4795
  %v4813 = vunpack.c.l.b16 %v4797
  %v4814 = vunpack.c.h.b16 %v4797
  %v4815 = vunpack.c.l.b16 %v4798
  %v4816 = vunpack.c.h.b16 %v4798
  %v4817 = vunpack.c.l.b16 %v4799
  %v4818 = vunpack.c.h.b16 %v4799
  %v4819 = vunpack.c.l.b16 %v4800
  %v4820 = vunpack.c.h.b16 %v4800
  %v4821 = vunpack.c.l.b16 %v4801
  %v4822 = vunpack.c.h.b16 %v4801
  %v4823 = vunpack.c.l.b16 %v4802
  %v4824 = vunpack.c.h.b16 %v4802
  %v4825 = vunpack.c.l.b16 %v4803
  %v4826 = vunpack.c.h.b16 %v4803
  %v4827 = vunpack.c.l.b16 %v4804
  %v4828 = vunpack.c.h.b16 %v4804
  %v4829 = vpack.c.b16 %v4813, %v4813
  %v4830 = vpack.c.b16 %v4814, %v4814
  %v4831 = vpack.c.b16 %v4815, %v4815
  %v4832 = vpack.c.b16 %v4816, %v4816
  %v4833 = vpack.c.b16 %v4817, %v4817
  %v4834 = vpack.c.b16 %v4818, %v4818
  %v4835 = vpack.c.b16 %v4819, %v4819
  %v4836 = vpack.c.b16 %v4820, %v4820
  %v4837 = vpack.c.b16 %v4821, %v4821
  %v4838 = vpack.c.b16 %v4822, %v4822
  %v4839 = vpack.c.b16 %v4823, %v4823
  %v4840 = vpack.c.b16 %v4824, %v4824
  %v4841 = vpack.c.b16 %v4825, %v4825
  %v4842 = vpack.c.b16 %v4826, %v4826
  %v4843 = vpack.c.b16 %v4827, %v4827
  %v4844 = vpack.c.b16 %v4828, %v4828
  %vm4861 = vcmask 519168
  %4862 = vst.msk [vmem:[%s3] sm:$0xf] %vm4861, %v4829
  %4863 = vst.msk [vmem:[%s3 + $0x4] sm:$0xf] %vm4861, %v4830
  %4864 = vst.msk [vmem:[%s3 + $0x8] sm:$0xf] %vm4861, %v4831
  %4865 = vst.msk [vmem:[%s3 + $0xc] sm:$0xf] %vm4861, %v4832
  %4866 = vst.msk [vmem:[%s3 + $0x10] sm:$0xf] %vm4861, %v4833
  %4867 = vst.msk [vmem:[%s3 + $0x14] sm:$0xf] %vm4861, %v4834
  %4868 = vst.msk [vmem:[%s3 + $0x18] sm:$0xf] %vm4861, %v4835
  %4869 = vst.msk [vmem:[%s3 + $0x1c] sm:$0xf] %vm4861, %v4836
  %4870 = vst.msk [vmem:[%s3 + $0x20] sm:$0xf] %vm4861, %v4837
  %4871 = vst.msk [vmem:[%s3 + $0x24] sm:$0xf] %vm4861, %v4838
  %4872 = vst.msk [vmem:[%s3 + $0x28] sm:$0xf] %vm4861, %v4839
  %4873 = vst.msk [vmem:[%s3 + $0x2c] sm:$0xf] %vm4861, %v4840
  %4874 = vst.msk [vmem:[%s3 + $0x30] sm:$0xf] %vm4861, %v4841
  %4875 = vst.msk [vmem:[%s3 + $0x34] sm:$0xf] %vm4861, %v4842
  %4876 = vst.msk [vmem:[%s3 + $0x38] sm:$0xf] %vm4861, %v4843
  %4877 = vst.msk [vmem:[%s3 + $0x3c] sm:$0xf] %vm4861, %v4844
  // Predicated region
  $region14: #{fedavg_cnn_forward.4} parent=0 // pred_check
    _
  $region15: #{fedavg_cnn_forward.4} parent=0 // pred_check_branch
    %4879 = sbr.rel (0) target = $region17
  $region16: #{fedavg_cnn_forward.4} parent=0 // pred_region
    _
  $region17: #{fedavg_cnn_forward.4} parent=0 // pred_fallthru
    _
  // Predicated region
  $region18: #{fedavg_cnn_forward.4} parent=0 // pred_check
    _
  $region19: #{fedavg_cnn_forward.4} parent=0 // pred_check_branch
    %4881 = sbr.rel (0) target = $region21
  $region20: #{fedavg_cnn_forward.4} parent=0 // pred_region
    _
  $region21: #{fedavg_cnn_forward.4} parent=0 // pred_fallthru
    _

// kernel: fedavg_cnn_forward.5
$region0: #{fedavg_cnn_forward.5}
  #allocation0 [shape = 'u32[]', space=smem, size = 0x4, offset = 0x4, fixed_abs, tag = 'smem constant byte address 0x4 - core index']
  #allocation1 [shape = 'u32[144,128]{1,0:T(1,128)}', space=vmem, size = 0x12000, scoped, tag = 'internal scratch']
  %s0 = inlined_call_operand.vmem [shape: bf16[8,1024], index: 0, kind: input, shape index: {}]
  %s1 = inlined_call_operand.vmem [shape: bf16[1024,512], index: 1, kind: input, shape index: {}]
  %s2 = inlined_call_operand.vmem [shape: f32[1,512], index: 2, kind: input, shape index: {}]
  %s3 = inlined_call_operand.vmem [shape: bf16[512,128], index: 3, kind: input, shape index: {}]
  %s4 = inlined_call_operand.vmem [shape: f32[1,128], index: 4, kind: input, shape index: {}]
  %s5 = inlined_call_operand.vmem [shape: f32[8,128], index: 5, kind: output, shape index: {}]
  %s6 = sld [smem:[#allocation0]]
  $region30: #{fedavg_cnn_forward.5} parent=0
    _
  %s8 = ssub.s32 1, %s6
  %s9 = scalar_select 0, %s8, %s6
  // Predicated region
  $region2: #{fedavg_cnn_forward.5} parent=0 // pred_check
    _
  $region3: #{fedavg_cnn_forward.5} parent=0 // pred_check_branch
    %11 = sbr.rel (0) target = $region5
  $region4: #{fedavg_cnn_forward.5} parent=0 // pred_region
    _
  $region5: #{fedavg_cnn_forward.5} parent=0 // pred_fallthru
    _
  // Predicated region
  $region6: #{fedavg_cnn_forward.5} parent=0 // pred_check
    _
  $region7: #{fedavg_cnn_forward.5} parent=0 // pred_check_branch
    %13 = sbr.rel (0) target = $region9
  $region8: #{fedavg_cnn_forward.5} parent=0 // pred_region
    _
  $region9: #{fedavg_cnn_forward.5} parent=0 // pred_fallthru
    _
  // Predicated region
  $region10: #{fedavg_cnn_forward.5} parent=0 // pred_check
    _
  $region11: #{fedavg_cnn_forward.5} parent=0 // pred_check_branch
    %15 = sbr.rel (0) target = $region13
  $region12: #{fedavg_cnn_forward.5} parent=0 // pred_region
    _
  $region13: #{fedavg_cnn_forward.5} parent=0 // pred_fallthru
    _
  // Predicated region
  $region14: #{fedavg_cnn_forward.5} parent=0 // pred_check
    _
  $region15: #{fedavg_cnn_forward.5} parent=0 // pred_check_branch
    %17 = sbr.rel (0) target = $region17
  $region16: #{fedavg_cnn_forward.5} parent=0 // pred_region
    _
  $region17: #{fedavg_cnn_forward.5} parent=0 // pred_fallthru
    _
  // Predicated region
  $region18: #{fedavg_cnn_forward.5} parent=0 // pred_check
    _
  $region19: #{fedavg_cnn_forward.5} parent=0 // pred_check_branch
    %19 = sbr.rel (0) target = $region21
  $region20: #{fedavg_cnn_forward.5} parent=0 // pred_region
    _
  $region21: #{fedavg_cnn_forward.5} parent=0 // pred_fallthru
    _
  %v21 = vld [vmem:[%s0] sm:$0xff]
  %v22 = vld [vmem:[%s0 + $0x8] sm:$0xff]
  %v23 = vld [vmem:[%s0 + $0x10] sm:$0xff]
  %v24 = vld [vmem:[%s0 + $0x18] sm:$0xff]
  %v25 = vld [vmem:[%s1] sm:$0xff]
  %v26 = vld [vmem:[%s1 + $0x8] sm:$0xff]
  %v27 = vld [vmem:[%s1 + $0x10] sm:$0xff]
  %v28 = vld [vmem:[%s1 + $0x18] sm:$0xff]
  %v29 = vld [vmem:[%s1 + $0x20] sm:$0xff]
  %v30 = vld [vmem:[%s1 + $0x28] sm:$0xff]
  %v31 = vld [vmem:[%s1 + $0x30] sm:$0xff]
  %v32 = vld [vmem:[%s1 + $0x38] sm:$0xff]
  %v33 = vld [vmem:[%s1 + $0x40] sm:$0xff]
  %v34 = vld [vmem:[%s1 + $0x48] sm:$0xff]
  %v35 = vld [vmem:[%s1 + $0x50] sm:$0xff]
  %v36 = vld [vmem:[%s1 + $0x58] sm:$0xff]
  %v37 = vld [vmem:[%s1 + $0x60] sm:$0xff]
  %v38 = vld [vmem:[%s1 + $0x68] sm:$0xff]
  %v39 = vld [vmem:[%s1 + $0x70] sm:$0xff]
  %v40 = vld [vmem:[%s1 + $0x78] sm:$0xff]
  %v41 = vld [vmem:[%s1 + $0x80] sm:$0xff]
  %v42 = vld [vmem:[%s1 + $0x88] sm:$0xff]
  %v43 = vld [vmem:[%s1 + $0x90] sm:$0xff]
  %v44 = vld [vmem:[%s1 + $0x98] sm:$0xff]
  %v45 = vld [vmem:[%s1 + $0xa0] sm:$0xff]
  %v46 = vld [vmem:[%s1 + $0xa8] sm:$0xff]
  %v47 = vld [vmem:[%s1 + $0xb0] sm:$0xff]
  %v48 = vld [vmem:[%s1 + $0xb8] sm:$0xff]
  %v49 = vld [vmem:[%s1 + $0xc0] sm:$0xff]
  %v50 = vld [vmem:[%s1 + $0xc8] sm:$0xff]
  %v51 = vld [vmem:[%s1 + $0xd0] sm:$0xff]
  %v52 = vld [vmem:[%s1 + $0xd8] sm:$0xff]
  %v53 = vld [vmem:[%s1 + $0xe0] sm:$0xff]
  %v54 = vld [vmem:[%s1 + $0xe8] sm:$0xff]
  %v55 = vld [vmem:[%s1 + $0xf0] sm:$0xff]
  %v56 = vld [vmem:[%s1 + $0xf8] sm:$0xff]
  %v57 = vld [vmem:[%s1 + $0x100] sm:$0xff]
  %v58 = vld [vmem:[%s1 + $0x108] sm:$0xff]
  %v59 = vld [vmem:[%s1 + $0x110] sm:$0xff]
  %v60 = vld [vmem:[%s1 + $0x118] sm:$0xff]
  %v61 = vld [vmem:[%s1 + $0x120] sm:$0xff]
  %v62 = vld [vmem:[%s1 + $0x128] sm:$0xff]
  %v63 = vld [vmem:[%s1 + $0x130] sm:$0xff]
  %v64 = vld [vmem:[%s1 + $0x138] sm:$0xff]
  %v65 = vld [vmem:[%s1 + $0x140] sm:$0xff]
  %v66 = vld [vmem:[%s1 + $0x148] sm:$0xff]
  %v67 = vld [vmem:[%s1 + $0x150] sm:$0xff]
  %v68 = vld [vmem:[%s1 + $0x158] sm:$0xff]
  %v69 = vld [vmem:[%s1 + $0x160] sm:$0xff]
  %v70 = vld [vmem:[%s1 + $0x168] sm:$0xff]
  %v71 = vld [vmem:[%s1 + $0x170] sm:$0xff]
  %v72 = vld [vmem:[%s1 + $0x178] sm:$0xff]
  %v73 = vld [vmem:[%s1 + $0x180] sm:$0xff]
  %v74 = vld [vmem:[%s1 + $0x188] sm:$0xff]
  %v75 = vld [vmem:[%s1 + $0x190] sm:$0xff]
  %v76 = vld [vmem:[%s1 + $0x198] sm:$0xff]
  %v77 = vld [vmem:[%s1 + $0x1a0] sm:$0xff]
  %v78 = vld [vmem:[%s1 + $0x1a8] sm:$0xff]
  %v79 = vld [vmem:[%s1 + $0x1b0] sm:$0xff]
  %v80 = vld [vmem:[%s1 + $0x1b8] sm:$0xff]
  %v81 = vld [vmem:[%s1 + $0x1c0] sm:$0xff]
  %v82 = vld [vmem:[%s1 + $0x1c8] sm:$0xff]
  %v83 = vld [vmem:[%s1 + $0x1d0] sm:$0xff]
  %v84 = vld [vmem:[%s1 + $0x1d8] sm:$0xff]
  %v85 = vld [vmem:[%s1 + $0x1e0] sm:$0xff]
  %v86 = vld [vmem:[%s1 + $0x1e8] sm:$0xff]
  %v87 = vld [vmem:[%s1 + $0x1f0] sm:$0xff]
  %v88 = vld [vmem:[%s1 + $0x1f8] sm:$0xff]
  %v89 = vld [vmem:[%s1 + $0x200] sm:$0xff]
  %v90 = vld [vmem:[%s1 + $0x208] sm:$0xff]
  %v91 = vld [vmem:[%s1 + $0x210] sm:$0xff]
  %v92 = vld [vmem:[%s1 + $0x218] sm:$0xff]
  %v93 = vld [vmem:[%s1 + $0x220] sm:$0xff]
  %v94 = vld [vmem:[%s1 + $0x228] sm:$0xff]
  %v95 = vld [vmem:[%s1 + $0x230] sm:$0xff]
  %v96 = vld [vmem:[%s1 + $0x238] sm:$0xff]
  %v97 = vld [vmem:[%s1 + $0x240] sm:$0xff]
  %v98 = vld [vmem:[%s1 + $0x248] sm:$0xff]
  %v99 = vld [vmem:[%s1 + $0x250] sm:$0xff]
  %v100 = vld [vmem:[%s1 + $0x258] sm:$0xff]
  %v101 = vld [vmem:[%s1 + $0x260] sm:$0xff]
  %v102 = vld [vmem:[%s1 + $0x268] sm:$0xff]
  %v103 = vld [vmem:[%s1 + $0x270] sm:$0xff]
  %v104 = vld [vmem:[%s1 + $0x278] sm:$0xff]
  %v105 = vld [vmem:[%s1 + $0x280] sm:$0xff]
  %v106 = vld [vmem:[%s1 + $0x288] sm:$0xff]
  %v107 = vld [vmem:[%s1 + $0x290] sm:$0xff]
  %v108 = vld [vmem:[%s1 + $0x298] sm:$0xff]
  %v109 = vld [vmem:[%s1 + $0x2a0] sm:$0xff]
  %v110 = vld [vmem:[%s1 + $0x2a8] sm:$0xff]
  %v111 = vld [vmem:[%s1 + $0x2b0] sm:$0xff]
  %v112 = vld [vmem:[%s1 + $0x2b8] sm:$0xff]
  %v113 = vld [vmem:[%s1 + $0x2c0] sm:$0xff]
  %v114 = vld [vmem:[%s1 + $0x2c8] sm:$0xff]
  %v115 = vld [vmem:[%s1 + $0x2d0] sm:$0xff]
  %v116 = vld [vmem:[%s1 + $0x2d8] sm:$0xff]
  %v117 = vld [vmem:[%s1 + $0x2e0] sm:$0xff]
  %v118 = vld [vmem:[%s1 + $0x2e8] sm:$0xff]
  %v119 = vld [vmem:[%s1 + $0x2f0] sm:$0xff]
  %v120 = vld [vmem:[%s1 + $0x2f8] sm:$0xff]
  %v121 = vld [vmem:[%s1 + $0x300] sm:$0xff]
  %v122 = vld [vmem:[%s1 + $0x308] sm:$0xff]
  %v123 = vld [vmem:[%s1 + $0x310] sm:$0xff]
  %v124 = vld [vmem:[%s1 + $0x318] sm:$0xff]
  %v125 = vld [vmem:[%s1 + $0x320] sm:$0xff]
  %v126 = vld [vmem:[%s1 + $0x328] sm:$0xff]
  %v127 = vld [vmem:[%s1 + $0x330] sm:$0xff]
  %v128 = vld [vmem:[%s1 + $0x338] sm:$0xff]
  %v129 = vld [vmem:[%s1 + $0x340] sm:$0xff]
  %v130 = vld [vmem:[%s1 + $0x348] sm:$0xff]
  %v131 = vld [vmem:[%s1 + $0x350] sm:$0xff]
  %v132 = vld [vmem:[%s1 + $0x358] sm:$0xff]
  %v133 = vld [vmem:[%s1 + $0x360] sm:$0xff]
  %v134 = vld [vmem:[%s1 + $0x368] sm:$0xff]
  %v135 = vld [vmem:[%s1 + $0x370] sm:$0xff]
  %v136 = vld [vmem:[%s1 + $0x378] sm:$0xff]
  %v137 = vld [vmem:[%s1 + $0x380] sm:$0xff]
  %v138 = vld [vmem:[%s1 + $0x388] sm:$0xff]
  %v139 = vld [vmem:[%s1 + $0x390] sm:$0xff]
  %v140 = vld [vmem:[%s1 + $0x398] sm:$0xff]
  %v141 = vld [vmem:[%s1 + $0x3a0] sm:$0xff]
  %v142 = vld [vmem:[%s1 + $0x3a8] sm:$0xff]
  %v143 = vld [vmem:[%s1 + $0x3b0] sm:$0xff]
  %v144 = vld [vmem:[%s1 + $0x3b8] sm:$0xff]
  %v145 = vld [vmem:[%s1 + $0x3c0] sm:$0xff]
  %v146 = vld [vmem:[%s1 + $0x3c8] sm:$0xff]
  %v147 = vld [vmem:[%s1 + $0x3d0] sm:$0xff]
  %v148 = vld [vmem:[%s1 + $0x3d8] sm:$0xff]
  %v149 = vld [vmem:[%s1 + $0x3e0] sm:$0xff]
  %v150 = vld [vmem:[%s1 + $0x3e8] sm:$0xff]
  %v151 = vld [vmem:[%s1 + $0x3f0] sm:$0xff]
  %v152 = vld [vmem:[%s1 + $0x3f8] sm:$0xff]
  %v153 = vld [vmem:[%s1 + $0x400] sm:$0xff]
  %v154 = vld [vmem:[%s1 + $0x408] sm:$0xff]
  %v155 = vld [vmem:[%s1 + $0x410] sm:$0xff]
  %v156 = vld [vmem:[%s1 + $0x418] sm:$0xff]
  %v157 = vld [vmem:[%s1 + $0x420] sm:$0xff]
  %v158 = vld [vmem:[%s1 + $0x428] sm:$0xff]
  %v159 = vld [vmem:[%s1 + $0x430] sm:$0xff]
  %v160 = vld [vmem:[%s1 + $0x438] sm:$0xff]
  %v161 = vld [vmem:[%s1 + $0x440] sm:$0xff]
  %v162 = vld [vmem:[%s1 + $0x448] sm:$0xff]
  %v163 = vld [vmem:[%s1 + $0x450] sm:$0xff]
  %v164 = vld [vmem:[%s1 + $0x458] sm:$0xff]
  %v165 = vld [vmem:[%s1 + $0x460] sm:$0xff]
  %v166 = vld [vmem:[%s1 + $0x468] sm:$0xff]
  %v167 = vld [vmem:[%s1 + $0x470] sm:$0xff]
  %v168 = vld [vmem:[%s1 + $0x478] sm:$0xff]
  %v169 = vld [vmem:[%s1 + $0x480] sm:$0xff]
  %v170 = vld [vmem:[%s1 + $0x488] sm:$0xff]
  %v171 = vld [vmem:[%s1 + $0x490] sm:$0xff]
  %v172 = vld [vmem:[%s1 + $0x498] sm:$0xff]
  %v173 = vld [vmem:[%s1 + $0x4a0] sm:$0xff]
  %v174 = vld [vmem:[%s1 + $0x4a8] sm:$0xff]
  %v175 = vld [vmem:[%s1 + $0x4b0] sm:$0xff]
  %v176 = vld [vmem:[%s1 + $0x4b8] sm:$0xff]
  %v177 = vld [vmem:[%s1 + $0x4c0] sm:$0xff]
  %v178 = vld [vmem:[%s1 + $0x4c8] sm:$0xff]
  %v179 = vld [vmem:[%s1 + $0x4d0] sm:$0xff]
  %v180 = vld [vmem:[%s1 + $0x4d8] sm:$0xff]
  %v181 = vld [vmem:[%s1 + $0x4e0] sm:$0xff]
  %v182 = vld [vmem:[%s1 + $0x4e8] sm:$0xff]
  %v183 = vld [vmem:[%s1 + $0x4f0] sm:$0xff]
  %v184 = vld [vmem:[%s1 + $0x4f8] sm:$0xff]
  %v185 = vld [vmem:[%s1 + $0x500] sm:$0xff]
  %v186 = vld [vmem:[%s1 + $0x508] sm:$0xff]
  %v187 = vld [vmem:[%s1 + $0x510] sm:$0xff]
  %v188 = vld [vmem:[%s1 + $0x518] sm:$0xff]
  %v189 = vld [vmem:[%s1 + $0x520] sm:$0xff]
  %v190 = vld [vmem:[%s1 + $0x528] sm:$0xff]
  %v191 = vld [vmem:[%s1 + $0x530] sm:$0xff]
  %v192 = vld [vmem:[%s1 + $0x538] sm:$0xff]
  %v193 = vld [vmem:[%s1 + $0x540] sm:$0xff]
  %v194 = vld [vmem:[%s1 + $0x548] sm:$0xff]
  %v195 = vld [vmem:[%s1 + $0x550] sm:$0xff]
  %v196 = vld [vmem:[%s1 + $0x558] sm:$0xff]
  %v197 = vld [vmem:[%s1 + $0x560] sm:$0xff]
  %v198 = vld [vmem:[%s1 + $0x568] sm:$0xff]
  %v199 = vld [vmem:[%s1 + $0x570] sm:$0xff]
  %v200 = vld [vmem:[%s1 + $0x578] sm:$0xff]
  %v201 = vld [vmem:[%s1 + $0x580] sm:$0xff]
  %v202 = vld [vmem:[%s1 + $0x588] sm:$0xff]
  %v203 = vld [vmem:[%s1 + $0x590] sm:$0xff]
  %v204 = vld [vmem:[%s1 + $0x598] sm:$0xff]
  %v205 = vld [vmem:[%s1 + $0x5a0] sm:$0xff]
  %v206 = vld [vmem:[%s1 + $0x5a8] sm:$0xff]
  %v207 = vld [vmem:[%s1 + $0x5b0] sm:$0xff]
  %v208 = vld [vmem:[%s1 + $0x5b8] sm:$0xff]
  %v209 = vld [vmem:[%s1 + $0x5c0] sm:$0xff]
  %v210 = vld [vmem:[%s1 + $0x5c8] sm:$0xff]
  %v211 = vld [vmem:[%s1 + $0x5d0] sm:$0xff]
  %v212 = vld [vmem:[%s1 + $0x5d8] sm:$0xff]
  %v213 = vld [vmem:[%s1 + $0x5e0] sm:$0xff]
  %v214 = vld [vmem:[%s1 + $0x5e8] sm:$0xff]
  %v215 = vld [vmem:[%s1 + $0x5f0] sm:$0xff]
  %v216 = vld [vmem:[%s1 + $0x5f8] sm:$0xff]
  %v217 = vld [vmem:[%s1 + $0x600] sm:$0xff]
  %v218 = vld [vmem:[%s1 + $0x608] sm:$0xff]
  %v219 = vld [vmem:[%s1 + $0x610] sm:$0xff]
  %v220 = vld [vmem:[%s1 + $0x618] sm:$0xff]
  %v221 = vld [vmem:[%s1 + $0x620] sm:$0xff]
  %v222 = vld [vmem:[%s1 + $0x628] sm:$0xff]
  %v223 = vld [vmem:[%s1 + $0x630] sm:$0xff]
  %v224 = vld [vmem:[%s1 + $0x638] sm:$0xff]
  %v225 = vld [vmem:[%s1 + $0x640] sm:$0xff]
  %v226 = vld [vmem:[%s1 + $0x648] sm:$0xff]
  %v227 = vld [vmem:[%s1 + $0x650] sm:$0xff]
  %v228 = vld [vmem:[%s1 + $0x658] sm:$0xff]
  %v229 = vld [vmem:[%s1 + $0x660] sm:$0xff]
  %v230 = vld [vmem:[%s1 + $0x668] sm:$0xff]
  %v231 = vld [vmem:[%s1 + $0x670] sm:$0xff]
  %v232 = vld [vmem:[%s1 + $0x678] sm:$0xff]
  %v233 = vld [vmem:[%s1 + $0x680] sm:$0xff]
  %v234 = vld [vmem:[%s1 + $0x688] sm:$0xff]
  %v235 = vld [vmem:[%s1 + $0x690] sm:$0xff]
  %v236 = vld [vmem:[%s1 + $0x698] sm:$0xff]
  %v237 = vld [vmem:[%s1 + $0x6a0] sm:$0xff]
  %v238 = vld [vmem:[%s1 + $0x6a8] sm:$0xff]
  %v239 = vld [vmem:[%s1 + $0x6b0] sm:$0xff]
  %v240 = vld [vmem:[%s1 + $0x6b8] sm:$0xff]
  %v241 = vld [vmem:[%s1 + $0x6c0] sm:$0xff]
  %v242 = vld [vmem:[%s1 + $0x6c8] sm:$0xff]
  %v243 = vld [vmem:[%s1 + $0x6d0] sm:$0xff]
  %v244 = vld [vmem:[%s1 + $0x6d8] sm:$0xff]
  %v245 = vld [vmem:[%s1 + $0x6e0] sm:$0xff]
  %v246 = vld [vmem:[%s1 + $0x6e8] sm:$0xff]
  %v247 = vld [vmem:[%s1 + $0x6f0] sm:$0xff]
  %v248 = vld [vmem:[%s1 + $0x6f8] sm:$0xff]
  %v249 = vld [vmem:[%s1 + $0x700] sm:$0xff]
  %v250 = vld [vmem:[%s1 + $0x708] sm:$0xff]
  %v251 = vld [vmem:[%s1 + $0x710] sm:$0xff]
  %v252 = vld [vmem:[%s1 + $0x718] sm:$0xff]
  %v253 = vld [vmem:[%s1 + $0x720] sm:$0xff]
  %v254 = vld [vmem:[%s1 + $0x728] sm:$0xff]
  %v255 = vld [vmem:[%s1 + $0x730] sm:$0xff]
  %v256 = vld [vmem:[%s1 + $0x738] sm:$0xff]
  %v257 = vld [vmem:[%s1 + $0x740] sm:$0xff]
  %v258 = vld [vmem:[%s1 + $0x748] sm:$0xff]
  %v259 = vld [vmem:[%s1 + $0x750] sm:$0xff]
  %v260 = vld [vmem:[%s1 + $0x758] sm:$0xff]
  %v261 = vld [vmem:[%s1 + $0x760] sm:$0xff]
  %v262 = vld [vmem:[%s1 + $0x768] sm:$0xff]
  %v263 = vld [vmem:[%s1 + $0x770] sm:$0xff]
  %v264 = vld [vmem:[%s1 + $0x778] sm:$0xff]
  %v265 = vld [vmem:[%s1 + $0x780] sm:$0xff]
  %v266 = vld [vmem:[%s1 + $0x788] sm:$0xff]
  %v267 = vld [vmem:[%s1 + $0x790] sm:$0xff]
  %v268 = vld [vmem:[%s1 + $0x798] sm:$0xff]
  %v269 = vld [vmem:[%s1 + $0x7a0] sm:$0xff]
  %v270 = vld [vmem:[%s1 + $0x7a8] sm:$0xff]
  %v271 = vld [vmem:[%s1 + $0x7b0] sm:$0xff]
  %v272 = vld [vmem:[%s1 + $0x7b8] sm:$0xff]
  %v273 = vld [vmem:[%s1 + $0x7c0] sm:$0xff]
  %v274 = vld [vmem:[%s1 + $0x7c8] sm:$0xff]
  %v275 = vld [vmem:[%s1 + $0x7d0] sm:$0xff]
  %v276 = vld [vmem:[%s1 + $0x7d8] sm:$0xff]
  %v277 = vld [vmem:[%s1 + $0x7e0] sm:$0xff]
  %v278 = vld [vmem:[%s1 + $0x7e8] sm:$0xff]
  %v279 = vld [vmem:[%s1 + $0x7f0] sm:$0xff]
  %v280 = vld [vmem:[%s1 + $0x7f8] sm:$0xff]
  %v281 = vld [vmem:[%s2] sm:$0xf]
  %v283 = vlaneseq
  %v284 = vshrl.u32 %v283, 7
  %v285 = vsub.s32 0, %v284
  %v286 = vrot.slane %v281, %v285
  %v287 = vlaneseq
  %v288 = vshrl.u32 %v287, 7
  %v289 = vsub.s32 1, %v288
  %v290 = vrot.slane %v281, %v289
  %v291 = vlaneseq
  %v292 = vshrl.u32 %v291, 7
  %v293 = vsub.s32 2, %v292
  %v294 = vrot.slane %v281, %v293
  %v295 = vlaneseq
  %v296 = vshrl.u32 %v295, 7
  %v297 = vsub.s32 3, %v296
  %v298 = vrot.slane %v281, %v297
  %v307 = vunpack.c.l.b16 %v21
  %v308 = vunpack.c.h.b16 %v21
  %v309 = vunpack.c.l.b16 %v22
  %v310 = vunpack.c.h.b16 %v22
  %v311 = vunpack.c.l.b16 %v23
  %v312 = vunpack.c.h.b16 %v23
  %v313 = vunpack.c.l.b16 %v24
  %v314 = vunpack.c.h.b16 %v24
  %v315 = vpack.c.b16 %v307, %v307
  %v316 = vpack.c.b16 %v308, %v308
  %v317 = vpack.c.b16 %v309, %v309
  %v318 = vpack.c.b16 %v310, %v310
  %v319 = vpack.c.b16 %v311, %v311
  %v320 = vpack.c.b16 %v312, %v312
  %v321 = vpack.c.b16 %v313, %v313
  %v322 = vpack.c.b16 %v314, %v314
  %v587 = vunpack.c.l.b16 %v25
  %v588 = vunpack.c.h.b16 %v25
  %v589 = vunpack.c.l.b16 %v26
  %v590 = vunpack.c.h.b16 %v26
  %v591 = vunpack.c.l.b16 %v27
  %v592 = vunpack.c.h.b16 %v27
  %v593 = vunpack.c.l.b16 %v28
  %v594 = vunpack.c.h.b16 %v28
  %v595 = vunpack.c.l.b16 %v29
  %v596 = vunpack.c.h.b16 %v29
  %v597 = vunpack.c.l.b16 %v30
  %v598 = vunpack.c.h.b16 %v30
  %v599 = vunpack.c.l.b16 %v31
  %v600 = vunpack.c.h.b16 %v31
  %v601 = vunpack.c.l.b16 %v32
  %v602 = vunpack.c.h.b16 %v32
  %v603 = vunpack.c.l.b16 %v33
  %v604 = vunpack.c.h.b16 %v33
  %v605 = vunpack.c.l.b16 %v34
  %v606 = vunpack.c.h.b16 %v34
  %v607 = vunpack.c.l.b16 %v35
  %v608 = vunpack.c.h.b16 %v35
  %v609 = vunpack.c.l.b16 %v36
  %v610 = vunpack.c.h.b16 %v36
  %v611 = vunpack.c.l.b16 %v37
  %v612 = vunpack.c.h.b16 %v37
  %v613 = vunpack.c.l.b16 %v38
  %v614 = vunpack.c.h.b16 %v38
  %v615 = vunpack.c.l.b16 %v39
  %v616 = vunpack.c.h.b16 %v39
  %v617 = vunpack.c.l.b16 %v40
  %v618 = vunpack.c.h.b16 %v40
  %v619 = vunpack.c.l.b16 %v41
  %v620 = vunpack.c.h.b16 %v41
  %v621 = vunpack.c.l.b16 %v42
  %v622 = vunpack.c.h.b16 %v42
  %v623 = vunpack.c.l.b16 %v43
  %v624 = vunpack.c.h.b16 %v43
  %v625 = vunpack.c.l.b16 %v44
  %v626 = vunpack.c.h.b16 %v44
  %v627 = vunpack.c.l.b16 %v45
  %v628 = vunpack.c.h.b16 %v45
  %v629 = vunpack.c.l.b16 %v46
  %v630 = vunpack.c.h.b16 %v46
  %v631 = vunpack.c.l.b16 %v47
  %v632 = vunpack.c.h.b16 %v47
  %v633 = vunpack.c.l.b16 %v48
  %v634 = vunpack.c.h.b16 %v48
  %v635 = vunpack.c.l.b16 %v49
  %v636 = vunpack.c.h.b16 %v49
  %v637 = vunpack.c.l.b16 %v50
  %v638 = vunpack.c.h.b16 %v50
  %v639 = vunpack.c.l.b16 %v51
  %v640 = vunpack.c.h.b16 %v51
  %v641 = vunpack.c.l.b16 %v52
  %v642 = vunpack.c.h.b16 %v52
  %v643 = vunpack.c.l.b16 %v53
  %v644 = vunpack.c.h.b16 %v53
  %v645 = vunpack.c.l.b16 %v54
  %v646 = vunpack.c.h.b16 %v54
  %v647 = vunpack.c.l.b16 %v55
  %v648 = vunpack.c.h.b16 %v55
  %v649 = vunpack.c.l.b16 %v56
  %v650 = vunpack.c.h.b16 %v56
  %v651 = vunpack.c.l.b16 %v57
  %v652 = vunpack.c.h.b16 %v57
  %v653 = vunpack.c.l.b16 %v58
  %v654 = vunpack.c.h.b16 %v58
  %v655 = vunpack.c.l.b16 %v59
  %v656 = vunpack.c.h.b16 %v59
  %v657 = vunpack.c.l.b16 %v60
  %v658 = vunpack.c.h.b16 %v60
  %v659 = vunpack.c.l.b16 %v61
  %v660 = vunpack.c.h.b16 %v61
  %v661 = vunpack.c.l.b16 %v62
  %v662 = vunpack.c.h.b16 %v62
  %v663 = vunpack.c.l.b16 %v63
  %v664 = vunpack.c.h.b16 %v63
  %v665 = vunpack.c.l.b16 %v64
  %v666 = vunpack.c.h.b16 %v64
  %v667 = vunpack.c.l.b16 %v65
  %v668 = vunpack.c.h.b16 %v65
  %v669 = vunpack.c.l.b16 %v66
  %v670 = vunpack.c.h.b16 %v66
  %v671 = vunpack.c.l.b16 %v67
  %v672 = vunpack.c.h.b16 %v67
  %v673 = vunpack.c.l.b16 %v68
  %v674 = vunpack.c.h.b16 %v68
  %v675 = vunpack.c.l.b16 %v69
  %v676 = vunpack.c.h.b16 %v69
  %v677 = vunpack.c.l.b16 %v70
  %v678 = vunpack.c.h.b16 %v70
  %v679 = vunpack.c.l.b16 %v71
  %v680 = vunpack.c.h.b16 %v71
  %v681 = vunpack.c.l.b16 %v72
  %v682 = vunpack.c.h.b16 %v72
  %v683 = vunpack.c.l.b16 %v73
  %v684 = vunpack.c.h.b16 %v73
  %v685 = vunpack.c.l.b16 %v74
  %v686 = vunpack.c.h.b16 %v74
  %v687 = vunpack.c.l.b16 %v75
  %v688 = vunpack.c.h.b16 %v75
  %v689 = vunpack.c.l.b16 %v76
  %v690 = vunpack.c.h.b16 %v76
  %v691 = vunpack.c.l.b16 %v77
  %v692 = vunpack.c.h.b16 %v77
  %v693 = vunpack.c.l.b16 %v78
  %v694 = vunpack.c.h.b16 %v78
  %v695 = vunpack.c.l.b16 %v79
  %v696 = vunpack.c.h.b16 %v79
  %v697 = vunpack.c.l.b16 %v80
  %v698 = vunpack.c.h.b16 %v80
  %v699 = vunpack.c.l.b16 %v81
  %v700 = vunpack.c.h.b16 %v81
  %v701 = vunpack.c.l.b16 %v82
  %v702 = vunpack.c.h.b16 %v82
  %v703 = vunpack.c.l.b16 %v83
  %v704 = vunpack.c.h.b16 %v83
  %v705 = vunpack.c.l.b16 %v84
  %v706 = vunpack.c.h.b16 %v84
  %v707 = vunpack.c.l.b16 %v85
  %v708 = vunpack.c.h.b16 %v85
  %v709 = vunpack.c.l.b16 %v86
  %v710 = vunpack.c.h.b16 %v86
  %v711 = vunpack.c.l.b16 %v87
  %v712 = vunpack.c.h.b16 %v87
  %v713 = vunpack.c.l.b16 %v88
  %v714 = vunpack.c.h.b16 %v88
  %v715 = vunpack.c.l.b16 %v89
  %v716 = vunpack.c.h.b16 %v89
  %v717 = vunpack.c.l.b16 %v90
  %v718 = vunpack.c.h.b16 %v90
  %v719 = vunpack.c.l.b16 %v91
  %v720 = vunpack.c.h.b16 %v91
  %v721 = vunpack.c.l.b16 %v92
  %v722 = vunpack.c.h.b16 %v92
  %v723 = vunpack.c.l.b16 %v93
  %v724 = vunpack.c.h.b16 %v93
  %v725 = vunpack.c.l.b16 %v94
  %v726 = vunpack.c.h.b16 %v94
  %v727 = vunpack.c.l.b16 %v95
  %v728 = vunpack.c.h.b16 %v95
  %v729 = vunpack.c.l.b16 %v96
  %v730 = vunpack.c.h.b16 %v96
  %v731 = vunpack.c.l.b16 %v97
  %v732 = vunpack.c.h.b16 %v97
  %v733 = vunpack.c.l.b16 %v98
  %v734 = vunpack.c.h.b16 %v98
  %v735 = vunpack.c.l.b16 %v99
  %v736 = vunpack.c.h.b16 %v99
  %v737 = vunpack.c.l.b16 %v100
  %v738 = vunpack.c.h.b16 %v100
  %v739 = vunpack.c.l.b16 %v101
  %v740 = vunpack.c.h.b16 %v101
  %v741 = vunpack.c.l.b16 %v102
  %v742 = vunpack.c.h.b16 %v102
  %v743 = vunpack.c.l.b16 %v103
  %v744 = vunpack.c.h.b16 %v103
  %v745 = vunpack.c.l.b16 %v104
  %v746 = vunpack.c.h.b16 %v104
  %v747 = vunpack.c.l.b16 %v105
  %v748 = vunpack.c.h.b16 %v105
  %v749 = vunpack.c.l.b16 %v106
  %v750 = vunpack.c.h.b16 %v106
  %v751 = vunpack.c.l.b16 %v107
  %v752 = vunpack.c.h.b16 %v107
  %v753 = vunpack.c.l.b16 %v108
  %v754 = vunpack.c.h.b16 %v108
  %v755 = vunpack.c.l.b16 %v109
  %v756 = vunpack.c.h.b16 %v109
  %v757 = vunpack.c.l.b16 %v110
  %v758 = vunpack.c.h.b16 %v110
  %v759 = vunpack.c.l.b16 %v111
  %v760 = vunpack.c.h.b16 %v111
  %v761 = vunpack.c.l.b16 %v112
  %v762 = vunpack.c.h.b16 %v112
  %v763 = vunpack.c.l.b16 %v113
  %v764 = vunpack.c.h.b16 %v113
  %v765 = vunpack.c.l.b16 %v114
  %v766 = vunpack.c.h.b16 %v114
  %v767 = vunpack.c.l.b16 %v115
  %v768 = vunpack.c.h.b16 %v115
  %v769 = vunpack.c.l.b16 %v116
  %v770 = vunpack.c.h.b16 %v116
  %v771 = vunpack.c.l.b16 %v117
  %v772 = vunpack.c.h.b16 %v117
  %v773 = vunpack.c.l.b16 %v118
  %v774 = vunpack.c.h.b16 %v118
  %v775 = vunpack.c.l.b16 %v119
  %v776 = vunpack.c.h.b16 %v119
  %v777 = vunpack.c.l.b16 %v120
  %v778 = vunpack.c.h.b16 %v120
  %v779 = vunpack.c.l.b16 %v121
  %v780 = vunpack.c.h.b16 %v121
  %v781 = vunpack.c.l.b16 %v122
  %v782 = vunpack.c.h.b16 %v122
  %v783 = vunpack.c.l.b16 %v123
  %v784 = vunpack.c.h.b16 %v123
  %v785 = vunpack.c.l.b16 %v124
  %v786 = vunpack.c.h.b16 %v124
  %v787 = vunpack.c.l.b16 %v125
  %v788 = vunpack.c.h.b16 %v125
  %v789 = vunpack.c.l.b16 %v126
  %v790 = vunpack.c.h.b16 %v126
  %v791 = vunpack.c.l.b16 %v127
  %v792 = vunpack.c.h.b16 %v127
  %v793 = vunpack.c.l.b16 %v128
  %v794 = vunpack.c.h.b16 %v128
  %v795 = vunpack.c.l.b16 %v129
  %v796 = vunpack.c.h.b16 %v129
  %v797 = vunpack.c.l.b16 %v130
  %v798 = vunpack.c.h.b16 %v130
  %v799 = vunpack.c.l.b16 %v131
  %v800 = vunpack.c.h.b16 %v131
  %v801 = vunpack.c.l.b16 %v132
  %v802 = vunpack.c.h.b16 %v132
  %v803 = vunpack.c.l.b16 %v133
  %v804 = vunpack.c.h.b16 %v133
  %v805 = vunpack.c.l.b16 %v134
  %v806 = vunpack.c.h.b16 %v134
  %v807 = vunpack.c.l.b16 %v135
  %v808 = vunpack.c.h.b16 %v135
  %v809 = vunpack.c.l.b16 %v136
  %v810 = vunpack.c.h.b16 %v136
  %v811 = vunpack.c.l.b16 %v137
  %v812 = vunpack.c.h.b16 %v137
  %v813 = vunpack.c.l.b16 %v138
  %v814 = vunpack.c.h.b16 %v138
  %v815 = vunpack.c.l.b16 %v139
  %v816 = vunpack.c.h.b16 %v139
  %v817 = vunpack.c.l.b16 %v140
  %v818 = vunpack.c.h.b16 %v140
  %v819 = vunpack.c.l.b16 %v141
  %v820 = vunpack.c.h.b16 %v141
  %v821 = vunpack.c.l.b16 %v142
  %v822 = vunpack.c.h.b16 %v142
  %v823 = vunpack.c.l.b16 %v143
  %v824 = vunpack.c.h.b16 %v143
  %v825 = vunpack.c.l.b16 %v144
  %v826 = vunpack.c.h.b16 %v144
  %v827 = vunpack.c.l.b16 %v145
  %v828 = vunpack.c.h.b16 %v145
  %v829 = vunpack.c.l.b16 %v146
  %v830 = vunpack.c.h.b16 %v146
  %v831 = vunpack.c.l.b16 %v147
  %v832 = vunpack.c.h.b16 %v147
  %v833 = vunpack.c.l.b16 %v148
  %v834 = vunpack.c.h.b16 %v148
  %v835 = vunpack.c.l.b16 %v149
  %v836 = vunpack.c.h.b16 %v149
  %v837 = vunpack.c.l.b16 %v150
  %v838 = vunpack.c.h.b16 %v150
  %v839 = vunpack.c.l.b16 %v151
  %v840 = vunpack.c.h.b16 %v151
  %v841 = vunpack.c.l.b16 %v152
  %v842 = vunpack.c.h.b16 %v152
  %v843 = vunpack.c.l.b16 %v153
  %v844 = vunpack.c.h.b16 %v153
  %v845 = vunpack.c.l.b16 %v154
  %v846 = vunpack.c.h.b16 %v154
  %v847 = vunpack.c.l.b16 %v155
  %v848 = vunpack.c.h.b16 %v155
  %v849 = vunpack.c.l.b16 %v156
  %v850 = vunpack.c.h.b16 %v156
  %v851 = vunpack.c.l.b16 %v157
  %v852 = vunpack.c.h.b16 %v157
  %v853 = vunpack.c.l.b16 %v158
  %v854 = vunpack.c.h.b16 %v158
  %v855 = vunpack.c.l.b16 %v159
  %v856 = vunpack.c.h.b16 %v159
  %v857 = vunpack.c.l.b16 %v160
  %v858 = vunpack.c.h.b16 %v160
  %v859 = vunpack.c.l.b16 %v161
  %v860 = vunpack.c.h.b16 %v161
  %v861 = vunpack.c.l.b16 %v162
  %v862 = vunpack.c.h.b16 %v162
  %v863 = vunpack.c.l.b16 %v163
  %v864 = vunpack.c.h.b16 %v163
  %v865 = vunpack.c.l.b16 %v164
  %v866 = vunpack.c.h.b16 %v164
  %v867 = vunpack.c.l.b16 %v165
  %v868 = vunpack.c.h.b16 %v165
  %v869 = vunpack.c.l.b16 %v166
  %v870 = vunpack.c.h.b16 %v166
  %v871 = vunpack.c.l.b16 %v167
  %v872 = vunpack.c.h.b16 %v167
  %v873 = vunpack.c.l.b16 %v168
  %v874 = vunpack.c.h.b16 %v168
  %v875 = vunpack.c.l.b16 %v169
  %v876 = vunpack.c.h.b16 %v169
  %v877 = vunpack.c.l.b16 %v170
  %v878 = vunpack.c.h.b16 %v170
  %v879 = vunpack.c.l.b16 %v171
  %v880 = vunpack.c.h.b16 %v171
  %v881 = vunpack.c.l.b16 %v172
  %v882 = vunpack.c.h.b16 %v172
  %v883 = vunpack.c.l.b16 %v173
  %v884 = vunpack.c.h.b16 %v173
  %v885 = vunpack.c.l.b16 %v174
  %v886 = vunpack.c.h.b16 %v174
  %v887 = vunpack.c.l.b16 %v175
  %v888 = vunpack.c.h.b16 %v175
  %v889 = vunpack.c.l.b16 %v176
  %v890 = vunpack.c.h.b16 %v176
  %v891 = vunpack.c.l.b16 %v177
  %v892 = vunpack.c.h.b16 %v177
  %v893 = vunpack.c.l.b16 %v178
  %v894 = vunpack.c.h.b16 %v178
  %v895 = vunpack.c.l.b16 %v179
  %v896 = vunpack.c.h.b16 %v179
  %v897 = vunpack.c.l.b16 %v180
  %v898 = vunpack.c.h.b16 %v180
  %v899 = vunpack.c.l.b16 %v181
  %v900 = vunpack.c.h.b16 %v181
  %v901 = vunpack.c.l.b16 %v182
  %v902 = vunpack.c.h.b16 %v182
  %v903 = vunpack.c.l.b16 %v183
  %v904 = vunpack.c.h.b16 %v183
  %v905 = vunpack.c.l.b16 %v184
  %v906 = vunpack.c.h.b16 %v184
  %v907 = vunpack.c.l.b16 %v185
  %v908 = vunpack.c.h.b16 %v185
  %v909 = vunpack.c.l.b16 %v186
  %v910 = vunpack.c.h.b16 %v186
  %v911 = vunpack.c.l.b16 %v187
  %v912 = vunpack.c.h.b16 %v187
  %v913 = vunpack.c.l.b16 %v188
  %v914 = vunpack.c.h.b16 %v188
  %v915 = vunpack.c.l.b16 %v189
  %v916 = vunpack.c.h.b16 %v189
  %v917 = vunpack.c.l.b16 %v190
  %v918 = vunpack.c.h.b16 %v190
  %v919 = vunpack.c.l.b16 %v191
  %v920 = vunpack.c.h.b16 %v191
  %v921 = vunpack.c.l.b16 %v192
  %v922 = vunpack.c.h.b16 %v192
  %v923 = vunpack.c.l.b16 %v193
  %v924 = vunpack.c.h.b16 %v193
  %v925 = vunpack.c.l.b16 %v194
  %v926 = vunpack.c.h.b16 %v194
  %v927 = vunpack.c.l.b16 %v195
  %v928 = vunpack.c.h.b16 %v195
  %v929 = vunpack.c.l.b16 %v196
  %v930 = vunpack.c.h.b16 %v196
  %v931 = vunpack.c.l.b16 %v197
  %v932 = vunpack.c.h.b16 %v197
  %v933 = vunpack.c.l.b16 %v198
  %v934 = vunpack.c.h.b16 %v198
  %v935 = vunpack.c.l.b16 %v199
  %v936 = vunpack.c.h.b16 %v199
  %v937 = vunpack.c.l.b16 %v200
  %v938 = vunpack.c.h.b16 %v200
  %v939 = vunpack.c.l.b16 %v201
  %v940 = vunpack.c.h.b16 %v201
  %v941 = vunpack.c.l.b16 %v202
  %v942 = vunpack.c.h.b16 %v202
  %v943 = vunpack.c.l.b16 %v203
  %v944 = vunpack.c.h.b16 %v203
  %v945 = vunpack.c.l.b16 %v204
  %v946 = vunpack.c.h.b16 %v204
  %v947 = vunpack.c.l.b16 %v205
  %v948 = vunpack.c.h.b16 %v205
  %v949 = vunpack.c.l.b16 %v206
  %v950 = vunpack.c.h.b16 %v206
  %v951 = vunpack.c.l.b16 %v207
  %v952 = vunpack.c.h.b16 %v207
  %v953 = vunpack.c.l.b16 %v208
  %v954 = vunpack.c.h.b16 %v208
  %v955 = vunpack.c.l.b16 %v209
  %v956 = vunpack.c.h.b16 %v209
  %v957 = vunpack.c.l.b16 %v210
  %v958 = vunpack.c.h.b16 %v210
  %v959 = vunpack.c.l.b16 %v211
  %v960 = vunpack.c.h.b16 %v211
  %v961 = vunpack.c.l.b16 %v212
  %v962 = vunpack.c.h.b16 %v212
  %v963 = vunpack.c.l.b16 %v213
  %v964 = vunpack.c.h.b16 %v213
  %v965 = vunpack.c.l.b16 %v214
  %v966 = vunpack.c.h.b16 %v214
  %v967 = vunpack.c.l.b16 %v215
  %v968 = vunpack.c.h.b16 %v215
  %v969 = vunpack.c.l.b16 %v216
  %v970 = vunpack.c.h.b16 %v216
  %v971 = vunpack.c.l.b16 %v217
  %v972 = vunpack.c.h.b16 %v217
  %v973 = vunpack.c.l.b16 %v218
  %v974 = vunpack.c.h.b16 %v218
  %v975 = vunpack.c.l.b16 %v219
  %v976 = vunpack.c.h.b16 %v219
  %v977 = vunpack.c.l.b16 %v220
  %v978 = vunpack.c.h.b16 %v220
  %v979 = vunpack.c.l.b16 %v221
  %v980 = vunpack.c.h.b16 %v221
  %v981 = vunpack.c.l.b16 %v222
  %v982 = vunpack.c.h.b16 %v222
  %v983 = vunpack.c.l.b16 %v223
  %v984 = vunpack.c.h.b16 %v223
  %v985 = vunpack.c.l.b16 %v224
  %v986 = vunpack.c.h.b16 %v224
  %v987 = vunpack.c.l.b16 %v225
  %v988 = vunpack.c.h.b16 %v225
  %v989 = vunpack.c.l.b16 %v226
  %v990 = vunpack.c.h.b16 %v226
  %v991 = vunpack.c.l.b16 %v227
  %v992 = vunpack.c.h.b16 %v227
  %v993 = vunpack.c.l.b16 %v228
  %v994 = vunpack.c.h.b16 %v228
  %v995 = vunpack.c.l.b16 %v229
  %v996 = vunpack.c.h.b16 %v229
  %v997 = vunpack.c.l.b16 %v230
  %v998 = vunpack.c.h.b16 %v230
  %v999 = vunpack.c.l.b16 %v231
  %v1000 = vunpack.c.h.b16 %v231
  %v1001 = vunpack.c.l.b16 %v232
  %v1002 = vunpack.c.h.b16 %v232
  %v1003 = vunpack.c.l.b16 %v233
  %v1004 = vunpack.c.h.b16 %v233
  %v1005 = vunpack.c.l.b16 %v234
  %v1006 = vunpack.c.h.b16 %v234
  %v1007 = vunpack.c.l.b16 %v235
  %v1008 = vunpack.c.h.b16 %v235
  %v1009 = vunpack.c.l.b16 %v236
  %v1010 = vunpack.c.h.b16 %v236
  %v1011 = vunpack.c.l.b16 %v237
  %v1012 = vunpack.c.h.b16 %v237
  %v1013 = vunpack.c.l.b16 %v238
  %v1014 = vunpack.c.h.b16 %v238
  %v1015 = vunpack.c.l.b16 %v239
  %v1016 = vunpack.c.h.b16 %v239
  %v1017 = vunpack.c.l.b16 %v240
  %v1018 = vunpack.c.h.b16 %v240
  %v1019 = vunpack.c.l.b16 %v241
  %v1020 = vunpack.c.h.b16 %v241
  %v1021 = vunpack.c.l.b16 %v242
  %v1022 = vunpack.c.h.b16 %v242
  %v1023 = vunpack.c.l.b16 %v243
  %v1024 = vunpack.c.h.b16 %v243
  %v1025 = vunpack.c.l.b16 %v244
  %v1026 = vunpack.c.h.b16 %v244
  %v1027 = vunpack.c.l.b16 %v245
  %v1028 = vunpack.c.h.b16 %v245
  %v1029 = vunpack.c.l.b16 %v246
  %v1030 = vunpack.c.h.b16 %v246
  %v1031 = vunpack.c.l.b16 %v247
  %v1032 = vunpack.c.h.b16 %v247
  %v1033 = vunpack.c.l.b16 %v248
  %v1034 = vunpack.c.h.b16 %v248
  %v1035 = vunpack.c.l.b16 %v249
  %v1036 = vunpack.c.h.b16 %v249
  %v1037 = vunpack.c.l.b16 %v250
  %v1038 = vunpack.c.h.b16 %v250
  %v1039 = vunpack.c.l.b16 %v251
  %v1040 = vunpack.c.h.b16 %v251
  %v1041 = vunpack.c.l.b16 %v252
  %v1042 = vunpack.c.h.b16 %v252
  %v1043 = vunpack.c.l.b16 %v253
  %v1044 = vunpack.c.h.b16 %v253
  %v1045 = vunpack.c.l.b16 %v254
  %v1046 = vunpack.c.h.b16 %v254
  %v1047 = vunpack.c.l.b16 %v255
  %v1048 = vunpack.c.h.b16 %v255
  %v1049 = vunpack.c.l.b16 %v256
  %v1050 = vunpack.c.h.b16 %v256
  %v1051 = vunpack.c.l.b16 %v257
  %v1052 = vunpack.c.h.b16 %v257
  %v1053 = vunpack.c.l.b16 %v258
  %v1054 = vunpack.c.h.b16 %v258
  %v1055 = vunpack.c.l.b16 %v259
  %v1056 = vunpack.c.h.b16 %v259
  %v1057 = vunpack.c.l.b16 %v260
  %v1058 = vunpack.c.h.b16 %v260
  %v1059 = vunpack.c.l.b16 %v261
  %v1060 = vunpack.c.h.b16 %v261
  %v1061 = vunpack.c.l.b16 %v262
  %v1062 = vunpack.c.h.b16 %v262
  %v1063 = vunpack.c.l.b16 %v263
  %v1064 = vunpack.c.h.b16 %v263
  %v1065 = vunpack.c.l.b16 %v264
  %v1066 = vunpack.c.h.b16 %v264
  %v1067 = vunpack.c.l.b16 %v265
  %v1068 = vunpack.c.h.b16 %v265
  %v1069 = vunpack.c.l.b16 %v266
  %v1070 = vunpack.c.h.b16 %v266
  %v1071 = vunpack.c.l.b16 %v267
  %v1072 = vunpack.c.h.b16 %v267
  %v1073 = vunpack.c.l.b16 %v268
  %v1074 = vunpack.c.h.b16 %v268
  %v1075 = vunpack.c.l.b16 %v269
  %v1076 = vunpack.c.h.b16 %v269
  %v1077 = vunpack.c.l.b16 %v270
  %v1078 = vunpack.c.h.b16 %v270
  %v1079 = vunpack.c.l.b16 %v271
  %v1080 = vunpack.c.h.b16 %v271
  %v1081 = vunpack.c.l.b16 %v272
  %v1082 = vunpack.c.h.b16 %v272
  %v1083 = vunpack.c.l.b16 %v273
  %v1084 = vunpack.c.h.b16 %v273
  %v1085 = vunpack.c.l.b16 %v274
  %v1086 = vunpack.c.h.b16 %v274
  %v1087 = vunpack.c.l.b16 %v275
  %v1088 = vunpack.c.h.b16 %v275
  %v1089 = vunpack.c.l.b16 %v276
  %v1090 = vunpack.c.h.b16 %v276
  %v1091 = vunpack.c.l.b16 %v277
  %v1092 = vunpack.c.h.b16 %v277
  %v1093 = vunpack.c.l.b16 %v278
  %v1094 = vunpack.c.h.b16 %v278
  %v1095 = vunpack.c.l.b16 %v279
  %v1096 = vunpack.c.h.b16 %v279
  %v1097 = vunpack.c.l.b16 %v280
  %v1098 = vunpack.c.h.b16 %v280
  %v1099 = vpack.c.b16 %v591, %v587
  %v1100 = vpack.c.b16 %v592, %v588
  %v1101 = vpack.c.b16 %v593, %v589
  %v1102 = vpack.c.b16 %v594, %v590
  %v1103 = vpack.c.b16 %v599, %v595
  %v1104 = vpack.c.b16 %v600, %v596
  %v1105 = vpack.c.b16 %v601, %v597
  %v1106 = vpack.c.b16 %v602, %v598
  %v1107 = vpack.c.b16 %v607, %v603
  %v1108 = vpack.c.b16 %v608, %v604
  %v1109 = vpack.c.b16 %v609, %v605
  %v1110 = vpack.c.b16 %v610, %v606
  %v1111 = vpack.c.b16 %v615, %v611
  %v1112 = vpack.c.b16 %v616, %v612
  %v1113 = vpack.c.b16 %v617, %v613
  %v1114 = vpack.c.b16 %v618, %v614
  %v1115 = vpack.c.b16 %v623, %v619
  %v1116 = vpack.c.b16 %v624, %v620
  %v1117 = vpack.c.b16 %v625, %v621
  %v1118 = vpack.c.b16 %v626, %v622
  %v1119 = vpack.c.b16 %v631, %v627
  %v1120 = vpack.c.b16 %v632, %v628
  %v1121 = vpack.c.b16 %v633, %v629
  %v1122 = vpack.c.b16 %v634, %v630
  %v1123 = vpack.c.b16 %v639, %v635
  %v1124 = vpack.c.b16 %v640, %v636
  %v1125 = vpack.c.b16 %v641, %v637
  %v1126 = vpack.c.b16 %v642, %v638
  %v1127 = vpack.c.b16 %v647, %v643
  %v1128 = vpack.c.b16 %v648, %v644
  %v1129 = vpack.c.b16 %v649, %v645
  %v1130 = vpack.c.b16 %v650, %v646
  %v1131 = vpack.c.b16 %v655, %v651
  %v1132 = vpack.c.b16 %v656, %v652
  %v1133 = vpack.c.b16 %v657, %v653
  %v1134 = vpack.c.b16 %v658, %v654
  %v1135 = vpack.c.b16 %v663, %v659
  %v1136 = vpack.c.b16 %v664, %v660
  %v1137 = vpack.c.b16 %v665, %v661
  %v1138 = vpack.c.b16 %v666, %v662
  %v1139 = vpack.c.b16 %v671, %v667
  %v1140 = vpack.c.b16 %v672, %v668
  %v1141 = vpack.c.b16 %v673, %v669
  %v1142 = vpack.c.b16 %v674, %v670
  %v1143 = vpack.c.b16 %v679, %v675
  %v1144 = vpack.c.b16 %v680, %v676
  %v1145 = vpack.c.b16 %v681, %v677
  %v1146 = vpack.c.b16 %v682, %v678
  %v1147 = vpack.c.b16 %v687, %v683
  %v1148 = vpack.c.b16 %v688, %v684
  %v1149 = vpack.c.b16 %v689, %v685
  %v1150 = vpack.c.b16 %v690, %v686
  %v1151 = vpack.c.b16 %v695, %v691
  %v1152 = vpack.c.b16 %v696, %v692
  %v1153 = vpack.c.b16 %v697, %v693
  %v1154 = vpack.c.b16 %v698, %v694
  %v1155 = vpack.c.b16 %v703, %v699
  %v1156 = vpack.c.b16 %v704, %v700
  %v1157 = vpack.c.b16 %v705, %v701
  %v1158 = vpack.c.b16 %v706, %v702
  %v1159 = vpack.c.b16 %v711, %v707
  %v1160 = vpack.c.b16 %v712, %v708
  %v1161 = vpack.c.b16 %v713, %v709
  %v1162 = vpack.c.b16 %v714, %v710
  %v1163 = vpack.c.b16 %v719, %v715
  %v1164 = vpack.c.b16 %v720, %v716
  %v1165 = vpack.c.b16 %v721, %v717
  %v1166 = vpack.c.b16 %v722, %v718
  %v1167 = vpack.c.b16 %v727, %v723
  %v1168 = vpack.c.b16 %v728, %v724
  %v1169 = vpack.c.b16 %v729, %v725
  %v1170 = vpack.c.b16 %v730, %v726
  %v1171 = vpack.c.b16 %v735, %v731
  %v1172 = vpack.c.b16 %v736, %v732
  %v1173 = vpack.c.b16 %v737, %v733
  %v1174 = vpack.c.b16 %v738, %v734
  %v1175 = vpack.c.b16 %v743, %v739
  %v1176 = vpack.c.b16 %v744, %v740
  %v1177 = vpack.c.b16 %v745, %v741
  %v1178 = vpack.c.b16 %v746, %v742
  %v1179 = vpack.c.b16 %v751, %v747
  %v1180 = vpack.c.b16 %v752, %v748
  %v1181 = vpack.c.b16 %v753, %v749
  %v1182 = vpack.c.b16 %v754, %v750
  %v1183 = vpack.c.b16 %v759, %v755
  %v1184 = vpack.c.b16 %v760, %v756
  %v1185 = vpack.c.b16 %v761, %v757
  %v1186 = vpack.c.b16 %v762, %v758
  %v1187 = vpack.c.b16 %v767, %v763
  %v1188 = vpack.c.b16 %v768, %v764
  %v1189 = vpack.c.b16 %v769, %v765
  %v1190 = vpack.c.b16 %v770, %v766
  %v1191 = vpack.c.b16 %v775, %v771
  %v1192 = vpack.c.b16 %v776, %v772
  %v1193 = vpack.c.b16 %v777, %v773
  %v1194 = vpack.c.b16 %v778, %v774
  %v1195 = vpack.c.b16 %v783, %v779
  %v1196 = vpack.c.b16 %v784, %v780
  %v1197 = vpack.c.b16 %v785, %v781
  %v1198 = vpack.c.b16 %v786, %v782
  %v1199 = vpack.c.b16 %v791, %v787
  %v1200 = vpack.c.b16 %v792, %v788
  %v1201 = vpack.c.b16 %v793, %v789
  %v1202 = vpack.c.b16 %v794, %v790
  %v1203 = vpack.c.b16 %v799, %v795
  %v1204 = vpack.c.b16 %v800, %v796
  %v1205 = vpack.c.b16 %v801, %v797
  %v1206 = vpack.c.b16 %v802, %v798
  %v1207 = vpack.c.b16 %v807, %v803
  %v1208 = vpack.c.b16 %v808, %v804
  %v1209 = vpack.c.b16 %v809, %v805
  %v1210 = vpack.c.b16 %v810, %v806
  %v1211 = vpack.c.b16 %v815, %v811
  %v1212 = vpack.c.b16 %v816, %v812
  %v1213 = vpack.c.b16 %v817, %v813
  %v1214 = vpack.c.b16 %v818, %v814
  %v1215 = vpack.c.b16 %v823, %v819
  %v1216 = vpack.c.b16 %v824, %v820
  %v1217 = vpack.c.b16 %v825, %v821
  %v1218 = vpack.c.b16 %v826, %v822
  %v1219 = vpack.c.b16 %v831, %v827
  %v1220 = vpack.c.b16 %v832, %v828
  %v1221 = vpack.c.b16 %v833, %v829
  %v1222 = vpack.c.b16 %v834, %v830
  %v1223 = vpack.c.b16 %v839, %v835
  %v1224 = vpack.c.b16 %v840, %v836
  %v1225 = vpack.c.b16 %v841, %v837
  %v1226 = vpack.c.b16 %v842, %v838
  %v1227 = vpack.c.b16 %v847, %v843
  %v1228 = vpack.c.b16 %v848, %v844
  %v1229 = vpack.c.b16 %v849, %v845
  %v1230 = vpack.c.b16 %v850, %v846
  %v1231 = vpack.c.b16 %v855, %v851
  %v1232 = vpack.c.b16 %v856, %v852
  %v1233 = vpack.c.b16 %v857, %v853
  %v1234 = vpack.c.b16 %v858, %v854
  %v1235 = vpack.c.b16 %v863, %v859
  %v1236 = vpack.c.b16 %v864, %v860
  %v1237 = vpack.c.b16 %v865, %v861
  %v1238 = vpack.c.b16 %v866, %v862
  %v1239 = vpack.c.b16 %v871, %v867
  %v1240 = vpack.c.b16 %v872, %v868
  %v1241 = vpack.c.b16 %v873, %v869
  %v1242 = vpack.c.b16 %v874, %v870
  %v1243 = vpack.c.b16 %v879, %v875
  %v1244 = vpack.c.b16 %v880, %v876
  %v1245 = vpack.c.b16 %v881, %v877
  %v1246 = vpack.c.b16 %v882, %v878
  %v1247 = vpack.c.b16 %v887, %v883
  %v1248 = vpack.c.b16 %v888, %v884
  %v1249 = vpack.c.b16 %v889, %v885
  %v1250 = vpack.c.b16 %v890, %v886
  %v1251 = vpack.c.b16 %v895, %v891
  %v1252 = vpack.c.b16 %v896, %v892
  %v1253 = vpack.c.b16 %v897, %v893
  %v1254 = vpack.c.b16 %v898, %v894
  %v1255 = vpack.c.b16 %v903, %v899
  %v1256 = vpack.c.b16 %v904, %v900
  %v1257 = vpack.c.b16 %v905, %v901
  %v1258 = vpack.c.b16 %v906, %v902
  %v1259 = vpack.c.b16 %v911, %v907
  %v1260 = vpack.c.b16 %v912, %v908
  %v1261 = vpack.c.b16 %v913, %v909
  %v1262 = vpack.c.b16 %v914, %v910
  %v1263 = vpack.c.b16 %v919, %v915
  %v1264 = vpack.c.b16 %v920, %v916
  %v1265 = vpack.c.b16 %v921, %v917
  %v1266 = vpack.c.b16 %v922, %v918
  %v1267 = vpack.c.b16 %v927, %v923
  %v1268 = vpack.c.b16 %v928, %v924
  %v1269 = vpack.c.b16 %v929, %v925
  %v1270 = vpack.c.b16 %v930, %v926
  %v1271 = vpack.c.b16 %v935, %v931
  %v1272 = vpack.c.b16 %v936, %v932
  %v1273 = vpack.c.b16 %v937, %v933
  %v1274 = vpack.c.b16 %v938, %v934
  %v1275 = vpack.c.b16 %v943, %v939
  %v1276 = vpack.c.b16 %v944, %v940
  %v1277 = vpack.c.b16 %v945, %v941
  %v1278 = vpack.c.b16 %v946, %v942
  %v1279 = vpack.c.b16 %v951, %v947
  %v1280 = vpack.c.b16 %v952, %v948
  %v1281 = vpack.c.b16 %v953, %v949
  %v1282 = vpack.c.b16 %v954, %v950
  %v1283 = vpack.c.b16 %v959, %v955
  %v1284 = vpack.c.b16 %v960, %v956
  %v1285 = vpack.c.b16 %v961, %v957
  %v1286 = vpack.c.b16 %v962, %v958
  %v1287 = vpack.c.b16 %v967, %v963
  %v1288 = vpack.c.b16 %v968, %v964
  %v1289 = vpack.c.b16 %v969, %v965
  %v1290 = vpack.c.b16 %v970, %v966
  %v1291 = vpack.c.b16 %v975, %v971
  %v1292 = vpack.c.b16 %v976, %v972
  %v1293 = vpack.c.b16 %v977, %v973
  %v1294 = vpack.c.b16 %v978, %v974
  %v1295 = vpack.c.b16 %v983, %v979
  %v1296 = vpack.c.b16 %v984, %v980
  %v1297 = vpack.c.b16 %v985, %v981
  %v1298 = vpack.c.b16 %v986, %v982
  %v1299 = vpack.c.b16 %v991, %v987
  %v1300 = vpack.c.b16 %v992, %v988
  %v1301 = vpack.c.b16 %v993, %v989
  %v1302 = vpack.c.b16 %v994, %v990
  %v1303 = vpack.c.b16 %v999, %v995
  %v1304 = vpack.c.b16 %v1000, %v996
  %v1305 = vpack.c.b16 %v1001, %v997
  %v1306 = vpack.c.b16 %v1002, %v998
  %v1307 = vpack.c.b16 %v1007, %v1003
  %v1308 = vpack.c.b16 %v1008, %v1004
  %v1309 = vpack.c.b16 %v1009, %v1005
  %v1310 = vpack.c.b16 %v1010, %v1006
  %v1311 = vpack.c.b16 %v1015, %v1011
  %v1312 = vpack.c.b16 %v1016, %v1012
  %v1313 = vpack.c.b16 %v1017, %v1013
  %v1314 = vpack.c.b16 %v1018, %v1014
  %v1315 = vpack.c.b16 %v1023, %v1019
  %v1316 = vpack.c.b16 %v1024, %v1020
  %v1317 = vpack.c.b16 %v1025, %v1021
  %v1318 = vpack.c.b16 %v1026, %v1022
  %v1319 = vpack.c.b16 %v1031, %v1027
  %v1320 = vpack.c.b16 %v1032, %v1028
  %v1321 = vpack.c.b16 %v1033, %v1029
  %v1322 = vpack.c.b16 %v1034, %v1030
  %v1323 = vpack.c.b16 %v1039, %v1035
  %v1324 = vpack.c.b16 %v1040, %v1036
  %v1325 = vpack.c.b16 %v1041, %v1037
  %v1326 = vpack.c.b16 %v1042, %v1038
  %v1327 = vpack.c.b16 %v1047, %v1043
  %v1328 = vpack.c.b16 %v1048, %v1044
  %v1329 = vpack.c.b16 %v1049, %v1045
  %v1330 = vpack.c.b16 %v1050, %v1046
  %v1331 = vpack.c.b16 %v1055, %v1051
  %v1332 = vpack.c.b16 %v1056, %v1052
  %v1333 = vpack.c.b16 %v1057, %v1053
  %v1334 = vpack.c.b16 %v1058, %v1054
  %v1335 = vpack.c.b16 %v1063, %v1059
  %v1336 = vpack.c.b16 %v1064, %v1060
  %v1337 = vpack.c.b16 %v1065, %v1061
  %v1338 = vpack.c.b16 %v1066, %v1062
  %v1339 = vpack.c.b16 %v1071, %v1067
  %v1340 = vpack.c.b16 %v1072, %v1068
  %v1341 = vpack.c.b16 %v1073, %v1069
  %v1342 = vpack.c.b16 %v1074, %v1070
  %v1343 = vpack.c.b16 %v1079, %v1075
  %v1344 = vpack.c.b16 %v1080, %v1076
  %v1345 = vpack.c.b16 %v1081, %v1077
  %v1346 = vpack.c.b16 %v1082, %v1078
  %v1347 = vpack.c.b16 %v1087, %v1083
  %v1348 = vpack.c.b16 %v1088, %v1084
  %v1349 = vpack.c.b16 %v1089, %v1085
  %v1350 = vpack.c.b16 %v1090, %v1086
  %v1351 = vpack.c.b16 %v1095, %v1091
  %v1352 = vpack.c.b16 %v1096, %v1092
  %v1353 = vpack.c.b16 %v1097, %v1093
  %v1354 = vpack.c.b16 %v1098, %v1094
  %1611 = vmatprep.subr.bf16.mxu0 %v1100
  %1612 = vmatpush1.bf16.msra.mxu0 %v1099
  %1613 = vmatprep.subr.bf16.mxu0 %v1104
  %1614 = vmatpush1.bf16.msra.mxu0 %v1103
  %1615 = vmatprep.subr.bf16.mxu0 %v1108
  %1616 = vmatpush1.bf16.msra.mxu0 %v1107
  %1617 = vmatprep.subr.bf16.mxu0 %v1112
  %1618 = vmatpush1.bf16.msra.mxu0 %v1111
  %1619 = vmatprep.subr.bf16.mxu0 %v1116
  %1620 = vmatpush1.bf16.msra.mxu0 %v1115
  %1621 = vmatprep.subr.bf16.mxu0 %v1120
  %1622 = vmatpush1.bf16.msra.mxu0 %v1119
  %1623 = vmatprep.subr.bf16.mxu0 %v1124
  %1624 = vmatpush1.bf16.msra.mxu0 %v1123
  %1625 = vmatprep.subr.bf16.mxu0 %v1128
  %1626 = vmatpush1.bf16.msra.mxu0 %v1127
  %1627 = vmatprep.subr.bf16.mxu0 %v1132
  %1628 = vmatpush1.bf16.msra.mxu0 %v1131
  %1629 = vmatprep.subr.bf16.mxu0 %v1136
  %1630 = vmatpush1.bf16.msra.mxu0 %v1135
  %1631 = vmatprep.subr.bf16.mxu0 %v1140
  %1632 = vmatpush1.bf16.msra.mxu0 %v1139
  %1633 = vmatprep.subr.bf16.mxu0 %v1144
  %1634 = vmatpush1.bf16.msra.mxu0 %v1143
  %1635 = vmatprep.subr.bf16.mxu0 %v1148
  %1636 = vmatpush1.bf16.msra.mxu0 %v1147
  %1637 = vmatprep.subr.bf16.mxu0 %v1152
  %1638 = vmatpush1.bf16.msra.mxu0 %v1151
  %1639 = vmatprep.subr.bf16.mxu0 %v1156
  %1640 = vmatpush1.bf16.msra.mxu0 %v1155
  %1641 = vmatprep.subr.bf16.mxu0 %v1160
  %1642 = vmatpush1.bf16.msra.mxu0 %v1159
  %1643 = vmatprep.mubr.bf16.mxu0 %v316
  %1644 = vmatmul.mubr.bf16.gmra.mrb[0].mxu0 %v315
  %v1645 = vpop.f32.mrb[0].mxu0
  %v1646 = vadd.f32 %v286, %v1645
  %v1647 = vpop.f32.mrb[0].mxu0
  %v1648 = vadd.f32 %v290, %v1647
  %v1649 = vpop.f32.mrb[0].mxu0
  %v1650 = vpop.f32.mrb[0].mxu0
  %1651 = vdwg.mxu0
  %1652 = vmatprep.subr.bf16.mxu0 %v1164
  %1653 = vmatpush1.bf16.msra.mxu0 %v1163
  %1654 = vmatprep.subr.bf16.mxu0 %v1168
  %1655 = vmatpush1.bf16.msra.mxu0 %v1167
  %1656 = vmatprep.subr.bf16.mxu0 %v1172
  %1657 = vmatpush1.bf16.msra.mxu0 %v1171
  %1658 = vmatprep.subr.bf16.mxu0 %v1176
  %1659 = vmatpush1.bf16.msra.mxu0 %v1175
  %1660 = vmatprep.subr.bf16.mxu0 %v1180
  %1661 = vmatpush1.bf16.msra.mxu0 %v1179
  %1662 = vmatprep.subr.bf16.mxu0 %v1184
  %1663 = vmatpush1.bf16.msra.mxu0 %v1183
  %1664 = vmatprep.subr.bf16.mxu0 %v1188
  %1665 = vmatpush1.bf16.msra.mxu0 %v1187
  %1666 = vmatprep.subr.bf16.mxu0 %v1192
  %1667 = vmatpush1.bf16.msra.mxu0 %v1191
  %1668 = vmatprep.subr.bf16.mxu0 %v1196
  %1669 = vmatpush1.bf16.msra.mxu0 %v1195
  %1670 = vmatprep.subr.bf16.mxu0 %v1200
  %1671 = vmatpush1.bf16.msra.mxu0 %v1199
  %1672 = vmatprep.subr.bf16.mxu0 %v1204
  %1673 = vmatpush1.bf16.msra.mxu0 %v1203
  %1674 = vmatprep.subr.bf16.mxu0 %v1208
  %1675 = vmatpush1.bf16.msra.mxu0 %v1207
  %1676 = vmatprep.subr.bf16.mxu0 %v1212
  %1677 = vmatpush1.bf16.msra.mxu0 %v1211
  %1678 = vmatprep.subr.bf16.mxu0 %v1216
  %1679 = vmatpush1.bf16.msra.mxu0 %v1215
  %1680 = vmatprep.subr.bf16.mxu0 %v1220
  %1681 = vmatpush1.bf16.msra.mxu0 %v1219
  %1682 = vmatprep.subr.bf16.mxu0 %v1224
  %1683 = vmatpush1.bf16.msra.mxu0 %v1223
  %1684 = vmatprep.mubr.bf16.mxu0 %v318
  %1685 = vmatmul.mubr.bf16.gmra.mrb[0].mxu0 %v317
  %v1686 = vpop.f32.mrb[0].mxu0
  %v1687 = vadd.f32 %v1646, %v1686
  %v1688 = vpop.f32.mrb[0].mxu0
  %v1689 = vadd.f32 %v1648, %v1688
  %v1690 = vpop.f32.mrb[0].mxu0
  %v1691 = vpop.f32.mrb[0].mxu0
  %1692 = vdwg.mxu0
  %1693 = vmatprep.subr.bf16.mxu0 %v1228
  %1694 = vmatpush1.bf16.msra.mxu0 %v1227
  %1695 = vmatprep.subr.bf16.mxu0 %v1232
  %1696 = vmatpush1.bf16.msra.mxu0 %v1231
  %1697 = vmatprep.subr.bf16.mxu0 %v1236
  %1698 = vmatpush1.bf16.msra.mxu0 %v1235
  %1699 = vmatprep.subr.bf16.mxu0 %v1240
  %1700 = vmatpush1.bf16.msra.mxu0 %v1239
  %1701 = vmatprep.subr.bf16.mxu0 %v1244
  %1702 = vmatpush1.bf16.msra.mxu0 %v1243
  %1703 = vmatprep.subr.bf16.mxu0 %v1248
  %1704 = vmatpush1.bf16.msra.mxu0 %v1247
  %1705 = vmatprep.subr.bf16.mxu0 %v1252
  %1706 = vmatpush1.bf16.msra.mxu0 %v1251
  %1707 = vmatprep.subr.bf16.mxu0 %v1256
  %1708 = vmatpush1.bf16.msra.mxu0 %v1255
  %1709 = vmatprep.subr.bf16.mxu0 %v1260
  %1710 = vmatpush1.bf16.msra.mxu0 %v1259
  %1711 = vmatprep.subr.bf16.mxu0 %v1264
  %1712 = vmatpush1.bf16.msra.mxu0 %v1263
  %1713 = vmatprep.subr.bf16.mxu0 %v1268
  %1714 = vmatpush1.bf16.msra.mxu0 %v1267
  %1715 = vmatprep.subr.bf16.mxu0 %v1272
  %1716 = vmatpush1.bf16.msra.mxu0 %v1271
  %1717 = vmatprep.subr.bf16.mxu0 %v1276
  %1718 = vmatpush1.bf16.msra.mxu0 %v1275
  %1719 = vmatprep.subr.bf16.mxu0 %v1280
  %1720 = vmatpush1.bf16.msra.mxu0 %v1279
  %1721 = vmatprep.subr.bf16.mxu0 %v1284
  %1722 = vmatpush1.bf16.msra.mxu0 %v1283
  %1723 = vmatprep.subr.bf16.mxu0 %v1288
  %1724 = vmatpush1.bf16.msra.mxu0 %v1287
  %1725 = vmatprep.mubr.bf16.mxu0 %v320
  %1726 = vmatmul.mubr.bf16.gmra.mrb[0].mxu0 %v319
  %v1727 = vpop.f32.mrb[0].mxu0
  %v1728 = vadd.f32 %v1687, %v1727
  %v1729 = vpop.f32.mrb[0].mxu0
  %v1730 = vadd.f32 %v1689, %v1729
  %v1731 = vpop.f32.mrb[0].mxu0
  %v1732 = vpop.f32.mrb[0].mxu0
  %1733 = vdwg.mxu0
  %1734 = vmatprep.subr.bf16.mxu0 %v1292
  %1735 = vmatpush1.bf16.msra.mxu0 %v1291
  %1736 = vmatprep.subr.bf16.mxu0 %v1296
  %1737 = vmatpush1.bf16.msra.mxu0 %v1295
  %1738 = vmatprep.subr.bf16.mxu0 %v1300
  %1739 = vmatpush1.bf16.msra.mxu0 %v1299
  %1740 = vmatprep.subr.bf16.mxu0 %v1304
  %1741 = vmatpush1.bf16.msra.mxu0 %v1303
  %1742 = vmatprep.subr.bf16.mxu0 %v1308
  %1743 = vmatpush1.bf16.msra.mxu0 %v1307
  %1744 = vmatprep.subr.bf16.mxu0 %v1312
  %1745 = vmatpush1.bf16.msra.mxu0 %v1311
  %1746 = vmatprep.subr.bf16.mxu0 %v1316
  %1747 = vmatpush1.bf16.msra.mxu0 %v1315
  %1748 = vmatprep.subr.bf16.mxu0 %v1320
  %1749 = vmatpush1.bf16.msra.mxu0 %v1319
  %1750 = vmatprep.subr.bf16.mxu0 %v1324
  %1751 = vmatpush1.bf16.msra.mxu0 %v1323
  %1752 = vmatprep.subr.bf16.mxu0 %v1328
  %1753 = vmatpush1.bf16.msra.mxu0 %v1327
  %1754 = vmatprep.subr.bf16.mxu0 %v1332
  %1755 = vmatpush1.bf16.msra.mxu0 %v1331
  %1756 = vmatprep.subr.bf16.mxu0 %v1336
  %1757 = vmatpush1.bf16.msra.mxu0 %v1335
  %1758 = vmatprep.subr.bf16.mxu0 %v1340
  %1759 = vmatpush1.bf16.msra.mxu0 %v1339
  %1760 = vmatprep.subr.bf16.mxu0 %v1344
  %1761 = vmatpush1.bf16.msra.mxu0 %v1343
  %1762 = vmatprep.subr.bf16.mxu0 %v1348
  %1763 = vmatpush1.bf16.msra.mxu0 %v1347
  %1764 = vmatprep.subr.bf16.mxu0 %v1352
  %1765 = vmatpush1.bf16.msra.mxu0 %v1351
  %1766 = vmatprep.mubr.bf16.mxu0 %v322
  %1767 = vmatmul.mubr.bf16.gmra.mrb[0].mxu0 %v321
  %v1768 = vpop.f32.mrb[0].mxu0
  %v1769 = vadd.f32 %v1728, %v1768
  %v1770 = vpop.f32.mrb[0].mxu0
  %v1771 = vadd.f32 %v1730, %v1770
  %v1772 = vpop.f32.mrb[0].mxu0
  %v1773 = vpop.f32.mrb[0].mxu0
  %1774 = vdwg.mxu0
  %1775 = vmatprep.subr.bf16.mxu0 %v1102
  %1776 = vmatpush1.bf16.msra.mxu0 %v1101
  %1777 = vmatprep.subr.bf16.mxu0 %v1106
  %1778 = vmatpush1.bf16.msra.mxu0 %v1105
  %1779 = vmatprep.subr.bf16.mxu0 %v1110
  %1780 = vmatpush1.bf16.msra.mxu0 %v1109
  %1781 = vmatprep.subr.bf16.mxu0 %v1114
  %1782 = vmatpush1.bf16.msra.mxu0 %v1113
  %1783 = vmatprep.subr.bf16.mxu0 %v1118
  %1784 = vmatpush1.bf16.msra.mxu0 %v1117
  %1785 = vmatprep.subr.bf16.mxu0 %v1122
  %1786 = vmatpush1.bf16.msra.mxu0 %v1121
  %1787 = vmatprep.subr.bf16.mxu0 %v1126
  %1788 = vmatpush1.bf16.msra.mxu0 %v1125
  %1789 = vmatprep.subr.bf16.mxu0 %v1130
  %1790 = vmatpush1.bf16.msra.mxu0 %v1129
  %1791 = vmatprep.subr.bf16.mxu0 %v1134
  %1792 = vmatpush1.bf16.msra.mxu0 %v1133
  %1793 = vmatprep.subr.bf16.mxu0 %v1138
  %1794 = vmatpush1.bf16.msra.mxu0 %v1137
  %1795 = vmatprep.subr.bf16.mxu0 %v1142
  %1796 = vmatpush1.bf16.msra.mxu0 %v1141
  %1797 = vmatprep.subr.bf16.mxu0 %v1146
  %1798 = vmatpush1.bf16.msra.mxu0 %v1145
  %1799 = vmatprep.subr.bf16.mxu0 %v1150
  %1800 = vmatpush1.bf16.msra.mxu0 %v1149
  %1801 = vmatprep.subr.bf16.mxu0 %v1154
  %1802 = vmatpush1.bf16.msra.mxu0 %v1153
  %1803 = vmatprep.subr.bf16.mxu0 %v1158
  %1804 = vmatpush1.bf16.msra.mxu0 %v1157
  %1805 = vmatprep.subr.bf16.mxu0 %v1162
  %1806 = vmatpush1.bf16.msra.mxu0 %v1161
  %1807 = vmatprep.mubr.bf16.mxu0 %v316
  %1808 = vmatmul.mubr.bf16.gmra.mrb[0].mxu0 %v315
  %v1809 = vpop.f32.mrb[0].mxu0
  %v1810 = vadd.f32 %v294, %v1809
  %v1811 = vpop.f32.mrb[0].mxu0
  %v1812 = vadd.f32 %v298, %v1811
  %v1813 = vpop.f32.mrb[0].mxu0
  %v1814 = vpop.f32.mrb[0].mxu0
  %1815 = vdwg.mxu0
  %1816 = vmatprep.subr.bf16.mxu0 %v1166
  %1817 = vmatpush1.bf16.msra.mxu0 %v1165
  %1818 = vmatprep.subr.bf16.mxu0 %v1170
  %1819 = vmatpush1.bf16.msra.mxu0 %v1169
  %1820 = vmatprep.subr.bf16.mxu0 %v1174
  %1821 = vmatpush1.bf16.msra.mxu0 %v1173
  %1822 = vmatprep.subr.bf16.mxu0 %v1178
  %1823 = vmatpush1.bf16.msra.mxu0 %v1177
  %1824 = vmatprep.subr.bf16.mxu0 %v1182
  %1825 = vmatpush1.bf16.msra.mxu0 %v1181
  %1826 = vmatprep.subr.bf16.mxu0 %v1186
  %1827 = vmatpush1.bf16.msra.mxu0 %v1185
  %1828 = vmatprep.subr.bf16.mxu0 %v1190
  %1829 = vmatpush1.bf16.msra.mxu0 %v1189
  %1830 = vmatprep.subr.bf16.mxu0 %v1194
  %1831 = vmatpush1.bf16.msra.mxu0 %v1193
  %1832 = vmatprep.subr.bf16.mxu0 %v1198
  %1833 = vmatpush1.bf16.msra.mxu0 %v1197
  %1834 = vmatprep.subr.bf16.mxu0 %v1202
  %1835 = vmatpush1.bf16.msra.mxu0 %v1201
  %1836 = vmatprep.subr.bf16.mxu0 %v1206
  %1837 = vmatpush1.bf16.msra.mxu0 %v1205
  %1838 = vmatprep.subr.bf16.mxu0 %v1210
  %1839 = vmatpush1.bf16.msra.mxu0 %v1209
  %1840 = vmatprep.subr.bf16.mxu0 %v1214
  %1841 = vmatpush1.bf16.msra.mxu0 %v1213
  %1842 = vmatprep.subr.bf16.mxu0 %v1218
  %1843 = vmatpush1.bf16.msra.mxu0 %v1217
  %1844 = vmatprep.subr.bf16.mxu0 %v1222
  %1845 = vmatpush1.bf16.msra.mxu0 %v1221
  %1846 = vmatprep.subr.bf16.mxu0 %v1226
  %1847 = vmatpush1.bf16.msra.mxu0 %v1225
  %1848 = vmatprep.mubr.bf16.mxu0 %v318
  %1849 = vmatmul.mubr.bf16.gmra.mrb[0].mxu0 %v317
  %v1850 = vpop.f32.mrb[0].mxu0
  %v1851 = vadd.f32 %v1810, %v1850
  %v1852 = vpop.f32.mrb[0].mxu0
  %v1853 = vadd.f32 %v1812, %v1852
  %v1854 = vpop.f32.mrb[0].mxu0
  %v1855 = vpop.f32.mrb[0].mxu0
  %1856 = vdwg.mxu0
  %1857 = vmatprep.subr.bf16.mxu0 %v1230
  %1858 = vmatpush1.bf16.msra.mxu0 %v1229
  %1859 = vmatprep.subr.bf16.mxu0 %v1234
  %1860 = vmatpush1.bf16.msra.mxu0 %v1233
  %1861 = vmatprep.subr.bf16.mxu0 %v1238
  %1862 = vmatpush1.bf16.msra.mxu0 %v1237
  %1863 = vmatprep.subr.bf16.mxu0 %v1242
  %1864 = vmatpush1.bf16.msra.mxu0 %v1241
  %1865 = vmatprep.subr.bf16.mxu0 %v1246
  %1866 = vmatpush1.bf16.msra.mxu0 %v1245
  %1867 = vmatprep.subr.bf16.mxu0 %v1250
  %1868 = vmatpush1.bf16.msra.mxu0 %v1249
  %1869 = vmatprep.subr.bf16.mxu0 %v1254
  %1870 = vmatpush1.bf16.msra.mxu0 %v1253
  %1871 = vmatprep.subr.bf16.mxu0 %v1258
  %1872 = vmatpush1.bf16.msra.mxu0 %v1257
  %1873 = vmatprep.subr.bf16.mxu0 %v1262
  %1874 = vmatpush1.bf16.msra.mxu0 %v1261
  %1875 = vmatprep.subr.bf16.mxu0 %v1266
  %1876 = vmatpush1.bf16.msra.mxu0 %v1265
  %1877 = vmatprep.subr.bf16.mxu0 %v1270
  %1878 = vmatpush1.bf16.msra.mxu0 %v1269
  %1879 = vmatprep.subr.bf16.mxu0 %v1274
  %1880 = vmatpush1.bf16.msra.mxu0 %v1273
  %1881 = vmatprep.subr.bf16.mxu0 %v1278
  %1882 = vmatpush1.bf16.msra.mxu0 %v1277
  %1883 = vmatprep.subr.bf16.mxu0 %v1282
  %1884 = vmatpush1.bf16.msra.mxu0 %v1281
  %1885 = vmatprep.subr.bf16.mxu0 %v1286
  %1886 = vmatpush1.bf16.msra.mxu0 %v1285
  %1887 = vmatprep.subr.bf16.mxu0 %v1290
  %1888 = vmatpush1.bf16.msra.mxu0 %v1289
  %1889 = vmatprep.mubr.bf16.mxu0 %v320
  %1890 = vmatmul.mubr.bf16.gmra.mrb[0].mxu0 %v319
  %v1891 = vpop.f32.mrb[0].mxu0
  %v1892 = vadd.f32 %v1851, %v1891
  %v1893 = vpop.f32.mrb[0].mxu0
  %v1894 = vadd.f32 %v1853, %v1893
  %v1895 = vpop.f32.mrb[0].mxu0
  %v1896 = vpop.f32.mrb[0].mxu0
  %1897 = vdwg.mxu0
  %1898 = vmatprep.subr.bf16.mxu0 %v1294
  %1899 = vmatpush1.bf16.msra.mxu0 %v1293
  %1900 = vmatprep.subr.bf16.mxu0 %v1298
  %1901 = vmatpush1.bf16.msra.mxu0 %v1297
  %1902 = vmatprep.subr.bf16.mxu0 %v1302
  %1903 = vmatpush1.bf16.msra.mxu0 %v1301
  %1904 = vmatprep.subr.bf16.mxu0 %v1306
  %1905 = vmatpush1.bf16.msra.mxu0 %v1305
  %1906 = vmatprep.subr.bf16.mxu0 %v1310
  %1907 = vmatpush1.bf16.msra.mxu0 %v1309
  %1908 = vmatprep.subr.bf16.mxu0 %v1314
  %1909 = vmatpush1.bf16.msra.mxu0 %v1313
  %1910 = vmatprep.subr.bf16.mxu0 %v1318
  %1911 = vmatpush1.bf16.msra.mxu0 %v1317
  %1912 = vmatprep.subr.bf16.mxu0 %v1322
  %1913 = vmatpush1.bf16.msra.mxu0 %v1321
  %1914 = vmatprep.subr.bf16.mxu0 %v1326
  %1915 = vmatpush1.bf16.msra.mxu0 %v1325
  %1916 = vmatprep.subr.bf16.mxu0 %v1330
  %1917 = vmatpush1.bf16.msra.mxu0 %v1329
  %1918 = vmatprep.subr.bf16.mxu0 %v1334
  %1919 = vmatpush1.bf16.msra.mxu0 %v1333
  %1920 = vmatprep.subr.bf16.mxu0 %v1338
  %1921 = vmatpush1.bf16.msra.mxu0 %v1337
  %1922 = vmatprep.subr.bf16.mxu0 %v1342
  %1923 = vmatpush1.bf16.msra.mxu0 %v1341
  %1924 = vmatprep.subr.bf16.mxu0 %v1346
  %1925 = vmatpush1.bf16.msra.mxu0 %v1345
  %1926 = vmatprep.subr.bf16.mxu0 %v1350
  %1927 = vmatpush1.bf16.msra.mxu0 %v1349
  %1928 = vmatprep.subr.bf16.mxu0 %v1354
  %1929 = vmatpush1.bf16.msra.mxu0 %v1353
  %1930 = vmatprep.mubr.bf16.mxu0 %v322
  %1931 = vmatmul.mubr.bf16.gmra.mrb[0].mxu0 %v321
  %v1932 = vpop.f32.mrb[0].mxu0
  %v1933 = vadd.f32 %v1892, %v1932
  %v1934 = vpop.f32.mrb[0].mxu0
  %v1935 = vadd.f32 %v1894, %v1934
  %v1936 = vpop.f32.mrb[0].mxu0
  %v1937 = vpop.f32.mrb[0].mxu0
  %1938 = vdwg.mxu0
  %v1939 = vmax.f32 %v1769, 0.0
  %v1940 = vmax.f32 %v1771, 0.0
  %v1941 = vmax.f32 %v1933, 0.0
  %v1942 = vmax.f32 %v1935, 0.0
  %v1943 = vpack.c.bf16 %v1939, %v1939
  %v1944 = vpack.c.bf16 %v1940, %v1940
  %v1945 = vpack.c.bf16 %v1941, %v1941
  %v1946 = vpack.c.bf16 %v1942, %v1942
  %v1947 = vld [vmem:[%s3] sm:$0xf]
  %v1948 = vld [vmem:[%s3 + $0x4] sm:$0xf]
  %v1949 = vld [vmem:[%s3 + $0x8] sm:$0xf]
  %v1950 = vld [vmem:[%s3 + $0xc] sm:$0xf]
  %v1951 = vld [vmem:[%s3 + $0x10] sm:$0xf]
  %v1952 = vld [vmem:[%s3 + $0x14] sm:$0xf]
  %v1953 = vld [vmem:[%s3 + $0x18] sm:$0xf]
  %v1954 = vld [vmem:[%s3 + $0x1c] sm:$0xf]
  %v1955 = vld [vmem:[%s3 + $0x20] sm:$0xf]
  %v1956 = vld [vmem:[%s3 + $0x24] sm:$0xf]
  %v1957 = vld [vmem:[%s3 + $0x28] sm:$0xf]
  %v1958 = vld [vmem:[%s3 + $0x2c] sm:$0xf]
  %v1959 = vld [vmem:[%s3 + $0x30] sm:$0xf]
  %v1960 = vld [vmem:[%s3 + $0x34] sm:$0xf]
  %v1961 = vld [vmem:[%s3 + $0x38] sm:$0xf]
  %v1962 = vld [vmem:[%s3 + $0x3c] sm:$0xf]
  %v1963 = vld [vmem:[%s3 + $0x40] sm:$0xf]
  %v1964 = vld [vmem:[%s3 + $0x44] sm:$0xf]
  %v1965 = vld [vmem:[%s3 + $0x48] sm:$0xf]
  %v1966 = vld [vmem:[%s3 + $0x4c] sm:$0xf]
  %v1967 = vld [vmem:[%s3 + $0x50] sm:$0xf]
  %v1968 = vld [vmem:[%s3 + $0x54] sm:$0xf]
  %v1969 = vld [vmem:[%s3 + $0x58] sm:$0xf]
  %v1970 = vld [vmem:[%s3 + $0x5c] sm:$0xf]
  %v1971 = vld [vmem:[%s3 + $0x60] sm:$0xf]
  %v1972 = vld [vmem:[%s3 + $0x64] sm:$0xf]
  %v1973 = vld [vmem:[%s3 + $0x68] sm:$0xf]
  %v1974 = vld [vmem:[%s3 + $0x6c] sm:$0xf]
  %v1975 = vld [vmem:[%s3 + $0x70] sm:$0xf]
  %v1976 = vld [vmem:[%s3 + $0x74] sm:$0xf]
  %v1977 = vld [vmem:[%s3 + $0x78] sm:$0xf]
  %v1978 = vld [vmem:[%s3 + $0x7c] sm:$0xf]
  %v1979 = vld [vmem:[%s3 + $0x80] sm:$0xf]
  %v1980 = vld [vmem:[%s3 + $0x84] sm:$0xf]
  %v1981 = vld [vmem:[%s3 + $0x88] sm:$0xf]
  %v1982 = vld [vmem:[%s3 + $0x8c] sm:$0xf]
  %v1983 = vld [vmem:[%s3 + $0x90] sm:$0xf]
  %v1984 = vld [vmem:[%s3 + $0x94] sm:$0xf]
  %v1985 = vld [vmem:[%s3 + $0x98] sm:$0xf]
  %v1986 = vld [vmem:[%s3 + $0x9c] sm:$0xf]
  %v1987 = vld [vmem:[%s3 + $0xa0] sm:$0xf]
  %v1988 = vld [vmem:[%s3 + $0xa4] sm:$0xf]
  %v1989 = vld [vmem:[%s3 + $0xa8] sm:$0xf]
  %v1990 = vld [vmem:[%s3 + $0xac] sm:$0xf]
  %v1991 = vld [vmem:[%s3 + $0xb0] sm:$0xf]
  %v1992 = vld [vmem:[%s3 + $0xb4] sm:$0xf]
  %v1993 = vld [vmem:[%s3 + $0xb8] sm:$0xf]
  %v1994 = vld [vmem:[%s3 + $0xbc] sm:$0xf]
  %v1995 = vld [vmem:[%s3 + $0xc0] sm:$0xf]
  %v1996 = vld [vmem:[%s3 + $0xc4] sm:$0xf]
  %v1997 = vld [vmem:[%s3 + $0xc8] sm:$0xf]
  %v1998 = vld [vmem:[%s3 + $0xcc] sm:$0xf]
  %v1999 = vld [vmem:[%s3 + $0xd0] sm:$0xf]
  %v2000 = vld [vmem:[%s3 + $0xd4] sm:$0xf]
  %v2001 = vld [vmem:[%s3 + $0xd8] sm:$0xf]
  %v2002 = vld [vmem:[%s3 + $0xdc] sm:$0xf]
  %v2003 = vld [vmem:[%s3 + $0xe0] sm:$0xf]
  %v2004 = vld [vmem:[%s3 + $0xe4] sm:$0xf]
  %v2005 = vld [vmem:[%s3 + $0xe8] sm:$0xf]
  %v2006 = vld [vmem:[%s3 + $0xec] sm:$0xf]
  %v2007 = vld [vmem:[%s3 + $0xf0] sm:$0xf]
  %v2008 = vld [vmem:[%s3 + $0xf4] sm:$0xf]
  %v2009 = vld [vmem:[%s3 + $0xf8] sm:$0xf]
  %v2010 = vld [vmem:[%s3 + $0xfc] sm:$0xf]
  %v2011 = vld [vmem:[%s4] sm:$0x1]
  %v2013 = vlaneseq
  %v2014 = vshrl.u32 %v2013, 7
  %v2015 = vsub.s32 0, %v2014
  %v2016 = vrot.slane %v2011, %v2015
  %v2082 = vunpack.c.l.b16 %v1947
  %v2083 = vunpack.c.l.b16 %v1948
  %v2084 = vunpack.c.l.b16 %v1949
  %v2085 = vunpack.c.l.b16 %v1950
  %v2086 = vunpack.c.l.b16 %v1951
  %v2087 = vunpack.c.l.b16 %v1952
  %v2088 = vunpack.c.l.b16 %v1953
  %v2089 = vunpack.c.l.b16 %v1954
  %v2090 = vunpack.c.l.b16 %v1955
  %v2091 = vunpack.c.l.b16 %v1956
  %v2092 = vunpack.c.l.b16 %v1957
  %v2093 = vunpack.c.l.b16 %v1958
  %v2094 = vunpack.c.l.b16 %v1959
  %v2095 = vunpack.c.l.b16 %v1960
  %v2096 = vunpack.c.l.b16 %v1961
  %v2097 = vunpack.c.l.b16 %v1962
  %v2098 = vunpack.c.l.b16 %v1963
  %v2099 = vunpack.c.l.b16 %v1964
  %v2100 = vunpack.c.l.b16 %v1965
  %v2101 = vunpack.c.l.b16 %v1966
  %v2102 = vunpack.c.l.b16 %v1967
  %v2103 = vunpack.c.l.b16 %v1968
  %v2104 = vunpack.c.l.b16 %v1969
  %v2105 = vunpack.c.l.b16 %v1970
  %v2106 = vunpack.c.l.b16 %v1971
  %v2107 = vunpack.c.l.b16 %v1972
  %v2108 = vunpack.c.l.b16 %v1973
  %v2109 = vunpack.c.l.b16 %v1974
  %v2110 = vunpack.c.l.b16 %v1975
  %v2111 = vunpack.c.l.b16 %v1976
  %v2112 = vunpack.c.l.b16 %v1977
  %v2113 = vunpack.c.l.b16 %v1978
  %v2114 = vunpack.c.l.b16 %v1979
  %v2115 = vunpack.c.l.b16 %v1980
  %v2116 = vunpack.c.l.b16 %v1981
  %v2117 = vunpack.c.l.b16 %v1982
  %v2118 = vunpack.c.l.b16 %v1983
  %v2119 = vunpack.c.l.b16 %v1984
  %v2120 = vunpack.c.l.b16 %v1985
  %v2121 = vunpack.c.l.b16 %v1986
  %v2122 = vunpack.c.l.b16 %v1987
  %v2123 = vunpack.c.l.b16 %v1988
  %v2124 = vunpack.c.l.b16 %v1989
  %v2125 = vunpack.c.l.b16 %v1990
  %v2126 = vunpack.c.l.b16 %v1991
  %v2127 = vunpack.c.l.b16 %v1992
  %v2128 = vunpack.c.l.b16 %v1993
  %v2129 = vunpack.c.l.b16 %v1994
  %v2130 = vunpack.c.l.b16 %v1995
  %v2131 = vunpack.c.l.b16 %v1996
  %v2132 = vunpack.c.l.b16 %v1997
  %v2133 = vunpack.c.l.b16 %v1998
  %v2134 = vunpack.c.l.b16 %v1999
  %v2135 = vunpack.c.l.b16 %v2000
  %v2136 = vunpack.c.l.b16 %v2001
  %v2137 = vunpack.c.l.b16 %v2002
  %v2138 = vunpack.c.l.b16 %v2003
  %v2139 = vunpack.c.l.b16 %v2004
  %v2140 = vunpack.c.l.b16 %v2005
  %v2141 = vunpack.c.l.b16 %v2006
  %v2142 = vunpack.c.l.b16 %v2007
  %v2143 = vunpack.c.l.b16 %v2008
  %v2144 = vunpack.c.l.b16 %v2009
  %v2145 = vunpack.c.l.b16 %v2010
  %v2146 = vpack.c.b16 %v2083, %v2082
  %v2147 = vpack.c.b16 %v2085, %v2084
  %v2148 = vpack.c.b16 %v2087, %v2086
  %v2149 = vpack.c.b16 %v2089, %v2088
  %v2150 = vpack.c.b16 %v2091, %v2090
  %v2151 = vpack.c.b16 %v2093, %v2092
  %v2152 = vpack.c.b16 %v2095, %v2094
  %v2153 = vpack.c.b16 %v2097, %v2096
  %v2154 = vpack.c.b16 %v2099, %v2098
  %v2155 = vpack.c.b16 %v2101, %v2100
  %v2156 = vpack.c.b16 %v2103, %v2102
  %v2157 = vpack.c.b16 %v2105, %v2104
  %v2158 = vpack.c.b16 %v2107, %v2106
  %v2159 = vpack.c.b16 %v2109, %v2108
  %v2160 = vpack.c.b16 %v2111, %v2110
  %v2161 = vpack.c.b16 %v2113, %v2112
  %v2162 = vpack.c.b16 %v2115, %v2114
  %v2163 = vpack.c.b16 %v2117, %v2116
  %v2164 = vpack.c.b16 %v2119, %v2118
  %v2165 = vpack.c.b16 %v2121, %v2120
  %v2166 = vpack.c.b16 %v2123, %v2122
  %v2167 = vpack.c.b16 %v2125, %v2124
  %v2168 = vpack.c.b16 %v2127, %v2126
  %v2169 = vpack.c.b16 %v2129, %v2128
  %v2170 = vpack.c.b16 %v2131, %v2130
  %v2171 = vpack.c.b16 %v2133, %v2132
  %v2172 = vpack.c.b16 %v2135, %v2134
  %v2173 = vpack.c.b16 %v2137, %v2136
  %v2174 = vpack.c.b16 %v2139, %v2138
  %v2175 = vpack.c.b16 %v2141, %v2140
  %v2176 = vpack.c.b16 %v2143, %v2142
  %v2177 = vpack.c.b16 %v2145, %v2144
  %2210 = vmatprep.subr.bf16.mxu0 0
  %2211 = vmatpush1.bf16.msra.mxu0 %v2146
  %2212 = vmatprep.subr.bf16.mxu0 0
  %2213 = vmatpush1.bf16.msra.mxu0 %v2147
  %2214 = vmatprep.subr.bf16.mxu0 0
  %2215 = vmatpush1.bf16.msra.mxu0 %v2148
  %2216 = vmatprep.subr.bf16.mxu0 0
  %2217 = vmatpush1.bf16.msra.mxu0 %v2149
  %2218 = vmatprep.subr.bf16.mxu0 0
  %2219 = vmatpush1.bf16.msra.mxu0 %v2150
  %2220 = vmatprep.subr.bf16.mxu0 0
  %2221 = vmatpush1.bf16.msra.mxu0 %v2151
  %2222 = vmatprep.subr.bf16.mxu0 0
  %2223 = vmatpush1.bf16.msra.mxu0 %v2152
  %2224 = vmatprep.subr.bf16.mxu0 0
  %2225 = vmatpush1.bf16.msra.mxu0 %v2153
  %2226 = vmatprep.subr.bf16.mxu0 0
  %2227 = vmatpush1.bf16.msra.mxu0 %v2154
  %2228 = vmatprep.subr.bf16.mxu0 0
  %2229 = vmatpush1.bf16.msra.mxu0 %v2155
  %2230 = vmatprep.subr.bf16.mxu0 0
  %2231 = vmatpush1.bf16.msra.mxu0 %v2156
  %2232 = vmatprep.subr.bf16.mxu0 0
  %2233 = vmatpush1.bf16.msra.mxu0 %v2157
  %2234 = vmatprep.subr.bf16.mxu0 0
  %2235 = vmatpush1.bf16.msra.mxu0 %v2158
  %2236 = vmatprep.subr.bf16.mxu0 0
  %2237 = vmatpush1.bf16.msra.mxu0 %v2159
  %2238 = vmatprep.subr.bf16.mxu0 0
  %2239 = vmatpush1.bf16.msra.mxu0 %v2160
  %2240 = vmatprep.subr.bf16.mxu0 0
  %2241 = vmatpush1.bf16.msra.mxu0 %v2161
  %2242 = vmatprep.mubr.bf16.mxu0 %v1944
  %2243 = vmatmul.mubr.bf16.gmra.mrb[0].mxu0 %v1943
  %v2244 = vpop.f32.mrb[0].mxu0
  %v2245 = vadd.f32 %v2016, %v2244
  %v2246 = vpop.f32.mrb[0].mxu0
  %v2247 = vpop.f32.mrb[0].mxu0
  %v2248 = vpop.f32.mrb[0].mxu0
  %2249 = vdwg.mxu0
  %2250 = vmatprep.subr.bf16.mxu0 0
  %2251 = vmatpush1.bf16.msra.mxu0 %v2162
  %2252 = vmatprep.subr.bf16.mxu0 0
  %2253 = vmatpush1.bf16.msra.mxu0 %v2163
  %2254 = vmatprep.subr.bf16.mxu0 0
  %2255 = vmatpush1.bf16.msra.mxu0 %v2164
  %2256 = vmatprep.subr.bf16.mxu0 0
  %2257 = vmatpush1.bf16.msra.mxu0 %v2165
  %2258 = vmatprep.subr.bf16.mxu0 0
  %2259 = vmatpush1.bf16.msra.mxu0 %v2166
  %2260 = vmatprep.subr.bf16.mxu0 0
  %2261 = vmatpush1.bf16.msra.mxu0 %v2167
  %2262 = vmatprep.subr.bf16.mxu0 0
  %2263 = vmatpush1.bf16.msra.mxu0 %v2168
  %2264 = vmatprep.subr.bf16.mxu0 0
  %2265 = vmatpush1.bf16.msra.mxu0 %v2169
  %2266 = vmatprep.subr.bf16.mxu0 0
  %2267 = vmatpush1.bf16.msra.mxu0 %v2170
  %2268 = vmatprep.subr.bf16.mxu0 0
  %2269 = vmatpush1.bf16.msra.mxu0 %v2171
  %2270 = vmatprep.subr.bf16.mxu0 0
  %2271 = vmatpush1.bf16.msra.mxu0 %v2172
  %2272 = vmatprep.subr.bf16.mxu0 0
  %2273 = vmatpush1.bf16.msra.mxu0 %v2173
  %2274 = vmatprep.subr.bf16.mxu0 0
  %2275 = vmatpush1.bf16.msra.mxu0 %v2174
  %2276 = vmatprep.subr.bf16.mxu0 0
  %2277 = vmatpush1.bf16.msra.mxu0 %v2175
  %2278 = vmatprep.subr.bf16.mxu0 0
  %2279 = vmatpush1.bf16.msra.mxu0 %v2176
  %2280 = vmatprep.subr.bf16.mxu0 0
  %2281 = vmatpush1.bf16.msra.mxu0 %v2177
  %2282 = vmatprep.mubr.bf16.mxu0 %v1946
  %2283 = vmatmul.mubr.bf16.gmra.mrb[0].mxu0 %v1945
  %v2284 = vpop.f32.mrb[0].mxu0
  %v2285 = vadd.f32 %v2245, %v2284
  %v2286 = vpop.f32.mrb[0].mxu0
  %v2287 = vpop.f32.mrb[0].mxu0
  %v2288 = vpop.f32.mrb[0].mxu0
  %2289 = vdwg.mxu0
  %2290 = vst [vmem:[%s5] sm:$0xff] %v2285
  // Predicated region
  $region22: #{fedavg_cnn_forward.5} parent=0 // pred_check
    _
  $region23: #{fedavg_cnn_forward.5} parent=0 // pred_check_branch
    %2292 = sbr.rel (0) target = $region25
  $region24: #{fedavg_cnn_forward.5} parent=0 // pred_region
    _
  $region25: #{fedavg_cnn_forward.5} parent=0 // pred_fallthru
    _
  // Predicated region
  $region26: #{fedavg_cnn_forward.5} parent=0 // pred_check
    _
  $region27: #{fedavg_cnn_forward.5} parent=0 // pred_check_branch
    %2294 = sbr.rel (0) target = $region29
  $region28: #{fedavg_cnn_forward.5} parent=0 // pred_region
    _
  $region29: #{fedavg_cnn_forward.5} parent=0 // pred_fallthru
    _

</llo_original>
